<compile_context>
chip_gen: v5e
topology: v5e:2x2
jax: 0.10.0
libtpu: 0.0.40
codegen_flags: <defaults>
</compile_context>

<pallas_src>
import functools

import jax
import jax.numpy as jnp
import numpy as np
from jax.experimental import pallas as pl
from jax.experimental.pallas import tpu as pltpu

ALPHA = 4.0
THRESH = 0.693                               # literal threshold (~log 2)
THRESH_EXP = float(np.exp(THRESH) - 1.0)     # sp > 0.693  <=>  exp(dp-dq) > this
BLK = 8                                      # anchors per grid step (one sublane tile)
LANE = 128                                   # pad n up to a multiple of this


def _triplet_block_kernel(x_blk_ref, x_full_ref, t_row_ref, t_col_ref,
                          t_smem_ref, out_ref, *, alpha, n_real):
    b = pl.program_id(0)
    n_pad = x_full_ref.shape[0]
    a2 = jnp.float32(alpha * alpha)

    # ---- alpha * L2 row-normalization: rsqrt (EUP) + multiply (VPU) ----
    # eps keeps the all-zero pad rows at 0 instead of 0*inf = NaN.
    xf = x_full_ref[...].astype(jnp.float32)                       # (n_pad, d)
    xb = x_blk_ref[...].astype(jnp.float32)                        # (BLK, d)
    ssq_f = jnp.sum(xf * xf, axis=1, keepdims=True)
    ssq_b = jnp.sum(xb * xb, axis=1, keepdims=True)
    xnf = xf * (alpha * jax.lax.rsqrt(jnp.maximum(ssq_f, 1e-12)))
    xnb = xb * (alpha * jax.lax.rsqrt(jnp.maximum(ssq_b, 1e-12)))

    # ---- squared-euclidean distances, both orientations, on the MXU ----
    # Two thin matmuls instead of one + transpose: the column-oriented slab gives
    # each anchor's EP "column" directly with a static lane slice (no XLU transpose,
    # no per-anchor one-hot matmul).
    gram_rows = jax.lax.dot_general(xnb, xnf, (((1,), (1,)), ((), ())),
                                    preferred_element_type=jnp.float32)   # (BLK, n_pad)
    gram_cols = jax.lax.dot_general(xnf, xnb, (((1,), (1,)), ((), ())),
                                    preferred_element_type=jnp.float32)   # (n_pad, BLK)
    dist_rows = 2.0 * a2 - 2.0 * gram_rows
    dist_cols = 2.0 * a2 - 2.0 * gram_cols

    t_row = t_row_ref[...]                                         # (1, n_pad) int32
    t_col = t_col_ref[...]                                         # (n_pad, 1) int32

    ridx_col = jax.lax.broadcasted_iota(jnp.int32, (n_pad, 1), 0)
    ridx_row = jax.lax.broadcasted_iota(jnp.int32, (1, n_pad), 1)
    valid_col = ridx_col < n_real                                  # real samples only
    valid_row = ridx_row < n_real

    base = b * BLK
    oh8 = [(jax.lax.broadcasted_iota(jnp.int32, (1, BLK), 1) == j).astype(jnp.float32)
           for j in range(BLK)]

    s_vec = jnp.zeros((1, BLK), jnp.float32)       # per-anchor sum of valid softplus
    c_vec = jnp.zeros((1, BLK), jnp.float32)       # per-anchor valid-triplet count
    av_vec = jnp.zeros((1, BLK), jnp.float32)      # per-anchor "is a real anchor"
    pos_sum = jnp.float32(0.0)
    pos_cnt = jnp.float32(0.0)
    neg_sum = jnp.float32(0.0)
    neg_cnt = jnp.float32(0.0)

    # Static loop over the block's 8 anchors (independent blocks => no long carried
    # scalar chain; the per-anchor O(n^2) log is the dominant, EUP-bound work).
    for j in range(BLK):
        gidx = base + j                                            # global anchor index
        a_valid = gidx < n_real
        t_j = t_smem_ref[gidx]                                     # int32 label (SMEM)

        d_col = dist_cols[:, j:j + 1]                              # (n_pad, 1)
        d_row = dist_rows[j:j + 1, :]                              # (1, n_pad)

        pos_j = jnp.logical_and(
            jnp.logical_and(t_col == t_j, ridx_col != gidx),
            jnp.logical_and(valid_col, a_valid))                   # (n_pad, 1)
        neg_j = jnp.logical_and(t_row != t_j,
                                jnp.logical_and(valid_row, a_valid))  # (1, n_pad)

        # alpha=4 bounds dist by 4*alpha^2 = 64, so exp stays finite in f32.
        ep_col = jnp.where(pos_j, jnp.exp(d_col), 0.0)             # (n_pad, 1)
        rn_row = jnp.where(neg_j, jnp.exp(-d_row), 0.0)            # (1, n_pad)

        prod = ep_col * rn_row           # (n_pad, n_pad): exp(d[i,p]-d[i,q]); 0 if invalid
        vmask = prod > THRESH_EXP                                  # VPU-only threshold
        cnt_j = jnp.sum(vmask.astype(jnp.float32))
        s_j = jnp.sum(jnp.where(vmask, jnp.log(prod + 1.0), 0.0))  # only EUP op per pair

        s_vec = s_vec + s_j * oh8[j]
        c_vec = c_vec + cnt_j * oh8[j]
        av_vec = av_vec + jnp.where(a_valid, 1.0, 0.0) * oh8[j]

        pos_sum = pos_sum + jnp.sum(jnp.where(pos_j, d_col, 0.0))
        pos_cnt = pos_cnt + jnp.sum(pos_j.astype(jnp.float32))
        neg_sum = neg_sum + jnp.sum(jnp.where(neg_j, d_row, 0.0))
        neg_cnt = neg_cnt + jnp.sum(neg_j.astype(jnp.float32))

    # ---- vectorized per-block epilogue: one divide/select for all 8 anchors ----
    has = c_vec > 0.5
    loss_num = jnp.sum(jnp.where(has, s_vec / jnp.maximum(c_vec, 1.0), 0.0))
    total_cnt = jnp.sum(c_vec)
    acc_num = jnp.sum(jnp.where(has, 0.0, av_vec))   # real anchors with no valid triplet

    # ---- pack the 7 partials into a lane-dense (8, 128) output plane ----
    lane = jax.lax.broadcasted_iota(jnp.int32, (BLK, LANE), 1)
    vals = (loss_num, total_cnt, acc_num, pos_sum, pos_cnt, neg_sum, neg_cnt)
    plane = jnp.zeros((BLK, LANE), jnp.float32)
    for k, v in enumerate(vals):
        plane = plane + jnp.where(lane == k, v, 0.0)
    out_ref[0] = plane


def triplet_pallas(inputs, targets, alpha=ALPHA):
    n, d = inputs.shape
    n_pad = ((n + LANE - 1) // LANE) * LANE
    n_blocks = (n + BLK - 1) // BLK

    x_pad = jnp.zeros((n_pad, d), inputs.dtype).at[:n, :].set(inputs)
    t_pad = jnp.full((n_pad,), -1, jnp.int32).at[:n].set(targets.astype(jnp.int32))
    t_row = t_pad.reshape(1, n_pad)
    t_col = t_pad.reshape(n_pad, 1)

    kernel = functools.partial(_triplet_block_kernel,
                               alpha=float(alpha), n_real=n)

    cost = pl.CostEstimate(
        flops=int(4 * n * n_pad * d + 5 * n * n_pad * n_pad),
        transcendentals=int(n * n_pad * n_pad + 2 * n * n_pad),
        bytes_accessed=int(4 * (n_blocks * (n_pad * d + 2 * n_pad)
                                + n * d + n_blocks * BLK * LANE)),
    )
    # >= 32 MiB (raises v5e's 16 MiB default), capped well under every chip's VMEM.
    vmem_limit = int(min(64 * 2**20,
                         max(32 * 2**20, 4 * n_pad * d * 4 + 8 * n_pad * n_pad * 4)))

    out = pl.pallas_call(
        kernel,
        out_shape=jax.ShapeDtypeStruct((n_blocks, BLK, LANE), jnp.float32),
        grid=(n_blocks,),
        in_specs=[
            pl.BlockSpec((BLK, d), lambda b: (b, 0)),              # anchor rows of x
            pl.BlockSpec((n_pad, d), lambda b: (0, 0)),            # full x (Gram RHS)
            pl.BlockSpec((1, n_pad), lambda b: (0, 0)),            # labels, row layout
            pl.BlockSpec((n_pad, 1), lambda b: (0, 0)),            # labels, col layout
            pl.BlockSpec(memory_space=pltpu.MemorySpace.SMEM),     # labels, scalar reads
        ],
        out_specs=pl.BlockSpec((1, BLK, LANE), lambda b: (b, 0, 0)),
        compiler_params=pltpu.CompilerParams(
            dimension_semantics=("parallel",),
            vmem_limit_bytes=vmem_limit),
        cost_estimate=cost,
    )(x_pad, x_pad, t_row, t_col, t_pad)

    parts = out[:, 0, :]                                           # (n_blocks, 128)
    loss_num = jnp.sum(parts[:, 0])
    total_cnt = jnp.sum(parts[:, 1])
    acc_num = jnp.sum(parts[:, 2])
    pos_sum = jnp.sum(parts[:, 3])
    pos_cnt = jnp.sum(parts[:, 4])
    neg_sum = jnp.sum(parts[:, 5])
    neg_cnt = jnp.sum(parts[:, 6])

    loss = jnp.where(total_cnt > 0.0, loss_num / jnp.maximum(total_cnt, 1.0), 0.0)
    acc = acc_num / jnp.float32(n)
    pos_d = pos_sum / jnp.maximum(pos_cnt, 1.0)
    neg_d = neg_sum / jnp.maximum(neg_cnt, 1.0)
    return loss, acc, pos_d, neg_d


def triplet_reference(inputs, targets, alpha=ALPHA):
    """Plain-JAX reference matching the PyTorch forward (static-mask form)."""
    x = inputs.astype(jnp.float32)
    n = x.shape[0]
    xn = alpha * x / jnp.linalg.norm(x, axis=1, keepdims=True)
    sq = jnp.sum(xn * xn, axis=1, keepdims=True)
    dist = sq + sq.T - 2.0 * (xn @ xn.T)
    same = targets[:, None] == targets[None, :]
    eye = jnp.eye(n, dtype=bool)
    pos = same & ~eye
    neg = ~same
    sp = jnp.log(jnp.exp(dist[:, :, None] - dist[:, None, :]) + 1.0)   # [i,p,q]
    m3 = pos[:, :, None] & neg[:, None, :]
    vf = (m3 & (sp > THRESH)).astype(jnp.float32)
    cnt_i = vf.sum(axis=(1, 2))
    sum_i = (sp * vf).sum(axis=(1, 2))
    mean_i = jnp.where(cnt_i > 0, sum_i / jnp.maximum(cnt_i, 1.0), 0.0)
    total = cnt_i.sum()
    loss = jnp.where(total > 0, mean_i.sum() / jnp.maximum(total, 1.0), 0.0)
    acc = jnp.mean((cnt_i == 0).astype(jnp.float32))
    pos_d = jnp.sum(dist * pos) / jnp.maximum(jnp.sum(pos), 1)
    neg_d = jnp.sum(dist * neg) / jnp.maximum(jnp.sum(neg), 1)
    return loss, acc, pos_d, neg_d


def _check(inputs, targets):
    loss, acc, pos_d, neg_d = triplet_pallas(inputs, targets)
    jax.block_until_ready(loss)
    r = triplet_reference(inputs, targets)
    got = np.array([float(loss), float(acc), float(pos_d), float(neg_d)])
    ref = np.array([float(v) for v in r])
    assert np.allclose(got, ref, rtol=2e-4, atol=2e-4), (got, ref)


if __name__ == "__main__":
    key = jax.random.PRNGKey(0)

    # main case: 8 classes x 4 instances, 32-d embeddings
    k1, k2 = jax.random.split(key)
    inputs = jax.random.normal(k1, (32, 32), dtype=jnp.float32)
    targets = jnp.repeat(jnp.arange(8, dtype=jnp.int32), 4)
    _check(inputs, targets)

    # ragged case: n not a multiple of 8 (exercises pad-anchor masking) and a
    # singleton class (exercises the "no valid triplet" accuracy path)
    inputs2 = jax.random.normal(k2, (12, 16), dtype=jnp.float32)
    targets2 = jnp.array([0, 0, 0, 1, 1, 1, 2, 2, 2, 3, 3, 4], dtype=jnp.int32)
    _check(inputs2, targets2)

    print("KERNEL_OK")
</pallas_src>

<mosaic_0001>
module attributes {stable_mosaic.version = 11 : i64} {
  func.func @_triplet_block_kernel(%arg0: i32, %arg1: memref<8x32xf32, #tpu.memory_space<vmem>>, %arg2: memref<128x32xf32, #tpu.memory_space<vmem>>, %arg3: memref<1x128xi32, #tpu.memory_space<vmem>>, %arg4: memref<128x1xi32, #tpu.memory_space<vmem>>, %arg5: memref<128xi32, #tpu.memory_space<smem>>, %arg6: memref<1x8x128xf32, #tpu.memory_space<vmem>>) attributes {dimension_semantics = [#tpu.dimension_semantics<parallel>], iteration_bounds = array<i64: 4>, scalar_prefetch = 0 : i64, scratch_operands = 0 : i64, tpu.core_type = #tpu.core_type<tc>, window_params = [{transform_indices = @transform_0, window_bounds = array<i64: 8, 32>}, {pipeline_mode = #tpu.pipeline_mode<synchronous>, transform_indices = @transform_1, window_bounds = array<i64: 128, 32>}, {pipeline_mode = #tpu.pipeline_mode<synchronous>, transform_indices = @transform_2, window_bounds = array<i64: 1, 128>}, {pipeline_mode = #tpu.pipeline_mode<synchronous>, transform_indices = @transform_3, window_bounds = array<i64: 128, 1>}, {transform_indices = @transform_4, window_bounds = array<i64: 128>}, {transform_indices = @transform_5, window_bounds = array<i64: 1, 8, 128>}]} {
    %c0 = arith.constant 0 : index
    %c0_0 = arith.constant 0 : index
    %0 = vector.load %arg2[%c0, %c0_0] : memref<128x32xf32, #tpu.memory_space<vmem>>, vector<128x32xf32>
    %c0_1 = arith.constant 0 : index
    %c0_2 = arith.constant 0 : index
    %1 = vector.load %arg1[%c0_1, %c0_2] : memref<8x32xf32, #tpu.memory_space<vmem>>, vector<8x32xf32>
    %2 = arith.mulf %0, %0 : vector<128x32xf32>
    %cst = arith.constant dense<0.000000e+00> : vector<128xf32>
    %3 = vector.multi_reduction <add>, %2, %cst [1] : vector<128x32xf32> to vector<128xf32>
    %4 = vector.shape_cast %3 : vector<128xf32> to vector<128x1xf32>
    %5 = arith.mulf %1, %1 : vector<8x32xf32>
    %cst_3 = arith.constant dense<0.000000e+00> : vector<8xf32>
    %6 = vector.multi_reduction <add>, %5, %cst_3 [1] : vector<8x32xf32> to vector<8xf32>
    %7 = vector.shape_cast %6 : vector<8xf32> to vector<8x1xf32>
    %cst_4 = arith.constant 9.99999996E-13 : f32
    %8 = vector.broadcast %cst_4 : f32 to vector<128x1xf32>
    %9 = arith.maximumf %4, %8 : vector<128x1xf32>
    %10 = math.rsqrt %9 : vector<128x1xf32>
    %cst_5 = arith.constant 4.000000e+00 : f32
    %11 = vector.broadcast %cst_5 : f32 to vector<128x1xf32>
    %12 = arith.mulf %11, %10 : vector<128x1xf32>
    %13 = vector.broadcast %12 : vector<128x1xf32> to vector<128x32xf32>
    %14 = arith.mulf %0, %13 : vector<128x32xf32>
    %cst_6 = arith.constant 9.99999996E-13 : f32
    %15 = vector.broadcast %cst_6 : f32 to vector<8x1xf32>
    %16 = arith.maximumf %7, %15 : vector<8x1xf32>
    %17 = math.rsqrt %16 : vector<8x1xf32>
    %cst_7 = arith.constant 4.000000e+00 : f32
    %18 = vector.broadcast %cst_7 : f32 to vector<8x1xf32>
    %19 = arith.mulf %18, %17 : vector<8x1xf32>
    %20 = vector.broadcast %19 : vector<8x1xf32> to vector<8x32xf32>
    %21 = arith.mulf %1, %20 : vector<8x32xf32>
    %cst_8 = arith.constant dense<0.000000e+00> : vector<8x128xf32>
    %22 = tpu.matmul %21, %14, %cst_8 {dimension_numbers = #tpu.dot_dimension_numbers<[1], [1], [0], [0], [0, 0, 1, 0], [], []>} : vector<8x32xf32>, vector<128x32xf32>, vector<8x128xf32> -> vector<8x128xf32>
    %cst_9 = arith.constant dense<0.000000e+00> : vector<128x8xf32>
    %23 = tpu.matmul %14, %21, %cst_9 {dimension_numbers = #tpu.dot_dimension_numbers<[1], [1], [0], [0], [0, 0, 1, 0], [], []>} : vector<128x32xf32>, vector<8x32xf32>, vector<128x8xf32> -> vector<128x8xf32>
    %cst_10 = arith.constant 2.000000e+00 : f32
    %cst_11 = arith.constant 1.600000e+01 : f32
    %24 = arith.mulf %cst_10, %cst_11 : f32
    %cst_12 = arith.constant 2.000000e+00 : f32
    %25 = vector.broadcast %cst_12 : f32 to vector<8x128xf32>
    %26 = arith.mulf %25, %22 : vector<8x128xf32>
    %27 = vector.broadcast %24 : f32 to vector<8x128xf32>
    %28 = arith.subf %27, %26 : vector<8x128xf32>
    %cst_13 = arith.constant 2.000000e+00 : f32
    %cst_14 = arith.constant 1.600000e+01 : f32
    %29 = arith.mulf %cst_13, %cst_14 : f32
    %cst_15 = arith.constant 2.000000e+00 : f32
    %30 = vector.broadcast %cst_15 : f32 to vector<128x8xf32>
    %31 = arith.mulf %30, %23 : vector<128x8xf32>
    %32 = vector.broadcast %29 : f32 to vector<128x8xf32>
    %33 = arith.subf %32, %31 : vector<128x8xf32>
    %c0_16 = arith.constant 0 : index
    %c0_17 = arith.constant 0 : index
    %34 = vector.load %arg3[%c0_16, %c0_17] : memref<1x128xi32, #tpu.memory_space<vmem>>, vector<1x128xi32>
    %c0_18 = arith.constant 0 : index
    %c0_19 = arith.constant 0 : index
    %35 = vector.load %arg4[%c0_18, %c0_19] : memref<128x1xi32, #tpu.memory_space<vmem>>, vector<128x1xi32>
    %36 = tpu.iota {dimensions = array<i32: 0>} : vector<128x1xi32>
    %37 = tpu.iota {dimensions = array<i32: 1>} : vector<1x128xi32>
    %c32_i32 = arith.constant 32 : i32
    %38 = vector.broadcast %c32_i32 : i32 to vector<128x1xi32>
    %39 = arith.cmpi slt, %36, %38 : vector<128x1xi32>
    %c32_i32_20 = arith.constant 32 : i32
    %40 = vector.broadcast %c32_i32_20 : i32 to vector<1x128xi32>
    %41 = arith.cmpi slt, %37, %40 : vector<1x128xi32>
    %c8_i32 = arith.constant 8 : i32
    %42 = arith.muli %arg0, %c8_i32 : i32
    %43 = tpu.iota {dimensions = array<i32: 1>} : vector<1x8xi32>
    %c0_i32 = arith.constant 0 : i32
    %44 = vector.broadcast %c0_i32 : i32 to vector<1x8xi32>
    %45 = arith.cmpi eq, %43, %44 : vector<1x8xi32>
    %46 = arith.extui %45 : vector<1x8xi1> to vector<1x8xi32>
    %47 = arith.sitofp %46 : vector<1x8xi32> to vector<1x8xf32>
    %48 = tpu.iota {dimensions = array<i32: 1>} : vector<1x8xi32>
    %c1_i32 = arith.constant 1 : i32
    %49 = vector.broadcast %c1_i32 : i32 to vector<1x8xi32>
    %50 = arith.cmpi eq, %48, %49 : vector<1x8xi32>
    %51 = arith.extui %50 : vector<1x8xi1> to vector<1x8xi32>
    %52 = arith.sitofp %51 : vector<1x8xi32> to vector<1x8xf32>
    %53 = tpu.iota {dimensions = array<i32: 1>} : vector<1x8xi32>
    %c2_i32 = arith.constant 2 : i32
    %54 = vector.broadcast %c2_i32 : i32 to vector<1x8xi32>
    %55 = arith.cmpi eq, %53, %54 : vector<1x8xi32>
    %56 = arith.extui %55 : vector<1x8xi1> to vector<1x8xi32>
    %57 = arith.sitofp %56 : vector<1x8xi32> to vector<1x8xf32>
    %58 = tpu.iota {dimensions = array<i32: 1>} : vector<1x8xi32>
    %c3_i32 = arith.constant 3 : i32
    %59 = vector.broadcast %c3_i32 : i32 to vector<1x8xi32>
    %60 = arith.cmpi eq, %58, %59 : vector<1x8xi32>
    %61 = arith.extui %60 : vector<1x8xi1> to vector<1x8xi32>
    %62 = arith.sitofp %61 : vector<1x8xi32> to vector<1x8xf32>
    %63 = tpu.iota {dimensions = array<i32: 1>} : vector<1x8xi32>
    %c4_i32 = arith.constant 4 : i32
    %64 = vector.broadcast %c4_i32 : i32 to vector<1x8xi32>
    %65 = arith.cmpi eq, %63, %64 : vector<1x8xi32>
    %66 = arith.extui %65 : vector<1x8xi1> to vector<1x8xi32>
    %67 = arith.sitofp %66 : vector<1x8xi32> to vector<1x8xf32>
    %68 = tpu.iota {dimensions = array<i32: 1>} : vector<1x8xi32>
    %c5_i32 = arith.constant 5 : i32
    %69 = vector.broadcast %c5_i32 : i32 to vector<1x8xi32>
    %70 = arith.cmpi eq, %68, %69 : vector<1x8xi32>
    %71 = arith.extui %70 : vector<1x8xi1> to vector<1x8xi32>
    %72 = arith.sitofp %71 : vector<1x8xi32> to vector<1x8xf32>
    %73 = tpu.iota {dimensions = array<i32: 1>} : vector<1x8xi32>
    %c6_i32 = arith.constant 6 : i32
    %74 = vector.broadcast %c6_i32 : i32 to vector<1x8xi32>
    %75 = arith.cmpi eq, %73, %74 : vector<1x8xi32>
    %76 = arith.extui %75 : vector<1x8xi1> to vector<1x8xi32>
    %77 = arith.sitofp %76 : vector<1x8xi32> to vector<1x8xf32>
    %78 = tpu.iota {dimensions = array<i32: 1>} : vector<1x8xi32>
    %c7_i32 = arith.constant 7 : i32
    %79 = vector.broadcast %c7_i32 : i32 to vector<1x8xi32>
    %80 = arith.cmpi eq, %78, %79 : vector<1x8xi32>
    %81 = arith.extui %80 : vector<1x8xi1> to vector<1x8xi32>
    %82 = arith.sitofp %81 : vector<1x8xi32> to vector<1x8xf32>
    %cst_21 = arith.constant 0.000000e+00 : f32
    %83 = vector.broadcast %cst_21 : f32 to vector<1x8xf32>
    %cst_22 = arith.constant 0.000000e+00 : f32
    %84 = vector.broadcast %cst_22 : f32 to vector<1x8xf32>
    %cst_23 = arith.constant 0.000000e+00 : f32
    %85 = vector.broadcast %cst_23 : f32 to vector<1x8xf32>
    %c0_i32_24 = arith.constant 0 : i32
    %86 = arith.addi %42, %c0_i32_24 : i32
    %c32_i32_25 = arith.constant 32 : i32
    %87 = arith.cmpi slt, %86, %c32_i32_25 : i32
    %88 = arith.index_cast %86 : i32 to index
    %89 = memref.load %arg5[%88] : memref<128xi32, #tpu.memory_space<smem>>
    %90 = vector.extract_strided_slice %33 {offsets = [0, 0], sizes = [128, 1], strides = [1, 1]} : vector<128x8xf32> to vector<128x1xf32>
    %91 = vector.extract_strided_slice %28 {offsets = [0, 0], sizes = [1, 128], strides = [1, 1]} : vector<8x128xf32> to vector<1x128xf32>
    %92 = vector.broadcast %89 : i32 to vector<128x1xi32>
    %93 = arith.cmpi eq, %35, %92 : vector<128x1xi32>
    %94 = vector.broadcast %86 : i32 to vector<128x1xi32>
    %95 = arith.cmpi ne, %36, %94 : vector<128x1xi32>
    %96 = arith.andi %93, %95 : vector<128x1xi1>
    %97 = vector.broadcast %87 : i1 to vector<128x1xi1>
    %98 = arith.andi %39, %97 : vector<128x1xi1>
    %99 = arith.andi %96, %98 : vector<128x1xi1>
    %100 = vector.broadcast %89 : i32 to vector<1x128xi32>
    %101 = arith.cmpi ne, %34, %100 : vector<1x128xi32>
    %102 = vector.broadcast %87 : i1 to vector<1x128xi1>
    %103 = arith.andi %41, %102 : vector<1x128xi1>
    %104 = arith.andi %101, %103 : vector<1x128xi1>
    %105 = math.exp %90 : vector<128x1xf32>
    %cst_26 = arith.constant 0.000000e+00 : f32
    %106 = vector.broadcast %cst_26 : f32 to vector<128x1xf32>
    %107 = arith.select %99, %105, %106 : vector<128x1xi1>, vector<128x1xf32>
    %cst_27 = arith.constant 0.000000e+00 : f32
    %108 = vector.broadcast %cst_27 : f32 to vector<1x128xf32>
    %109 = arith.subf %108, %91 : vector<1x128xf32>
    %110 = math.exp %109 : vector<1x128xf32>
    %cst_28 = arith.constant 0.000000e+00 : f32
    %111 = vector.broadcast %cst_28 : f32 to vector<1x128xf32>
    %112 = arith.select %104, %110, %111 : vector<1x128xi1>, vector<1x128xf32>
    %113 = vector.broadcast %107 : vector<128x1xf32> to vector<128x128xf32>
    %114 = vector.broadcast %112 : vector<1x128xf32> to vector<128x128xf32>
    %115 = arith.mulf %113, %114 : vector<128x128xf32>
    %cst_29 = arith.constant 0.999705672 : f32
    %116 = vector.broadcast %cst_29 : f32 to vector<128x128xf32>
    %117 = arith.cmpf ogt, %115, %116 : vector<128x128xf32>
    %118 = arith.extui %117 : vector<128x128xi1> to vector<128x128xi32>
    %119 = arith.sitofp %118 : vector<128x128xi32> to vector<128x128xf32>
    %120 = vector.shape_cast %119 : vector<128x128xf32> to vector<1x128x128xf32>
    %cst_30 = arith.constant dense<0.000000e+00> : vector<1xf32>
    %121 = vector.multi_reduction <add>, %120, %cst_30 [1, 2] : vector<1x128x128xf32> to vector<1xf32>
    %122 = vector.shape_cast %121 : vector<1xf32> to vector<1x1x1xf32>
    %123 = vector.extract %122[0, 0, 0] : f32 from vector<1x1x1xf32>
    %cst_31 = arith.constant 1.000000e+00 : f32
    %124 = vector.broadcast %cst_31 : f32 to vector<128x128xf32>
    %125 = arith.addf %115, %124 : vector<128x128xf32>
    %126 = math.log %125 : vector<128x128xf32>
    %cst_32 = arith.constant 0.000000e+00 : f32
    %127 = vector.broadcast %cst_32 : f32 to vector<128x128xf32>
    %128 = arith.select %117, %126, %127 : vector<128x128xi1>, vector<128x128xf32>
    %129 = vector.shape_cast %128 : vector<128x128xf32> to vector<1x128x128xf32>
    %cst_33 = arith.constant dense<0.000000e+00> : vector<1xf32>
    %130 = vector.multi_reduction <add>, %129, %cst_33 [1, 2] : vector<1x128x128xf32> to vector<1xf32>
    %131 = vector.shape_cast %130 : vector<1xf32> to vector<1x1x1xf32>
    %132 = vector.extract %131[0, 0, 0] : f32 from vector<1x1x1xf32>
    %133 = vector.broadcast %132 : f32 to vector<1x8xf32>
    %134 = arith.mulf %133, %47 : vector<1x8xf32>
    %135 = arith.addf %83, %134 : vector<1x8xf32>
    %136 = vector.broadcast %123 : f32 to vector<1x8xf32>
    %137 = arith.mulf %136, %47 : vector<1x8xf32>
    %138 = arith.addf %84, %137 : vector<1x8xf32>
    %cst_34 = arith.constant 1.000000e+00 : f32
    %cst_35 = arith.constant 0.000000e+00 : f32
    %139 = arith.select %87, %cst_34, %cst_35 : f32
    %140 = vector.broadcast %139 : f32 to vector<1x8xf32>
    %141 = arith.mulf %140, %47 : vector<1x8xf32>
    %142 = arith.addf %85, %141 : vector<1x8xf32>
    %cst_36 = arith.constant 0.000000e+00 : f32
    %143 = vector.broadcast %cst_36 : f32 to vector<128x1xf32>
    %144 = arith.select %99, %90, %143 : vector<128x1xi1>, vector<128x1xf32>
    %145 = vector.shape_cast %144 : vector<128x1xf32> to vector<1x128x1xf32>
    %cst_37 = arith.constant dense<0.000000e+00> : vector<1xf32>
    %146 = vector.multi_reduction <add>, %145, %cst_37 [1, 2] : vector<1x128x1xf32> to vector<1xf32>
    %147 = vector.shape_cast %146 : vector<1xf32> to vector<1x1x1xf32>
    %148 = vector.extract %147[0, 0, 0] : f32 from vector<1x1x1xf32>
    %cst_38 = arith.constant 0.000000e+00 : f32
    %149 = arith.addf %cst_38, %148 : f32
    %150 = arith.extui %99 : vector<128x1xi1> to vector<128x1xi32>
    %151 = arith.sitofp %150 : vector<128x1xi32> to vector<128x1xf32>
    %152 = vector.shape_cast %151 : vector<128x1xf32> to vector<1x128x1xf32>
    %cst_39 = arith.constant dense<0.000000e+00> : vector<1xf32>
    %153 = vector.multi_reduction <add>, %152, %cst_39 [1, 2] : vector<1x128x1xf32> to vector<1xf32>
    %154 = vector.shape_cast %153 : vector<1xf32> to vector<1x1x1xf32>
    %155 = vector.extract %154[0, 0, 0] : f32 from vector<1x1x1xf32>
    %cst_40 = arith.constant 0.000000e+00 : f32
    %156 = arith.addf %cst_40, %155 : f32
    %cst_41 = arith.constant 0.000000e+00 : f32
    %157 = vector.broadcast %cst_41 : f32 to vector<1x128xf32>
    %158 = arith.select %104, %91, %157 : vector<1x128xi1>, vector<1x128xf32>
    %159 = vector.shape_cast %158 : vector<1x128xf32> to vector<1x1x128xf32>
    %cst_42 = arith.constant dense<0.000000e+00> : vector<1xf32>
    %160 = vector.multi_reduction <add>, %159, %cst_42 [1, 2] : vector<1x1x128xf32> to vector<1xf32>
    %161 = vector.shape_cast %160 : vector<1xf32> to vector<1x1x1xf32>
    %162 = vector.extract %161[0, 0, 0] : f32 from vector<1x1x1xf32>
    %cst_43 = arith.constant 0.000000e+00 : f32
    %163 = arith.addf %cst_43, %162 : f32
    %164 = arith.extui %104 : vector<1x128xi1> to vector<1x128xi32>
    %165 = arith.sitofp %164 : vector<1x128xi32> to vector<1x128xf32>
    %166 = vector.shape_cast %165 : vector<1x128xf32> to vector<1x1x128xf32>
    %cst_44 = arith.constant dense<0.000000e+00> : vector<1xf32>
    %167 = vector.multi_reduction <add>, %166, %cst_44 [1, 2] : vector<1x1x128xf32> to vector<1xf32>
    %168 = vector.shape_cast %167 : vector<1xf32> to vector<1x1x1xf32>
    %169 = vector.extract %168[0, 0, 0] : f32 from vector<1x1x1xf32>
    %cst_45 = arith.constant 0.000000e+00 : f32
    %170 = arith.addf %cst_45, %169 : f32
    %c1_i32_46 = arith.constant 1 : i32
    %171 = arith.addi %42, %c1_i32_46 : i32
    %c32_i32_47 = arith.constant 32 : i32
    %172 = arith.cmpi slt, %171, %c32_i32_47 : i32
    %173 = arith.index_cast %171 : i32 to index
    %174 = memref.load %arg5[%173] : memref<128xi32, #tpu.memory_space<smem>>
    %175 = vector.extract_strided_slice %33 {offsets = [0, 1], sizes = [128, 1], strides = [1, 1]} : vector<128x8xf32> to vector<128x1xf32>
    %176 = vector.extract_strided_slice %28 {offsets = [1, 0], sizes = [1, 128], strides = [1, 1]} : vector<8x128xf32> to vector<1x128xf32>
    %177 = vector.broadcast %174 : i32 to vector<128x1xi32>
    %178 = arith.cmpi eq, %35, %177 : vector<128x1xi32>
    %179 = vector.broadcast %171 : i32 to vector<128x1xi32>
    %180 = arith.cmpi ne, %36, %179 : vector<128x1xi32>
    %181 = arith.andi %178, %180 : vector<128x1xi1>
    %182 = vector.broadcast %172 : i1 to vector<128x1xi1>
    %183 = arith.andi %39, %182 : vector<128x1xi1>
    %184 = arith.andi %181, %183 : vector<128x1xi1>
    %185 = vector.broadcast %174 : i32 to vector<1x128xi32>
    %186 = arith.cmpi ne, %34, %185 : vector<1x128xi32>
    %187 = vector.broadcast %172 : i1 to vector<1x128xi1>
    %188 = arith.andi %41, %187 : vector<1x128xi1>
    %189 = arith.andi %186, %188 : vector<1x128xi1>
    %190 = math.exp %175 : vector<128x1xf32>
    %cst_48 = arith.constant 0.000000e+00 : f32
    %191 = vector.broadcast %cst_48 : f32 to vector<128x1xf32>
    %192 = arith.select %184, %190, %191 : vector<128x1xi1>, vector<128x1xf32>
    %cst_49 = arith.constant 0.000000e+00 : f32
    %193 = vector.broadcast %cst_49 : f32 to vector<1x128xf32>
    %194 = arith.subf %193, %176 : vector<1x128xf32>
    %195 = math.exp %194 : vector<1x128xf32>
    %cst_50 = arith.constant 0.000000e+00 : f32
    %196 = vector.broadcast %cst_50 : f32 to vector<1x128xf32>
    %197 = arith.select %189, %195, %196 : vector<1x128xi1>, vector<1x128xf32>
    %198 = vector.broadcast %192 : vector<128x1xf32> to vector<128x128xf32>
    %199 = vector.broadcast %197 : vector<1x128xf32> to vector<128x128xf32>
    %200 = arith.mulf %198, %199 : vector<128x128xf32>
    %cst_51 = arith.constant 0.999705672 : f32
    %201 = vector.broadcast %cst_51 : f32 to vector<128x128xf32>
    %202 = arith.cmpf ogt, %200, %201 : vector<128x128xf32>
    %203 = arith.extui %202 : vector<128x128xi1> to vector<128x128xi32>
    %204 = arith.sitofp %203 : vector<128x128xi32> to vector<128x128xf32>
    %205 = vector.shape_cast %204 : vector<128x128xf32> to vector<1x128x128xf32>
    %cst_52 = arith.constant dense<0.000000e+00> : vector<1xf32>
    %206 = vector.multi_reduction <add>, %205, %cst_52 [1, 2] : vector<1x128x128xf32> to vector<1xf32>
    %207 = vector.shape_cast %206 : vector<1xf32> to vector<1x1x1xf32>
    %208 = vector.extract %207[0, 0, 0] : f32 from vector<1x1x1xf32>
    %cst_53 = arith.constant 1.000000e+00 : f32
    %209 = vector.broadcast %cst_53 : f32 to vector<128x128xf32>
    %210 = arith.addf %200, %209 : vector<128x128xf32>
    %211 = math.log %210 : vector<128x128xf32>
    %cst_54 = arith.constant 0.000000e+00 : f32
    %212 = vector.broadcast %cst_54 : f32 to vector<128x128xf32>
    %213 = arith.select %202, %211, %212 : vector<128x128xi1>, vector<128x128xf32>
    %214 = vector.shape_cast %213 : vector<128x128xf32> to vector<1x128x128xf32>
    %cst_55 = arith.constant dense<0.000000e+00> : vector<1xf32>
    %215 = vector.multi_reduction <add>, %214, %cst_55 [1, 2] : vector<1x128x128xf32> to vector<1xf32>
    %216 = vector.shape_cast %215 : vector<1xf32> to vector<1x1x1xf32>
    %217 = vector.extract %216[0, 0, 0] : f32 from vector<1x1x1xf32>
    %218 = vector.broadcast %217 : f32 to vector<1x8xf32>
    %219 = arith.mulf %218, %52 : vector<1x8xf32>
    %220 = arith.addf %135, %219 : vector<1x8xf32>
    %221 = vector.broadcast %208 : f32 to vector<1x8xf32>
    %222 = arith.mulf %221, %52 : vector<1x8xf32>
    %223 = arith.addf %138, %222 : vector<1x8xf32>
    %cst_56 = arith.constant 1.000000e+00 : f32
    %cst_57 = arith.constant 0.000000e+00 : f32
    %224 = arith.select %172, %cst_56, %cst_57 : f32
    %225 = vector.broadcast %224 : f32 to vector<1x8xf32>
    %226 = arith.mulf %225, %52 : vector<1x8xf32>
    %227 = arith.addf %142, %226 : vector<1x8xf32>
    %cst_58 = arith.constant 0.000000e+00 : f32
    %228 = vector.broadcast %cst_58 : f32 to vector<128x1xf32>
    %229 = arith.select %184, %175, %228 : vector<128x1xi1>, vector<128x1xf32>
    %230 = vector.shape_cast %229 : vector<128x1xf32> to vector<1x128x1xf32>
    %cst_59 = arith.constant dense<0.000000e+00> : vector<1xf32>
    %231 = vector.multi_reduction <add>, %230, %cst_59 [1, 2] : vector<1x128x1xf32> to vector<1xf32>
    %232 = vector.shape_cast %231 : vector<1xf32> to vector<1x1x1xf32>
    %233 = vector.extract %232[0, 0, 0] : f32 from vector<1x1x1xf32>
    %234 = arith.addf %149, %233 : f32
    %235 = arith.extui %184 : vector<128x1xi1> to vector<128x1xi32>
    %236 = arith.sitofp %235 : vector<128x1xi32> to vector<128x1xf32>
    %237 = vector.shape_cast %236 : vector<128x1xf32> to vector<1x128x1xf32>
    %cst_60 = arith.constant dense<0.000000e+00> : vector<1xf32>
    %238 = vector.multi_reduction <add>, %237, %cst_60 [1, 2] : vector<1x128x1xf32> to vector<1xf32>
    %239 = vector.shape_cast %238 : vector<1xf32> to vector<1x1x1xf32>
    %240 = vector.extract %239[0, 0, 0] : f32 from vector<1x1x1xf32>
    %241 = arith.addf %156, %240 : f32
    %cst_61 = arith.constant 0.000000e+00 : f32
    %242 = vector.broadcast %cst_61 : f32 to vector<1x128xf32>
    %243 = arith.select %189, %176, %242 : vector<1x128xi1>, vector<1x128xf32>
    %244 = vector.shape_cast %243 : vector<1x128xf32> to vector<1x1x128xf32>
    %cst_62 = arith.constant dense<0.000000e+00> : vector<1xf32>
    %245 = vector.multi_reduction <add>, %244, %cst_62 [1, 2] : vector<1x1x128xf32> to vector<1xf32>
    %246 = vector.shape_cast %245 : vector<1xf32> to vector<1x1x1xf32>
    %247 = vector.extract %246[0, 0, 0] : f32 from vector<1x1x1xf32>
    %248 = arith.addf %163, %247 : f32
    %249 = arith.extui %189 : vector<1x128xi1> to vector<1x128xi32>
    %250 = arith.sitofp %249 : vector<1x128xi32> to vector<1x128xf32>
    %251 = vector.shape_cast %250 : vector<1x128xf32> to vector<1x1x128xf32>
    %cst_63 = arith.constant dense<0.000000e+00> : vector<1xf32>
    %252 = vector.multi_reduction <add>, %251, %cst_63 [1, 2] : vector<1x1x128xf32> to vector<1xf32>
    %253 = vector.shape_cast %252 : vector<1xf32> to vector<1x1x1xf32>
    %254 = vector.extract %253[0, 0, 0] : f32 from vector<1x1x1xf32>
    %255 = arith.addf %170, %254 : f32
    %c2_i32_64 = arith.constant 2 : i32
    %256 = arith.addi %42, %c2_i32_64 : i32
    %c32_i32_65 = arith.constant 32 : i32
    %257 = arith.cmpi slt, %256, %c32_i32_65 : i32
    %258 = arith.index_cast %256 : i32 to index
    %259 = memref.load %arg5[%258] : memref<128xi32, #tpu.memory_space<smem>>
    %260 = vector.extract_strided_slice %33 {offsets = [0, 2], sizes = [128, 1], strides = [1, 1]} : vector<128x8xf32> to vector<128x1xf32>
    %261 = vector.extract_strided_slice %28 {offsets = [2, 0], sizes = [1, 128], strides = [1, 1]} : vector<8x128xf32> to vector<1x128xf32>
    %262 = vector.broadcast %259 : i32 to vector<128x1xi32>
    %263 = arith.cmpi eq, %35, %262 : vector<128x1xi32>
    %264 = vector.broadcast %256 : i32 to vector<128x1xi32>
    %265 = arith.cmpi ne, %36, %264 : vector<128x1xi32>
    %266 = arith.andi %263, %265 : vector<128x1xi1>
    %267 = vector.broadcast %257 : i1 to vector<128x1xi1>
    %268 = arith.andi %39, %267 : vector<128x1xi1>
    %269 = arith.andi %266, %268 : vector<128x1xi1>
    %270 = vector.broadcast %259 : i32 to vector<1x128xi32>
    %271 = arith.cmpi ne, %34, %270 : vector<1x128xi32>
    %272 = vector.broadcast %257 : i1 to vector<1x128xi1>
    %273 = arith.andi %41, %272 : vector<1x128xi1>
    %274 = arith.andi %271, %273 : vector<1x128xi1>
    %275 = math.exp %260 : vector<128x1xf32>
    %cst_66 = arith.constant 0.000000e+00 : f32
    %276 = vector.broadcast %cst_66 : f32 to vector<128x1xf32>
    %277 = arith.select %269, %275, %276 : vector<128x1xi1>, vector<128x1xf32>
    %cst_67 = arith.constant 0.000000e+00 : f32
    %278 = vector.broadcast %cst_67 : f32 to vector<1x128xf32>
    %279 = arith.subf %278, %261 : vector<1x128xf32>
    %280 = math.exp %279 : vector<1x128xf32>
    %cst_68 = arith.constant 0.000000e+00 : f32
    %281 = vector.broadcast %cst_68 : f32 to vector<1x128xf32>
    %282 = arith.select %274, %280, %281 : vector<1x128xi1>, vector<1x128xf32>
    %283 = vector.broadcast %277 : vector<128x1xf32> to vector<128x128xf32>
    %284 = vector.broadcast %282 : vector<1x128xf32> to vector<128x128xf32>
    %285 = arith.mulf %283, %284 : vector<128x128xf32>
    %cst_69 = arith.constant 0.999705672 : f32
    %286 = vector.broadcast %cst_69 : f32 to vector<128x128xf32>
    %287 = arith.cmpf ogt, %285, %286 : vector<128x128xf32>
    %288 = arith.extui %287 : vector<128x128xi1> to vector<128x128xi32>
    %289 = arith.sitofp %288 : vector<128x128xi32> to vector<128x128xf32>
    %290 = vector.shape_cast %289 : vector<128x128xf32> to vector<1x128x128xf32>
    %cst_70 = arith.constant dense<0.000000e+00> : vector<1xf32>
    %291 = vector.multi_reduction <add>, %290, %cst_70 [1, 2] : vector<1x128x128xf32> to vector<1xf32>
    %292 = vector.shape_cast %291 : vector<1xf32> to vector<1x1x1xf32>
    %293 = vector.extract %292[0, 0, 0] : f32 from vector<1x1x1xf32>
    %cst_71 = arith.constant 1.000000e+00 : f32
    %294 = vector.broadcast %cst_71 : f32 to vector<128x128xf32>
    %295 = arith.addf %285, %294 : vector<128x128xf32>
    %296 = math.log %295 : vector<128x128xf32>
    %cst_72 = arith.constant 0.000000e+00 : f32
    %297 = vector.broadcast %cst_72 : f32 to vector<128x128xf32>
    %298 = arith.select %287, %296, %297 : vector<128x128xi1>, vector<128x128xf32>
    %299 = vector.shape_cast %298 : vector<128x128xf32> to vector<1x128x128xf32>
    %cst_73 = arith.constant dense<0.000000e+00> : vector<1xf32>
    %300 = vector.multi_reduction <add>, %299, %cst_73 [1, 2] : vector<1x128x128xf32> to vector<1xf32>
    %301 = vector.shape_cast %300 : vector<1xf32> to vector<1x1x1xf32>
    %302 = vector.extract %301[0, 0, 0] : f32 from vector<1x1x1xf32>
    %303 = vector.broadcast %302 : f32 to vector<1x8xf32>
    %304 = arith.mulf %303, %57 : vector<1x8xf32>
    %305 = arith.addf %220, %304 : vector<1x8xf32>
    %306 = vector.broadcast %293 : f32 to vector<1x8xf32>
    %307 = arith.mulf %306, %57 : vector<1x8xf32>
    %308 = arith.addf %223, %307 : vector<1x8xf32>
    %cst_74 = arith.constant 1.000000e+00 : f32
    %cst_75 = arith.constant 0.000000e+00 : f32
    %309 = arith.select %257, %cst_74, %cst_75 : f32
    %310 = vector.broadcast %309 : f32 to vector<1x8xf32>
    %311 = arith.mulf %310, %57 : vector<1x8xf32>
    %312 = arith.addf %227, %311 : vector<1x8xf32>
    %cst_76 = arith.constant 0.000000e+00 : f32
    %313 = vector.broadcast %cst_76 : f32 to vector<128x1xf32>
    %314 = arith.select %269, %260, %313 : vector<128x1xi1>, vector<128x1xf32>
    %315 = vector.shape_cast %314 : vector<128x1xf32> to vector<1x128x1xf32>
    %cst_77 = arith.constant dense<0.000000e+00> : vector<1xf32>
    %316 = vector.multi_reduction <add>, %315, %cst_77 [1, 2] : vector<1x128x1xf32> to vector<1xf32>
    %317 = vector.shape_cast %316 : vector<1xf32> to vector<1x1x1xf32>
    %318 = vector.extract %317[0, 0, 0] : f32 from vector<1x1x1xf32>
    %319 = arith.addf %234, %318 : f32
    %320 = arith.extui %269 : vector<128x1xi1> to vector<128x1xi32>
    %321 = arith.sitofp %320 : vector<128x1xi32> to vector<128x1xf32>
    %322 = vector.shape_cast %321 : vector<128x1xf32> to vector<1x128x1xf32>
    %cst_78 = arith.constant dense<0.000000e+00> : vector<1xf32>
    %323 = vector.multi_reduction <add>, %322, %cst_78 [1, 2] : vector<1x128x1xf32> to vector<1xf32>
    %324 = vector.shape_cast %323 : vector<1xf32> to vector<1x1x1xf32>
    %325 = vector.extract %324[0, 0, 0] : f32 from vector<1x1x1xf32>
    %326 = arith.addf %241, %325 : f32
    %cst_79 = arith.constant 0.000000e+00 : f32
    %327 = vector.broadcast %cst_79 : f32 to vector<1x128xf32>
    %328 = arith.select %274, %261, %327 : vector<1x128xi1>, vector<1x128xf32>
    %329 = vector.shape_cast %328 : vector<1x128xf32> to vector<1x1x128xf32>
    %cst_80 = arith.constant dense<0.000000e+00> : vector<1xf32>
    %330 = vector.multi_reduction <add>, %329, %cst_80 [1, 2] : vector<1x1x128xf32> to vector<1xf32>
    %331 = vector.shape_cast %330 : vector<1xf32> to vector<1x1x1xf32>
    %332 = vector.extract %331[0, 0, 0] : f32 from vector<1x1x1xf32>
    %333 = arith.addf %248, %332 : f32
    %334 = arith.extui %274 : vector<1x128xi1> to vector<1x128xi32>
    %335 = arith.sitofp %334 : vector<1x128xi32> to vector<1x128xf32>
    %336 = vector.shape_cast %335 : vector<1x128xf32> to vector<1x1x128xf32>
    %cst_81 = arith.constant dense<0.000000e+00> : vector<1xf32>
    %337 = vector.multi_reduction <add>, %336, %cst_81 [1, 2] : vector<1x1x128xf32> to vector<1xf32>
    %338 = vector.shape_cast %337 : vector<1xf32> to vector<1x1x1xf32>
    %339 = vector.extract %338[0, 0, 0] : f32 from vector<1x1x1xf32>
    %340 = arith.addf %255, %339 : f32
    %c3_i32_82 = arith.constant 3 : i32
    %341 = arith.addi %42, %c3_i32_82 : i32
    %c32_i32_83 = arith.constant 32 : i32
    %342 = arith.cmpi slt, %341, %c32_i32_83 : i32
    %343 = arith.index_cast %341 : i32 to index
    %344 = memref.load %arg5[%343] : memref<128xi32, #tpu.memory_space<smem>>
    %345 = vector.extract_strided_slice %33 {offsets = [0, 3], sizes = [128, 1], strides = [1, 1]} : vector<128x8xf32> to vector<128x1xf32>
    %346 = vector.extract_strided_slice %28 {offsets = [3, 0], sizes = [1, 128], strides = [1, 1]} : vector<8x128xf32> to vector<1x128xf32>
    %347 = vector.broadcast %344 : i32 to vector<128x1xi32>
    %348 = arith.cmpi eq, %35, %347 : vector<128x1xi32>
    %349 = vector.broadcast %341 : i32 to vector<128x1xi32>
    %350 = arith.cmpi ne, %36, %349 : vector<128x1xi32>
    %351 = arith.andi %348, %350 : vector<128x1xi1>
    %352 = vector.broadcast %342 : i1 to vector<128x1xi1>
    %353 = arith.andi %39, %352 : vector<128x1xi1>
    %354 = arith.andi %351, %353 : vector<128x1xi1>
    %355 = vector.broadcast %344 : i32 to vector<1x128xi32>
    %356 = arith.cmpi ne, %34, %355 : vector<1x128xi32>
    %357 = vector.broadcast %342 : i1 to vector<1x128xi1>
    %358 = arith.andi %41, %357 : vector<1x128xi1>
    %359 = arith.andi %356, %358 : vector<1x128xi1>
    %360 = math.exp %345 : vector<128x1xf32>
    %cst_84 = arith.constant 0.000000e+00 : f32
    %361 = vector.broadcast %cst_84 : f32 to vector<128x1xf32>
    %362 = arith.select %354, %360, %361 : vector<128x1xi1>, vector<128x1xf32>
    %cst_85 = arith.constant 0.000000e+00 : f32
    %363 = vector.broadcast %cst_85 : f32 to vector<1x128xf32>
    %364 = arith.subf %363, %346 : vector<1x128xf32>
    %365 = math.exp %364 : vector<1x128xf32>
    %cst_86 = arith.constant 0.000000e+00 : f32
    %366 = vector.broadcast %cst_86 : f32 to vector<1x128xf32>
    %367 = arith.select %359, %365, %366 : vector<1x128xi1>, vector<1x128xf32>
    %368 = vector.broadcast %362 : vector<128x1xf32> to vector<128x128xf32>
    %369 = vector.broadcast %367 : vector<1x128xf32> to vector<128x128xf32>
    %370 = arith.mulf %368, %369 : vector<128x128xf32>
    %cst_87 = arith.constant 0.999705672 : f32
    %371 = vector.broadcast %cst_87 : f32 to vector<128x128xf32>
    %372 = arith.cmpf ogt, %370, %371 : vector<128x128xf32>
    %373 = arith.extui %372 : vector<128x128xi1> to vector<128x128xi32>
    %374 = arith.sitofp %373 : vector<128x128xi32> to vector<128x128xf32>
    %375 = vector.shape_cast %374 : vector<128x128xf32> to vector<1x128x128xf32>
    %cst_88 = arith.constant dense<0.000000e+00> : vector<1xf32>
    %376 = vector.multi_reduction <add>, %375, %cst_88 [1, 2] : vector<1x128x128xf32> to vector<1xf32>
    %377 = vector.shape_cast %376 : vector<1xf32> to vector<1x1x1xf32>
    %378 = vector.extract %377[0, 0, 0] : f32 from vector<1x1x1xf32>
    %cst_89 = arith.constant 1.000000e+00 : f32
    %379 = vector.broadcast %cst_89 : f32 to vector<128x128xf32>
    %380 = arith.addf %370, %379 : vector<128x128xf32>
    %381 = math.log %380 : vector<128x128xf32>
    %cst_90 = arith.constant 0.000000e+00 : f32
    %382 = vector.broadcast %cst_90 : f32 to vector<128x128xf32>
    %383 = arith.select %372, %381, %382 : vector<128x128xi1>, vector<128x128xf32>
    %384 = vector.shape_cast %383 : vector<128x128xf32> to vector<1x128x128xf32>
    %cst_91 = arith.constant dense<0.000000e+00> : vector<1xf32>
    %385 = vector.multi_reduction <add>, %384, %cst_91 [1, 2] : vector<1x128x128xf32> to vector<1xf32>
    %386 = vector.shape_cast %385 : vector<1xf32> to vector<1x1x1xf32>
    %387 = vector.extract %386[0, 0, 0] : f32 from vector<1x1x1xf32>
    %388 = vector.broadcast %387 : f32 to vector<1x8xf32>
    %389 = arith.mulf %388, %62 : vector<1x8xf32>
    %390 = arith.addf %305, %389 : vector<1x8xf32>
    %391 = vector.broadcast %378 : f32 to vector<1x8xf32>
    %392 = arith.mulf %391, %62 : vector<1x8xf32>
    %393 = arith.addf %308, %392 : vector<1x8xf32>
    %cst_92 = arith.constant 1.000000e+00 : f32
    %cst_93 = arith.constant 0.000000e+00 : f32
    %394 = arith.select %342, %cst_92, %cst_93 : f32
    %395 = vector.broadcast %394 : f32 to vector<1x8xf32>
    %396 = arith.mulf %395, %62 : vector<1x8xf32>
    %397 = arith.addf %312, %396 : vector<1x8xf32>
    %cst_94 = arith.constant 0.000000e+00 : f32
    %398 = vector.broadcast %cst_94 : f32 to vector<128x1xf32>
    %399 = arith.select %354, %345, %398 : vector<128x1xi1>, vector<128x1xf32>
    %400 = vector.shape_cast %399 : vector<128x1xf32> to vector<1x128x1xf32>
    %cst_95 = arith.constant dense<0.000000e+00> : vector<1xf32>
    %401 = vector.multi_reduction <add>, %400, %cst_95 [1, 2] : vector<1x128x1xf32> to vector<1xf32>
    %402 = vector.shape_cast %401 : vector<1xf32> to vector<1x1x1xf32>
    %403 = vector.extract %402[0, 0, 0] : f32 from vector<1x1x1xf32>
    %404 = arith.addf %319, %403 : f32
    %405 = arith.extui %354 : vector<128x1xi1> to vector<128x1xi32>
    %406 = arith.sitofp %405 : vector<128x1xi32> to vector<128x1xf32>
    %407 = vector.shape_cast %406 : vector<128x1xf32> to vector<1x128x1xf32>
    %cst_96 = arith.constant dense<0.000000e+00> : vector<1xf32>
    %408 = vector.multi_reduction <add>, %407, %cst_96 [1, 2] : vector<1x128x1xf32> to vector<1xf32>
    %409 = vector.shape_cast %408 : vector<1xf32> to vector<1x1x1xf32>
    %410 = vector.extract %409[0, 0, 0] : f32 from vector<1x1x1xf32>
    %411 = arith.addf %326, %410 : f32
    %cst_97 = arith.constant 0.000000e+00 : f32
    %412 = vector.broadcast %cst_97 : f32 to vector<1x128xf32>
    %413 = arith.select %359, %346, %412 : vector<1x128xi1>, vector<1x128xf32>
    %414 = vector.shape_cast %413 : vector<1x128xf32> to vector<1x1x128xf32>
    %cst_98 = arith.constant dense<0.000000e+00> : vector<1xf32>
    %415 = vector.multi_reduction <add>, %414, %cst_98 [1, 2] : vector<1x1x128xf32> to vector<1xf32>
    %416 = vector.shape_cast %415 : vector<1xf32> to vector<1x1x1xf32>
    %417 = vector.extract %416[0, 0, 0] : f32 from vector<1x1x1xf32>
    %418 = arith.addf %333, %417 : f32
    %419 = arith.extui %359 : vector<1x128xi1> to vector<1x128xi32>
    %420 = arith.sitofp %419 : vector<1x128xi32> to vector<1x128xf32>
    %421 = vector.shape_cast %420 : vector<1x128xf32> to vector<1x1x128xf32>
    %cst_99 = arith.constant dense<0.000000e+00> : vector<1xf32>
    %422 = vector.multi_reduction <add>, %421, %cst_99 [1, 2] : vector<1x1x128xf32> to vector<1xf32>
    %423 = vector.shape_cast %422 : vector<1xf32> to vector<1x1x1xf32>
    %424 = vector.extract %423[0, 0, 0] : f32 from vector<1x1x1xf32>
    %425 = arith.addf %340, %424 : f32
    %c4_i32_100 = arith.constant 4 : i32
    %426 = arith.addi %42, %c4_i32_100 : i32
    %c32_i32_101 = arith.constant 32 : i32
    %427 = arith.cmpi slt, %426, %c32_i32_101 : i32
    %428 = arith.index_cast %426 : i32 to index
    %429 = memref.load %arg5[%428] : memref<128xi32, #tpu.memory_space<smem>>
    %430 = vector.extract_strided_slice %33 {offsets = [0, 4], sizes = [128, 1], strides = [1, 1]} : vector<128x8xf32> to vector<128x1xf32>
    %431 = vector.extract_strided_slice %28 {offsets = [4, 0], sizes = [1, 128], strides = [1, 1]} : vector<8x128xf32> to vector<1x128xf32>
    %432 = vector.broadcast %429 : i32 to vector<128x1xi32>
    %433 = arith.cmpi eq, %35, %432 : vector<128x1xi32>
    %434 = vector.broadcast %426 : i32 to vector<128x1xi32>
    %435 = arith.cmpi ne, %36, %434 : vector<128x1xi32>
    %436 = arith.andi %433, %435 : vector<128x1xi1>
    %437 = vector.broadcast %427 : i1 to vector<128x1xi1>
    %438 = arith.andi %39, %437 : vector<128x1xi1>
    %439 = arith.andi %436, %438 : vector<128x1xi1>
    %440 = vector.broadcast %429 : i32 to vector<1x128xi32>
    %441 = arith.cmpi ne, %34, %440 : vector<1x128xi32>
    %442 = vector.broadcast %427 : i1 to vector<1x128xi1>
    %443 = arith.andi %41, %442 : vector<1x128xi1>
    %444 = arith.andi %441, %443 : vector<1x128xi1>
    %445 = math.exp %430 : vector<128x1xf32>
    %cst_102 = arith.constant 0.000000e+00 : f32
    %446 = vector.broadcast %cst_102 : f32 to vector<128x1xf32>
    %447 = arith.select %439, %445, %446 : vector<128x1xi1>, vector<128x1xf32>
    %cst_103 = arith.constant 0.000000e+00 : f32
    %448 = vector.broadcast %cst_103 : f32 to vector<1x128xf32>
    %449 = arith.subf %448, %431 : vector<1x128xf32>
    %450 = math.exp %449 : vector<1x128xf32>
    %cst_104 = arith.constant 0.000000e+00 : f32
    %451 = vector.broadcast %cst_104 : f32 to vector<1x128xf32>
    %452 = arith.select %444, %450, %451 : vector<1x128xi1>, vector<1x128xf32>
    %453 = vector.broadcast %447 : vector<128x1xf32> to vector<128x128xf32>
    %454 = vector.broadcast %452 : vector<1x128xf32> to vector<128x128xf32>
    %455 = arith.mulf %453, %454 : vector<128x128xf32>
    %cst_105 = arith.constant 0.999705672 : f32
    %456 = vector.broadcast %cst_105 : f32 to vector<128x128xf32>
    %457 = arith.cmpf ogt, %455, %456 : vector<128x128xf32>
    %458 = arith.extui %457 : vector<128x128xi1> to vector<128x128xi32>
    %459 = arith.sitofp %458 : vector<128x128xi32> to vector<128x128xf32>
    %460 = vector.shape_cast %459 : vector<128x128xf32> to vector<1x128x128xf32>
    %cst_106 = arith.constant dense<0.000000e+00> : vector<1xf32>
    %461 = vector.multi_reduction <add>, %460, %cst_106 [1, 2] : vector<1x128x128xf32> to vector<1xf32>
    %462 = vector.shape_cast %461 : vector<1xf32> to vector<1x1x1xf32>
    %463 = vector.extract %462[0, 0, 0] : f32 from vector<1x1x1xf32>
    %cst_107 = arith.constant 1.000000e+00 : f32
    %464 = vector.broadcast %cst_107 : f32 to vector<128x128xf32>
    %465 = arith.addf %455, %464 : vector<128x128xf32>
    %466 = math.log %465 : vector<128x128xf32>
    %cst_108 = arith.constant 0.000000e+00 : f32
    %467 = vector.broadcast %cst_108 : f32 to vector<128x128xf32>
    %468 = arith.select %457, %466, %467 : vector<128x128xi1>, vector<128x128xf32>
    %469 = vector.shape_cast %468 : vector<128x128xf32> to vector<1x128x128xf32>
    %cst_109 = arith.constant dense<0.000000e+00> : vector<1xf32>
    %470 = vector.multi_reduction <add>, %469, %cst_109 [1, 2] : vector<1x128x128xf32> to vector<1xf32>
    %471 = vector.shape_cast %470 : vector<1xf32> to vector<1x1x1xf32>
    %472 = vector.extract %471[0, 0, 0] : f32 from vector<1x1x1xf32>
    %473 = vector.broadcast %472 : f32 to vector<1x8xf32>
    %474 = arith.mulf %473, %67 : vector<1x8xf32>
    %475 = arith.addf %390, %474 : vector<1x8xf32>
    %476 = vector.broadcast %463 : f32 to vector<1x8xf32>
    %477 = arith.mulf %476, %67 : vector<1x8xf32>
    %478 = arith.addf %393, %477 : vector<1x8xf32>
    %cst_110 = arith.constant 1.000000e+00 : f32
    %cst_111 = arith.constant 0.000000e+00 : f32
    %479 = arith.select %427, %cst_110, %cst_111 : f32
    %480 = vector.broadcast %479 : f32 to vector<1x8xf32>
    %481 = arith.mulf %480, %67 : vector<1x8xf32>
    %482 = arith.addf %397, %481 : vector<1x8xf32>
    %cst_112 = arith.constant 0.000000e+00 : f32
    %483 = vector.broadcast %cst_112 : f32 to vector<128x1xf32>
    %484 = arith.select %439, %430, %483 : vector<128x1xi1>, vector<128x1xf32>
    %485 = vector.shape_cast %484 : vector<128x1xf32> to vector<1x128x1xf32>
    %cst_113 = arith.constant dense<0.000000e+00> : vector<1xf32>
    %486 = vector.multi_reduction <add>, %485, %cst_113 [1, 2] : vector<1x128x1xf32> to vector<1xf32>
    %487 = vector.shape_cast %486 : vector<1xf32> to vector<1x1x1xf32>
    %488 = vector.extract %487[0, 0, 0] : f32 from vector<1x1x1xf32>
    %489 = arith.addf %404, %488 : f32
    %490 = arith.extui %439 : vector<128x1xi1> to vector<128x1xi32>
    %491 = arith.sitofp %490 : vector<128x1xi32> to vector<128x1xf32>
    %492 = vector.shape_cast %491 : vector<128x1xf32> to vector<1x128x1xf32>
    %cst_114 = arith.constant dense<0.000000e+00> : vector<1xf32>
    %493 = vector.multi_reduction <add>, %492, %cst_114 [1, 2] : vector<1x128x1xf32> to vector<1xf32>
    %494 = vector.shape_cast %493 : vector<1xf32> to vector<1x1x1xf32>
    %495 = vector.extract %494[0, 0, 0] : f32 from vector<1x1x1xf32>
    %496 = arith.addf %411, %495 : f32
    %cst_115 = arith.constant 0.000000e+00 : f32
    %497 = vector.broadcast %cst_115 : f32 to vector<1x128xf32>
    %498 = arith.select %444, %431, %497 : vector<1x128xi1>, vector<1x128xf32>
    %499 = vector.shape_cast %498 : vector<1x128xf32> to vector<1x1x128xf32>
    %cst_116 = arith.constant dense<0.000000e+00> : vector<1xf32>
    %500 = vector.multi_reduction <add>, %499, %cst_116 [1, 2] : vector<1x1x128xf32> to vector<1xf32>
    %501 = vector.shape_cast %500 : vector<1xf32> to vector<1x1x1xf32>
    %502 = vector.extract %501[0, 0, 0] : f32 from vector<1x1x1xf32>
    %503 = arith.addf %418, %502 : f32
    %504 = arith.extui %444 : vector<1x128xi1> to vector<1x128xi32>
    %505 = arith.sitofp %504 : vector<1x128xi32> to vector<1x128xf32>
    %506 = vector.shape_cast %505 : vector<1x128xf32> to vector<1x1x128xf32>
    %cst_117 = arith.constant dense<0.000000e+00> : vector<1xf32>
    %507 = vector.multi_reduction <add>, %506, %cst_117 [1, 2] : vector<1x1x128xf32> to vector<1xf32>
    %508 = vector.shape_cast %507 : vector<1xf32> to vector<1x1x1xf32>
    %509 = vector.extract %508[0, 0, 0] : f32 from vector<1x1x1xf32>
    %510 = arith.addf %425, %509 : f32
    %c5_i32_118 = arith.constant 5 : i32
    %511 = arith.addi %42, %c5_i32_118 : i32
    %c32_i32_119 = arith.constant 32 : i32
    %512 = arith.cmpi slt, %511, %c32_i32_119 : i32
    %513 = arith.index_cast %511 : i32 to index
    %514 = memref.load %arg5[%513] : memref<128xi32, #tpu.memory_space<smem>>
    %515 = vector.extract_strided_slice %33 {offsets = [0, 5], sizes = [128, 1], strides = [1, 1]} : vector<128x8xf32> to vector<128x1xf32>
    %516 = vector.extract_strided_slice %28 {offsets = [5, 0], sizes = [1, 128], strides = [1, 1]} : vector<8x128xf32> to vector<1x128xf32>
    %517 = vector.broadcast %514 : i32 to vector<128x1xi32>
    %518 = arith.cmpi eq, %35, %517 : vector<128x1xi32>
    %519 = vector.broadcast %511 : i32 to vector<128x1xi32>
    %520 = arith.cmpi ne, %36, %519 : vector<128x1xi32>
    %521 = arith.andi %518, %520 : vector<128x1xi1>
    %522 = vector.broadcast %512 : i1 to vector<128x1xi1>
    %523 = arith.andi %39, %522 : vector<128x1xi1>
    %524 = arith.andi %521, %523 : vector<128x1xi1>
    %525 = vector.broadcast %514 : i32 to vector<1x128xi32>
    %526 = arith.cmpi ne, %34, %525 : vector<1x128xi32>
    %527 = vector.broadcast %512 : i1 to vector<1x128xi1>
    %528 = arith.andi %41, %527 : vector<1x128xi1>
    %529 = arith.andi %526, %528 : vector<1x128xi1>
    %530 = math.exp %515 : vector<128x1xf32>
    %cst_120 = arith.constant 0.000000e+00 : f32
    %531 = vector.broadcast %cst_120 : f32 to vector<128x1xf32>
    %532 = arith.select %524, %530, %531 : vector<128x1xi1>, vector<128x1xf32>
    %cst_121 = arith.constant 0.000000e+00 : f32
    %533 = vector.broadcast %cst_121 : f32 to vector<1x128xf32>
    %534 = arith.subf %533, %516 : vector<1x128xf32>
    %535 = math.exp %534 : vector<1x128xf32>
    %cst_122 = arith.constant 0.000000e+00 : f32
    %536 = vector.broadcast %cst_122 : f32 to vector<1x128xf32>
    %537 = arith.select %529, %535, %536 : vector<1x128xi1>, vector<1x128xf32>
    %538 = vector.broadcast %532 : vector<128x1xf32> to vector<128x128xf32>
    %539 = vector.broadcast %537 : vector<1x128xf32> to vector<128x128xf32>
    %540 = arith.mulf %538, %539 : vector<128x128xf32>
    %cst_123 = arith.constant 0.999705672 : f32
    %541 = vector.broadcast %cst_123 : f32 to vector<128x128xf32>
    %542 = arith.cmpf ogt, %540, %541 : vector<128x128xf32>
    %543 = arith.extui %542 : vector<128x128xi1> to vector<128x128xi32>
    %544 = arith.sitofp %543 : vector<128x128xi32> to vector<128x128xf32>
    %545 = vector.shape_cast %544 : vector<128x128xf32> to vector<1x128x128xf32>
    %cst_124 = arith.constant dense<0.000000e+00> : vector<1xf32>
    %546 = vector.multi_reduction <add>, %545, %cst_124 [1, 2] : vector<1x128x128xf32> to vector<1xf32>
    %547 = vector.shape_cast %546 : vector<1xf32> to vector<1x1x1xf32>
    %548 = vector.extract %547[0, 0, 0] : f32 from vector<1x1x1xf32>
    %cst_125 = arith.constant 1.000000e+00 : f32
    %549 = vector.broadcast %cst_125 : f32 to vector<128x128xf32>
    %550 = arith.addf %540, %549 : vector<128x128xf32>
    %551 = math.log %550 : vector<128x128xf32>
    %cst_126 = arith.constant 0.000000e+00 : f32
    %552 = vector.broadcast %cst_126 : f32 to vector<128x128xf32>
    %553 = arith.select %542, %551, %552 : vector<128x128xi1>, vector<128x128xf32>
    %554 = vector.shape_cast %553 : vector<128x128xf32> to vector<1x128x128xf32>
    %cst_127 = arith.constant dense<0.000000e+00> : vector<1xf32>
    %555 = vector.multi_reduction <add>, %554, %cst_127 [1, 2] : vector<1x128x128xf32> to vector<1xf32>
    %556 = vector.shape_cast %555 : vector<1xf32> to vector<1x1x1xf32>
    %557 = vector.extract %556[0, 0, 0] : f32 from vector<1x1x1xf32>
    %558 = vector.broadcast %557 : f32 to vector<1x8xf32>
    %559 = arith.mulf %558, %72 : vector<1x8xf32>
    %560 = arith.addf %475, %559 : vector<1x8xf32>
    %561 = vector.broadcast %548 : f32 to vector<1x8xf32>
    %562 = arith.mulf %561, %72 : vector<1x8xf32>
    %563 = arith.addf %478, %562 : vector<1x8xf32>
    %cst_128 = arith.constant 1.000000e+00 : f32
    %cst_129 = arith.constant 0.000000e+00 : f32
    %564 = arith.select %512, %cst_128, %cst_129 : f32
    %565 = vector.broadcast %564 : f32 to vector<1x8xf32>
    %566 = arith.mulf %565, %72 : vector<1x8xf32>
    %567 = arith.addf %482, %566 : vector<1x8xf32>
    %cst_130 = arith.constant 0.000000e+00 : f32
    %568 = vector.broadcast %cst_130 : f32 to vector<128x1xf32>
    %569 = arith.select %524, %515, %568 : vector<128x1xi1>, vector<128x1xf32>
    %570 = vector.shape_cast %569 : vector<128x1xf32> to vector<1x128x1xf32>
    %cst_131 = arith.constant dense<0.000000e+00> : vector<1xf32>
    %571 = vector.multi_reduction <add>, %570, %cst_131 [1, 2] : vector<1x128x1xf32> to vector<1xf32>
    %572 = vector.shape_cast %571 : vector<1xf32> to vector<1x1x1xf32>
    %573 = vector.extract %572[0, 0, 0] : f32 from vector<1x1x1xf32>
    %574 = arith.addf %489, %573 : f32
    %575 = arith.extui %524 : vector<128x1xi1> to vector<128x1xi32>
    %576 = arith.sitofp %575 : vector<128x1xi32> to vector<128x1xf32>
    %577 = vector.shape_cast %576 : vector<128x1xf32> to vector<1x128x1xf32>
    %cst_132 = arith.constant dense<0.000000e+00> : vector<1xf32>
    %578 = vector.multi_reduction <add>, %577, %cst_132 [1, 2] : vector<1x128x1xf32> to vector<1xf32>
    %579 = vector.shape_cast %578 : vector<1xf32> to vector<1x1x1xf32>
    %580 = vector.extract %579[0, 0, 0] : f32 from vector<1x1x1xf32>
    %581 = arith.addf %496, %580 : f32
    %cst_133 = arith.constant 0.000000e+00 : f32
    %582 = vector.broadcast %cst_133 : f32 to vector<1x128xf32>
    %583 = arith.select %529, %516, %582 : vector<1x128xi1>, vector<1x128xf32>
    %584 = vector.shape_cast %583 : vector<1x128xf32> to vector<1x1x128xf32>
    %cst_134 = arith.constant dense<0.000000e+00> : vector<1xf32>
    %585 = vector.multi_reduction <add>, %584, %cst_134 [1, 2] : vector<1x1x128xf32> to vector<1xf32>
    %586 = vector.shape_cast %585 : vector<1xf32> to vector<1x1x1xf32>
    %587 = vector.extract %586[0, 0, 0] : f32 from vector<1x1x1xf32>
    %588 = arith.addf %503, %587 : f32
    %589 = arith.extui %529 : vector<1x128xi1> to vector<1x128xi32>
    %590 = arith.sitofp %589 : vector<1x128xi32> to vector<1x128xf32>
    %591 = vector.shape_cast %590 : vector<1x128xf32> to vector<1x1x128xf32>
    %cst_135 = arith.constant dense<0.000000e+00> : vector<1xf32>
    %592 = vector.multi_reduction <add>, %591, %cst_135 [1, 2] : vector<1x1x128xf32> to vector<1xf32>
    %593 = vector.shape_cast %592 : vector<1xf32> to vector<1x1x1xf32>
    %594 = vector.extract %593[0, 0, 0] : f32 from vector<1x1x1xf32>
    %595 = arith.addf %510, %594 : f32
    %c6_i32_136 = arith.constant 6 : i32
    %596 = arith.addi %42, %c6_i32_136 : i32
    %c32_i32_137 = arith.constant 32 : i32
    %597 = arith.cmpi slt, %596, %c32_i32_137 : i32
    %598 = arith.index_cast %596 : i32 to index
    %599 = memref.load %arg5[%598] : memref<128xi32, #tpu.memory_space<smem>>
    %600 = vector.extract_strided_slice %33 {offsets = [0, 6], sizes = [128, 1], strides = [1, 1]} : vector<128x8xf32> to vector<128x1xf32>
    %601 = vector.extract_strided_slice %28 {offsets = [6, 0], sizes = [1, 128], strides = [1, 1]} : vector<8x128xf32> to vector<1x128xf32>
    %602 = vector.broadcast %599 : i32 to vector<128x1xi32>
    %603 = arith.cmpi eq, %35, %602 : vector<128x1xi32>
    %604 = vector.broadcast %596 : i32 to vector<128x1xi32>
    %605 = arith.cmpi ne, %36, %604 : vector<128x1xi32>
    %606 = arith.andi %603, %605 : vector<128x1xi1>
    %607 = vector.broadcast %597 : i1 to vector<128x1xi1>
    %608 = arith.andi %39, %607 : vector<128x1xi1>
    %609 = arith.andi %606, %608 : vector<128x1xi1>
    %610 = vector.broadcast %599 : i32 to vector<1x128xi32>
    %611 = arith.cmpi ne, %34, %610 : vector<1x128xi32>
    %612 = vector.broadcast %597 : i1 to vector<1x128xi1>
    %613 = arith.andi %41, %612 : vector<1x128xi1>
    %614 = arith.andi %611, %613 : vector<1x128xi1>
    %615 = math.exp %600 : vector<128x1xf32>
    %cst_138 = arith.constant 0.000000e+00 : f32
    %616 = vector.broadcast %cst_138 : f32 to vector<128x1xf32>
    %617 = arith.select %609, %615, %616 : vector<128x1xi1>, vector<128x1xf32>
    %cst_139 = arith.constant 0.000000e+00 : f32
    %618 = vector.broadcast %cst_139 : f32 to vector<1x128xf32>
    %619 = arith.subf %618, %601 : vector<1x128xf32>
    %620 = math.exp %619 : vector<1x128xf32>
    %cst_140 = arith.constant 0.000000e+00 : f32
    %621 = vector.broadcast %cst_140 : f32 to vector<1x128xf32>
    %622 = arith.select %614, %620, %621 : vector<1x128xi1>, vector<1x128xf32>
    %623 = vector.broadcast %617 : vector<128x1xf32> to vector<128x128xf32>
    %624 = vector.broadcast %622 : vector<1x128xf32> to vector<128x128xf32>
    %625 = arith.mulf %623, %624 : vector<128x128xf32>
    %cst_141 = arith.constant 0.999705672 : f32
    %626 = vector.broadcast %cst_141 : f32 to vector<128x128xf32>
    %627 = arith.cmpf ogt, %625, %626 : vector<128x128xf32>
    %628 = arith.extui %627 : vector<128x128xi1> to vector<128x128xi32>
    %629 = arith.sitofp %628 : vector<128x128xi32> to vector<128x128xf32>
    %630 = vector.shape_cast %629 : vector<128x128xf32> to vector<1x128x128xf32>
    %cst_142 = arith.constant dense<0.000000e+00> : vector<1xf32>
    %631 = vector.multi_reduction <add>, %630, %cst_142 [1, 2] : vector<1x128x128xf32> to vector<1xf32>
    %632 = vector.shape_cast %631 : vector<1xf32> to vector<1x1x1xf32>
    %633 = vector.extract %632[0, 0, 0] : f32 from vector<1x1x1xf32>
    %cst_143 = arith.constant 1.000000e+00 : f32
    %634 = vector.broadcast %cst_143 : f32 to vector<128x128xf32>
    %635 = arith.addf %625, %634 : vector<128x128xf32>
    %636 = math.log %635 : vector<128x128xf32>
    %cst_144 = arith.constant 0.000000e+00 : f32
    %637 = vector.broadcast %cst_144 : f32 to vector<128x128xf32>
    %638 = arith.select %627, %636, %637 : vector<128x128xi1>, vector<128x128xf32>
    %639 = vector.shape_cast %638 : vector<128x128xf32> to vector<1x128x128xf32>
    %cst_145 = arith.constant dense<0.000000e+00> : vector<1xf32>
    %640 = vector.multi_reduction <add>, %639, %cst_145 [1, 2] : vector<1x128x128xf32> to vector<1xf32>
    %641 = vector.shape_cast %640 : vector<1xf32> to vector<1x1x1xf32>
    %642 = vector.extract %641[0, 0, 0] : f32 from vector<1x1x1xf32>
    %643 = vector.broadcast %642 : f32 to vector<1x8xf32>
    %644 = arith.mulf %643, %77 : vector<1x8xf32>
    %645 = arith.addf %560, %644 : vector<1x8xf32>
    %646 = vector.broadcast %633 : f32 to vector<1x8xf32>
    %647 = arith.mulf %646, %77 : vector<1x8xf32>
    %648 = arith.addf %563, %647 : vector<1x8xf32>
    %cst_146 = arith.constant 1.000000e+00 : f32
    %cst_147 = arith.constant 0.000000e+00 : f32
    %649 = arith.select %597, %cst_146, %cst_147 : f32
    %650 = vector.broadcast %649 : f32 to vector<1x8xf32>
    %651 = arith.mulf %650, %77 : vector<1x8xf32>
    %652 = arith.addf %567, %651 : vector<1x8xf32>
    %cst_148 = arith.constant 0.000000e+00 : f32
    %653 = vector.broadcast %cst_148 : f32 to vector<128x1xf32>
    %654 = arith.select %609, %600, %653 : vector<128x1xi1>, vector<128x1xf32>
    %655 = vector.shape_cast %654 : vector<128x1xf32> to vector<1x128x1xf32>
    %cst_149 = arith.constant dense<0.000000e+00> : vector<1xf32>
    %656 = vector.multi_reduction <add>, %655, %cst_149 [1, 2] : vector<1x128x1xf32> to vector<1xf32>
    %657 = vector.shape_cast %656 : vector<1xf32> to vector<1x1x1xf32>
    %658 = vector.extract %657[0, 0, 0] : f32 from vector<1x1x1xf32>
    %659 = arith.addf %574, %658 : f32
    %660 = arith.extui %609 : vector<128x1xi1> to vector<128x1xi32>
    %661 = arith.sitofp %660 : vector<128x1xi32> to vector<128x1xf32>
    %662 = vector.shape_cast %661 : vector<128x1xf32> to vector<1x128x1xf32>
    %cst_150 = arith.constant dense<0.000000e+00> : vector<1xf32>
    %663 = vector.multi_reduction <add>, %662, %cst_150 [1, 2] : vector<1x128x1xf32> to vector<1xf32>
    %664 = vector.shape_cast %663 : vector<1xf32> to vector<1x1x1xf32>
    %665 = vector.extract %664[0, 0, 0] : f32 from vector<1x1x1xf32>
    %666 = arith.addf %581, %665 : f32
    %cst_151 = arith.constant 0.000000e+00 : f32
    %667 = vector.broadcast %cst_151 : f32 to vector<1x128xf32>
    %668 = arith.select %614, %601, %667 : vector<1x128xi1>, vector<1x128xf32>
    %669 = vector.shape_cast %668 : vector<1x128xf32> to vector<1x1x128xf32>
    %cst_152 = arith.constant dense<0.000000e+00> : vector<1xf32>
    %670 = vector.multi_reduction <add>, %669, %cst_152 [1, 2] : vector<1x1x128xf32> to vector<1xf32>
    %671 = vector.shape_cast %670 : vector<1xf32> to vector<1x1x1xf32>
    %672 = vector.extract %671[0, 0, 0] : f32 from vector<1x1x1xf32>
    %673 = arith.addf %588, %672 : f32
    %674 = arith.extui %614 : vector<1x128xi1> to vector<1x128xi32>
    %675 = arith.sitofp %674 : vector<1x128xi32> to vector<1x128xf32>
    %676 = vector.shape_cast %675 : vector<1x128xf32> to vector<1x1x128xf32>
    %cst_153 = arith.constant dense<0.000000e+00> : vector<1xf32>
    %677 = vector.multi_reduction <add>, %676, %cst_153 [1, 2] : vector<1x1x128xf32> to vector<1xf32>
    %678 = vector.shape_cast %677 : vector<1xf32> to vector<1x1x1xf32>
    %679 = vector.extract %678[0, 0, 0] : f32 from vector<1x1x1xf32>
    %680 = arith.addf %595, %679 : f32
    %c7_i32_154 = arith.constant 7 : i32
    %681 = arith.addi %42, %c7_i32_154 : i32
    %c32_i32_155 = arith.constant 32 : i32
    %682 = arith.cmpi slt, %681, %c32_i32_155 : i32
    %683 = arith.index_cast %681 : i32 to index
    %684 = memref.load %arg5[%683] : memref<128xi32, #tpu.memory_space<smem>>
    %685 = vector.extract_strided_slice %33 {offsets = [0, 7], sizes = [128, 1], strides = [1, 1]} : vector<128x8xf32> to vector<128x1xf32>
    %686 = vector.extract_strided_slice %28 {offsets = [7, 0], sizes = [1, 128], strides = [1, 1]} : vector<8x128xf32> to vector<1x128xf32>
    %687 = vector.broadcast %684 : i32 to vector<128x1xi32>
    %688 = arith.cmpi eq, %35, %687 : vector<128x1xi32>
    %689 = vector.broadcast %681 : i32 to vector<128x1xi32>
    %690 = arith.cmpi ne, %36, %689 : vector<128x1xi32>
    %691 = arith.andi %688, %690 : vector<128x1xi1>
    %692 = vector.broadcast %682 : i1 to vector<128x1xi1>
    %693 = arith.andi %39, %692 : vector<128x1xi1>
    %694 = arith.andi %691, %693 : vector<128x1xi1>
    %695 = vector.broadcast %684 : i32 to vector<1x128xi32>
    %696 = arith.cmpi ne, %34, %695 : vector<1x128xi32>
    %697 = vector.broadcast %682 : i1 to vector<1x128xi1>
    %698 = arith.andi %41, %697 : vector<1x128xi1>
    %699 = arith.andi %696, %698 : vector<1x128xi1>
    %700 = math.exp %685 : vector<128x1xf32>
    %cst_156 = arith.constant 0.000000e+00 : f32
    %701 = vector.broadcast %cst_156 : f32 to vector<128x1xf32>
    %702 = arith.select %694, %700, %701 : vector<128x1xi1>, vector<128x1xf32>
    %cst_157 = arith.constant 0.000000e+00 : f32
    %703 = vector.broadcast %cst_157 : f32 to vector<1x128xf32>
    %704 = arith.subf %703, %686 : vector<1x128xf32>
    %705 = math.exp %704 : vector<1x128xf32>
    %cst_158 = arith.constant 0.000000e+00 : f32
    %706 = vector.broadcast %cst_158 : f32 to vector<1x128xf32>
    %707 = arith.select %699, %705, %706 : vector<1x128xi1>, vector<1x128xf32>
    %708 = vector.broadcast %702 : vector<128x1xf32> to vector<128x128xf32>
    %709 = vector.broadcast %707 : vector<1x128xf32> to vector<128x128xf32>
    %710 = arith.mulf %708, %709 : vector<128x128xf32>
    %cst_159 = arith.constant 0.999705672 : f32
    %711 = vector.broadcast %cst_159 : f32 to vector<128x128xf32>
    %712 = arith.cmpf ogt, %710, %711 : vector<128x128xf32>
    %713 = arith.extui %712 : vector<128x128xi1> to vector<128x128xi32>
    %714 = arith.sitofp %713 : vector<128x128xi32> to vector<128x128xf32>
    %715 = vector.shape_cast %714 : vector<128x128xf32> to vector<1x128x128xf32>
    %cst_160 = arith.constant dense<0.000000e+00> : vector<1xf32>
    %716 = vector.multi_reduction <add>, %715, %cst_160 [1, 2] : vector<1x128x128xf32> to vector<1xf32>
    %717 = vector.shape_cast %716 : vector<1xf32> to vector<1x1x1xf32>
    %718 = vector.extract %717[0, 0, 0] : f32 from vector<1x1x1xf32>
    %cst_161 = arith.constant 1.000000e+00 : f32
    %719 = vector.broadcast %cst_161 : f32 to vector<128x128xf32>
    %720 = arith.addf %710, %719 : vector<128x128xf32>
    %721 = math.log %720 : vector<128x128xf32>
    %cst_162 = arith.constant 0.000000e+00 : f32
    %722 = vector.broadcast %cst_162 : f32 to vector<128x128xf32>
    %723 = arith.select %712, %721, %722 : vector<128x128xi1>, vector<128x128xf32>
    %724 = vector.shape_cast %723 : vector<128x128xf32> to vector<1x128x128xf32>
    %cst_163 = arith.constant dense<0.000000e+00> : vector<1xf32>
    %725 = vector.multi_reduction <add>, %724, %cst_163 [1, 2] : vector<1x128x128xf32> to vector<1xf32>
    %726 = vector.shape_cast %725 : vector<1xf32> to vector<1x1x1xf32>
    %727 = vector.extract %726[0, 0, 0] : f32 from vector<1x1x1xf32>
    %728 = vector.broadcast %727 : f32 to vector<1x8xf32>
    %729 = arith.mulf %728, %82 : vector<1x8xf32>
    %730 = arith.addf %645, %729 : vector<1x8xf32>
    %731 = vector.broadcast %718 : f32 to vector<1x8xf32>
    %732 = arith.mulf %731, %82 : vector<1x8xf32>
    %733 = arith.addf %648, %732 : vector<1x8xf32>
    %cst_164 = arith.constant 1.000000e+00 : f32
    %cst_165 = arith.constant 0.000000e+00 : f32
    %734 = arith.select %682, %cst_164, %cst_165 : f32
    %735 = vector.broadcast %734 : f32 to vector<1x8xf32>
    %736 = arith.mulf %735, %82 : vector<1x8xf32>
    %737 = arith.addf %652, %736 : vector<1x8xf32>
    %cst_166 = arith.constant 0.000000e+00 : f32
    %738 = vector.broadcast %cst_166 : f32 to vector<128x1xf32>
    %739 = arith.select %694, %685, %738 : vector<128x1xi1>, vector<128x1xf32>
    %740 = vector.shape_cast %739 : vector<128x1xf32> to vector<1x128x1xf32>
    %cst_167 = arith.constant dense<0.000000e+00> : vector<1xf32>
    %741 = vector.multi_reduction <add>, %740, %cst_167 [1, 2] : vector<1x128x1xf32> to vector<1xf32>
    %742 = vector.shape_cast %741 : vector<1xf32> to vector<1x1x1xf32>
    %743 = vector.extract %742[0, 0, 0] : f32 from vector<1x1x1xf32>
    %744 = arith.addf %659, %743 : f32
    %745 = arith.extui %694 : vector<128x1xi1> to vector<128x1xi32>
    %746 = arith.sitofp %745 : vector<128x1xi32> to vector<128x1xf32>
    %747 = vector.shape_cast %746 : vector<128x1xf32> to vector<1x128x1xf32>
    %cst_168 = arith.constant dense<0.000000e+00> : vector<1xf32>
    %748 = vector.multi_reduction <add>, %747, %cst_168 [1, 2] : vector<1x128x1xf32> to vector<1xf32>
    %749 = vector.shape_cast %748 : vector<1xf32> to vector<1x1x1xf32>
    %750 = vector.extract %749[0, 0, 0] : f32 from vector<1x1x1xf32>
    %751 = arith.addf %666, %750 : f32
    %cst_169 = arith.constant 0.000000e+00 : f32
    %752 = vector.broadcast %cst_169 : f32 to vector<1x128xf32>
    %753 = arith.select %699, %686, %752 : vector<1x128xi1>, vector<1x128xf32>
    %754 = vector.shape_cast %753 : vector<1x128xf32> to vector<1x1x128xf32>
    %cst_170 = arith.constant dense<0.000000e+00> : vector<1xf32>
    %755 = vector.multi_reduction <add>, %754, %cst_170 [1, 2] : vector<1x1x128xf32> to vector<1xf32>
    %756 = vector.shape_cast %755 : vector<1xf32> to vector<1x1x1xf32>
    %757 = vector.extract %756[0, 0, 0] : f32 from vector<1x1x1xf32>
    %758 = arith.addf %673, %757 : f32
    %759 = arith.extui %699 : vector<1x128xi1> to vector<1x128xi32>
    %760 = arith.sitofp %759 : vector<1x128xi32> to vector<1x128xf32>
    %761 = vector.shape_cast %760 : vector<1x128xf32> to vector<1x1x128xf32>
    %cst_171 = arith.constant dense<0.000000e+00> : vector<1xf32>
    %762 = vector.multi_reduction <add>, %761, %cst_171 [1, 2] : vector<1x1x128xf32> to vector<1xf32>
    %763 = vector.shape_cast %762 : vector<1xf32> to vector<1x1x1xf32>
    %764 = vector.extract %763[0, 0, 0] : f32 from vector<1x1x1xf32>
    %765 = arith.addf %680, %764 : f32
    %cst_172 = arith.constant 5.000000e-01 : f32
    %766 = vector.broadcast %cst_172 : f32 to vector<1x8xf32>
    %767 = arith.cmpf ogt, %733, %766 : vector<1x8xf32>
    %cst_173 = arith.constant 1.000000e+00 : f32
    %768 = vector.broadcast %cst_173 : f32 to vector<1x8xf32>
    %769 = arith.maximumf %733, %768 : vector<1x8xf32>
    %770 = arith.divf %730, %769 : vector<1x8xf32>
    %cst_174 = arith.constant 0.000000e+00 : f32
    %771 = vector.broadcast %cst_174 : f32 to vector<1x8xf32>
    %772 = arith.select %767, %770, %771 : vector<1x8xi1>, vector<1x8xf32>
    %773 = vector.shape_cast %772 : vector<1x8xf32> to vector<1x1x8xf32>
    %cst_175 = arith.constant dense<0.000000e+00> : vector<1xf32>
    %774 = vector.multi_reduction <add>, %773, %cst_175 [1, 2] : vector<1x1x8xf32> to vector<1xf32>
    %775 = vector.shape_cast %774 : vector<1xf32> to vector<1x1x1xf32>
    %776 = vector.extract %775[0, 0, 0] : f32 from vector<1x1x1xf32>
    %777 = vector.shape_cast %733 : vector<1x8xf32> to vector<1x1x8xf32>
    %cst_176 = arith.constant dense<0.000000e+00> : vector<1xf32>
    %778 = vector.multi_reduction <add>, %777, %cst_176 [1, 2] : vector<1x1x8xf32> to vector<1xf32>
    %779 = vector.shape_cast %778 : vector<1xf32> to vector<1x1x1xf32>
    %780 = vector.extract %779[0, 0, 0] : f32 from vector<1x1x1xf32>
    %cst_177 = arith.constant 0.000000e+00 : f32
    %781 = vector.broadcast %cst_177 : f32 to vector<1x8xf32>
    %782 = arith.select %767, %781, %737 : vector<1x8xi1>, vector<1x8xf32>
    %783 = vector.shape_cast %782 : vector<1x8xf32> to vector<1x1x8xf32>
    %cst_178 = arith.constant dense<0.000000e+00> : vector<1xf32>
    %784 = vector.multi_reduction <add>, %783, %cst_178 [1, 2] : vector<1x1x8xf32> to vector<1xf32>
    %785 = vector.shape_cast %784 : vector<1xf32> to vector<1x1x1xf32>
    %786 = vector.extract %785[0, 0, 0] : f32 from vector<1x1x1xf32>
    %787 = tpu.iota {dimensions = array<i32: 1>} : vector<8x128xi32>
    %cst_179 = arith.constant 0.000000e+00 : f32
    %788 = vector.broadcast %cst_179 : f32 to vector<8x128xf32>
    %c0_i32_180 = arith.constant 0 : i32
    %789 = vector.broadcast %c0_i32_180 : i32 to vector<8x128xi32>
    %790 = arith.cmpi eq, %787, %789 : vector<8x128xi32>
    %cst_181 = arith.constant 0.000000e+00 : f32
    %791 = vector.broadcast %776 : f32 to vector<8x128xf32>
    %792 = vector.broadcast %cst_181 : f32 to vector<8x128xf32>
    %793 = arith.select %790, %791, %792 : vector<8x128xi1>, vector<8x128xf32>
    %794 = arith.addf %788, %793 : vector<8x128xf32>
    %c1_i32_182 = arith.constant 1 : i32
    %795 = vector.broadcast %c1_i32_182 : i32 to vector<8x128xi32>
    %796 = arith.cmpi eq, %787, %795 : vector<8x128xi32>
    %cst_183 = arith.constant 0.000000e+00 : f32
    %797 = vector.broadcast %780 : f32 to vector<8x128xf32>
    %798 = vector.broadcast %cst_183 : f32 to vector<8x128xf32>
    %799 = arith.select %796, %797, %798 : vector<8x128xi1>, vector<8x128xf32>
    %800 = arith.addf %794, %799 : vector<8x128xf32>
    %c2_i32_184 = arith.constant 2 : i32
    %801 = vector.broadcast %c2_i32_184 : i32 to vector<8x128xi32>
    %802 = arith.cmpi eq, %787, %801 : vector<8x128xi32>
    %cst_185 = arith.constant 0.000000e+00 : f32
    %803 = vector.broadcast %786 : f32 to vector<8x128xf32>
    %804 = vector.broadcast %cst_185 : f32 to vector<8x128xf32>
    %805 = arith.select %802, %803, %804 : vector<8x128xi1>, vector<8x128xf32>
    %806 = arith.addf %800, %805 : vector<8x128xf32>
    %c3_i32_186 = arith.constant 3 : i32
    %807 = vector.broadcast %c3_i32_186 : i32 to vector<8x128xi32>
    %808 = arith.cmpi eq, %787, %807 : vector<8x128xi32>
    %cst_187 = arith.constant 0.000000e+00 : f32
    %809 = vector.broadcast %744 : f32 to vector<8x128xf32>
    %810 = vector.broadcast %cst_187 : f32 to vector<8x128xf32>
    %811 = arith.select %808, %809, %810 : vector<8x128xi1>, vector<8x128xf32>
    %812 = arith.addf %806, %811 : vector<8x128xf32>
    %c4_i32_188 = arith.constant 4 : i32
    %813 = vector.broadcast %c4_i32_188 : i32 to vector<8x128xi32>
    %814 = arith.cmpi eq, %787, %813 : vector<8x128xi32>
    %cst_189 = arith.constant 0.000000e+00 : f32
    %815 = vector.broadcast %751 : f32 to vector<8x128xf32>
    %816 = vector.broadcast %cst_189 : f32 to vector<8x128xf32>
    %817 = arith.select %814, %815, %816 : vector<8x128xi1>, vector<8x128xf32>
    %818 = arith.addf %812, %817 : vector<8x128xf32>
    %c5_i32_190 = arith.constant 5 : i32
    %819 = vector.broadcast %c5_i32_190 : i32 to vector<8x128xi32>
    %820 = arith.cmpi eq, %787, %819 : vector<8x128xi32>
    %cst_191 = arith.constant 0.000000e+00 : f32
    %821 = vector.broadcast %758 : f32 to vector<8x128xf32>
    %822 = vector.broadcast %cst_191 : f32 to vector<8x128xf32>
    %823 = arith.select %820, %821, %822 : vector<8x128xi1>, vector<8x128xf32>
    %824 = arith.addf %818, %823 : vector<8x128xf32>
    %c6_i32_192 = arith.constant 6 : i32
    %825 = vector.broadcast %c6_i32_192 : i32 to vector<8x128xi32>
    %826 = arith.cmpi eq, %787, %825 : vector<8x128xi32>
    %cst_193 = arith.constant 0.000000e+00 : f32
    %827 = vector.broadcast %765 : f32 to vector<8x128xf32>
    %828 = vector.broadcast %cst_193 : f32 to vector<8x128xf32>
    %829 = arith.select %826, %827, %828 : vector<8x128xi1>, vector<8x128xf32>
    %830 = arith.addf %824, %829 : vector<8x128xf32>
    %c0_194 = arith.constant 0 : index
    %c0_195 = arith.constant 0 : index
    %c0_196 = arith.constant 0 : index
    %831 = vector.load %arg6[%c0_194, %c0_195, %c0_196] : memref<1x8x128xf32, #tpu.memory_space<vmem>>, vector<1x8x128xf32>
    %832 = vector.shape_cast %831 : vector<1x8x128xf32> to vector<8x128xf32>
    %833 = vector.shape_cast %830 : vector<8x128xf32> to vector<1x8x128xf32>
    tpu.vector_store %arg6[%c0_194, %c0_195, %c0_196], %833 {strides = array<i32>} : memref<1x8x128xf32, #tpu.memory_space<vmem>>, vector<1x8x128xf32>,
    return
  }
  func.func @transform_0(%arg0: i32) -> (i32, i32) {
    %c0_i32 = arith.constant 0 : i32
    %c0_i32_0 = arith.constant 0 : i32
    return %arg0, %c0_i32 : i32, i32
  }
  func.func @transform_1(%arg0: i32) -> (i32, i32) {
    %c0_i32 = arith.constant 0 : i32
    %c0_i32_0 = arith.constant 0 : i32
    %c0_i32_1 = arith.constant 0 : i32
    return %c0_i32, %c0_i32_0 : i32, i32
  }
  func.func @transform_2(%arg0: i32) -> (i32, i32) {
    %c0_i32 = arith.constant 0 : i32
    %c0_i32_0 = arith.constant 0 : i32
    %c0_i32_1 = arith.constant 0 : i32
    return %c0_i32, %c0_i32_0 : i32, i32
  }
  func.func @transform_3(%arg0: i32) -> (i32, i32) {
    %c0_i32 = arith.constant 0 : i32
    %c0_i32_0 = arith.constant 0 : i32
    %c0_i32_1 = arith.constant 0 : i32
    return %c0_i32, %c0_i32_0 : i32, i32
  }
  func.func @transform_4(%arg0: i32) -> i32 {
    %c0_i32 = arith.constant 0 : i32
    %c0_i32_0 = arith.constant 0 : i32
    return %c0_i32 : i32
  }
  func.func @transform_5(%arg0: i32) -> (i32, i32, i32) {
    %c0_i32 = arith.constant 0 : i32
    %c0_i32_0 = arith.constant 0 : i32
    %c0_i32_1 = arith.constant 0 : i32
    return %arg0, %c0_i32, %c0_i32_0 : i32, i32, i32
  }
}

</mosaic_0001>

<llo_original>
// kernel: tpu_custom_call.1
$region0: #{tpu_custom_call.1}
  #allocation0 [shape = 'u32[]', space=smem, size = 0x4, offset = 0x4, fixed_abs, tag = 'smem constant byte address 0x4 - core index']
  #allocation1 [shape = 'u32[72,128]{1,0:T(1,128)}', space=vmem, size = 0x9000, scoped, tag = 'internal scratch']
  %s0 = inlined_call_operand.vmem [shape: f32[128,32], index: 0, kind: input, shape index: {}]
  %s1 = inlined_call_operand.vmem [shape: f32[128,32], index: 1, kind: input, shape index: {}]
  %s2 = inlined_call_operand.vmem [shape: s32[1,128], index: 2, kind: input, shape index: {}]
  %s3 = inlined_call_operand.vmem [shape: s32[128,1], index: 3, kind: input, shape index: {}]
  %s4 = inlined_call_operand.vmem [shape: s32[128], index: 4, kind: input, shape index: {}]
  %s5 = inlined_call_operand.hbm [shape: f32[4,8,128], index: 5, kind: output, shape index: {}]
  %s6 = sld [smem:[#allocation0]]
  $region57: #{tpu_custom_call.1} parent=0
    _
  %s8 = ssub.s32 1, %s6
  %s9 = scalar_select 0, %s8, %s6
  $region1: #{tpu_custom_call.1} parent=0
    #allocation2 [shape = 'u8[512]{0}', space=smem, size = 0x200, scoped, tag = 'input window, operand 4, single buffered']
    #allocation3 [shape = 's32[2]{0}', space=sflag, size = 0x8, scoped, tag = 'scoped memory for tpu_custom_call.1']
    #allocation4 [shape = 's32[2]{0}', space=sflag, size = 0x8, scoped, tag = 'scoped memory for tpu_custom_call.1']
    #allocation5 [shape = 'u8[8192]{0}', space=vmem, size = 0x2000, scoped, tag = 'output window, operand 0']
    %10 = vsyncpa [#allocation4], 0
    %11 = vsyncpa [#allocation3], 0
    %s12 = scalar_lea.sflag [#allocation3], 1
    %13 = vsyncpa %s12, 0
    loop: start=0, step=1, limit=6
    $region2: #{tpu_custom_call.1} parent=1 // loop_pre_header
      _
    $region3: #{tpu_custom_call.1} parent=1 // loop_header
      %s15 = sphi 0, %s19
      %p16 = scmp.ge.s32.totalorder %s15, 6
      %s25 = sphi 0, %s27
      %s28 = sphi 0, %s25
      %s29 = sphi 0, %s28
      %s45 = sphi 0, %s29
      %s49 = sphi 0, %s49
      %s51 = sphi 0, %s49
      %s52 = sphi 0, %s51
      %s66 = sphi 0, %s52
      %s70 = sphi 0, %s70
      %s72 = sphi 0, %s70
      %s73 = sphi 0, %s72
      %s87 = sphi 0, %s73
      %s91 = sphi 0, %s91
      %s93 = sphi 0, %s91
      %s94 = sphi 0, %s93
      %s108 = sphi 0, %s94
      %s112 = sphi 0, %s112
      %s114 = sphi 0, %s112
      %s115 = sphi 0, %s114
      %s129 = sphi 0, %s115
      %s135 = sphi 0, %s137
      %s138 = sphi 0, %s135
      %s139 = sphi 0, %s138
      %s155 = sphi 0, %s139
    $region4: #{tpu_custom_call.1} parent=1 // loop_header_branch
      %18 = sbr.rel (%p16) target = $region8
    $region5: #{tpu_custom_call.1} parent=1 // loop_body
      %s20 = ssub.s32 %s15, 1
      %s21 = ssub.s32 %s15, 2
      %s22 = sadd.s32 %s15, 1
      %s23 = ssub.s32 %s15, %s22
      %p24 = scmp.eq.s32.totalorder %s23, 0
      %s26 = sadd.s32 %s25, 1
      %s27 = scalar_select %p24, %s25, %s26
      %p30 = pneg %p24
      %p31 = scmp.eq.s32.totalorder %s15, 3
      %p32 = por %p30, %p31
      %p33 = scmp.ne.s32.totalorder %s25, %s28
      %p34 = scmp.eq.s32.totalorder %s15, 0
      %p35 = por %p33, %p34
      %p36 = scmp.ne.s32.totalorder %s25, %s28
      %p37 = scmp.eq.s32.totalorder %s20, 3
      %p38 = por %p36, %p37
      %p39 = scmp.ne.s32.totalorder %s28, %s29
      %p40 = scmp.eq.s32.totalorder %s20, 0
      %p41 = por %p39, %p40
      %p42 = scmp.ne.s32.totalorder %s28, %s29
      %p43 = scmp.eq.s32.totalorder %s21, 3
      %p44 = por %p42, %p43
      %p46 = scmp.ne.s32.totalorder %s29, %s45
      %p47 = scmp.eq.s32.totalorder %s21, 0
      %p48 = por %p46, %p47
      %s50 = sadd.s32 %s49, 1
      %p53 = scmp.eq.s32.totalorder %s15, 3
      %p54 = scmp.ne.s32.totalorder %s49, %s51
      %p55 = scmp.eq.s32.totalorder %s15, 0
      %p56 = por %p54, %p55
      %p57 = scmp.ne.s32.totalorder %s49, %s51
      %p58 = scmp.eq.s32.totalorder %s20, 3
      %p59 = por %p57, %p58
      %p60 = scmp.ne.s32.totalorder %s51, %s52
      %p61 = scmp.eq.s32.totalorder %s20, 0
      %p62 = por %p60, %p61
      %p63 = scmp.ne.s32.totalorder %s51, %s52
      %p64 = scmp.eq.s32.totalorder %s21, 3
      %p65 = por %p63, %p64
      %p67 = scmp.ne.s32.totalorder %s52, %s66
      %p68 = scmp.eq.s32.totalorder %s21, 0
      %p69 = por %p67, %p68
      %s71 = sadd.s32 %s70, 1
      %p74 = scmp.eq.s32.totalorder %s15, 3
      %p75 = scmp.ne.s32.totalorder %s70, %s72
      %p76 = scmp.eq.s32.totalorder %s15, 0
      %p77 = por %p75, %p76
      %p78 = scmp.ne.s32.totalorder %s70, %s72
      %p79 = scmp.eq.s32.totalorder %s20, 3
      %p80 = por %p78, %p79
      %p81 = scmp.ne.s32.totalorder %s72, %s73
      %p82 = scmp.eq.s32.totalorder %s20, 0
      %p83 = por %p81, %p82
      %p84 = scmp.ne.s32.totalorder %s72, %s73
      %p85 = scmp.eq.s32.totalorder %s21, 3
      %p86 = por %p84, %p85
      %p88 = scmp.ne.s32.totalorder %s73, %s87
      %p89 = scmp.eq.s32.totalorder %s21, 0
      %p90 = por %p88, %p89
      %s92 = sadd.s32 %s91, 1
      %p95 = scmp.eq.s32.totalorder %s15, 3
      %p96 = scmp.ne.s32.totalorder %s91, %s93
      %p97 = scmp.eq.s32.totalorder %s15, 0
      %p98 = por %p96, %p97
      %p99 = scmp.ne.s32.totalorder %s91, %s93
      %p100 = scmp.eq.s32.totalorder %s20, 3
      %p101 = por %p99, %p100
      %p102 = scmp.ne.s32.totalorder %s93, %s94
      %p103 = scmp.eq.s32.totalorder %s20, 0
      %p104 = por %p102, %p103
      %p105 = scmp.ne.s32.totalorder %s93, %s94
      %p106 = scmp.eq.s32.totalorder %s21, 3
      %p107 = por %p105, %p106
      %p109 = scmp.ne.s32.totalorder %s94, %s108
      %p110 = scmp.eq.s32.totalorder %s21, 0
      %p111 = por %p109, %p110
      %s113 = sadd.s32 %s112, 1
      %p116 = scmp.eq.s32.totalorder %s15, 3
      %p117 = scmp.ne.s32.totalorder %s112, %s114
      %p118 = scmp.eq.s32.totalorder %s15, 0
      %p119 = por %p117, %p118
      %p120 = scmp.ne.s32.totalorder %s112, %s114
      %p121 = scmp.eq.s32.totalorder %s20, 3
      %p122 = por %p120, %p121
      %p123 = scmp.ne.s32.totalorder %s114, %s115
      %p124 = scmp.eq.s32.totalorder %s20, 0
      %p125 = por %p123, %p124
      %p126 = scmp.ne.s32.totalorder %s114, %s115
      %p127 = scmp.eq.s32.totalorder %s21, 3
      %p128 = por %p126, %p127
      %p130 = scmp.ne.s32.totalorder %s115, %s129
      %p131 = scmp.eq.s32.totalorder %s21, 0
      %p132 = por %p130, %p131
      %s133 = ssub.s32 %s15, %s22
      %p134 = scmp.eq.s32.totalorder %s133, 0
      %s136 = sadd.s32 %s135, 1
      %s137 = scalar_select %p134, %s135, %s136
      %p140 = pneg %p134
      %p141 = scmp.eq.s32.totalorder %s15, 3
      %p142 = por %p140, %p141
      %p143 = scmp.ne.s32.totalorder %s135, %s138
      %p144 = scmp.eq.s32.totalorder %s15, 0
      %p145 = por %p143, %p144
      %p146 = scmp.ne.s32.totalorder %s135, %s138
      %p147 = scmp.eq.s32.totalorder %s20, 3
      %p148 = por %p146, %p147
      %p149 = scmp.ne.s32.totalorder %s138, %s139
      %p150 = scmp.eq.s32.totalorder %s20, 0
      %p151 = por %p149, %p150
      %p152 = scmp.ne.s32.totalorder %s138, %s139
      %p153 = scmp.eq.s32.totalorder %s21, 3
      %p154 = por %p152, %p153
      %p156 = scmp.ne.s32.totalorder %s139, %s155
      %p157 = scmp.eq.s32.totalorder %s21, 0
      %p158 = por %p156, %p157
      %p159 = scmp.le.s32.totalorder 1, %s15
      %p160 = scmp.lt.s32.totalorder %s15, 5
      %p161 = pnand %p159, %p160
      %p162 = pneg %p161
      // Predicated region
      $region9: #{tpu_custom_call.1} parent=5 // pred_check
        _
      $region10: #{tpu_custom_call.1} parent=5 // pred_check_branch
        %164 = sbr.rel (%p161) target = $region12
      $region11: #{tpu_custom_call.1} parent=5 // pred_region
        %s165 = ssub.s32 %s15, 1
        // Predicated region
        $region13: #{tpu_custom_call.1} parent=11 // pred_check
          %p166 = pneg %p62
        $region14: #{tpu_custom_call.1} parent=11 // pred_check_branch
          %168 = sbr.rel (%p166) target = $region16
        $region15: #{tpu_custom_call.1} parent=11 // pred_region
          _
        $region16: #{tpu_custom_call.1} parent=11 // pred_fallthru
          _
        // Predicated region
        $region17: #{tpu_custom_call.1} parent=11 // pred_check
          %p169 = pneg %p83
        $region18: #{tpu_custom_call.1} parent=11 // pred_check_branch
          %171 = sbr.rel (%p169) target = $region20
        $region19: #{tpu_custom_call.1} parent=11 // pred_region
          _
        $region20: #{tpu_custom_call.1} parent=11 // pred_fallthru
          _
        // Predicated region
        $region21: #{tpu_custom_call.1} parent=11 // pred_check
          %p172 = pneg %p104
        $region22: #{tpu_custom_call.1} parent=11 // pred_check_branch
          %174 = sbr.rel (%p172) target = $region24
        $region23: #{tpu_custom_call.1} parent=11 // pred_region
          _
        $region24: #{tpu_custom_call.1} parent=11 // pred_fallthru
          _
        // Predicated region
        $region25: #{tpu_custom_call.1} parent=11 // pred_check
          %p175 = pneg %p125
        $region26: #{tpu_custom_call.1} parent=11 // pred_check_branch
          %177 = sbr.rel (%p175) target = $region28
        $region27: #{tpu_custom_call.1} parent=11 // pred_region
          %179 = vsyncadd [#allocation4], 0
          %s181 = sshll.u32 %s4, 4
          %s182 = int_to_ptr.vmem [resolvable:$true] %s181
          %184 = dma.vmem_to_smem %s182, 16, [#allocation2], [#allocation4]
        $region28: #{tpu_custom_call.1} parent=11 // pred_fallthru
          _
      $region12: #{tpu_custom_call.1} parent=5 // pred_fallthru
        _
      %p185 = scmp.lt.s32.totalorder %s15, 4
      // Predicated region
      $region29: #{tpu_custom_call.1} parent=5 // pred_check
        %p186 = pneg %p185
      $region30: #{tpu_custom_call.1} parent=5 // pred_check_branch
        %188 = sbr.rel (%p186) target = $region32
      $region31: #{tpu_custom_call.1} parent=5 // pred_region
        // Predicated region
        $region33: #{tpu_custom_call.1} parent=31 // pred_check
          %p189 = pneg %p35
        $region34: #{tpu_custom_call.1} parent=31 // pred_check_branch
          %191 = sbr.rel (%p189) target = $region36
        $region35: #{tpu_custom_call.1} parent=31 // pred_region
          %p192 = scmp.lt.s32.totalorder %s15, 15
          %s193 = scalar_select %p192, %s15, 15
          %s194 = smul.addr %s193, 8
          %s195 = scalar_lea.vmem %s0, %s194
        $region36: #{tpu_custom_call.1} parent=31 // pred_fallthru
          _
      $region32: #{tpu_custom_call.1} parent=5 // pred_fallthru
        _
      %p196 = scmp.le.s32.totalorder 1, %s15
      %p197 = scmp.lt.s32.totalorder %s15, 5
      %p198 = pnand %p196, %p197
      %p199 = pneg %p198
      // Predicated region
      $region37: #{tpu_custom_call.1} parent=5 // pred_check
        _
      $region38: #{tpu_custom_call.1} parent=5 // pred_check_branch
        %201 = sbr.rel (%p198) target = $region40
      $region39: #{tpu_custom_call.1} parent=5 // pred_region
        %s202 = ssub.s32 %s15, 1
        // Predicated region
        $region41: #{tpu_custom_call.1} parent=39 // pred_check
          %p203 = pneg %p125
        $region42: #{tpu_custom_call.1} parent=39 // pred_check_branch
          %205 = sbr.rel (%p203) target = $region44
        $region43: #{tpu_custom_call.1} parent=39 // pred_region
          %207 = dma.done [#allocation4], 16
        $region44: #{tpu_custom_call.1} parent=39 // pred_fallthru
          _
        %208 = sfence
        %p209 = scmp.lt.s32.totalorder %s20, 15
        %s210 = scalar_select %p209, %s20, 15
        %s211 = smul.addr %s210, 8
        %s212 = scalar_lea.vmem %s0, %s211
        %p213 = pneg %p41
        %p214 = pneg %p38
        %p215 = pneg %p62
        %p216 = pneg %p59
        %p217 = pneg %p83
        %p218 = pneg %p80
        %p219 = pneg %p104
        %p220 = pneg %p101
        %p221 = pneg %p125
        %p222 = pneg %p122
        %p223 = pneg %p151
        %p224 = pneg %p148
        %s225 = sand.u32 %s138, 1
        %s226 = scalar_lea.sflag [#allocation3], %s225
        %s227 = sand.u32 %s138, 1
        %s228 = smul.addr %s227, 8
        %s229 = scalar_lea.vmem [#allocation5], %s228
        %p230 = scmp.lt.s32.totalorder %s20, 15
        %s231 = scalar_select %p230, %s20, 15
        %s232 = smul.addr %s231, 8
        %s233 = scalar_lea.vmem %s0, %s232
        %v234 = vld [vmem:[%s1] sm:$0xff]
        %v235 = vld [vmem:[%s1 + $0x8] sm:$0xff]
        %v236 = vld [vmem:[%s1 + $0x10] sm:$0xff]
        %v237 = vld [vmem:[%s1 + $0x18] sm:$0xff]
        %v238 = vld [vmem:[%s1 + $0x20] sm:$0xff]
        %v239 = vld [vmem:[%s1 + $0x28] sm:$0xff]
        %v240 = vld [vmem:[%s1 + $0x30] sm:$0xff]
        %v241 = vld [vmem:[%s1 + $0x38] sm:$0xff]
        %v242 = vld [vmem:[%s1 + $0x40] sm:$0xff]
        %v243 = vld [vmem:[%s1 + $0x48] sm:$0xff]
        %v244 = vld [vmem:[%s1 + $0x50] sm:$0xff]
        %v245 = vld [vmem:[%s1 + $0x58] sm:$0xff]
        %v246 = vld [vmem:[%s1 + $0x60] sm:$0xff]
        %v247 = vld [vmem:[%s1 + $0x68] sm:$0xff]
        %v248 = vld [vmem:[%s1 + $0x70] sm:$0xff]
        %v249 = vld [vmem:[%s1 + $0x78] sm:$0xff]
        %v250 = vld [vmem:[%s233] sm:$0xff]
        %v251 = vmul.f32 %v234, %v234
        %v252 = vmul.f32 %v235, %v235
        %v253 = vmul.f32 %v236, %v236
        %v254 = vmul.f32 %v237, %v237
        %v255 = vmul.f32 %v238, %v238
        %v256 = vmul.f32 %v239, %v239
        %v257 = vmul.f32 %v240, %v240
        %v258 = vmul.f32 %v241, %v241
        %v259 = vmul.f32 %v242, %v242
        %v260 = vmul.f32 %v243, %v243
        %v261 = vmul.f32 %v244, %v244
        %v262 = vmul.f32 %v245, %v245
        %v263 = vmul.f32 %v246, %v246
        %v264 = vmul.f32 %v247, %v247
        %v265 = vmul.f32 %v248, %v248
        %v266 = vmul.f32 %v249, %v249
        %vm267 = vcmask 261120
        %v268 = vsel %vm267, %v251, 0.0
        %269 = vadd.xlane.f32.xlu0 %v268
        %v270 = vpop.xlane.xlu0 %269
        %v271 = vsel %vm267, %v252, 0.0
        %272 = vadd.xlane.f32.xlu0 %v271
        %v273 = vpop.xlane.xlu0 %272
        %v274 = vsel %vm267, %v253, 0.0
        %275 = vadd.xlane.f32.xlu0 %v274
        %v276 = vpop.xlane.xlu0 %275
        %v277 = vsel %vm267, %v254, 0.0
        %278 = vadd.xlane.f32.xlu0 %v277
        %v279 = vpop.xlane.xlu0 %278
        %v280 = vsel %vm267, %v255, 0.0
        %281 = vadd.xlane.f32.xlu0 %v280
        %v282 = vpop.xlane.xlu0 %281
        %v283 = vsel %vm267, %v256, 0.0
        %284 = vadd.xlane.f32.xlu0 %v283
        %v285 = vpop.xlane.xlu0 %284
        %v286 = vsel %vm267, %v257, 0.0
        %287 = vadd.xlane.f32.xlu0 %v286
        %v288 = vpop.xlane.xlu0 %287
        %v289 = vsel %vm267, %v258, 0.0
        %290 = vadd.xlane.f32.xlu0 %v289
        %v291 = vpop.xlane.xlu0 %290
        %v292 = vsel %vm267, %v259, 0.0
        %293 = vadd.xlane.f32.xlu0 %v292
        %v294 = vpop.xlane.xlu0 %293
        %v295 = vsel %vm267, %v260, 0.0
        %296 = vadd.xlane.f32.xlu0 %v295
        %v297 = vpop.xlane.xlu0 %296
        %v298 = vsel %vm267, %v261, 0.0
        %299 = vadd.xlane.f32.xlu0 %v298
        %v300 = vpop.xlane.xlu0 %299
        %v301 = vsel %vm267, %v262, 0.0
        %302 = vadd.xlane.f32.xlu0 %v301
        %v303 = vpop.xlane.xlu0 %302
        %v304 = vsel %vm267, %v263, 0.0
        %305 = vadd.xlane.f32.xlu0 %v304
        %v306 = vpop.xlane.xlu0 %305
        %v307 = vsel %vm267, %v264, 0.0
        %308 = vadd.xlane.f32.xlu0 %v307
        %v309 = vpop.xlane.xlu0 %308
        %v310 = vsel %vm267, %v265, 0.0
        %311 = vadd.xlane.f32.xlu0 %v310
        %v312 = vpop.xlane.xlu0 %311
        %v313 = vsel %vm267, %v266, 0.0
        %314 = vadd.xlane.f32.xlu0 %v313
        %v315 = vpop.xlane.xlu0 %314
        %v316 = vmul.f32 %v250, %v250
        %v317 = vsel %vm267, %v316, 0.0
        %318 = vadd.xlane.f32.xlu0 %v317
        %v319 = vpop.xlane.xlu0 %318
        %v320 = vmax.f32 %v270, 1e-12
        %v321 = vmax.f32 %v273, 1e-12
        %v322 = vmax.f32 %v276, 1e-12
        %v323 = vmax.f32 %v279, 1e-12
        %v324 = vmax.f32 %v282, 1e-12
        %v325 = vmax.f32 %v285, 1e-12
        %v326 = vmax.f32 %v288, 1e-12
        %v327 = vmax.f32 %v291, 1e-12
        %v328 = vmax.f32 %v294, 1e-12
        %v329 = vmax.f32 %v297, 1e-12
        %v330 = vmax.f32 %v300, 1e-12
        %v331 = vmax.f32 %v303, 1e-12
        %v332 = vmax.f32 %v306, 1e-12
        %v333 = vmax.f32 %v309, 1e-12
        %v334 = vmax.f32 %v312, 1e-12
        %v335 = vmax.f32 %v315, 1e-12
        %v336 = vrsqrt.pop %v320
        %v337 = vmul.f32 %v336, %v320
        %v338 = vmul.f32 %v337, %v336
        %v339 = vmul.f32 0.5, %v338
        %v340 = vsub.f32 1.5, %v339
        %v341 = vmul.f32 %v336, %v340
        %vm342 = vweird.f32 %v320
        %vm343 = vweird.f32 %v336
        %vm344 = vmor %vm342, %vm343
        %v345 = vsel %vm344, %v336, %v341
        %v346 = vrsqrt.pop %v321
        %v347 = vmul.f32 %v346, %v321
        %v348 = vmul.f32 %v347, %v346
        %v349 = vmul.f32 0.5, %v348
        %v350 = vsub.f32 1.5, %v349
        %v351 = vmul.f32 %v346, %v350
        %vm352 = vweird.f32 %v321
        %vm353 = vweird.f32 %v346
        %vm354 = vmor %vm352, %vm353
        %v355 = vsel %vm354, %v346, %v351
        %v356 = vrsqrt.pop %v322
        %v357 = vmul.f32 %v356, %v322
        %v358 = vmul.f32 %v357, %v356
        %v359 = vmul.f32 0.5, %v358
        %v360 = vsub.f32 1.5, %v359
        %v361 = vmul.f32 %v356, %v360
        %vm362 = vweird.f32 %v322
        %vm363 = vweird.f32 %v356
        %vm364 = vmor %vm362, %vm363
        %v365 = vsel %vm364, %v356, %v361
        %v366 = vrsqrt.pop %v323
        %v367 = vmul.f32 %v366, %v323
        %v368 = vmul.f32 %v367, %v366
        %v369 = vmul.f32 0.5, %v368
        %v370 = vsub.f32 1.5, %v369
        %v371 = vmul.f32 %v366, %v370
        %vm372 = vweird.f32 %v323
        %vm373 = vweird.f32 %v366
        %vm374 = vmor %vm372, %vm373
        %v375 = vsel %vm374, %v366, %v371
        %v376 = vrsqrt.pop %v324
        %v377 = vmul.f32 %v376, %v324
        %v378 = vmul.f32 %v377, %v376
        %v379 = vmul.f32 0.5, %v378
        %v380 = vsub.f32 1.5, %v379
        %v381 = vmul.f32 %v376, %v380
        %vm382 = vweird.f32 %v324
        %vm383 = vweird.f32 %v376
        %vm384 = vmor %vm382, %vm383
        %v385 = vsel %vm384, %v376, %v381
        %v386 = vrsqrt.pop %v325
        %v387 = vmul.f32 %v386, %v325
        %v388 = vmul.f32 %v387, %v386
        %v389 = vmul.f32 0.5, %v388
        %v390 = vsub.f32 1.5, %v389
        %v391 = vmul.f32 %v386, %v390
        %vm392 = vweird.f32 %v325
        %vm393 = vweird.f32 %v386
        %vm394 = vmor %vm392, %vm393
        %v395 = vsel %vm394, %v386, %v391
        %v396 = vrsqrt.pop %v326
        %v397 = vmul.f32 %v396, %v326
        %v398 = vmul.f32 %v397, %v396
        %v399 = vmul.f32 0.5, %v398
        %v400 = vsub.f32 1.5, %v399
        %v401 = vmul.f32 %v396, %v400
        %vm402 = vweird.f32 %v326
        %vm403 = vweird.f32 %v396
        %vm404 = vmor %vm402, %vm403
        %v405 = vsel %vm404, %v396, %v401
        %v406 = vrsqrt.pop %v327
        %v407 = vmul.f32 %v406, %v327
        %v408 = vmul.f32 %v407, %v406
        %v409 = vmul.f32 0.5, %v408
        %v410 = vsub.f32 1.5, %v409
        %v411 = vmul.f32 %v406, %v410
        %vm412 = vweird.f32 %v327
        %vm413 = vweird.f32 %v406
        %vm414 = vmor %vm412, %vm413
        %v415 = vsel %vm414, %v406, %v411
        %v416 = vrsqrt.pop %v328
        %v417 = vmul.f32 %v416, %v328
        %v418 = vmul.f32 %v417, %v416
        %v419 = vmul.f32 0.5, %v418
        %v420 = vsub.f32 1.5, %v419
        %v421 = vmul.f32 %v416, %v420
        %vm422 = vweird.f32 %v328
        %vm423 = vweird.f32 %v416
        %vm424 = vmor %vm422, %vm423
        %v425 = vsel %vm424, %v416, %v421
        %v426 = vrsqrt.pop %v329
        %v427 = vmul.f32 %v426, %v329
        %v428 = vmul.f32 %v427, %v426
        %v429 = vmul.f32 0.5, %v428
        %v430 = vsub.f32 1.5, %v429
        %v431 = vmul.f32 %v426, %v430
        %vm432 = vweird.f32 %v329
        %vm433 = vweird.f32 %v426
        %vm434 = vmor %vm432, %vm433
        %v435 = vsel %vm434, %v426, %v431
        %v436 = vrsqrt.pop %v330
        %v437 = vmul.f32 %v436, %v330
        %v438 = vmul.f32 %v437, %v436
        %v439 = vmul.f32 0.5, %v438
        %v440 = vsub.f32 1.5, %v439
        %v441 = vmul.f32 %v436, %v440
        %vm442 = vweird.f32 %v330
        %vm443 = vweird.f32 %v436
        %vm444 = vmor %vm442, %vm443
        %v445 = vsel %vm444, %v436, %v441
        %v446 = vrsqrt.pop %v331
        %v447 = vmul.f32 %v446, %v331
        %v448 = vmul.f32 %v447, %v446
        %v449 = vmul.f32 0.5, %v448
        %v450 = vsub.f32 1.5, %v449
        %v451 = vmul.f32 %v446, %v450
        %vm452 = vweird.f32 %v331
        %vm453 = vweird.f32 %v446
        %vm454 = vmor %vm452, %vm453
        %v455 = vsel %vm454, %v446, %v451
        %v456 = vrsqrt.pop %v332
        %v457 = vmul.f32 %v456, %v332
        %v458 = vmul.f32 %v457, %v456
        %v459 = vmul.f32 0.5, %v458
        %v460 = vsub.f32 1.5, %v459
        %v461 = vmul.f32 %v456, %v460
        %vm462 = vweird.f32 %v332
        %vm463 = vweird.f32 %v456
        %vm464 = vmor %vm462, %vm463
        %v465 = vsel %vm464, %v456, %v461
        %v466 = vrsqrt.pop %v333
        %v467 = vmul.f32 %v466, %v333
        %v468 = vmul.f32 %v467, %v466
        %v469 = vmul.f32 0.5, %v468
        %v470 = vsub.f32 1.5, %v469
        %v471 = vmul.f32 %v466, %v470
        %vm472 = vweird.f32 %v333
        %vm473 = vweird.f32 %v466
        %vm474 = vmor %vm472, %vm473
        %v475 = vsel %vm474, %v466, %v471
        %v476 = vrsqrt.pop %v334
        %v477 = vmul.f32 %v476, %v334
        %v478 = vmul.f32 %v477, %v476
        %v479 = vmul.f32 0.5, %v478
        %v480 = vsub.f32 1.5, %v479
        %v481 = vmul.f32 %v476, %v480
        %vm482 = vweird.f32 %v334
        %vm483 = vweird.f32 %v476
        %vm484 = vmor %vm482, %vm483
        %v485 = vsel %vm484, %v476, %v481
        %v486 = vrsqrt.pop %v335
        %v487 = vmul.f32 %v486, %v335
        %v488 = vmul.f32 %v487, %v486
        %v489 = vmul.f32 0.5, %v488
        %v490 = vsub.f32 1.5, %v489
        %v491 = vmul.f32 %v486, %v490
        %vm492 = vweird.f32 %v335
        %vm493 = vweird.f32 %v486
        %vm494 = vmor %vm492, %vm493
        %v495 = vsel %vm494, %v486, %v491
        %v496 = vmul.f32 %v345, 4.0
        %v497 = vmul.f32 %v355, 4.0
        %v498 = vmul.f32 %v365, 4.0
        %v499 = vmul.f32 %v375, 4.0
        %v500 = vmul.f32 %v385, 4.0
        %v501 = vmul.f32 %v395, 4.0
        %v502 = vmul.f32 %v405, 4.0
        %v503 = vmul.f32 %v415, 4.0
        %v504 = vmul.f32 %v425, 4.0
        %v505 = vmul.f32 %v435, 4.0
        %v506 = vmul.f32 %v445, 4.0
        %v507 = vmul.f32 %v455, 4.0
        %v508 = vmul.f32 %v465, 4.0
        %v509 = vmul.f32 %v475, 4.0
        %v510 = vmul.f32 %v485, 4.0
        %v511 = vmul.f32 %v495, 4.0
        %v512 = vmul.f32 %v234, %v496
        %v513 = vmul.f32 %v235, %v497
        %v514 = vmul.f32 %v236, %v498
        %v515 = vmul.f32 %v237, %v499
        %v516 = vmul.f32 %v238, %v500
        %v517 = vmul.f32 %v239, %v501
        %v518 = vmul.f32 %v240, %v502
        %v519 = vmul.f32 %v241, %v503
        %v520 = vmul.f32 %v242, %v504
        %v521 = vmul.f32 %v243, %v505
        %v522 = vmul.f32 %v244, %v506
        %v523 = vmul.f32 %v245, %v507
        %v524 = vmul.f32 %v246, %v508
        %v525 = vmul.f32 %v247, %v509
        %v526 = vmul.f32 %v248, %v510
        %v527 = vmul.f32 %v249, %v511
        %v528 = vmax.f32 %v319, 1e-12
        %v529 = vrsqrt.pop %v528
        %v530 = vmul.f32 %v529, %v528
        %v531 = vmul.f32 %v530, %v529
        %v532 = vmul.f32 0.5, %v531
        %v533 = vsub.f32 1.5, %v532
        %v534 = vmul.f32 %v529, %v533
        %vm535 = vweird.f32 %v528
        %vm536 = vweird.f32 %v529
        %vm537 = vmor %vm535, %vm536
        %v538 = vsel %vm537, %v529, %v534
        %v539 = vmul.f32 %v538, 4.0
        %v540 = vmul.f32 %v250, %v539
        %v542 = vsel %vm267, %v540, 0
        %v545 = vsel %vm267, %v512, 0
        %v548 = vsel %vm267, %v513, 0
        %v551 = vsel %vm267, %v514, 0
        %v554 = vsel %vm267, %v515, 0
        %v557 = vsel %vm267, %v516, 0
        %v560 = vsel %vm267, %v517, 0
        %v563 = vsel %vm267, %v518, 0
        %v566 = vsel %vm267, %v519, 0
        %v569 = vsel %vm267, %v520, 0
        %v572 = vsel %vm267, %v521, 0
        %v575 = vsel %vm267, %v522, 0
        %v578 = vsel %vm267, %v523, 0
        %v581 = vsel %vm267, %v524, 0
        %v584 = vsel %vm267, %v525, 0
        %v587 = vsel %vm267, %v526, 0
        %v590 = vsel %vm267, %v527, 0
        %592 = vmatpush.xpose.msra.mxu0 %v590
        %593 = vmatpush.xpose.msra.mxu0 %v587
        %594 = vmatpush.xpose.msra.mxu0 %v584
        %595 = vmatpush.xpose.msra.mxu0 %v581
        %596 = vmatpush.xpose.msra.mxu0 %v578
        %597 = vmatpush.xpose.msra.mxu0 %v575
        %598 = vmatpush.xpose.msra.mxu0 %v572
        %599 = vmatpush.xpose.msra.mxu0 %v569
        %600 = vmatpush.xpose.msra.mxu0 %v566
        %601 = vmatpush.xpose.msra.mxu0 %v563
        %602 = vmatpush.xpose.msra.mxu0 %v560
        %603 = vmatpush.xpose.msra.mxu0 %v557
        %604 = vmatpush.xpose.msra.mxu0 %v554
        %605 = vmatpush.xpose.msra.mxu0 %v551
        %606 = vmatpush.xpose.msra.mxu0 %v548
        %607 = vmatpush.xpose.msra.mxu0 %v545
        %608 = vmatmul.f32.gmra.mxu0 %v542
        %v609 = vpop.f32.mrf.mxu0
        %v610 = vadd.f32 0.0, %v609
        %611 = vdwg.mxu0
        %612 = vmatpush.xpose.msra.mxu0 0.0
        %613 = vmatpush.xpose.msra.mxu0 0.0
        %614 = vmatpush.xpose.msra.mxu0 0.0
        %615 = vmatpush.xpose.msra.mxu0 0.0
        %616 = vmatpush.xpose.msra.mxu0 0.0
        %617 = vmatpush.xpose.msra.mxu0 0.0
        %618 = vmatpush.xpose.msra.mxu0 0.0
        %619 = vmatpush.xpose.msra.mxu0 0.0
        %620 = vmatpush.xpose.msra.mxu0 0.0
        %621 = vmatpush.xpose.msra.mxu0 0.0
        %622 = vmatpush.xpose.msra.mxu0 0.0
        %623 = vmatpush.xpose.msra.mxu0 0.0
        %624 = vmatpush.xpose.msra.mxu0 0.0
        %625 = vmatpush.xpose.msra.mxu0 0.0
        %626 = vmatpush.xpose.msra.mxu0 0.0
        %627 = vmatpush.xpose.msra.mxu0 %v542
        %628 = vmatmul.f32.gmra.mxu0 %v545
        %v629 = vpop.f32.mrf.mxu0
        %v630 = vadd.f32 0.0, %v629
        %631 = vmatmul.f32.gmra.mxu0 %v548
        %v632 = vpop.f32.mrf.mxu0
        %v633 = vadd.f32 0.0, %v632
        %634 = vmatmul.f32.gmra.mxu0 %v551
        %v635 = vpop.f32.mrf.mxu0
        %v636 = vadd.f32 0.0, %v635
        %637 = vmatmul.f32.gmra.mxu0 %v554
        %v638 = vpop.f32.mrf.mxu0
        %v639 = vadd.f32 0.0, %v638
        %640 = vmatmul.f32.gmra.mxu0 %v557
        %v641 = vpop.f32.mrf.mxu0
        %v642 = vadd.f32 0.0, %v641
        %643 = vmatmul.f32.gmra.mxu0 %v560
        %v644 = vpop.f32.mrf.mxu0
        %v645 = vadd.f32 0.0, %v644
        %646 = vmatmul.f32.gmra.mxu0 %v563
        %v647 = vpop.f32.mrf.mxu0
        %v648 = vadd.f32 0.0, %v647
        %649 = vmatmul.f32.gmra.mxu0 %v566
        %v650 = vpop.f32.mrf.mxu0
        %v651 = vadd.f32 0.0, %v650
        %652 = vmatmul.f32.gmra.mxu0 %v569
        %v653 = vpop.f32.mrf.mxu0
        %v654 = vadd.f32 0.0, %v653
        %655 = vmatmul.f32.gmra.mxu0 %v572
        %v656 = vpop.f32.mrf.mxu0
        %v657 = vadd.f32 0.0, %v656
        %658 = vmatmul.f32.gmra.mxu0 %v575
        %v659 = vpop.f32.mrf.mxu0
        %v660 = vadd.f32 0.0, %v659
        %661 = vmatmul.f32.gmra.mxu0 %v578
        %v662 = vpop.f32.mrf.mxu0
        %v663 = vadd.f32 0.0, %v662
        %664 = vmatmul.f32.gmra.mxu0 %v581
        %v665 = vpop.f32.mrf.mxu0
        %v666 = vadd.f32 0.0, %v665
        %667 = vmatmul.f32.gmra.mxu0 %v584
        %v668 = vpop.f32.mrf.mxu0
        %v669 = vadd.f32 0.0, %v668
        %670 = vmatmul.f32.gmra.mxu0 %v587
        %v671 = vpop.f32.mrf.mxu0
        %v672 = vadd.f32 0.0, %v671
        %673 = vmatmul.f32.gmra.mxu0 %v590
        %v674 = vpop.f32.mrf.mxu0
        %v675 = vadd.f32 0.0, %v674
        %676 = vdwg.mxu0
        %v677 = vmul.f32 %v610, 2.0
        %v678 = vsub.f32 32.0, %v677
        %v679 = vmul.f32 %v630, 2.0
        %v680 = vmul.f32 %v633, 2.0
        %v681 = vmul.f32 %v636, 2.0
        %v682 = vmul.f32 %v639, 2.0
        %v683 = vmul.f32 %v642, 2.0
        %v684 = vmul.f32 %v645, 2.0
        %v685 = vmul.f32 %v648, 2.0
        %v686 = vmul.f32 %v651, 2.0
        %v687 = vmul.f32 %v654, 2.0
        %v688 = vmul.f32 %v657, 2.0
        %v689 = vmul.f32 %v660, 2.0
        %v690 = vmul.f32 %v663, 2.0
        %v691 = vmul.f32 %v666, 2.0
        %v692 = vmul.f32 %v669, 2.0
        %v693 = vmul.f32 %v672, 2.0
        %v694 = vmul.f32 %v675, 2.0
        %v695 = vsub.f32 32.0, %v679
        %v696 = vsub.f32 32.0, %v680
        %v697 = vsub.f32 32.0, %v681
        %v698 = vsub.f32 32.0, %v682
        %v699 = vsub.f32 32.0, %v683
        %v700 = vsub.f32 32.0, %v684
        %v701 = vsub.f32 32.0, %v685
        %v702 = vsub.f32 32.0, %v686
        %v703 = vsub.f32 32.0, %v687
        %v704 = vsub.f32 32.0, %v688
        %v705 = vsub.f32 32.0, %v689
        %v706 = vsub.f32 32.0, %v690
        %v707 = vsub.f32 32.0, %v691
        %v708 = vsub.f32 32.0, %v692
        %v709 = vsub.f32 32.0, %v693
        %v710 = vsub.f32 32.0, %v694
        %v711 = vld [vmem:[%s2] sm:$0x1]
        %v712 = vld [vmem:[%s3] sm:$0xff]
        %v713 = vld [vmem:[%s3 + $0x8] sm:$0xff]
        %v714 = vld [vmem:[%s3 + $0x10] sm:$0xff]
        %v715 = vld [vmem:[%s3 + $0x18] sm:$0xff]
        %v716 = vld [vmem:[%s3 + $0x20] sm:$0xff]
        %v717 = vld [vmem:[%s3 + $0x28] sm:$0xff]
        %v718 = vld [vmem:[%s3 + $0x30] sm:$0xff]
        %v719 = vld [vmem:[%s3 + $0x38] sm:$0xff]
        %v720 = vld [vmem:[%s3 + $0x40] sm:$0xff]
        %v721 = vld [vmem:[%s3 + $0x48] sm:$0xff]
        %v722 = vld [vmem:[%s3 + $0x50] sm:$0xff]
        %v723 = vld [vmem:[%s3 + $0x58] sm:$0xff]
        %v724 = vld [vmem:[%s3 + $0x60] sm:$0xff]
        %v725 = vld [vmem:[%s3 + $0x68] sm:$0xff]
        %v726 = vld [vmem:[%s3 + $0x70] sm:$0xff]
        %v727 = vld [vmem:[%s3 + $0x78] sm:$0xff]
        %v728 = vlaneseq
        %v729 = vshrl.u32 %v728, 7
        %v730 = vadd.s32 %v729, 8
        %v731 = vadd.s32 %v729, 16
        %v732 = vadd.s32 %v729, 24
        %v733 = vadd.s32 %v729, 32
        %v734 = vadd.s32 %v729, 40
        %v735 = vadd.s32 %v729, 48
        %v736 = vadd.s32 %v729, 56
        %v737 = vadd.s32 %v729, 64
        %v738 = vadd.s32 %v729, 72
        %v739 = vadd.s32 %v729, 80
        %v740 = vadd.s32 %v729, 88
        %v741 = vadd.s32 %v729, 96
        %v742 = vadd.s32 %v729, 104
        %v743 = vadd.s32 %v729, 112
        %v744 = vadd.s32 %v729, 120
        %v745 = vlaneseq
        %v746 = vand.u32 %v745, 127
        %vm747 = vcmp.lt.s32.totalorder %v729, 32
        %vm748 = vcmp.lt.s32.totalorder %v730, 32
        %vm749 = vcmp.lt.s32.totalorder %v731, 32
        %vm750 = vcmp.lt.s32.totalorder %v732, 32
        %vm751 = vcmp.lt.s32.totalorder %v733, 32
        %vm752 = vcmp.lt.s32.totalorder %v734, 32
        %vm753 = vcmp.lt.s32.totalorder %v735, 32
        %vm754 = vcmp.lt.s32.totalorder %v736, 32
        %vm755 = vcmp.lt.s32.totalorder %v737, 32
        %vm756 = vcmp.lt.s32.totalorder %v738, 32
        %vm757 = vcmp.lt.s32.totalorder %v739, 32
        %vm758 = vcmp.lt.s32.totalorder %v740, 32
        %vm759 = vcmp.lt.s32.totalorder %v741, 32
        %vm760 = vcmp.lt.s32.totalorder %v742, 32
        %vm761 = vcmp.lt.s32.totalorder %v743, 32
        %vm762 = vcmp.lt.s32.totalorder %v744, 32
        %vm763 = vcmp.lt.s32.totalorder %v746, 32
        %s764 = smul.u32 %s20, 8
        %vm765 = vcmp.eq.s32.totalorder %v746, 0
        %v766 = vsel %vm765, 1, 0
        %v767 = vcvt.s32.f32 %v766
        %vm768 = vcmp.eq.s32.totalorder %v746, 1
        %v769 = vsel %vm768, 1, 0
        %v770 = vcvt.s32.f32 %v769
        %vm771 = vcmp.eq.s32.totalorder %v746, 2
        %v772 = vsel %vm771, 1, 0
        %v773 = vcvt.s32.f32 %v772
        %vm774 = vcmp.eq.s32.totalorder %v746, 3
        %v775 = vsel %vm774, 1, 0
        %v776 = vcvt.s32.f32 %v775
        %vm777 = vcmp.eq.s32.totalorder %v746, 4
        %v778 = vsel %vm777, 1, 0
        %v779 = vcvt.s32.f32 %v778
        %vm780 = vcmp.eq.s32.totalorder %v746, 5
        %v781 = vsel %vm780, 1, 0
        %v782 = vcvt.s32.f32 %v781
        %vm783 = vcmp.eq.s32.totalorder %v746, 6
        %v784 = vsel %vm783, 1, 0
        %v785 = vcvt.s32.f32 %v784
        %vm786 = vcmp.eq.s32.totalorder %v746, 7
        %v787 = vsel %vm786, 1, 0
        %v788 = vcvt.s32.f32 %v787
        %p789 = scmp.lt.s32.totalorder %s764, 32
        %s790 = sld [smem:[#allocation2 + %s764]]
        %v791 = vstv %s790
        %vm792 = vcmp.eq.s32.totalorder %v712, %v791
        %vm793 = vcmp.eq.s32.totalorder %v713, %v791
        %vm794 = vcmp.eq.s32.totalorder %v714, %v791
        %vm795 = vcmp.eq.s32.totalorder %v715, %v791
        %vm796 = vcmp.eq.s32.totalorder %v716, %v791
        %vm797 = vcmp.eq.s32.totalorder %v717, %v791
        %vm798 = vcmp.eq.s32.totalorder %v718, %v791
        %vm799 = vcmp.eq.s32.totalorder %v719, %v791
        %vm800 = vcmp.eq.s32.totalorder %v720, %v791
        %vm801 = vcmp.eq.s32.totalorder %v721, %v791
        %vm802 = vcmp.eq.s32.totalorder %v722, %v791
        %vm803 = vcmp.eq.s32.totalorder %v723, %v791
        %vm804 = vcmp.eq.s32.totalorder %v724, %v791
        %vm805 = vcmp.eq.s32.totalorder %v725, %v791
        %vm806 = vcmp.eq.s32.totalorder %v726, %v791
        %vm807 = vcmp.eq.s32.totalorder %v727, %v791
        %v808 = vstv %s764
        %vm809 = vcmp.ne.s32.totalorder %v729, %v808
        %vm810 = vcmp.ne.s32.totalorder %v730, %v808
        %vm811 = vcmp.ne.s32.totalorder %v731, %v808
        %vm812 = vcmp.ne.s32.totalorder %v732, %v808
        %vm813 = vcmp.ne.s32.totalorder %v733, %v808
        %vm814 = vcmp.ne.s32.totalorder %v734, %v808
        %vm815 = vcmp.ne.s32.totalorder %v735, %v808
        %vm816 = vcmp.ne.s32.totalorder %v736, %v808
        %vm817 = vcmp.ne.s32.totalorder %v737, %v808
        %vm818 = vcmp.ne.s32.totalorder %v738, %v808
        %vm819 = vcmp.ne.s32.totalorder %v739, %v808
        %vm820 = vcmp.ne.s32.totalorder %v740, %v808
        %vm821 = vcmp.ne.s32.totalorder %v741, %v808
        %vm822 = vcmp.ne.s32.totalorder %v742, %v808
        %vm823 = vcmp.ne.s32.totalorder %v743, %v808
        %vm824 = vcmp.ne.s32.totalorder %v744, %v808
        %vm825 = vmand %vm792, %vm809
        %vm826 = vmand %vm793, %vm810
        %vm827 = vmand %vm794, %vm811
        %vm828 = vmand %vm795, %vm812
        %vm829 = vmand %vm796, %vm813
        %vm830 = vmand %vm797, %vm814
        %vm831 = vmand %vm798, %vm815
        %vm832 = vmand %vm799, %vm816
        %vm833 = vmand %vm800, %vm817
        %vm834 = vmand %vm801, %vm818
        %vm835 = vmand %vm802, %vm819
        %vm836 = vmand %vm803, %vm820
        %vm837 = vmand %vm804, %vm821
        %vm838 = vmand %vm805, %vm822
        %vm839 = vmand %vm806, %vm823
        %vm840 = vmand %vm807, %vm824
        %s841 = scalar_select %p789, 1, 0
        %v842 = vstv %s841
        %vm843 = vcmp.eq.s32.totalorder %v842, 1
        %vm844 = vmand %vm747, %vm843
        %vm845 = vmand %vm748, %vm843
        %vm846 = vmand %vm749, %vm843
        %vm847 = vmand %vm750, %vm843
        %vm848 = vmand %vm751, %vm843
        %vm849 = vmand %vm752, %vm843
        %vm850 = vmand %vm753, %vm843
        %vm851 = vmand %vm754, %vm843
        %vm852 = vmand %vm755, %vm843
        %vm853 = vmand %vm756, %vm843
        %vm854 = vmand %vm757, %vm843
        %vm855 = vmand %vm758, %vm843
        %vm856 = vmand %vm759, %vm843
        %vm857 = vmand %vm760, %vm843
        %vm858 = vmand %vm761, %vm843
        %vm859 = vmand %vm762, %vm843
        %vm860 = vmand %vm825, %vm844
        %vm861 = vmand %vm826, %vm845
        %vm862 = vmand %vm827, %vm846
        %vm863 = vmand %vm828, %vm847
        %vm864 = vmand %vm829, %vm848
        %vm865 = vmand %vm830, %vm849
        %vm866 = vmand %vm831, %vm850
        %vm867 = vmand %vm832, %vm851
        %vm868 = vmand %vm833, %vm852
        %vm869 = vmand %vm834, %vm853
        %vm870 = vmand %vm835, %vm854
        %vm871 = vmand %vm836, %vm855
        %vm872 = vmand %vm837, %vm856
        %vm873 = vmand %vm838, %vm857
        %vm874 = vmand %vm839, %vm858
        %vm875 = vmand %vm840, %vm859
        %vm876 = vcmp.ne.s32.totalorder %v711, %v791
        %vm877 = vmand %vm763, %vm843
        %vm878 = vmand %vm876, %vm877
        %v879 = vmul.f32 %v695, 1.442695
        %v880 = vpow.pop %v879
        %v881 = vmul.f32 %v696, 1.442695
        %v882 = vpow.pop %v881
        %v883 = vmul.f32 %v697, 1.442695
        %v884 = vpow.pop %v883
        %v885 = vmul.f32 %v698, 1.442695
        %v886 = vpow.pop %v885
        %v887 = vmul.f32 %v699, 1.442695
        %v888 = vpow.pop %v887
        %v889 = vmul.f32 %v700, 1.442695
        %v890 = vpow.pop %v889
        %v891 = vmul.f32 %v701, 1.442695
        %v892 = vpow.pop %v891
        %v893 = vmul.f32 %v702, 1.442695
        %v894 = vpow.pop %v893
        %v895 = vmul.f32 %v703, 1.442695
        %v896 = vpow.pop %v895
        %v897 = vmul.f32 %v704, 1.442695
        %v898 = vpow.pop %v897
        %v899 = vmul.f32 %v705, 1.442695
        %v900 = vpow.pop %v899
        %v901 = vmul.f32 %v706, 1.442695
        %v902 = vpow.pop %v901
        %v903 = vmul.f32 %v707, 1.442695
        %v904 = vpow.pop %v903
        %v905 = vmul.f32 %v708, 1.442695
        %v906 = vpow.pop %v905
        %v907 = vmul.f32 %v709, 1.442695
        %v908 = vpow.pop %v907
        %v909 = vmul.f32 %v710, 1.442695
        %v910 = vpow.pop %v909
        %v911 = vsel %vm860, %v880, 0.0
        %v912 = vsel %vm861, %v882, 0.0
        %v913 = vsel %vm862, %v884, 0.0
        %v914 = vsel %vm863, %v886, 0.0
        %v915 = vsel %vm864, %v888, 0.0
        %v916 = vsel %vm865, %v890, 0.0
        %v917 = vsel %vm866, %v892, 0.0
        %v918 = vsel %vm867, %v894, 0.0
        %v919 = vsel %vm868, %v896, 0.0
        %v920 = vsel %vm869, %v898, 0.0
        %v921 = vsel %vm870, %v900, 0.0
        %v922 = vsel %vm871, %v902, 0.0
        %v923 = vsel %vm872, %v904, 0.0
        %v924 = vsel %vm873, %v906, 0.0
        %v925 = vsel %vm874, %v908, 0.0
        %v926 = vsel %vm875, %v910, 0.0
        %v927 = vsub.f32 0.0, %v678
        %v928 = vmul.f32 %v927, 1.442695
        %v929 = vpow.pop %v928
        %v930 = vsel %vm878, %v929, 0.0
        %932 = vset.pattern.permute.xlu0 0
        %933 = vperm.xlu0 %932, %v911
        %v934 = vpop.permute.xlu0 %933
        %937 = vset.pattern.permute.xlu0 0
        %938 = vperm.xlu0 %937, %v912
        %v939 = vpop.permute.xlu0 %938
        %942 = vset.pattern.permute.xlu0 0
        %943 = vperm.xlu0 %942, %v913
        %v944 = vpop.permute.xlu0 %943
        %947 = vset.pattern.permute.xlu0 0
        %948 = vperm.xlu0 %947, %v914
        %v949 = vpop.permute.xlu0 %948
        %952 = vset.pattern.permute.xlu0 0
        %953 = vperm.xlu0 %952, %v915
        %v954 = vpop.permute.xlu0 %953
        %957 = vset.pattern.permute.xlu0 0
        %958 = vperm.xlu0 %957, %v916
        %v959 = vpop.permute.xlu0 %958
        %962 = vset.pattern.permute.xlu0 0
        %963 = vperm.xlu0 %962, %v917
        %v964 = vpop.permute.xlu0 %963
        %967 = vset.pattern.permute.xlu0 0
        %968 = vperm.xlu0 %967, %v918
        %v969 = vpop.permute.xlu0 %968
        %972 = vset.pattern.permute.xlu0 0
        %973 = vperm.xlu0 %972, %v919
        %v974 = vpop.permute.xlu0 %973
        %977 = vset.pattern.permute.xlu0 0
        %978 = vperm.xlu0 %977, %v920
        %v979 = vpop.permute.xlu0 %978
        %982 = vset.pattern.permute.xlu0 0
        %983 = vperm.xlu0 %982, %v921
        %v984 = vpop.permute.xlu0 %983
        %987 = vset.pattern.permute.xlu0 0
        %988 = vperm.xlu0 %987, %v922
        %v989 = vpop.permute.xlu0 %988
        %992 = vset.pattern.permute.xlu0 0
        %993 = vperm.xlu0 %992, %v923
        %v994 = vpop.permute.xlu0 %993
        %997 = vset.pattern.permute.xlu0 0
        %998 = vperm.xlu0 %997, %v924
        %v999 = vpop.permute.xlu0 %998
        %1002 = vset.pattern.permute.xlu0 0
        %1003 = vperm.xlu0 %1002, %v925
        %v1004 = vpop.permute.xlu0 %1003
        %1007 = vset.pattern.permute.xlu0 0
        %1008 = vperm.xlu0 %1007, %v926
        %v1009 = vpop.permute.xlu0 %1008
        %v1012 = vperm.slane %v930, 0
        %v1014 = vmul.f32 %v934, %v1012
        %v1015 = vmul.f32 %v939, %v1012
        %v1016 = vmul.f32 %v944, %v1012
        %v1017 = vmul.f32 %v949, %v1012
        %v1018 = vmul.f32 %v954, %v1012
        %v1019 = vmul.f32 %v959, %v1012
        %v1020 = vmul.f32 %v964, %v1012
        %v1021 = vmul.f32 %v969, %v1012
        %v1022 = vmul.f32 %v974, %v1012
        %v1023 = vmul.f32 %v979, %v1012
        %v1024 = vmul.f32 %v984, %v1012
        %v1025 = vmul.f32 %v989, %v1012
        %v1026 = vmul.f32 %v994, %v1012
        %v1027 = vmul.f32 %v999, %v1012
        %v1028 = vmul.f32 %v1004, %v1012
        %v1029 = vmul.f32 %v1009, %v1012
        %vm1030 = vcmp.gt.f32.partialorder %v1014, 0.9997057
        %vm1031 = vcmp.gt.f32.partialorder %v1015, 0.9997057
        %vm1032 = vcmp.gt.f32.partialorder %v1016, 0.9997057
        %vm1033 = vcmp.gt.f32.partialorder %v1017, 0.9997057
        %vm1034 = vcmp.gt.f32.partialorder %v1018, 0.9997057
        %vm1035 = vcmp.gt.f32.partialorder %v1019, 0.9997057
        %vm1036 = vcmp.gt.f32.partialorder %v1020, 0.9997057
        %vm1037 = vcmp.gt.f32.partialorder %v1021, 0.9997057
        %vm1038 = vcmp.gt.f32.partialorder %v1022, 0.9997057
        %vm1039 = vcmp.gt.f32.partialorder %v1023, 0.9997057
        %vm1040 = vcmp.gt.f32.partialorder %v1024, 0.9997057
        %vm1041 = vcmp.gt.f32.partialorder %v1025, 0.9997057
        %vm1042 = vcmp.gt.f32.partialorder %v1026, 0.9997057
        %vm1043 = vcmp.gt.f32.partialorder %v1027, 0.9997057
        %vm1044 = vcmp.gt.f32.partialorder %v1028, 0.9997057
        %vm1045 = vcmp.gt.f32.partialorder %v1029, 0.9997057
        %v1046 = vsel %vm1030, 1, 0
        %v1047 = vsel %vm1031, 1, 0
        %v1048 = vsel %vm1032, 1, 0
        %v1049 = vsel %vm1033, 1, 0
        %v1050 = vsel %vm1034, 1, 0
        %v1051 = vsel %vm1035, 1, 0
        %v1052 = vsel %vm1036, 1, 0
        %v1053 = vsel %vm1037, 1, 0
        %v1054 = vsel %vm1038, 1, 0
        %v1055 = vsel %vm1039, 1, 0
        %v1056 = vsel %vm1040, 1, 0
        %v1057 = vsel %vm1041, 1, 0
        %v1058 = vsel %vm1042, 1, 0
        %v1059 = vsel %vm1043, 1, 0
        %v1060 = vsel %vm1044, 1, 0
        %v1061 = vsel %vm1045, 1, 0
        %v1062 = vcvt.s32.f32 %v1046
        %v1063 = vcvt.s32.f32 %v1047
        %v1064 = vcvt.s32.f32 %v1048
        %v1065 = vcvt.s32.f32 %v1049
        %v1066 = vcvt.s32.f32 %v1050
        %v1067 = vcvt.s32.f32 %v1051
        %v1068 = vcvt.s32.f32 %v1052
        %v1069 = vcvt.s32.f32 %v1053
        %v1070 = vcvt.s32.f32 %v1054
        %v1071 = vcvt.s32.f32 %v1055
        %v1072 = vcvt.s32.f32 %v1056
        %v1073 = vcvt.s32.f32 %v1057
        %v1074 = vcvt.s32.f32 %v1058
        %v1075 = vcvt.s32.f32 %v1059
        %v1076 = vcvt.s32.f32 %v1060
        %v1077 = vcvt.s32.f32 %v1061
        %v1078 = vadd.f32 %v1062, %v1063
        %v1079 = vadd.f32 %v1078, %v1064
        %v1080 = vadd.f32 %v1079, %v1065
        %v1081 = vadd.f32 %v1080, %v1066
        %v1082 = vadd.f32 %v1081, %v1067
        %v1083 = vadd.f32 %v1082, %v1068
        %v1084 = vadd.f32 %v1083, %v1069
        %v1085 = vadd.f32 %v1084, %v1070
        %v1086 = vadd.f32 %v1085, %v1071
        %v1087 = vadd.f32 %v1086, %v1072
        %v1088 = vadd.f32 %v1087, %v1073
        %v1089 = vadd.f32 %v1088, %v1074
        %v1090 = vadd.f32 %v1089, %v1075
        %v1091 = vadd.f32 %v1090, %v1076
        %v1092 = vadd.f32 %v1091, %v1077
        %1093 = vadd.xlane.f32.xlu0 %v1092
        %v1094 = vpop.xlane.xlu0 %1093
        %v1095 = vrot.slane %v1094, 4
        %v1096 = vadd.f32 %v1094, %v1095
        %v1097 = vrot.slane %v1096, 2
        %v1098 = vadd.f32 %v1096, %v1097
        %v1099 = vrot.slane %v1098, 1
        %v1100 = vadd.f32 %v1098, %v1099
        %s1101 = vtos %v1100
        %v1102 = vadd.f32 %v1014, 1.0
        %v1103 = vadd.f32 %v1015, 1.0
        %v1104 = vadd.f32 %v1016, 1.0
        %v1105 = vadd.f32 %v1017, 1.0
        %v1106 = vadd.f32 %v1018, 1.0
        %v1107 = vadd.f32 %v1019, 1.0
        %v1108 = vadd.f32 %v1020, 1.0
        %v1109 = vadd.f32 %v1021, 1.0
        %v1110 = vadd.f32 %v1022, 1.0
        %v1111 = vadd.f32 %v1023, 1.0
        %v1112 = vadd.f32 %v1024, 1.0
        %v1113 = vadd.f32 %v1025, 1.0
        %v1114 = vadd.f32 %v1026, 1.0
        %v1115 = vadd.f32 %v1027, 1.0
        %v1116 = vadd.f32 %v1028, 1.0
        %v1117 = vadd.f32 %v1029, 1.0
        %v1118 = vlog2.pop %v1102
        %v1119 = vmul.f32 %v1118, 0.6931472
        %v1120 = vlog2.pop %v1103
        %v1121 = vmul.f32 %v1120, 0.6931472
        %v1122 = vlog2.pop %v1104
        %v1123 = vmul.f32 %v1122, 0.6931472
        %v1124 = vlog2.pop %v1105
        %v1125 = vmul.f32 %v1124, 0.6931472
        %v1126 = vlog2.pop %v1106
        %v1127 = vmul.f32 %v1126, 0.6931472
        %v1128 = vlog2.pop %v1107
        %v1129 = vmul.f32 %v1128, 0.6931472
        %v1130 = vlog2.pop %v1108
        %v1131 = vmul.f32 %v1130, 0.6931472
        %v1132 = vlog2.pop %v1109
        %v1133 = vmul.f32 %v1132, 0.6931472
        %v1134 = vlog2.pop %v1110
        %v1135 = vmul.f32 %v1134, 0.6931472
        %v1136 = vlog2.pop %v1111
        %v1137 = vmul.f32 %v1136, 0.6931472
        %v1138 = vlog2.pop %v1112
        %v1139 = vmul.f32 %v1138, 0.6931472
        %v1140 = vlog2.pop %v1113
        %v1141 = vmul.f32 %v1140, 0.6931472
        %v1142 = vlog2.pop %v1114
        %v1143 = vmul.f32 %v1142, 0.6931472
        %v1144 = vlog2.pop %v1115
        %v1145 = vmul.f32 %v1144, 0.6931472
        %v1146 = vlog2.pop %v1116
        %v1147 = vmul.f32 %v1146, 0.6931472
        %v1148 = vlog2.pop %v1117
        %v1149 = vmul.f32 %v1148, 0.6931472
        %v1150 = vsel %vm1030, %v1119, 0.0
        %v1151 = vsel %vm1031, %v1121, 0.0
        %v1152 = vsel %vm1032, %v1123, 0.0
        %v1153 = vsel %vm1033, %v1125, 0.0
        %v1154 = vsel %vm1034, %v1127, 0.0
        %v1155 = vsel %vm1035, %v1129, 0.0
        %v1156 = vsel %vm1036, %v1131, 0.0
        %v1157 = vsel %vm1037, %v1133, 0.0
        %v1158 = vsel %vm1038, %v1135, 0.0
        %v1159 = vsel %vm1039, %v1137, 0.0
        %v1160 = vsel %vm1040, %v1139, 0.0
        %v1161 = vsel %vm1041, %v1141, 0.0
        %v1162 = vsel %vm1042, %v1143, 0.0
        %v1163 = vsel %vm1043, %v1145, 0.0
        %v1164 = vsel %vm1044, %v1147, 0.0
        %v1165 = vsel %vm1045, %v1149, 0.0
        %v1166 = vadd.f32 %v1150, %v1151
        %v1167 = vadd.f32 %v1166, %v1152
        %v1168 = vadd.f32 %v1167, %v1153
        %v1169 = vadd.f32 %v1168, %v1154
        %v1170 = vadd.f32 %v1169, %v1155
        %v1171 = vadd.f32 %v1170, %v1156
        %v1172 = vadd.f32 %v1171, %v1157
        %v1173 = vadd.f32 %v1172, %v1158
        %v1174 = vadd.f32 %v1173, %v1159
        %v1175 = vadd.f32 %v1174, %v1160
        %v1176 = vadd.f32 %v1175, %v1161
        %v1177 = vadd.f32 %v1176, %v1162
        %v1178 = vadd.f32 %v1177, %v1163
        %v1179 = vadd.f32 %v1178, %v1164
        %v1180 = vadd.f32 %v1179, %v1165
        %1181 = vadd.xlane.f32.xlu0 %v1180
        %v1182 = vpop.xlane.xlu0 %1181
        %v1183 = vrot.slane %v1182, 4
        %v1184 = vadd.f32 %v1182, %v1183
        %v1185 = vrot.slane %v1184, 2
        %v1186 = vadd.f32 %v1184, %v1185
        %v1187 = vrot.slane %v1186, 1
        %v1188 = vadd.f32 %v1186, %v1187
        %s1189 = vtos %v1188
        %v1190 = vstv %s1189
        %v1191 = vmul.f32 %v1190, %v767
        %v1192 = vadd.f32 %v1191, 0.0
        %v1193 = vstv %s1101
        %v1194 = vmul.f32 %v1193, %v767
        %v1195 = vadd.f32 %v1194, 0.0
        %s1196 = scalar_select %p789, 1.0, 0.0
        %v1197 = vstv %s1196
        %v1198 = vmul.f32 %v1197, %v767
        %v1199 = vadd.f32 %v1198, 0.0
        %v1200 = vsel %vm860, %v695, 0.0
        %v1201 = vsel %vm861, %v696, 0.0
        %v1202 = vsel %vm862, %v697, 0.0
        %v1203 = vsel %vm863, %v698, 0.0
        %v1204 = vsel %vm864, %v699, 0.0
        %v1205 = vsel %vm865, %v700, 0.0
        %v1206 = vsel %vm866, %v701, 0.0
        %v1207 = vsel %vm867, %v702, 0.0
        %v1208 = vsel %vm868, %v703, 0.0
        %v1209 = vsel %vm869, %v704, 0.0
        %v1210 = vsel %vm870, %v705, 0.0
        %v1211 = vsel %vm871, %v706, 0.0
        %v1212 = vsel %vm872, %v707, 0.0
        %v1213 = vsel %vm873, %v708, 0.0
        %v1214 = vsel %vm874, %v709, 0.0
        %v1215 = vsel %vm875, %v710, 0.0
        %vm1216 = vcmask 7168
        %v1217 = vsel %vm1216, %v1200, 0.0
        %v1218 = vsel %vm1216, %v1201, 0.0
        %v1219 = vadd.f32 %v1217, %v1218
        %v1220 = vsel %vm1216, %v1202, 0.0
        %v1221 = vadd.f32 %v1219, %v1220
        %v1222 = vsel %vm1216, %v1203, 0.0
        %v1223 = vadd.f32 %v1221, %v1222
        %v1224 = vsel %vm1216, %v1204, 0.0
        %v1225 = vadd.f32 %v1223, %v1224
        %v1226 = vsel %vm1216, %v1205, 0.0
        %v1227 = vadd.f32 %v1225, %v1226
        %v1228 = vsel %vm1216, %v1206, 0.0
        %v1229 = vadd.f32 %v1227, %v1228
        %v1230 = vsel %vm1216, %v1207, 0.0
        %v1231 = vadd.f32 %v1229, %v1230
        %v1232 = vsel %vm1216, %v1208, 0.0
        %v1233 = vadd.f32 %v1231, %v1232
        %v1234 = vsel %vm1216, %v1209, 0.0
        %v1235 = vadd.f32 %v1233, %v1234
        %v1236 = vsel %vm1216, %v1210, 0.0
        %v1237 = vadd.f32 %v1235, %v1236
        %v1238 = vsel %vm1216, %v1211, 0.0
        %v1239 = vadd.f32 %v1237, %v1238
        %v1240 = vsel %vm1216, %v1212, 0.0
        %v1241 = vadd.f32 %v1239, %v1240
        %v1242 = vsel %vm1216, %v1213, 0.0
        %v1243 = vadd.f32 %v1241, %v1242
        %v1244 = vsel %vm1216, %v1214, 0.0
        %v1245 = vadd.f32 %v1243, %v1244
        %v1246 = vsel %vm1216, %v1215, 0.0
        %v1247 = vadd.f32 %v1245, %v1246
        %1248 = vadd.xlane.f32.xlu0 %v1247
        %v1249 = vpop.xlane.xlu0 %1248
        %v1250 = vrot.slane %v1249, 4
        %v1251 = vadd.f32 %v1249, %v1250
        %v1252 = vrot.slane %v1251, 2
        %v1253 = vadd.f32 %v1251, %v1252
        %v1254 = vrot.slane %v1253, 1
        %v1255 = vadd.f32 %v1253, %v1254
        %s1256 = vtos %v1255
        %s1257 = sadd.f32 %s1256, 0.0
        %v1258 = vsel %vm860, 1, 0
        %v1259 = vsel %vm861, 1, 0
        %v1260 = vsel %vm862, 1, 0
        %v1261 = vsel %vm863, 1, 0
        %v1262 = vsel %vm864, 1, 0
        %v1263 = vsel %vm865, 1, 0
        %v1264 = vsel %vm866, 1, 0
        %v1265 = vsel %vm867, 1, 0
        %v1266 = vsel %vm868, 1, 0
        %v1267 = vsel %vm869, 1, 0
        %v1268 = vsel %vm870, 1, 0
        %v1269 = vsel %vm871, 1, 0
        %v1270 = vsel %vm872, 1, 0
        %v1271 = vsel %vm873, 1, 0
        %v1272 = vsel %vm874, 1, 0
        %v1273 = vsel %vm875, 1, 0
        %v1274 = vcvt.s32.f32 %v1258
        %v1275 = vcvt.s32.f32 %v1259
        %v1276 = vcvt.s32.f32 %v1260
        %v1277 = vcvt.s32.f32 %v1261
        %v1278 = vcvt.s32.f32 %v1262
        %v1279 = vcvt.s32.f32 %v1263
        %v1280 = vcvt.s32.f32 %v1264
        %v1281 = vcvt.s32.f32 %v1265
        %v1282 = vcvt.s32.f32 %v1266
        %v1283 = vcvt.s32.f32 %v1267
        %v1284 = vcvt.s32.f32 %v1268
        %v1285 = vcvt.s32.f32 %v1269
        %v1286 = vcvt.s32.f32 %v1270
        %v1287 = vcvt.s32.f32 %v1271
        %v1288 = vcvt.s32.f32 %v1272
        %v1289 = vcvt.s32.f32 %v1273
        %v1290 = vsel %vm1216, %v1274, 0.0
        %v1291 = vsel %vm1216, %v1275, 0.0
        %v1292 = vadd.f32 %v1290, %v1291
        %v1293 = vsel %vm1216, %v1276, 0.0
        %v1294 = vadd.f32 %v1292, %v1293
        %v1295 = vsel %vm1216, %v1277, 0.0
        %v1296 = vadd.f32 %v1294, %v1295
        %v1297 = vsel %vm1216, %v1278, 0.0
        %v1298 = vadd.f32 %v1296, %v1297
        %v1299 = vsel %vm1216, %v1279, 0.0
        %v1300 = vadd.f32 %v1298, %v1299
        %v1301 = vsel %vm1216, %v1280, 0.0
        %v1302 = vadd.f32 %v1300, %v1301
        %v1303 = vsel %vm1216, %v1281, 0.0
        %v1304 = vadd.f32 %v1302, %v1303
        %v1305 = vsel %vm1216, %v1282, 0.0
        %v1306 = vadd.f32 %v1304, %v1305
        %v1307 = vsel %vm1216, %v1283, 0.0
        %v1308 = vadd.f32 %v1306, %v1307
        %v1309 = vsel %vm1216, %v1284, 0.0
        %v1310 = vadd.f32 %v1308, %v1309
        %v1311 = vsel %vm1216, %v1285, 0.0
        %v1312 = vadd.f32 %v1310, %v1311
        %v1313 = vsel %vm1216, %v1286, 0.0
        %v1314 = vadd.f32 %v1312, %v1313
        %v1315 = vsel %vm1216, %v1287, 0.0
        %v1316 = vadd.f32 %v1314, %v1315
        %v1317 = vsel %vm1216, %v1288, 0.0
        %v1318 = vadd.f32 %v1316, %v1317
        %v1319 = vsel %vm1216, %v1289, 0.0
        %v1320 = vadd.f32 %v1318, %v1319
        %1321 = vadd.xlane.f32.xlu0 %v1320
        %v1322 = vpop.xlane.xlu0 %1321
        %v1323 = vrot.slane %v1322, 4
        %v1324 = vadd.f32 %v1322, %v1323
        %v1325 = vrot.slane %v1324, 2
        %v1326 = vadd.f32 %v1324, %v1325
        %v1327 = vrot.slane %v1326, 1
        %v1328 = vadd.f32 %v1326, %v1327
        %s1329 = vtos %v1328
        %s1330 = sadd.f32 %s1329, 0.0
        %v1331 = vsel %vm878, %v678, 0.0
        %vm1332 = vcmask 1040384
        %v1333 = vsel %vm1332, %v1331, 0.0
        %1334 = vadd.xlane.f32.xlu0 %v1333
        %v1335 = vpop.xlane.xlu0 %1334
        %v1336 = vrot.slane %v1335, 4
        %v1337 = vadd.f32 %v1335, %v1336
        %v1338 = vrot.slane %v1337, 2
        %v1339 = vadd.f32 %v1337, %v1338
        %v1340 = vrot.slane %v1339, 1
        %v1341 = vadd.f32 %v1339, %v1340
        %s1342 = vtos %v1341
        %s1343 = sadd.f32 %s1342, 0.0
        %v1344 = vsel %vm878, 1, 0
        %v1345 = vcvt.s32.f32 %v1344
        %v1346 = vsel %vm1332, %v1345, 0.0
        %1347 = vadd.xlane.f32.xlu0 %v1346
        %v1348 = vpop.xlane.xlu0 %1347
        %v1349 = vrot.slane %v1348, 4
        %v1350 = vadd.f32 %v1348, %v1349
        %v1351 = vrot.slane %v1350, 2
        %v1352 = vadd.f32 %v1350, %v1351
        %v1353 = vrot.slane %v1352, 1
        %v1354 = vadd.f32 %v1352, %v1353
        %s1355 = vtos %v1354
        %s1356 = sadd.f32 %s1355, 0.0
        %s1357 = sadd.s32 %s764, 1
        %p1358 = scmp.lt.s32.totalorder %s1357, 32
        %s1359 = sld [smem:[#allocation2 + %s1357]]
        %v1360 = vstv %s1359
        %vm1361 = vcmp.eq.s32.totalorder %v712, %v1360
        %vm1362 = vcmp.eq.s32.totalorder %v713, %v1360
        %vm1363 = vcmp.eq.s32.totalorder %v714, %v1360
        %vm1364 = vcmp.eq.s32.totalorder %v715, %v1360
        %vm1365 = vcmp.eq.s32.totalorder %v716, %v1360
        %vm1366 = vcmp.eq.s32.totalorder %v717, %v1360
        %vm1367 = vcmp.eq.s32.totalorder %v718, %v1360
        %vm1368 = vcmp.eq.s32.totalorder %v719, %v1360
        %vm1369 = vcmp.eq.s32.totalorder %v720, %v1360
        %vm1370 = vcmp.eq.s32.totalorder %v721, %v1360
        %vm1371 = vcmp.eq.s32.totalorder %v722, %v1360
        %vm1372 = vcmp.eq.s32.totalorder %v723, %v1360
        %vm1373 = vcmp.eq.s32.totalorder %v724, %v1360
        %vm1374 = vcmp.eq.s32.totalorder %v725, %v1360
        %vm1375 = vcmp.eq.s32.totalorder %v726, %v1360
        %vm1376 = vcmp.eq.s32.totalorder %v727, %v1360
        %v1377 = vstv %s1357
        %vm1378 = vcmp.ne.s32.totalorder %v729, %v1377
        %vm1379 = vcmp.ne.s32.totalorder %v730, %v1377
        %vm1380 = vcmp.ne.s32.totalorder %v731, %v1377
        %vm1381 = vcmp.ne.s32.totalorder %v732, %v1377
        %vm1382 = vcmp.ne.s32.totalorder %v733, %v1377
        %vm1383 = vcmp.ne.s32.totalorder %v734, %v1377
        %vm1384 = vcmp.ne.s32.totalorder %v735, %v1377
        %vm1385 = vcmp.ne.s32.totalorder %v736, %v1377
        %vm1386 = vcmp.ne.s32.totalorder %v737, %v1377
        %vm1387 = vcmp.ne.s32.totalorder %v738, %v1377
        %vm1388 = vcmp.ne.s32.totalorder %v739, %v1377
        %vm1389 = vcmp.ne.s32.totalorder %v740, %v1377
        %vm1390 = vcmp.ne.s32.totalorder %v741, %v1377
        %vm1391 = vcmp.ne.s32.totalorder %v742, %v1377
        %vm1392 = vcmp.ne.s32.totalorder %v743, %v1377
        %vm1393 = vcmp.ne.s32.totalorder %v744, %v1377
        %vm1394 = vmand %vm1361, %vm1378
        %vm1395 = vmand %vm1362, %vm1379
        %vm1396 = vmand %vm1363, %vm1380
        %vm1397 = vmand %vm1364, %vm1381
        %vm1398 = vmand %vm1365, %vm1382
        %vm1399 = vmand %vm1366, %vm1383
        %vm1400 = vmand %vm1367, %vm1384
        %vm1401 = vmand %vm1368, %vm1385
        %vm1402 = vmand %vm1369, %vm1386
        %vm1403 = vmand %vm1370, %vm1387
        %vm1404 = vmand %vm1371, %vm1388
        %vm1405 = vmand %vm1372, %vm1389
        %vm1406 = vmand %vm1373, %vm1390
        %vm1407 = vmand %vm1374, %vm1391
        %vm1408 = vmand %vm1375, %vm1392
        %vm1409 = vmand %vm1376, %vm1393
        %s1410 = scalar_select %p1358, 1, 0
        %v1411 = vstv %s1410
        %vm1412 = vcmp.eq.s32.totalorder %v1411, 1
        %vm1413 = vmand %vm747, %vm1412
        %vm1414 = vmand %vm748, %vm1412
        %vm1415 = vmand %vm749, %vm1412
        %vm1416 = vmand %vm750, %vm1412
        %vm1417 = vmand %vm751, %vm1412
        %vm1418 = vmand %vm752, %vm1412
        %vm1419 = vmand %vm753, %vm1412
        %vm1420 = vmand %vm754, %vm1412
        %vm1421 = vmand %vm755, %vm1412
        %vm1422 = vmand %vm756, %vm1412
        %vm1423 = vmand %vm757, %vm1412
        %vm1424 = vmand %vm758, %vm1412
        %vm1425 = vmand %vm759, %vm1412
        %vm1426 = vmand %vm760, %vm1412
        %vm1427 = vmand %vm761, %vm1412
        %vm1428 = vmand %vm762, %vm1412
        %vm1429 = vmand %vm1394, %vm1413
        %vm1430 = vmand %vm1395, %vm1414
        %vm1431 = vmand %vm1396, %vm1415
        %vm1432 = vmand %vm1397, %vm1416
        %vm1433 = vmand %vm1398, %vm1417
        %vm1434 = vmand %vm1399, %vm1418
        %vm1435 = vmand %vm1400, %vm1419
        %vm1436 = vmand %vm1401, %vm1420
        %vm1437 = vmand %vm1402, %vm1421
        %vm1438 = vmand %vm1403, %vm1422
        %vm1439 = vmand %vm1404, %vm1423
        %vm1440 = vmand %vm1405, %vm1424
        %vm1441 = vmand %vm1406, %vm1425
        %vm1442 = vmand %vm1407, %vm1426
        %vm1443 = vmand %vm1408, %vm1427
        %vm1444 = vmand %vm1409, %vm1428
        %vm1445 = vcmp.ne.s32.totalorder %v711, %v1360
        %vm1446 = vmand %vm763, %vm1412
        %vm1447 = vmand %vm1445, %vm1446
        %1464 = vrot.lane.b32.xlu0 %v880, 127
        %v1465 = vpop.permute.xlu0 %1464
        %1466 = vrot.lane.b32.xlu0 %v882, 127
        %v1467 = vpop.permute.xlu0 %1466
        %1468 = vrot.lane.b32.xlu0 %v884, 127
        %v1469 = vpop.permute.xlu0 %1468
        %1470 = vrot.lane.b32.xlu0 %v886, 127
        %v1471 = vpop.permute.xlu0 %1470
        %1472 = vrot.lane.b32.xlu0 %v888, 127
        %v1473 = vpop.permute.xlu0 %1472
        %1474 = vrot.lane.b32.xlu0 %v890, 127
        %v1475 = vpop.permute.xlu0 %1474
        %1476 = vrot.lane.b32.xlu0 %v892, 127
        %v1477 = vpop.permute.xlu0 %1476
        %1478 = vrot.lane.b32.xlu0 %v894, 127
        %v1479 = vpop.permute.xlu0 %1478
        %1480 = vrot.lane.b32.xlu0 %v896, 127
        %v1481 = vpop.permute.xlu0 %1480
        %1482 = vrot.lane.b32.xlu0 %v898, 127
        %v1483 = vpop.permute.xlu0 %1482
        %1484 = vrot.lane.b32.xlu0 %v900, 127
        %v1485 = vpop.permute.xlu0 %1484
        %1486 = vrot.lane.b32.xlu0 %v902, 127
        %v1487 = vpop.permute.xlu0 %1486
        %1488 = vrot.lane.b32.xlu0 %v904, 127
        %v1489 = vpop.permute.xlu0 %1488
        %1490 = vrot.lane.b32.xlu0 %v906, 127
        %v1491 = vpop.permute.xlu0 %1490
        %1492 = vrot.lane.b32.xlu0 %v908, 127
        %v1493 = vpop.permute.xlu0 %1492
        %1494 = vrot.lane.b32.xlu0 %v910, 127
        %v1495 = vpop.permute.xlu0 %1494
        %v1512 = vsel %vm1429, %v1465, 0.0
        %v1513 = vsel %vm1430, %v1467, 0.0
        %v1514 = vsel %vm1431, %v1469, 0.0
        %v1515 = vsel %vm1432, %v1471, 0.0
        %v1516 = vsel %vm1433, %v1473, 0.0
        %v1517 = vsel %vm1434, %v1475, 0.0
        %v1518 = vsel %vm1435, %v1477, 0.0
        %v1519 = vsel %vm1436, %v1479, 0.0
        %v1520 = vsel %vm1437, %v1481, 0.0
        %v1521 = vsel %vm1438, %v1483, 0.0
        %v1522 = vsel %vm1439, %v1485, 0.0
        %v1523 = vsel %vm1440, %v1487, 0.0
        %v1524 = vsel %vm1441, %v1489, 0.0
        %v1525 = vsel %vm1442, %v1491, 0.0
        %v1526 = vsel %vm1443, %v1493, 0.0
        %v1527 = vsel %vm1444, %v1495, 0.0
        %1529 = vst [vmem:[#allocation1] sm:$0xff] %v929
        %s1530 = scalar_lea.vmem [#allocation1], 1
        %v1531 = vld [vmem:[%s1530] ss:$9 sm:$0xff]
        %v1533 = vsel %vm1447, %v1531, 0.0
        %1535 = vset.pattern.permute.xlu0 0
        %1536 = vperm.xlu0 %1535, %v1512
        %v1537 = vpop.permute.xlu0 %1536
        %1540 = vset.pattern.permute.xlu0 0
        %1541 = vperm.xlu0 %1540, %v1513
        %v1542 = vpop.permute.xlu0 %1541
        %1545 = vset.pattern.permute.xlu0 0
        %1546 = vperm.xlu0 %1545, %v1514
        %v1547 = vpop.permute.xlu0 %1546
        %1550 = vset.pattern.permute.xlu0 0
        %1551 = vperm.xlu0 %1550, %v1515
        %v1552 = vpop.permute.xlu0 %1551
        %1555 = vset.pattern.permute.xlu0 0
        %1556 = vperm.xlu0 %1555, %v1516
        %v1557 = vpop.permute.xlu0 %1556
        %1560 = vset.pattern.permute.xlu0 0
        %1561 = vperm.xlu0 %1560, %v1517
        %v1562 = vpop.permute.xlu0 %1561
        %1565 = vset.pattern.permute.xlu0 0
        %1566 = vperm.xlu0 %1565, %v1518
        %v1567 = vpop.permute.xlu0 %1566
        %1570 = vset.pattern.permute.xlu0 0
        %1571 = vperm.xlu0 %1570, %v1519
        %v1572 = vpop.permute.xlu0 %1571
        %1575 = vset.pattern.permute.xlu0 0
        %1576 = vperm.xlu0 %1575, %v1520
        %v1577 = vpop.permute.xlu0 %1576
        %1580 = vset.pattern.permute.xlu0 0
        %1581 = vperm.xlu0 %1580, %v1521
        %v1582 = vpop.permute.xlu0 %1581
        %1585 = vset.pattern.permute.xlu0 0
        %1586 = vperm.xlu0 %1585, %v1522
        %v1587 = vpop.permute.xlu0 %1586
        %1590 = vset.pattern.permute.xlu0 0
        %1591 = vperm.xlu0 %1590, %v1523
        %v1592 = vpop.permute.xlu0 %1591
        %1595 = vset.pattern.permute.xlu0 0
        %1596 = vperm.xlu0 %1595, %v1524
        %v1597 = vpop.permute.xlu0 %1596
        %1600 = vset.pattern.permute.xlu0 0
        %1601 = vperm.xlu0 %1600, %v1525
        %v1602 = vpop.permute.xlu0 %1601
        %1605 = vset.pattern.permute.xlu0 0
        %1606 = vperm.xlu0 %1605, %v1526
        %v1607 = vpop.permute.xlu0 %1606
        %1610 = vset.pattern.permute.xlu0 0
        %1611 = vperm.xlu0 %1610, %v1527
        %v1612 = vpop.permute.xlu0 %1611
        %v1615 = vperm.slane %v1533, 0
        %v1617 = vmul.f32 %v1537, %v1615
        %v1618 = vmul.f32 %v1542, %v1615
        %v1619 = vmul.f32 %v1547, %v1615
        %v1620 = vmul.f32 %v1552, %v1615
        %v1621 = vmul.f32 %v1557, %v1615
        %v1622 = vmul.f32 %v1562, %v1615
        %v1623 = vmul.f32 %v1567, %v1615
        %v1624 = vmul.f32 %v1572, %v1615
        %v1625 = vmul.f32 %v1577, %v1615
        %v1626 = vmul.f32 %v1582, %v1615
        %v1627 = vmul.f32 %v1587, %v1615
        %v1628 = vmul.f32 %v1592, %v1615
        %v1629 = vmul.f32 %v1597, %v1615
        %v1630 = vmul.f32 %v1602, %v1615
        %v1631 = vmul.f32 %v1607, %v1615
        %v1632 = vmul.f32 %v1612, %v1615
        %vm1633 = vcmp.gt.f32.partialorder %v1617, 0.9997057
        %vm1634 = vcmp.gt.f32.partialorder %v1618, 0.9997057
        %vm1635 = vcmp.gt.f32.partialorder %v1619, 0.9997057
        %vm1636 = vcmp.gt.f32.partialorder %v1620, 0.9997057
        %vm1637 = vcmp.gt.f32.partialorder %v1621, 0.9997057
        %vm1638 = vcmp.gt.f32.partialorder %v1622, 0.9997057
        %vm1639 = vcmp.gt.f32.partialorder %v1623, 0.9997057
        %vm1640 = vcmp.gt.f32.partialorder %v1624, 0.9997057
        %vm1641 = vcmp.gt.f32.partialorder %v1625, 0.9997057
        %vm1642 = vcmp.gt.f32.partialorder %v1626, 0.9997057
        %vm1643 = vcmp.gt.f32.partialorder %v1627, 0.9997057
        %vm1644 = vcmp.gt.f32.partialorder %v1628, 0.9997057
        %vm1645 = vcmp.gt.f32.partialorder %v1629, 0.9997057
        %vm1646 = vcmp.gt.f32.partialorder %v1630, 0.9997057
        %vm1647 = vcmp.gt.f32.partialorder %v1631, 0.9997057
        %vm1648 = vcmp.gt.f32.partialorder %v1632, 0.9997057
        %v1649 = vsel %vm1633, 1, 0
        %v1650 = vsel %vm1634, 1, 0
        %v1651 = vsel %vm1635, 1, 0
        %v1652 = vsel %vm1636, 1, 0
        %v1653 = vsel %vm1637, 1, 0
        %v1654 = vsel %vm1638, 1, 0
        %v1655 = vsel %vm1639, 1, 0
        %v1656 = vsel %vm1640, 1, 0
        %v1657 = vsel %vm1641, 1, 0
        %v1658 = vsel %vm1642, 1, 0
        %v1659 = vsel %vm1643, 1, 0
        %v1660 = vsel %vm1644, 1, 0
        %v1661 = vsel %vm1645, 1, 0
        %v1662 = vsel %vm1646, 1, 0
        %v1663 = vsel %vm1647, 1, 0
        %v1664 = vsel %vm1648, 1, 0
        %v1665 = vcvt.s32.f32 %v1649
        %v1666 = vcvt.s32.f32 %v1650
        %v1667 = vcvt.s32.f32 %v1651
        %v1668 = vcvt.s32.f32 %v1652
        %v1669 = vcvt.s32.f32 %v1653
        %v1670 = vcvt.s32.f32 %v1654
        %v1671 = vcvt.s32.f32 %v1655
        %v1672 = vcvt.s32.f32 %v1656
        %v1673 = vcvt.s32.f32 %v1657
        %v1674 = vcvt.s32.f32 %v1658
        %v1675 = vcvt.s32.f32 %v1659
        %v1676 = vcvt.s32.f32 %v1660
        %v1677 = vcvt.s32.f32 %v1661
        %v1678 = vcvt.s32.f32 %v1662
        %v1679 = vcvt.s32.f32 %v1663
        %v1680 = vcvt.s32.f32 %v1664
        %v1681 = vadd.f32 %v1665, %v1666
        %v1682 = vadd.f32 %v1681, %v1667
        %v1683 = vadd.f32 %v1682, %v1668
        %v1684 = vadd.f32 %v1683, %v1669
        %v1685 = vadd.f32 %v1684, %v1670
        %v1686 = vadd.f32 %v1685, %v1671
        %v1687 = vadd.f32 %v1686, %v1672
        %v1688 = vadd.f32 %v1687, %v1673
        %v1689 = vadd.f32 %v1688, %v1674
        %v1690 = vadd.f32 %v1689, %v1675
        %v1691 = vadd.f32 %v1690, %v1676
        %v1692 = vadd.f32 %v1691, %v1677
        %v1693 = vadd.f32 %v1692, %v1678
        %v1694 = vadd.f32 %v1693, %v1679
        %v1695 = vadd.f32 %v1694, %v1680
        %1696 = vadd.xlane.f32.xlu0 %v1695
        %v1697 = vpop.xlane.xlu0 %1696
        %v1698 = vrot.slane %v1697, 4
        %v1699 = vadd.f32 %v1697, %v1698
        %v1700 = vrot.slane %v1699, 2
        %v1701 = vadd.f32 %v1699, %v1700
        %v1702 = vrot.slane %v1701, 1
        %v1703 = vadd.f32 %v1701, %v1702
        %s1704 = vtos %v1703
        %v1705 = vadd.f32 %v1617, 1.0
        %v1706 = vadd.f32 %v1618, 1.0
        %v1707 = vadd.f32 %v1619, 1.0
        %v1708 = vadd.f32 %v1620, 1.0
        %v1709 = vadd.f32 %v1621, 1.0
        %v1710 = vadd.f32 %v1622, 1.0
        %v1711 = vadd.f32 %v1623, 1.0
        %v1712 = vadd.f32 %v1624, 1.0
        %v1713 = vadd.f32 %v1625, 1.0
        %v1714 = vadd.f32 %v1626, 1.0
        %v1715 = vadd.f32 %v1627, 1.0
        %v1716 = vadd.f32 %v1628, 1.0
        %v1717 = vadd.f32 %v1629, 1.0
        %v1718 = vadd.f32 %v1630, 1.0
        %v1719 = vadd.f32 %v1631, 1.0
        %v1720 = vadd.f32 %v1632, 1.0
        %v1721 = vlog2.pop %v1705
        %v1722 = vmul.f32 %v1721, 0.6931472
        %v1723 = vlog2.pop %v1706
        %v1724 = vmul.f32 %v1723, 0.6931472
        %v1725 = vlog2.pop %v1707
        %v1726 = vmul.f32 %v1725, 0.6931472
        %v1727 = vlog2.pop %v1708
        %v1728 = vmul.f32 %v1727, 0.6931472
        %v1729 = vlog2.pop %v1709
        %v1730 = vmul.f32 %v1729, 0.6931472
        %v1731 = vlog2.pop %v1710
        %v1732 = vmul.f32 %v1731, 0.6931472
        %v1733 = vlog2.pop %v1711
        %v1734 = vmul.f32 %v1733, 0.6931472
        %v1735 = vlog2.pop %v1712
        %v1736 = vmul.f32 %v1735, 0.6931472
        %v1737 = vlog2.pop %v1713
        %v1738 = vmul.f32 %v1737, 0.6931472
        %v1739 = vlog2.pop %v1714
        %v1740 = vmul.f32 %v1739, 0.6931472
        %v1741 = vlog2.pop %v1715
        %v1742 = vmul.f32 %v1741, 0.6931472
        %v1743 = vlog2.pop %v1716
        %v1744 = vmul.f32 %v1743, 0.6931472
        %v1745 = vlog2.pop %v1717
        %v1746 = vmul.f32 %v1745, 0.6931472
        %v1747 = vlog2.pop %v1718
        %v1748 = vmul.f32 %v1747, 0.6931472
        %v1749 = vlog2.pop %v1719
        %v1750 = vmul.f32 %v1749, 0.6931472
        %v1751 = vlog2.pop %v1720
        %v1752 = vmul.f32 %v1751, 0.6931472
        %v1753 = vsel %vm1633, %v1722, 0.0
        %v1754 = vsel %vm1634, %v1724, 0.0
        %v1755 = vsel %vm1635, %v1726, 0.0
        %v1756 = vsel %vm1636, %v1728, 0.0
        %v1757 = vsel %vm1637, %v1730, 0.0
        %v1758 = vsel %vm1638, %v1732, 0.0
        %v1759 = vsel %vm1639, %v1734, 0.0
        %v1760 = vsel %vm1640, %v1736, 0.0
        %v1761 = vsel %vm1641, %v1738, 0.0
        %v1762 = vsel %vm1642, %v1740, 0.0
        %v1763 = vsel %vm1643, %v1742, 0.0
        %v1764 = vsel %vm1644, %v1744, 0.0
        %v1765 = vsel %vm1645, %v1746, 0.0
        %v1766 = vsel %vm1646, %v1748, 0.0
        %v1767 = vsel %vm1647, %v1750, 0.0
        %v1768 = vsel %vm1648, %v1752, 0.0
        %v1769 = vadd.f32 %v1753, %v1754
        %v1770 = vadd.f32 %v1769, %v1755
        %v1771 = vadd.f32 %v1770, %v1756
        %v1772 = vadd.f32 %v1771, %v1757
        %v1773 = vadd.f32 %v1772, %v1758
        %v1774 = vadd.f32 %v1773, %v1759
        %v1775 = vadd.f32 %v1774, %v1760
        %v1776 = vadd.f32 %v1775, %v1761
        %v1777 = vadd.f32 %v1776, %v1762
        %v1778 = vadd.f32 %v1777, %v1763
        %v1779 = vadd.f32 %v1778, %v1764
        %v1780 = vadd.f32 %v1779, %v1765
        %v1781 = vadd.f32 %v1780, %v1766
        %v1782 = vadd.f32 %v1781, %v1767
        %v1783 = vadd.f32 %v1782, %v1768
        %1784 = vadd.xlane.f32.xlu0 %v1783
        %v1785 = vpop.xlane.xlu0 %1784
        %v1786 = vrot.slane %v1785, 4
        %v1787 = vadd.f32 %v1785, %v1786
        %v1788 = vrot.slane %v1787, 2
        %v1789 = vadd.f32 %v1787, %v1788
        %v1790 = vrot.slane %v1789, 1
        %v1791 = vadd.f32 %v1789, %v1790
        %s1792 = vtos %v1791
        %v1793 = vstv %s1792
        %v1794 = vmul.f32 %v1793, %v770
        %v1795 = vadd.f32 %v1192, %v1794
        %v1796 = vstv %s1704
        %v1797 = vmul.f32 %v1796, %v770
        %v1798 = vadd.f32 %v1195, %v1797
        %s1799 = scalar_select %p1358, 1.0, 0.0
        %v1800 = vstv %s1799
        %v1801 = vmul.f32 %v1800, %v770
        %v1802 = vadd.f32 %v1199, %v1801
        %1819 = vrot.lane.b32.xlu0 %v695, 127
        %v1820 = vpop.permute.xlu0 %1819
        %1821 = vrot.lane.b32.xlu0 %v696, 127
        %v1822 = vpop.permute.xlu0 %1821
        %1823 = vrot.lane.b32.xlu0 %v697, 127
        %v1824 = vpop.permute.xlu0 %1823
        %1825 = vrot.lane.b32.xlu0 %v698, 127
        %v1826 = vpop.permute.xlu0 %1825
        %1827 = vrot.lane.b32.xlu0 %v699, 127
        %v1828 = vpop.permute.xlu0 %1827
        %1829 = vrot.lane.b32.xlu0 %v700, 127
        %v1830 = vpop.permute.xlu0 %1829
        %1831 = vrot.lane.b32.xlu0 %v701, 127
        %v1832 = vpop.permute.xlu0 %1831
        %1833 = vrot.lane.b32.xlu0 %v702, 127
        %v1834 = vpop.permute.xlu0 %1833
        %1835 = vrot.lane.b32.xlu0 %v703, 127
        %v1836 = vpop.permute.xlu0 %1835
        %1837 = vrot.lane.b32.xlu0 %v704, 127
        %v1838 = vpop.permute.xlu0 %1837
        %1839 = vrot.lane.b32.xlu0 %v705, 127
        %v1840 = vpop.permute.xlu0 %1839
        %1841 = vrot.lane.b32.xlu0 %v706, 127
        %v1842 = vpop.permute.xlu0 %1841
        %1843 = vrot.lane.b32.xlu0 %v707, 127
        %v1844 = vpop.permute.xlu0 %1843
        %1845 = vrot.lane.b32.xlu0 %v708, 127
        %v1846 = vpop.permute.xlu0 %1845
        %1847 = vrot.lane.b32.xlu0 %v709, 127
        %v1848 = vpop.permute.xlu0 %1847
        %1849 = vrot.lane.b32.xlu0 %v710, 127
        %v1850 = vpop.permute.xlu0 %1849
        %v1867 = vsel %vm1429, %v1820, 0.0
        %v1868 = vsel %vm1430, %v1822, 0.0
        %v1869 = vsel %vm1431, %v1824, 0.0
        %v1870 = vsel %vm1432, %v1826, 0.0
        %v1871 = vsel %vm1433, %v1828, 0.0
        %v1872 = vsel %vm1434, %v1830, 0.0
        %v1873 = vsel %vm1435, %v1832, 0.0
        %v1874 = vsel %vm1436, %v1834, 0.0
        %v1875 = vsel %vm1437, %v1836, 0.0
        %v1876 = vsel %vm1438, %v1838, 0.0
        %v1877 = vsel %vm1439, %v1840, 0.0
        %v1878 = vsel %vm1440, %v1842, 0.0
        %v1879 = vsel %vm1441, %v1844, 0.0
        %v1880 = vsel %vm1442, %v1846, 0.0
        %v1881 = vsel %vm1443, %v1848, 0.0
        %v1882 = vsel %vm1444, %v1850, 0.0
        %v1883 = vsel %vm1216, %v1867, 0.0
        %v1884 = vsel %vm1216, %v1868, 0.0
        %v1885 = vadd.f32 %v1883, %v1884
        %v1886 = vsel %vm1216, %v1869, 0.0
        %v1887 = vadd.f32 %v1885, %v1886
        %v1888 = vsel %vm1216, %v1870, 0.0
        %v1889 = vadd.f32 %v1887, %v1888
        %v1890 = vsel %vm1216, %v1871, 0.0
        %v1891 = vadd.f32 %v1889, %v1890
        %v1892 = vsel %vm1216, %v1872, 0.0
        %v1893 = vadd.f32 %v1891, %v1892
        %v1894 = vsel %vm1216, %v1873, 0.0
        %v1895 = vadd.f32 %v1893, %v1894
        %v1896 = vsel %vm1216, %v1874, 0.0
        %v1897 = vadd.f32 %v1895, %v1896
        %v1898 = vsel %vm1216, %v1875, 0.0
        %v1899 = vadd.f32 %v1897, %v1898
        %v1900 = vsel %vm1216, %v1876, 0.0
        %v1901 = vadd.f32 %v1899, %v1900
        %v1902 = vsel %vm1216, %v1877, 0.0
        %v1903 = vadd.f32 %v1901, %v1902
        %v1904 = vsel %vm1216, %v1878, 0.0
        %v1905 = vadd.f32 %v1903, %v1904
        %v1906 = vsel %vm1216, %v1879, 0.0
        %v1907 = vadd.f32 %v1905, %v1906
        %v1908 = vsel %vm1216, %v1880, 0.0
        %v1909 = vadd.f32 %v1907, %v1908
        %v1910 = vsel %vm1216, %v1881, 0.0
        %v1911 = vadd.f32 %v1909, %v1910
        %v1912 = vsel %vm1216, %v1882, 0.0
        %v1913 = vadd.f32 %v1911, %v1912
        %1914 = vadd.xlane.f32.xlu0 %v1913
        %v1915 = vpop.xlane.xlu0 %1914
        %v1916 = vrot.slane %v1915, 4
        %v1917 = vadd.f32 %v1915, %v1916
        %v1918 = vrot.slane %v1917, 2
        %v1919 = vadd.f32 %v1917, %v1918
        %v1920 = vrot.slane %v1919, 1
        %v1921 = vadd.f32 %v1919, %v1920
        %s1922 = vtos %v1921
        %s1923 = sadd.f32 %s1257, %s1922
        %v1924 = vsel %vm1429, 1, 0
        %v1925 = vsel %vm1430, 1, 0
        %v1926 = vsel %vm1431, 1, 0
        %v1927 = vsel %vm1432, 1, 0
        %v1928 = vsel %vm1433, 1, 0
        %v1929 = vsel %vm1434, 1, 0
        %v1930 = vsel %vm1435, 1, 0
        %v1931 = vsel %vm1436, 1, 0
        %v1932 = vsel %vm1437, 1, 0
        %v1933 = vsel %vm1438, 1, 0
        %v1934 = vsel %vm1439, 1, 0
        %v1935 = vsel %vm1440, 1, 0
        %v1936 = vsel %vm1441, 1, 0
        %v1937 = vsel %vm1442, 1, 0
        %v1938 = vsel %vm1443, 1, 0
        %v1939 = vsel %vm1444, 1, 0
        %v1940 = vcvt.s32.f32 %v1924
        %v1941 = vcvt.s32.f32 %v1925
        %v1942 = vcvt.s32.f32 %v1926
        %v1943 = vcvt.s32.f32 %v1927
        %v1944 = vcvt.s32.f32 %v1928
        %v1945 = vcvt.s32.f32 %v1929
        %v1946 = vcvt.s32.f32 %v1930
        %v1947 = vcvt.s32.f32 %v1931
        %v1948 = vcvt.s32.f32 %v1932
        %v1949 = vcvt.s32.f32 %v1933
        %v1950 = vcvt.s32.f32 %v1934
        %v1951 = vcvt.s32.f32 %v1935
        %v1952 = vcvt.s32.f32 %v1936
        %v1953 = vcvt.s32.f32 %v1937
        %v1954 = vcvt.s32.f32 %v1938
        %v1955 = vcvt.s32.f32 %v1939
        %v1956 = vsel %vm1216, %v1940, 0.0
        %v1957 = vsel %vm1216, %v1941, 0.0
        %v1958 = vadd.f32 %v1956, %v1957
        %v1959 = vsel %vm1216, %v1942, 0.0
        %v1960 = vadd.f32 %v1958, %v1959
        %v1961 = vsel %vm1216, %v1943, 0.0
        %v1962 = vadd.f32 %v1960, %v1961
        %v1963 = vsel %vm1216, %v1944, 0.0
        %v1964 = vadd.f32 %v1962, %v1963
        %v1965 = vsel %vm1216, %v1945, 0.0
        %v1966 = vadd.f32 %v1964, %v1965
        %v1967 = vsel %vm1216, %v1946, 0.0
        %v1968 = vadd.f32 %v1966, %v1967
        %v1969 = vsel %vm1216, %v1947, 0.0
        %v1970 = vadd.f32 %v1968, %v1969
        %v1971 = vsel %vm1216, %v1948, 0.0
        %v1972 = vadd.f32 %v1970, %v1971
        %v1973 = vsel %vm1216, %v1949, 0.0
        %v1974 = vadd.f32 %v1972, %v1973
        %v1975 = vsel %vm1216, %v1950, 0.0
        %v1976 = vadd.f32 %v1974, %v1975
        %v1977 = vsel %vm1216, %v1951, 0.0
        %v1978 = vadd.f32 %v1976, %v1977
        %v1979 = vsel %vm1216, %v1952, 0.0
        %v1980 = vadd.f32 %v1978, %v1979
        %v1981 = vsel %vm1216, %v1953, 0.0
        %v1982 = vadd.f32 %v1980, %v1981
        %v1983 = vsel %vm1216, %v1954, 0.0
        %v1984 = vadd.f32 %v1982, %v1983
        %v1985 = vsel %vm1216, %v1955, 0.0
        %v1986 = vadd.f32 %v1984, %v1985
        %1987 = vadd.xlane.f32.xlu0 %v1986
        %v1988 = vpop.xlane.xlu0 %1987
        %v1989 = vrot.slane %v1988, 4
        %v1990 = vadd.f32 %v1988, %v1989
        %v1991 = vrot.slane %v1990, 2
        %v1992 = vadd.f32 %v1990, %v1991
        %v1993 = vrot.slane %v1992, 1
        %v1994 = vadd.f32 %v1992, %v1993
        %s1995 = vtos %v1994
        %s1996 = sadd.f32 %s1330, %s1995
        %1998 = vst [vmem:[#allocation1] sm:$0xff] %v678
        %s1999 = scalar_lea.vmem [#allocation1], 1
        %v2000 = vld [vmem:[%s1999] ss:$9 sm:$0xff]
        %v2002 = vsel %vm1447, %v2000, 0.0
        %v2003 = vsel %vm1332, %v2002, 0.0
        %2004 = vadd.xlane.f32.xlu0 %v2003
        %v2005 = vpop.xlane.xlu0 %2004
        %v2006 = vrot.slane %v2005, 4
        %v2007 = vadd.f32 %v2005, %v2006
        %v2008 = vrot.slane %v2007, 2
        %v2009 = vadd.f32 %v2007, %v2008
        %v2010 = vrot.slane %v2009, 1
        %v2011 = vadd.f32 %v2009, %v2010
        %s2012 = vtos %v2011
        %s2013 = sadd.f32 %s1343, %s2012
        %v2014 = vsel %vm1447, 1, 0
        %v2015 = vcvt.s32.f32 %v2014
        %v2016 = vsel %vm1332, %v2015, 0.0
        %2017 = vadd.xlane.f32.xlu0 %v2016
        %v2018 = vpop.xlane.xlu0 %2017
        %v2019 = vrot.slane %v2018, 4
        %v2020 = vadd.f32 %v2018, %v2019
        %v2021 = vrot.slane %v2020, 2
        %v2022 = vadd.f32 %v2020, %v2021
        %v2023 = vrot.slane %v2022, 1
        %v2024 = vadd.f32 %v2022, %v2023
        %s2025 = vtos %v2024
        %s2026 = sadd.f32 %s1356, %s2025
        %s2027 = sadd.s32 %s764, 2
        %p2028 = scmp.lt.s32.totalorder %s2027, 32
        %s2029 = sld [smem:[#allocation2 + %s2027]]
        %v2030 = vstv %s2029
        %vm2031 = vcmp.eq.s32.totalorder %v712, %v2030
        %vm2032 = vcmp.eq.s32.totalorder %v713, %v2030
        %vm2033 = vcmp.eq.s32.totalorder %v714, %v2030
        %vm2034 = vcmp.eq.s32.totalorder %v715, %v2030
        %vm2035 = vcmp.eq.s32.totalorder %v716, %v2030
        %vm2036 = vcmp.eq.s32.totalorder %v717, %v2030
        %vm2037 = vcmp.eq.s32.totalorder %v718, %v2030
        %vm2038 = vcmp.eq.s32.totalorder %v719, %v2030
        %vm2039 = vcmp.eq.s32.totalorder %v720, %v2030
        %vm2040 = vcmp.eq.s32.totalorder %v721, %v2030
        %vm2041 = vcmp.eq.s32.totalorder %v722, %v2030
        %vm2042 = vcmp.eq.s32.totalorder %v723, %v2030
        %vm2043 = vcmp.eq.s32.totalorder %v724, %v2030
        %vm2044 = vcmp.eq.s32.totalorder %v725, %v2030
        %vm2045 = vcmp.eq.s32.totalorder %v726, %v2030
        %vm2046 = vcmp.eq.s32.totalorder %v727, %v2030
        %v2047 = vstv %s2027
        %vm2048 = vcmp.ne.s32.totalorder %v729, %v2047
        %vm2049 = vcmp.ne.s32.totalorder %v730, %v2047
        %vm2050 = vcmp.ne.s32.totalorder %v731, %v2047
        %vm2051 = vcmp.ne.s32.totalorder %v732, %v2047
        %vm2052 = vcmp.ne.s32.totalorder %v733, %v2047
        %vm2053 = vcmp.ne.s32.totalorder %v734, %v2047
        %vm2054 = vcmp.ne.s32.totalorder %v735, %v2047
        %vm2055 = vcmp.ne.s32.totalorder %v736, %v2047
        %vm2056 = vcmp.ne.s32.totalorder %v737, %v2047
        %vm2057 = vcmp.ne.s32.totalorder %v738, %v2047
        %vm2058 = vcmp.ne.s32.totalorder %v739, %v2047
        %vm2059 = vcmp.ne.s32.totalorder %v740, %v2047
        %vm2060 = vcmp.ne.s32.totalorder %v741, %v2047
        %vm2061 = vcmp.ne.s32.totalorder %v742, %v2047
        %vm2062 = vcmp.ne.s32.totalorder %v743, %v2047
        %vm2063 = vcmp.ne.s32.totalorder %v744, %v2047
        %vm2064 = vmand %vm2031, %vm2048
        %vm2065 = vmand %vm2032, %vm2049
        %vm2066 = vmand %vm2033, %vm2050
        %vm2067 = vmand %vm2034, %vm2051
        %vm2068 = vmand %vm2035, %vm2052
        %vm2069 = vmand %vm2036, %vm2053
        %vm2070 = vmand %vm2037, %vm2054
        %vm2071 = vmand %vm2038, %vm2055
        %vm2072 = vmand %vm2039, %vm2056
        %vm2073 = vmand %vm2040, %vm2057
        %vm2074 = vmand %vm2041, %vm2058
        %vm2075 = vmand %vm2042, %vm2059
        %vm2076 = vmand %vm2043, %vm2060
        %vm2077 = vmand %vm2044, %vm2061
        %vm2078 = vmand %vm2045, %vm2062
        %vm2079 = vmand %vm2046, %vm2063
        %s2080 = scalar_select %p2028, 1, 0
        %v2081 = vstv %s2080
        %vm2082 = vcmp.eq.s32.totalorder %v2081, 1
        %vm2083 = vmand %vm747, %vm2082
        %vm2084 = vmand %vm748, %vm2082
        %vm2085 = vmand %vm749, %vm2082
        %vm2086 = vmand %vm750, %vm2082
        %vm2087 = vmand %vm751, %vm2082
        %vm2088 = vmand %vm752, %vm2082
        %vm2089 = vmand %vm753, %vm2082
        %vm2090 = vmand %vm754, %vm2082
        %vm2091 = vmand %vm755, %vm2082
        %vm2092 = vmand %vm756, %vm2082
        %vm2093 = vmand %vm757, %vm2082
        %vm2094 = vmand %vm758, %vm2082
        %vm2095 = vmand %vm759, %vm2082
        %vm2096 = vmand %vm760, %vm2082
        %vm2097 = vmand %vm761, %vm2082
        %vm2098 = vmand %vm762, %vm2082
        %vm2099 = vmand %vm2064, %vm2083
        %vm2100 = vmand %vm2065, %vm2084
        %vm2101 = vmand %vm2066, %vm2085
        %vm2102 = vmand %vm2067, %vm2086
        %vm2103 = vmand %vm2068, %vm2087
        %vm2104 = vmand %vm2069, %vm2088
        %vm2105 = vmand %vm2070, %vm2089
        %vm2106 = vmand %vm2071, %vm2090
        %vm2107 = vmand %vm2072, %vm2091
        %vm2108 = vmand %vm2073, %vm2092
        %vm2109 = vmand %vm2074, %vm2093
        %vm2110 = vmand %vm2075, %vm2094
        %vm2111 = vmand %vm2076, %vm2095
        %vm2112 = vmand %vm2077, %vm2096
        %vm2113 = vmand %vm2078, %vm2097
        %vm2114 = vmand %vm2079, %vm2098
        %vm2115 = vcmp.ne.s32.totalorder %v711, %v2030
        %vm2116 = vmand %vm763, %vm2082
        %vm2117 = vmand %vm2115, %vm2116
        %2118 = vrot.lane.b32.xlu0 %v880, 126
        %v2119 = vpop.permute.xlu0 %2118
        %2120 = vrot.lane.b32.xlu0 %v882, 126
        %v2121 = vpop.permute.xlu0 %2120
        %2122 = vrot.lane.b32.xlu0 %v884, 126
        %v2123 = vpop.permute.xlu0 %2122
        %2124 = vrot.lane.b32.xlu0 %v886, 126
        %v2125 = vpop.permute.xlu0 %2124
        %2126 = vrot.lane.b32.xlu0 %v888, 126
        %v2127 = vpop.permute.xlu0 %2126
        %2128 = vrot.lane.b32.xlu0 %v890, 126
        %v2129 = vpop.permute.xlu0 %2128
        %2130 = vrot.lane.b32.xlu0 %v892, 126
        %v2131 = vpop.permute.xlu0 %2130
        %2132 = vrot.lane.b32.xlu0 %v894, 126
        %v2133 = vpop.permute.xlu0 %2132
        %2134 = vrot.lane.b32.xlu0 %v896, 126
        %v2135 = vpop.permute.xlu0 %2134
        %2136 = vrot.lane.b32.xlu0 %v898, 126
        %v2137 = vpop.permute.xlu0 %2136
        %2138 = vrot.lane.b32.xlu0 %v900, 126
        %v2139 = vpop.permute.xlu0 %2138
        %2140 = vrot.lane.b32.xlu0 %v902, 126
        %v2141 = vpop.permute.xlu0 %2140
        %2142 = vrot.lane.b32.xlu0 %v904, 126
        %v2143 = vpop.permute.xlu0 %2142
        %2144 = vrot.lane.b32.xlu0 %v906, 126
        %v2145 = vpop.permute.xlu0 %2144
        %2146 = vrot.lane.b32.xlu0 %v908, 126
        %v2147 = vpop.permute.xlu0 %2146
        %2148 = vrot.lane.b32.xlu0 %v910, 126
        %v2149 = vpop.permute.xlu0 %2148
        %v2166 = vsel %vm2099, %v2119, 0.0
        %v2167 = vsel %vm2100, %v2121, 0.0
        %v2168 = vsel %vm2101, %v2123, 0.0
        %v2169 = vsel %vm2102, %v2125, 0.0
        %v2170 = vsel %vm2103, %v2127, 0.0
        %v2171 = vsel %vm2104, %v2129, 0.0
        %v2172 = vsel %vm2105, %v2131, 0.0
        %v2173 = vsel %vm2106, %v2133, 0.0
        %v2174 = vsel %vm2107, %v2135, 0.0
        %v2175 = vsel %vm2108, %v2137, 0.0
        %v2176 = vsel %vm2109, %v2139, 0.0
        %v2177 = vsel %vm2110, %v2141, 0.0
        %v2178 = vsel %vm2111, %v2143, 0.0
        %v2179 = vsel %vm2112, %v2145, 0.0
        %v2180 = vsel %vm2113, %v2147, 0.0
        %v2181 = vsel %vm2114, %v2149, 0.0
        %2182 = vst [vmem:[#allocation1] sm:$0xff] %v929
        %s2183 = scalar_lea.vmem [#allocation1], 2
        %v2184 = vld [vmem:[%s2183] ss:$9 sm:$0xff]
        %v2186 = vsel %vm2117, %v2184, 0.0
        %2188 = vset.pattern.permute.xlu0 0
        %2189 = vperm.xlu0 %2188, %v2166
        %v2190 = vpop.permute.xlu0 %2189
        %2193 = vset.pattern.permute.xlu0 0
        %2194 = vperm.xlu0 %2193, %v2167
        %v2195 = vpop.permute.xlu0 %2194
        %2198 = vset.pattern.permute.xlu0 0
        %2199 = vperm.xlu0 %2198, %v2168
        %v2200 = vpop.permute.xlu0 %2199
        %2203 = vset.pattern.permute.xlu0 0
        %2204 = vperm.xlu0 %2203, %v2169
        %v2205 = vpop.permute.xlu0 %2204
        %2208 = vset.pattern.permute.xlu0 0
        %2209 = vperm.xlu0 %2208, %v2170
        %v2210 = vpop.permute.xlu0 %2209
        %2213 = vset.pattern.permute.xlu0 0
        %2214 = vperm.xlu0 %2213, %v2171
        %v2215 = vpop.permute.xlu0 %2214
        %2218 = vset.pattern.permute.xlu0 0
        %2219 = vperm.xlu0 %2218, %v2172
        %v2220 = vpop.permute.xlu0 %2219
        %2223 = vset.pattern.permute.xlu0 0
        %2224 = vperm.xlu0 %2223, %v2173
        %v2225 = vpop.permute.xlu0 %2224
        %2228 = vset.pattern.permute.xlu0 0
        %2229 = vperm.xlu0 %2228, %v2174
        %v2230 = vpop.permute.xlu0 %2229
        %2233 = vset.pattern.permute.xlu0 0
        %2234 = vperm.xlu0 %2233, %v2175
        %v2235 = vpop.permute.xlu0 %2234
        %2238 = vset.pattern.permute.xlu0 0
        %2239 = vperm.xlu0 %2238, %v2176
        %v2240 = vpop.permute.xlu0 %2239
        %2243 = vset.pattern.permute.xlu0 0
        %2244 = vperm.xlu0 %2243, %v2177
        %v2245 = vpop.permute.xlu0 %2244
        %2248 = vset.pattern.permute.xlu0 0
        %2249 = vperm.xlu0 %2248, %v2178
        %v2250 = vpop.permute.xlu0 %2249
        %2253 = vset.pattern.permute.xlu0 0
        %2254 = vperm.xlu0 %2253, %v2179
        %v2255 = vpop.permute.xlu0 %2254
        %2258 = vset.pattern.permute.xlu0 0
        %2259 = vperm.xlu0 %2258, %v2180
        %v2260 = vpop.permute.xlu0 %2259
        %2263 = vset.pattern.permute.xlu0 0
        %2264 = vperm.xlu0 %2263, %v2181
        %v2265 = vpop.permute.xlu0 %2264
        %v2268 = vperm.slane %v2186, 0
        %v2270 = vmul.f32 %v2190, %v2268
        %v2271 = vmul.f32 %v2195, %v2268
        %v2272 = vmul.f32 %v2200, %v2268
        %v2273 = vmul.f32 %v2205, %v2268
        %v2274 = vmul.f32 %v2210, %v2268
        %v2275 = vmul.f32 %v2215, %v2268
        %v2276 = vmul.f32 %v2220, %v2268
        %v2277 = vmul.f32 %v2225, %v2268
        %v2278 = vmul.f32 %v2230, %v2268
        %v2279 = vmul.f32 %v2235, %v2268
        %v2280 = vmul.f32 %v2240, %v2268
        %v2281 = vmul.f32 %v2245, %v2268
        %v2282 = vmul.f32 %v2250, %v2268
        %v2283 = vmul.f32 %v2255, %v2268
        %v2284 = vmul.f32 %v2260, %v2268
        %v2285 = vmul.f32 %v2265, %v2268
        %vm2286 = vcmp.gt.f32.partialorder %v2270, 0.9997057
        %vm2287 = vcmp.gt.f32.partialorder %v2271, 0.9997057
        %vm2288 = vcmp.gt.f32.partialorder %v2272, 0.9997057
        %vm2289 = vcmp.gt.f32.partialorder %v2273, 0.9997057
        %vm2290 = vcmp.gt.f32.partialorder %v2274, 0.9997057
        %vm2291 = vcmp.gt.f32.partialorder %v2275, 0.9997057
        %vm2292 = vcmp.gt.f32.partialorder %v2276, 0.9997057
        %vm2293 = vcmp.gt.f32.partialorder %v2277, 0.9997057
        %vm2294 = vcmp.gt.f32.partialorder %v2278, 0.9997057
        %vm2295 = vcmp.gt.f32.partialorder %v2279, 0.9997057
        %vm2296 = vcmp.gt.f32.partialorder %v2280, 0.9997057
        %vm2297 = vcmp.gt.f32.partialorder %v2281, 0.9997057
        %vm2298 = vcmp.gt.f32.partialorder %v2282, 0.9997057
        %vm2299 = vcmp.gt.f32.partialorder %v2283, 0.9997057
        %vm2300 = vcmp.gt.f32.partialorder %v2284, 0.9997057
        %vm2301 = vcmp.gt.f32.partialorder %v2285, 0.9997057
        %v2302 = vsel %vm2286, 1, 0
        %v2303 = vsel %vm2287, 1, 0
        %v2304 = vsel %vm2288, 1, 0
        %v2305 = vsel %vm2289, 1, 0
        %v2306 = vsel %vm2290, 1, 0
        %v2307 = vsel %vm2291, 1, 0
        %v2308 = vsel %vm2292, 1, 0
        %v2309 = vsel %vm2293, 1, 0
        %v2310 = vsel %vm2294, 1, 0
        %v2311 = vsel %vm2295, 1, 0
        %v2312 = vsel %vm2296, 1, 0
        %v2313 = vsel %vm2297, 1, 0
        %v2314 = vsel %vm2298, 1, 0
        %v2315 = vsel %vm2299, 1, 0
        %v2316 = vsel %vm2300, 1, 0
        %v2317 = vsel %vm2301, 1, 0
        %v2318 = vcvt.s32.f32 %v2302
        %v2319 = vcvt.s32.f32 %v2303
        %v2320 = vcvt.s32.f32 %v2304
        %v2321 = vcvt.s32.f32 %v2305
        %v2322 = vcvt.s32.f32 %v2306
        %v2323 = vcvt.s32.f32 %v2307
        %v2324 = vcvt.s32.f32 %v2308
        %v2325 = vcvt.s32.f32 %v2309
        %v2326 = vcvt.s32.f32 %v2310
        %v2327 = vcvt.s32.f32 %v2311
        %v2328 = vcvt.s32.f32 %v2312
        %v2329 = vcvt.s32.f32 %v2313
        %v2330 = vcvt.s32.f32 %v2314
        %v2331 = vcvt.s32.f32 %v2315
        %v2332 = vcvt.s32.f32 %v2316
        %v2333 = vcvt.s32.f32 %v2317
        %v2334 = vadd.f32 %v2318, %v2319
        %v2335 = vadd.f32 %v2334, %v2320
        %v2336 = vadd.f32 %v2335, %v2321
        %v2337 = vadd.f32 %v2336, %v2322
        %v2338 = vadd.f32 %v2337, %v2323
        %v2339 = vadd.f32 %v2338, %v2324
        %v2340 = vadd.f32 %v2339, %v2325
        %v2341 = vadd.f32 %v2340, %v2326
        %v2342 = vadd.f32 %v2341, %v2327
        %v2343 = vadd.f32 %v2342, %v2328
        %v2344 = vadd.f32 %v2343, %v2329
        %v2345 = vadd.f32 %v2344, %v2330
        %v2346 = vadd.f32 %v2345, %v2331
        %v2347 = vadd.f32 %v2346, %v2332
        %v2348 = vadd.f32 %v2347, %v2333
        %2349 = vadd.xlane.f32.xlu0 %v2348
        %v2350 = vpop.xlane.xlu0 %2349
        %v2351 = vrot.slane %v2350, 4
        %v2352 = vadd.f32 %v2350, %v2351
        %v2353 = vrot.slane %v2352, 2
        %v2354 = vadd.f32 %v2352, %v2353
        %v2355 = vrot.slane %v2354, 1
        %v2356 = vadd.f32 %v2354, %v2355
        %s2357 = vtos %v2356
        %v2358 = vadd.f32 %v2270, 1.0
        %v2359 = vadd.f32 %v2271, 1.0
        %v2360 = vadd.f32 %v2272, 1.0
        %v2361 = vadd.f32 %v2273, 1.0
        %v2362 = vadd.f32 %v2274, 1.0
        %v2363 = vadd.f32 %v2275, 1.0
        %v2364 = vadd.f32 %v2276, 1.0
        %v2365 = vadd.f32 %v2277, 1.0
        %v2366 = vadd.f32 %v2278, 1.0
        %v2367 = vadd.f32 %v2279, 1.0
        %v2368 = vadd.f32 %v2280, 1.0
        %v2369 = vadd.f32 %v2281, 1.0
        %v2370 = vadd.f32 %v2282, 1.0
        %v2371 = vadd.f32 %v2283, 1.0
        %v2372 = vadd.f32 %v2284, 1.0
        %v2373 = vadd.f32 %v2285, 1.0
        %v2374 = vlog2.pop %v2358
        %v2375 = vmul.f32 %v2374, 0.6931472
        %v2376 = vlog2.pop %v2359
        %v2377 = vmul.f32 %v2376, 0.6931472
        %v2378 = vlog2.pop %v2360
        %v2379 = vmul.f32 %v2378, 0.6931472
        %v2380 = vlog2.pop %v2361
        %v2381 = vmul.f32 %v2380, 0.6931472
        %v2382 = vlog2.pop %v2362
        %v2383 = vmul.f32 %v2382, 0.6931472
        %v2384 = vlog2.pop %v2363
        %v2385 = vmul.f32 %v2384, 0.6931472
        %v2386 = vlog2.pop %v2364
        %v2387 = vmul.f32 %v2386, 0.6931472
        %v2388 = vlog2.pop %v2365
        %v2389 = vmul.f32 %v2388, 0.6931472
        %v2390 = vlog2.pop %v2366
        %v2391 = vmul.f32 %v2390, 0.6931472
        %v2392 = vlog2.pop %v2367
        %v2393 = vmul.f32 %v2392, 0.6931472
        %v2394 = vlog2.pop %v2368
        %v2395 = vmul.f32 %v2394, 0.6931472
        %v2396 = vlog2.pop %v2369
        %v2397 = vmul.f32 %v2396, 0.6931472
        %v2398 = vlog2.pop %v2370
        %v2399 = vmul.f32 %v2398, 0.6931472
        %v2400 = vlog2.pop %v2371
        %v2401 = vmul.f32 %v2400, 0.6931472
        %v2402 = vlog2.pop %v2372
        %v2403 = vmul.f32 %v2402, 0.6931472
        %v2404 = vlog2.pop %v2373
        %v2405 = vmul.f32 %v2404, 0.6931472
        %v2406 = vsel %vm2286, %v2375, 0.0
        %v2407 = vsel %vm2287, %v2377, 0.0
        %v2408 = vsel %vm2288, %v2379, 0.0
        %v2409 = vsel %vm2289, %v2381, 0.0
        %v2410 = vsel %vm2290, %v2383, 0.0
        %v2411 = vsel %vm2291, %v2385, 0.0
        %v2412 = vsel %vm2292, %v2387, 0.0
        %v2413 = vsel %vm2293, %v2389, 0.0
        %v2414 = vsel %vm2294, %v2391, 0.0
        %v2415 = vsel %vm2295, %v2393, 0.0
        %v2416 = vsel %vm2296, %v2395, 0.0
        %v2417 = vsel %vm2297, %v2397, 0.0
        %v2418 = vsel %vm2298, %v2399, 0.0
        %v2419 = vsel %vm2299, %v2401, 0.0
        %v2420 = vsel %vm2300, %v2403, 0.0
        %v2421 = vsel %vm2301, %v2405, 0.0
        %v2422 = vadd.f32 %v2406, %v2407
        %v2423 = vadd.f32 %v2422, %v2408
        %v2424 = vadd.f32 %v2423, %v2409
        %v2425 = vadd.f32 %v2424, %v2410
        %v2426 = vadd.f32 %v2425, %v2411
        %v2427 = vadd.f32 %v2426, %v2412
        %v2428 = vadd.f32 %v2427, %v2413
        %v2429 = vadd.f32 %v2428, %v2414
        %v2430 = vadd.f32 %v2429, %v2415
        %v2431 = vadd.f32 %v2430, %v2416
        %v2432 = vadd.f32 %v2431, %v2417
        %v2433 = vadd.f32 %v2432, %v2418
        %v2434 = vadd.f32 %v2433, %v2419
        %v2435 = vadd.f32 %v2434, %v2420
        %v2436 = vadd.f32 %v2435, %v2421
        %2437 = vadd.xlane.f32.xlu0 %v2436
        %v2438 = vpop.xlane.xlu0 %2437
        %v2439 = vrot.slane %v2438, 4
        %v2440 = vadd.f32 %v2438, %v2439
        %v2441 = vrot.slane %v2440, 2
        %v2442 = vadd.f32 %v2440, %v2441
        %v2443 = vrot.slane %v2442, 1
        %v2444 = vadd.f32 %v2442, %v2443
        %s2445 = vtos %v2444
        %v2446 = vstv %s2445
        %v2447 = vmul.f32 %v2446, %v773
        %v2448 = vadd.f32 %v1795, %v2447
        %v2449 = vstv %s2357
        %v2450 = vmul.f32 %v2449, %v773
        %v2451 = vadd.f32 %v1798, %v2450
        %s2452 = scalar_select %p2028, 1.0, 0.0
        %v2453 = vstv %s2452
        %v2454 = vmul.f32 %v2453, %v773
        %v2455 = vadd.f32 %v1802, %v2454
        %2456 = vrot.lane.b32.xlu0 %v695, 126
        %v2457 = vpop.permute.xlu0 %2456
        %2458 = vrot.lane.b32.xlu0 %v696, 126
        %v2459 = vpop.permute.xlu0 %2458
        %2460 = vrot.lane.b32.xlu0 %v697, 126
        %v2461 = vpop.permute.xlu0 %2460
        %2462 = vrot.lane.b32.xlu0 %v698, 126
        %v2463 = vpop.permute.xlu0 %2462
        %2464 = vrot.lane.b32.xlu0 %v699, 126
        %v2465 = vpop.permute.xlu0 %2464
        %2466 = vrot.lane.b32.xlu0 %v700, 126
        %v2467 = vpop.permute.xlu0 %2466
        %2468 = vrot.lane.b32.xlu0 %v701, 126
        %v2469 = vpop.permute.xlu0 %2468
        %2470 = vrot.lane.b32.xlu0 %v702, 126
        %v2471 = vpop.permute.xlu0 %2470
        %2472 = vrot.lane.b32.xlu0 %v703, 126
        %v2473 = vpop.permute.xlu0 %2472
        %2474 = vrot.lane.b32.xlu0 %v704, 126
        %v2475 = vpop.permute.xlu0 %2474
        %2476 = vrot.lane.b32.xlu0 %v705, 126
        %v2477 = vpop.permute.xlu0 %2476
        %2478 = vrot.lane.b32.xlu0 %v706, 126
        %v2479 = vpop.permute.xlu0 %2478
        %2480 = vrot.lane.b32.xlu0 %v707, 126
        %v2481 = vpop.permute.xlu0 %2480
        %2482 = vrot.lane.b32.xlu0 %v708, 126
        %v2483 = vpop.permute.xlu0 %2482
        %2484 = vrot.lane.b32.xlu0 %v709, 126
        %v2485 = vpop.permute.xlu0 %2484
        %2486 = vrot.lane.b32.xlu0 %v710, 126
        %v2487 = vpop.permute.xlu0 %2486
        %v2504 = vsel %vm2099, %v2457, 0.0
        %v2505 = vsel %vm2100, %v2459, 0.0
        %v2506 = vsel %vm2101, %v2461, 0.0
        %v2507 = vsel %vm2102, %v2463, 0.0
        %v2508 = vsel %vm2103, %v2465, 0.0
        %v2509 = vsel %vm2104, %v2467, 0.0
        %v2510 = vsel %vm2105, %v2469, 0.0
        %v2511 = vsel %vm2106, %v2471, 0.0
        %v2512 = vsel %vm2107, %v2473, 0.0
        %v2513 = vsel %vm2108, %v2475, 0.0
        %v2514 = vsel %vm2109, %v2477, 0.0
        %v2515 = vsel %vm2110, %v2479, 0.0
        %v2516 = vsel %vm2111, %v2481, 0.0
        %v2517 = vsel %vm2112, %v2483, 0.0
        %v2518 = vsel %vm2113, %v2485, 0.0
        %v2519 = vsel %vm2114, %v2487, 0.0
        %v2520 = vsel %vm1216, %v2504, 0.0
        %v2521 = vsel %vm1216, %v2505, 0.0
        %v2522 = vadd.f32 %v2520, %v2521
        %v2523 = vsel %vm1216, %v2506, 0.0
        %v2524 = vadd.f32 %v2522, %v2523
        %v2525 = vsel %vm1216, %v2507, 0.0
        %v2526 = vadd.f32 %v2524, %v2525
        %v2527 = vsel %vm1216, %v2508, 0.0
        %v2528 = vadd.f32 %v2526, %v2527
        %v2529 = vsel %vm1216, %v2509, 0.0
        %v2530 = vadd.f32 %v2528, %v2529
        %v2531 = vsel %vm1216, %v2510, 0.0
        %v2532 = vadd.f32 %v2530, %v2531
        %v2533 = vsel %vm1216, %v2511, 0.0
        %v2534 = vadd.f32 %v2532, %v2533
        %v2535 = vsel %vm1216, %v2512, 0.0
        %v2536 = vadd.f32 %v2534, %v2535
        %v2537 = vsel %vm1216, %v2513, 0.0
        %v2538 = vadd.f32 %v2536, %v2537
        %v2539 = vsel %vm1216, %v2514, 0.0
        %v2540 = vadd.f32 %v2538, %v2539
        %v2541 = vsel %vm1216, %v2515, 0.0
        %v2542 = vadd.f32 %v2540, %v2541
        %v2543 = vsel %vm1216, %v2516, 0.0
        %v2544 = vadd.f32 %v2542, %v2543
        %v2545 = vsel %vm1216, %v2517, 0.0
        %v2546 = vadd.f32 %v2544, %v2545
        %v2547 = vsel %vm1216, %v2518, 0.0
        %v2548 = vadd.f32 %v2546, %v2547
        %v2549 = vsel %vm1216, %v2519, 0.0
        %v2550 = vadd.f32 %v2548, %v2549
        %2551 = vadd.xlane.f32.xlu0 %v2550
        %v2552 = vpop.xlane.xlu0 %2551
        %v2553 = vrot.slane %v2552, 4
        %v2554 = vadd.f32 %v2552, %v2553
        %v2555 = vrot.slane %v2554, 2
        %v2556 = vadd.f32 %v2554, %v2555
        %v2557 = vrot.slane %v2556, 1
        %v2558 = vadd.f32 %v2556, %v2557
        %s2559 = vtos %v2558
        %s2560 = sadd.f32 %s1923, %s2559
        %v2561 = vsel %vm2099, 1, 0
        %v2562 = vsel %vm2100, 1, 0
        %v2563 = vsel %vm2101, 1, 0
        %v2564 = vsel %vm2102, 1, 0
        %v2565 = vsel %vm2103, 1, 0
        %v2566 = vsel %vm2104, 1, 0
        %v2567 = vsel %vm2105, 1, 0
        %v2568 = vsel %vm2106, 1, 0
        %v2569 = vsel %vm2107, 1, 0
        %v2570 = vsel %vm2108, 1, 0
        %v2571 = vsel %vm2109, 1, 0
        %v2572 = vsel %vm2110, 1, 0
        %v2573 = vsel %vm2111, 1, 0
        %v2574 = vsel %vm2112, 1, 0
        %v2575 = vsel %vm2113, 1, 0
        %v2576 = vsel %vm2114, 1, 0
        %v2577 = vcvt.s32.f32 %v2561
        %v2578 = vcvt.s32.f32 %v2562
        %v2579 = vcvt.s32.f32 %v2563
        %v2580 = vcvt.s32.f32 %v2564
        %v2581 = vcvt.s32.f32 %v2565
        %v2582 = vcvt.s32.f32 %v2566
        %v2583 = vcvt.s32.f32 %v2567
        %v2584 = vcvt.s32.f32 %v2568
        %v2585 = vcvt.s32.f32 %v2569
        %v2586 = vcvt.s32.f32 %v2570
        %v2587 = vcvt.s32.f32 %v2571
        %v2588 = vcvt.s32.f32 %v2572
        %v2589 = vcvt.s32.f32 %v2573
        %v2590 = vcvt.s32.f32 %v2574
        %v2591 = vcvt.s32.f32 %v2575
        %v2592 = vcvt.s32.f32 %v2576
        %v2593 = vsel %vm1216, %v2577, 0.0
        %v2594 = vsel %vm1216, %v2578, 0.0
        %v2595 = vadd.f32 %v2593, %v2594
        %v2596 = vsel %vm1216, %v2579, 0.0
        %v2597 = vadd.f32 %v2595, %v2596
        %v2598 = vsel %vm1216, %v2580, 0.0
        %v2599 = vadd.f32 %v2597, %v2598
        %v2600 = vsel %vm1216, %v2581, 0.0
        %v2601 = vadd.f32 %v2599, %v2600
        %v2602 = vsel %vm1216, %v2582, 0.0
        %v2603 = vadd.f32 %v2601, %v2602
        %v2604 = vsel %vm1216, %v2583, 0.0
        %v2605 = vadd.f32 %v2603, %v2604
        %v2606 = vsel %vm1216, %v2584, 0.0
        %v2607 = vadd.f32 %v2605, %v2606
        %v2608 = vsel %vm1216, %v2585, 0.0
        %v2609 = vadd.f32 %v2607, %v2608
        %v2610 = vsel %vm1216, %v2586, 0.0
        %v2611 = vadd.f32 %v2609, %v2610
        %v2612 = vsel %vm1216, %v2587, 0.0
        %v2613 = vadd.f32 %v2611, %v2612
        %v2614 = vsel %vm1216, %v2588, 0.0
        %v2615 = vadd.f32 %v2613, %v2614
        %v2616 = vsel %vm1216, %v2589, 0.0
        %v2617 = vadd.f32 %v2615, %v2616
        %v2618 = vsel %vm1216, %v2590, 0.0
        %v2619 = vadd.f32 %v2617, %v2618
        %v2620 = vsel %vm1216, %v2591, 0.0
        %v2621 = vadd.f32 %v2619, %v2620
        %v2622 = vsel %vm1216, %v2592, 0.0
        %v2623 = vadd.f32 %v2621, %v2622
        %2624 = vadd.xlane.f32.xlu0 %v2623
        %v2625 = vpop.xlane.xlu0 %2624
        %v2626 = vrot.slane %v2625, 4
        %v2627 = vadd.f32 %v2625, %v2626
        %v2628 = vrot.slane %v2627, 2
        %v2629 = vadd.f32 %v2627, %v2628
        %v2630 = vrot.slane %v2629, 1
        %v2631 = vadd.f32 %v2629, %v2630
        %s2632 = vtos %v2631
        %s2633 = sadd.f32 %s1996, %s2632
        %2634 = vst [vmem:[#allocation1] sm:$0xff] %v678
        %s2635 = scalar_lea.vmem [#allocation1], 2
        %v2636 = vld [vmem:[%s2635] ss:$9 sm:$0xff]
        %v2638 = vsel %vm2117, %v2636, 0.0
        %v2639 = vsel %vm1332, %v2638, 0.0
        %2640 = vadd.xlane.f32.xlu0 %v2639
        %v2641 = vpop.xlane.xlu0 %2640
        %v2642 = vrot.slane %v2641, 4
        %v2643 = vadd.f32 %v2641, %v2642
        %v2644 = vrot.slane %v2643, 2
        %v2645 = vadd.f32 %v2643, %v2644
        %v2646 = vrot.slane %v2645, 1
        %v2647 = vadd.f32 %v2645, %v2646
        %s2648 = vtos %v2647
        %s2649 = sadd.f32 %s2013, %s2648
        %v2650 = vsel %vm2117, 1, 0
        %v2651 = vcvt.s32.f32 %v2650
        %v2652 = vsel %vm1332, %v2651, 0.0
        %2653 = vadd.xlane.f32.xlu0 %v2652
        %v2654 = vpop.xlane.xlu0 %2653
        %v2655 = vrot.slane %v2654, 4
        %v2656 = vadd.f32 %v2654, %v2655
        %v2657 = vrot.slane %v2656, 2
        %v2658 = vadd.f32 %v2656, %v2657
        %v2659 = vrot.slane %v2658, 1
        %v2660 = vadd.f32 %v2658, %v2659
        %s2661 = vtos %v2660
        %s2662 = sadd.f32 %s2026, %s2661
        %s2663 = sadd.s32 %s764, 3
        %p2664 = scmp.lt.s32.totalorder %s2663, 32
        %s2665 = sld [smem:[#allocation2 + %s2663]]
        %v2666 = vstv %s2665
        %vm2667 = vcmp.eq.s32.totalorder %v712, %v2666
        %vm2668 = vcmp.eq.s32.totalorder %v713, %v2666
        %vm2669 = vcmp.eq.s32.totalorder %v714, %v2666
        %vm2670 = vcmp.eq.s32.totalorder %v715, %v2666
        %vm2671 = vcmp.eq.s32.totalorder %v716, %v2666
        %vm2672 = vcmp.eq.s32.totalorder %v717, %v2666
        %vm2673 = vcmp.eq.s32.totalorder %v718, %v2666
        %vm2674 = vcmp.eq.s32.totalorder %v719, %v2666
        %vm2675 = vcmp.eq.s32.totalorder %v720, %v2666
        %vm2676 = vcmp.eq.s32.totalorder %v721, %v2666
        %vm2677 = vcmp.eq.s32.totalorder %v722, %v2666
        %vm2678 = vcmp.eq.s32.totalorder %v723, %v2666
        %vm2679 = vcmp.eq.s32.totalorder %v724, %v2666
        %vm2680 = vcmp.eq.s32.totalorder %v725, %v2666
        %vm2681 = vcmp.eq.s32.totalorder %v726, %v2666
        %vm2682 = vcmp.eq.s32.totalorder %v727, %v2666
        %v2683 = vstv %s2663
        %vm2684 = vcmp.ne.s32.totalorder %v729, %v2683
        %vm2685 = vcmp.ne.s32.totalorder %v730, %v2683
        %vm2686 = vcmp.ne.s32.totalorder %v731, %v2683
        %vm2687 = vcmp.ne.s32.totalorder %v732, %v2683
        %vm2688 = vcmp.ne.s32.totalorder %v733, %v2683
        %vm2689 = vcmp.ne.s32.totalorder %v734, %v2683
        %vm2690 = vcmp.ne.s32.totalorder %v735, %v2683
        %vm2691 = vcmp.ne.s32.totalorder %v736, %v2683
        %vm2692 = vcmp.ne.s32.totalorder %v737, %v2683
        %vm2693 = vcmp.ne.s32.totalorder %v738, %v2683
        %vm2694 = vcmp.ne.s32.totalorder %v739, %v2683
        %vm2695 = vcmp.ne.s32.totalorder %v740, %v2683
        %vm2696 = vcmp.ne.s32.totalorder %v741, %v2683
        %vm2697 = vcmp.ne.s32.totalorder %v742, %v2683
        %vm2698 = vcmp.ne.s32.totalorder %v743, %v2683
        %vm2699 = vcmp.ne.s32.totalorder %v744, %v2683
        %vm2700 = vmand %vm2667, %vm2684
        %vm2701 = vmand %vm2668, %vm2685
        %vm2702 = vmand %vm2669, %vm2686
        %vm2703 = vmand %vm2670, %vm2687
        %vm2704 = vmand %vm2671, %vm2688
        %vm2705 = vmand %vm2672, %vm2689
        %vm2706 = vmand %vm2673, %vm2690
        %vm2707 = vmand %vm2674, %vm2691
        %vm2708 = vmand %vm2675, %vm2692
        %vm2709 = vmand %vm2676, %vm2693
        %vm2710 = vmand %vm2677, %vm2694
        %vm2711 = vmand %vm2678, %vm2695
        %vm2712 = vmand %vm2679, %vm2696
        %vm2713 = vmand %vm2680, %vm2697
        %vm2714 = vmand %vm2681, %vm2698
        %vm2715 = vmand %vm2682, %vm2699
        %s2716 = scalar_select %p2664, 1, 0
        %v2717 = vstv %s2716
        %vm2718 = vcmp.eq.s32.totalorder %v2717, 1
        %vm2719 = vmand %vm747, %vm2718
        %vm2720 = vmand %vm748, %vm2718
        %vm2721 = vmand %vm749, %vm2718
        %vm2722 = vmand %vm750, %vm2718
        %vm2723 = vmand %vm751, %vm2718
        %vm2724 = vmand %vm752, %vm2718
        %vm2725 = vmand %vm753, %vm2718
        %vm2726 = vmand %vm754, %vm2718
        %vm2727 = vmand %vm755, %vm2718
        %vm2728 = vmand %vm756, %vm2718
        %vm2729 = vmand %vm757, %vm2718
        %vm2730 = vmand %vm758, %vm2718
        %vm2731 = vmand %vm759, %vm2718
        %vm2732 = vmand %vm760, %vm2718
        %vm2733 = vmand %vm761, %vm2718
        %vm2734 = vmand %vm762, %vm2718
        %vm2735 = vmand %vm2700, %vm2719
        %vm2736 = vmand %vm2701, %vm2720
        %vm2737 = vmand %vm2702, %vm2721
        %vm2738 = vmand %vm2703, %vm2722
        %vm2739 = vmand %vm2704, %vm2723
        %vm2740 = vmand %vm2705, %vm2724
        %vm2741 = vmand %vm2706, %vm2725
        %vm2742 = vmand %vm2707, %vm2726
        %vm2743 = vmand %vm2708, %vm2727
        %vm2744 = vmand %vm2709, %vm2728
        %vm2745 = vmand %vm2710, %vm2729
        %vm2746 = vmand %vm2711, %vm2730
        %vm2747 = vmand %vm2712, %vm2731
        %vm2748 = vmand %vm2713, %vm2732
        %vm2749 = vmand %vm2714, %vm2733
        %vm2750 = vmand %vm2715, %vm2734
        %vm2751 = vcmp.ne.s32.totalorder %v711, %v2666
        %vm2752 = vmand %vm763, %vm2718
        %vm2753 = vmand %vm2751, %vm2752
        %2754 = vrot.lane.b32.xlu0 %v880, 125
        %v2755 = vpop.permute.xlu0 %2754
        %2756 = vrot.lane.b32.xlu0 %v882, 125
        %v2757 = vpop.permute.xlu0 %2756
        %2758 = vrot.lane.b32.xlu0 %v884, 125
        %v2759 = vpop.permute.xlu0 %2758
        %2760 = vrot.lane.b32.xlu0 %v886, 125
        %v2761 = vpop.permute.xlu0 %2760
        %2762 = vrot.lane.b32.xlu0 %v888, 125
        %v2763 = vpop.permute.xlu0 %2762
        %2764 = vrot.lane.b32.xlu0 %v890, 125
        %v2765 = vpop.permute.xlu0 %2764
        %2766 = vrot.lane.b32.xlu0 %v892, 125
        %v2767 = vpop.permute.xlu0 %2766
        %2768 = vrot.lane.b32.xlu0 %v894, 125
        %v2769 = vpop.permute.xlu0 %2768
        %2770 = vrot.lane.b32.xlu0 %v896, 125
        %v2771 = vpop.permute.xlu0 %2770
        %2772 = vrot.lane.b32.xlu0 %v898, 125
        %v2773 = vpop.permute.xlu0 %2772
        %2774 = vrot.lane.b32.xlu0 %v900, 125
        %v2775 = vpop.permute.xlu0 %2774
        %2776 = vrot.lane.b32.xlu0 %v902, 125
        %v2777 = vpop.permute.xlu0 %2776
        %2778 = vrot.lane.b32.xlu0 %v904, 125
        %v2779 = vpop.permute.xlu0 %2778
        %2780 = vrot.lane.b32.xlu0 %v906, 125
        %v2781 = vpop.permute.xlu0 %2780
        %2782 = vrot.lane.b32.xlu0 %v908, 125
        %v2783 = vpop.permute.xlu0 %2782
        %2784 = vrot.lane.b32.xlu0 %v910, 125
        %v2785 = vpop.permute.xlu0 %2784
        %v2802 = vsel %vm2735, %v2755, 0.0
        %v2803 = vsel %vm2736, %v2757, 0.0
        %v2804 = vsel %vm2737, %v2759, 0.0
        %v2805 = vsel %vm2738, %v2761, 0.0
        %v2806 = vsel %vm2739, %v2763, 0.0
        %v2807 = vsel %vm2740, %v2765, 0.0
        %v2808 = vsel %vm2741, %v2767, 0.0
        %v2809 = vsel %vm2742, %v2769, 0.0
        %v2810 = vsel %vm2743, %v2771, 0.0
        %v2811 = vsel %vm2744, %v2773, 0.0
        %v2812 = vsel %vm2745, %v2775, 0.0
        %v2813 = vsel %vm2746, %v2777, 0.0
        %v2814 = vsel %vm2747, %v2779, 0.0
        %v2815 = vsel %vm2748, %v2781, 0.0
        %v2816 = vsel %vm2749, %v2783, 0.0
        %v2817 = vsel %vm2750, %v2785, 0.0
        %2818 = vst [vmem:[#allocation1] sm:$0xff] %v929
        %s2819 = scalar_lea.vmem [#allocation1], 3
        %v2820 = vld [vmem:[%s2819] ss:$9 sm:$0xff]
        %v2822 = vsel %vm2753, %v2820, 0.0
        %2824 = vset.pattern.permute.xlu0 0
        %2825 = vperm.xlu0 %2824, %v2802
        %v2826 = vpop.permute.xlu0 %2825
        %2829 = vset.pattern.permute.xlu0 0
        %2830 = vperm.xlu0 %2829, %v2803
        %v2831 = vpop.permute.xlu0 %2830
        %2834 = vset.pattern.permute.xlu0 0
        %2835 = vperm.xlu0 %2834, %v2804
        %v2836 = vpop.permute.xlu0 %2835
        %2839 = vset.pattern.permute.xlu0 0
        %2840 = vperm.xlu0 %2839, %v2805
        %v2841 = vpop.permute.xlu0 %2840
        %2844 = vset.pattern.permute.xlu0 0
        %2845 = vperm.xlu0 %2844, %v2806
        %v2846 = vpop.permute.xlu0 %2845
        %2849 = vset.pattern.permute.xlu0 0
        %2850 = vperm.xlu0 %2849, %v2807
        %v2851 = vpop.permute.xlu0 %2850
        %2854 = vset.pattern.permute.xlu0 0
        %2855 = vperm.xlu0 %2854, %v2808
        %v2856 = vpop.permute.xlu0 %2855
        %2859 = vset.pattern.permute.xlu0 0
        %2860 = vperm.xlu0 %2859, %v2809
        %v2861 = vpop.permute.xlu0 %2860
        %2864 = vset.pattern.permute.xlu0 0
        %2865 = vperm.xlu0 %2864, %v2810
        %v2866 = vpop.permute.xlu0 %2865
        %2869 = vset.pattern.permute.xlu0 0
        %2870 = vperm.xlu0 %2869, %v2811
        %v2871 = vpop.permute.xlu0 %2870
        %2874 = vset.pattern.permute.xlu0 0
        %2875 = vperm.xlu0 %2874, %v2812
        %v2876 = vpop.permute.xlu0 %2875
        %2879 = vset.pattern.permute.xlu0 0
        %2880 = vperm.xlu0 %2879, %v2813
        %v2881 = vpop.permute.xlu0 %2880
        %2884 = vset.pattern.permute.xlu0 0
        %2885 = vperm.xlu0 %2884, %v2814
        %v2886 = vpop.permute.xlu0 %2885
        %2889 = vset.pattern.permute.xlu0 0
        %2890 = vperm.xlu0 %2889, %v2815
        %v2891 = vpop.permute.xlu0 %2890
        %2894 = vset.pattern.permute.xlu0 0
        %2895 = vperm.xlu0 %2894, %v2816
        %v2896 = vpop.permute.xlu0 %2895
        %2899 = vset.pattern.permute.xlu0 0
        %2900 = vperm.xlu0 %2899, %v2817
        %v2901 = vpop.permute.xlu0 %2900
        %v2904 = vperm.slane %v2822, 0
        %v2906 = vmul.f32 %v2826, %v2904
        %v2907 = vmul.f32 %v2831, %v2904
        %v2908 = vmul.f32 %v2836, %v2904
        %v2909 = vmul.f32 %v2841, %v2904
        %v2910 = vmul.f32 %v2846, %v2904
        %v2911 = vmul.f32 %v2851, %v2904
        %v2912 = vmul.f32 %v2856, %v2904
        %v2913 = vmul.f32 %v2861, %v2904
        %v2914 = vmul.f32 %v2866, %v2904
        %v2915 = vmul.f32 %v2871, %v2904
        %v2916 = vmul.f32 %v2876, %v2904
        %v2917 = vmul.f32 %v2881, %v2904
        %v2918 = vmul.f32 %v2886, %v2904
        %v2919 = vmul.f32 %v2891, %v2904
        %v2920 = vmul.f32 %v2896, %v2904
        %v2921 = vmul.f32 %v2901, %v2904
        %vm2922 = vcmp.gt.f32.partialorder %v2906, 0.9997057
        %vm2923 = vcmp.gt.f32.partialorder %v2907, 0.9997057
        %vm2924 = vcmp.gt.f32.partialorder %v2908, 0.9997057
        %vm2925 = vcmp.gt.f32.partialorder %v2909, 0.9997057
        %vm2926 = vcmp.gt.f32.partialorder %v2910, 0.9997057
        %vm2927 = vcmp.gt.f32.partialorder %v2911, 0.9997057
        %vm2928 = vcmp.gt.f32.partialorder %v2912, 0.9997057
        %vm2929 = vcmp.gt.f32.partialorder %v2913, 0.9997057
        %vm2930 = vcmp.gt.f32.partialorder %v2914, 0.9997057
        %vm2931 = vcmp.gt.f32.partialorder %v2915, 0.9997057
        %vm2932 = vcmp.gt.f32.partialorder %v2916, 0.9997057
        %vm2933 = vcmp.gt.f32.partialorder %v2917, 0.9997057
        %vm2934 = vcmp.gt.f32.partialorder %v2918, 0.9997057
        %vm2935 = vcmp.gt.f32.partialorder %v2919, 0.9997057
        %vm2936 = vcmp.gt.f32.partialorder %v2920, 0.9997057
        %vm2937 = vcmp.gt.f32.partialorder %v2921, 0.9997057
        %v2938 = vsel %vm2922, 1, 0
        %v2939 = vsel %vm2923, 1, 0
        %v2940 = vsel %vm2924, 1, 0
        %v2941 = vsel %vm2925, 1, 0
        %v2942 = vsel %vm2926, 1, 0
        %v2943 = vsel %vm2927, 1, 0
        %v2944 = vsel %vm2928, 1, 0
        %v2945 = vsel %vm2929, 1, 0
        %v2946 = vsel %vm2930, 1, 0
        %v2947 = vsel %vm2931, 1, 0
        %v2948 = vsel %vm2932, 1, 0
        %v2949 = vsel %vm2933, 1, 0
        %v2950 = vsel %vm2934, 1, 0
        %v2951 = vsel %vm2935, 1, 0
        %v2952 = vsel %vm2936, 1, 0
        %v2953 = vsel %vm2937, 1, 0
        %v2954 = vcvt.s32.f32 %v2938
        %v2955 = vcvt.s32.f32 %v2939
        %v2956 = vcvt.s32.f32 %v2940
        %v2957 = vcvt.s32.f32 %v2941
        %v2958 = vcvt.s32.f32 %v2942
        %v2959 = vcvt.s32.f32 %v2943
        %v2960 = vcvt.s32.f32 %v2944
        %v2961 = vcvt.s32.f32 %v2945
        %v2962 = vcvt.s32.f32 %v2946
        %v2963 = vcvt.s32.f32 %v2947
        %v2964 = vcvt.s32.f32 %v2948
        %v2965 = vcvt.s32.f32 %v2949
        %v2966 = vcvt.s32.f32 %v2950
        %v2967 = vcvt.s32.f32 %v2951
        %v2968 = vcvt.s32.f32 %v2952
        %v2969 = vcvt.s32.f32 %v2953
        %v2970 = vadd.f32 %v2954, %v2955
        %v2971 = vadd.f32 %v2970, %v2956
        %v2972 = vadd.f32 %v2971, %v2957
        %v2973 = vadd.f32 %v2972, %v2958
        %v2974 = vadd.f32 %v2973, %v2959
        %v2975 = vadd.f32 %v2974, %v2960
        %v2976 = vadd.f32 %v2975, %v2961
        %v2977 = vadd.f32 %v2976, %v2962
        %v2978 = vadd.f32 %v2977, %v2963
        %v2979 = vadd.f32 %v2978, %v2964
        %v2980 = vadd.f32 %v2979, %v2965
        %v2981 = vadd.f32 %v2980, %v2966
        %v2982 = vadd.f32 %v2981, %v2967
        %v2983 = vadd.f32 %v2982, %v2968
        %v2984 = vadd.f32 %v2983, %v2969
        %2985 = vadd.xlane.f32.xlu0 %v2984
        %v2986 = vpop.xlane.xlu0 %2985
        %v2987 = vrot.slane %v2986, 4
        %v2988 = vadd.f32 %v2986, %v2987
        %v2989 = vrot.slane %v2988, 2
        %v2990 = vadd.f32 %v2988, %v2989
        %v2991 = vrot.slane %v2990, 1
        %v2992 = vadd.f32 %v2990, %v2991
        %s2993 = vtos %v2992
        %v2994 = vadd.f32 %v2906, 1.0
        %v2995 = vadd.f32 %v2907, 1.0
        %v2996 = vadd.f32 %v2908, 1.0
        %v2997 = vadd.f32 %v2909, 1.0
        %v2998 = vadd.f32 %v2910, 1.0
        %v2999 = vadd.f32 %v2911, 1.0
        %v3000 = vadd.f32 %v2912, 1.0
        %v3001 = vadd.f32 %v2913, 1.0
        %v3002 = vadd.f32 %v2914, 1.0
        %v3003 = vadd.f32 %v2915, 1.0
        %v3004 = vadd.f32 %v2916, 1.0
        %v3005 = vadd.f32 %v2917, 1.0
        %v3006 = vadd.f32 %v2918, 1.0
        %v3007 = vadd.f32 %v2919, 1.0
        %v3008 = vadd.f32 %v2920, 1.0
        %v3009 = vadd.f32 %v2921, 1.0
        %v3010 = vlog2.pop %v2994
        %v3011 = vmul.f32 %v3010, 0.6931472
        %v3012 = vlog2.pop %v2995
        %v3013 = vmul.f32 %v3012, 0.6931472
        %v3014 = vlog2.pop %v2996
        %v3015 = vmul.f32 %v3014, 0.6931472
        %v3016 = vlog2.pop %v2997
        %v3017 = vmul.f32 %v3016, 0.6931472
        %v3018 = vlog2.pop %v2998
        %v3019 = vmul.f32 %v3018, 0.6931472
        %v3020 = vlog2.pop %v2999
        %v3021 = vmul.f32 %v3020, 0.6931472
        %v3022 = vlog2.pop %v3000
        %v3023 = vmul.f32 %v3022, 0.6931472
        %v3024 = vlog2.pop %v3001
        %v3025 = vmul.f32 %v3024, 0.6931472
        %v3026 = vlog2.pop %v3002
        %v3027 = vmul.f32 %v3026, 0.6931472
        %v3028 = vlog2.pop %v3003
        %v3029 = vmul.f32 %v3028, 0.6931472
        %v3030 = vlog2.pop %v3004
        %v3031 = vmul.f32 %v3030, 0.6931472
        %v3032 = vlog2.pop %v3005
        %v3033 = vmul.f32 %v3032, 0.6931472
        %v3034 = vlog2.pop %v3006
        %v3035 = vmul.f32 %v3034, 0.6931472
        %v3036 = vlog2.pop %v3007
        %v3037 = vmul.f32 %v3036, 0.6931472
        %v3038 = vlog2.pop %v3008
        %v3039 = vmul.f32 %v3038, 0.6931472
        %v3040 = vlog2.pop %v3009
        %v3041 = vmul.f32 %v3040, 0.6931472
        %v3042 = vsel %vm2922, %v3011, 0.0
        %v3043 = vsel %vm2923, %v3013, 0.0
        %v3044 = vsel %vm2924, %v3015, 0.0
        %v3045 = vsel %vm2925, %v3017, 0.0
        %v3046 = vsel %vm2926, %v3019, 0.0
        %v3047 = vsel %vm2927, %v3021, 0.0
        %v3048 = vsel %vm2928, %v3023, 0.0
        %v3049 = vsel %vm2929, %v3025, 0.0
        %v3050 = vsel %vm2930, %v3027, 0.0
        %v3051 = vsel %vm2931, %v3029, 0.0
        %v3052 = vsel %vm2932, %v3031, 0.0
        %v3053 = vsel %vm2933, %v3033, 0.0
        %v3054 = vsel %vm2934, %v3035, 0.0
        %v3055 = vsel %vm2935, %v3037, 0.0
        %v3056 = vsel %vm2936, %v3039, 0.0
        %v3057 = vsel %vm2937, %v3041, 0.0
        %v3058 = vadd.f32 %v3042, %v3043
        %v3059 = vadd.f32 %v3058, %v3044
        %v3060 = vadd.f32 %v3059, %v3045
        %v3061 = vadd.f32 %v3060, %v3046
        %v3062 = vadd.f32 %v3061, %v3047
        %v3063 = vadd.f32 %v3062, %v3048
        %v3064 = vadd.f32 %v3063, %v3049
        %v3065 = vadd.f32 %v3064, %v3050
        %v3066 = vadd.f32 %v3065, %v3051
        %v3067 = vadd.f32 %v3066, %v3052
        %v3068 = vadd.f32 %v3067, %v3053
        %v3069 = vadd.f32 %v3068, %v3054
        %v3070 = vadd.f32 %v3069, %v3055
        %v3071 = vadd.f32 %v3070, %v3056
        %v3072 = vadd.f32 %v3071, %v3057
        %3073 = vadd.xlane.f32.xlu0 %v3072
        %v3074 = vpop.xlane.xlu0 %3073
        %v3075 = vrot.slane %v3074, 4
        %v3076 = vadd.f32 %v3074, %v3075
        %v3077 = vrot.slane %v3076, 2
        %v3078 = vadd.f32 %v3076, %v3077
        %v3079 = vrot.slane %v3078, 1
        %v3080 = vadd.f32 %v3078, %v3079
        %s3081 = vtos %v3080
        %v3082 = vstv %s3081
        %v3083 = vmul.f32 %v3082, %v776
        %v3084 = vadd.f32 %v2448, %v3083
        %v3085 = vstv %s2993
        %v3086 = vmul.f32 %v3085, %v776
        %v3087 = vadd.f32 %v2451, %v3086
        %s3088 = scalar_select %p2664, 1.0, 0.0
        %v3089 = vstv %s3088
        %v3090 = vmul.f32 %v3089, %v776
        %v3091 = vadd.f32 %v2455, %v3090
        %3092 = vrot.lane.b32.xlu0 %v695, 125
        %v3093 = vpop.permute.xlu0 %3092
        %3094 = vrot.lane.b32.xlu0 %v696, 125
        %v3095 = vpop.permute.xlu0 %3094
        %3096 = vrot.lane.b32.xlu0 %v697, 125
        %v3097 = vpop.permute.xlu0 %3096
        %3098 = vrot.lane.b32.xlu0 %v698, 125
        %v3099 = vpop.permute.xlu0 %3098
        %3100 = vrot.lane.b32.xlu0 %v699, 125
        %v3101 = vpop.permute.xlu0 %3100
        %3102 = vrot.lane.b32.xlu0 %v700, 125
        %v3103 = vpop.permute.xlu0 %3102
        %3104 = vrot.lane.b32.xlu0 %v701, 125
        %v3105 = vpop.permute.xlu0 %3104
        %3106 = vrot.lane.b32.xlu0 %v702, 125
        %v3107 = vpop.permute.xlu0 %3106
        %3108 = vrot.lane.b32.xlu0 %v703, 125
        %v3109 = vpop.permute.xlu0 %3108
        %3110 = vrot.lane.b32.xlu0 %v704, 125
        %v3111 = vpop.permute.xlu0 %3110
        %3112 = vrot.lane.b32.xlu0 %v705, 125
        %v3113 = vpop.permute.xlu0 %3112
        %3114 = vrot.lane.b32.xlu0 %v706, 125
        %v3115 = vpop.permute.xlu0 %3114
        %3116 = vrot.lane.b32.xlu0 %v707, 125
        %v3117 = vpop.permute.xlu0 %3116
        %3118 = vrot.lane.b32.xlu0 %v708, 125
        %v3119 = vpop.permute.xlu0 %3118
        %3120 = vrot.lane.b32.xlu0 %v709, 125
        %v3121 = vpop.permute.xlu0 %3120
        %3122 = vrot.lane.b32.xlu0 %v710, 125
        %v3123 = vpop.permute.xlu0 %3122
        %v3140 = vsel %vm2735, %v3093, 0.0
        %v3141 = vsel %vm2736, %v3095, 0.0
        %v3142 = vsel %vm2737, %v3097, 0.0
        %v3143 = vsel %vm2738, %v3099, 0.0
        %v3144 = vsel %vm2739, %v3101, 0.0
        %v3145 = vsel %vm2740, %v3103, 0.0
        %v3146 = vsel %vm2741, %v3105, 0.0
        %v3147 = vsel %vm2742, %v3107, 0.0
        %v3148 = vsel %vm2743, %v3109, 0.0
        %v3149 = vsel %vm2744, %v3111, 0.0
        %v3150 = vsel %vm2745, %v3113, 0.0
        %v3151 = vsel %vm2746, %v3115, 0.0
        %v3152 = vsel %vm2747, %v3117, 0.0
        %v3153 = vsel %vm2748, %v3119, 0.0
        %v3154 = vsel %vm2749, %v3121, 0.0
        %v3155 = vsel %vm2750, %v3123, 0.0
        %v3156 = vsel %vm1216, %v3140, 0.0
        %v3157 = vsel %vm1216, %v3141, 0.0
        %v3158 = vadd.f32 %v3156, %v3157
        %v3159 = vsel %vm1216, %v3142, 0.0
        %v3160 = vadd.f32 %v3158, %v3159
        %v3161 = vsel %vm1216, %v3143, 0.0
        %v3162 = vadd.f32 %v3160, %v3161
        %v3163 = vsel %vm1216, %v3144, 0.0
        %v3164 = vadd.f32 %v3162, %v3163
        %v3165 = vsel %vm1216, %v3145, 0.0
        %v3166 = vadd.f32 %v3164, %v3165
        %v3167 = vsel %vm1216, %v3146, 0.0
        %v3168 = vadd.f32 %v3166, %v3167
        %v3169 = vsel %vm1216, %v3147, 0.0
        %v3170 = vadd.f32 %v3168, %v3169
        %v3171 = vsel %vm1216, %v3148, 0.0
        %v3172 = vadd.f32 %v3170, %v3171
        %v3173 = vsel %vm1216, %v3149, 0.0
        %v3174 = vadd.f32 %v3172, %v3173
        %v3175 = vsel %vm1216, %v3150, 0.0
        %v3176 = vadd.f32 %v3174, %v3175
        %v3177 = vsel %vm1216, %v3151, 0.0
        %v3178 = vadd.f32 %v3176, %v3177
        %v3179 = vsel %vm1216, %v3152, 0.0
        %v3180 = vadd.f32 %v3178, %v3179
        %v3181 = vsel %vm1216, %v3153, 0.0
        %v3182 = vadd.f32 %v3180, %v3181
        %v3183 = vsel %vm1216, %v3154, 0.0
        %v3184 = vadd.f32 %v3182, %v3183
        %v3185 = vsel %vm1216, %v3155, 0.0
        %v3186 = vadd.f32 %v3184, %v3185
        %3187 = vadd.xlane.f32.xlu0 %v3186
        %v3188 = vpop.xlane.xlu0 %3187
        %v3189 = vrot.slane %v3188, 4
        %v3190 = vadd.f32 %v3188, %v3189
        %v3191 = vrot.slane %v3190, 2
        %v3192 = vadd.f32 %v3190, %v3191
        %v3193 = vrot.slane %v3192, 1
        %v3194 = vadd.f32 %v3192, %v3193
        %s3195 = vtos %v3194
        %s3196 = sadd.f32 %s2560, %s3195
        %v3197 = vsel %vm2735, 1, 0
        %v3198 = vsel %vm2736, 1, 0
        %v3199 = vsel %vm2737, 1, 0
        %v3200 = vsel %vm2738, 1, 0
        %v3201 = vsel %vm2739, 1, 0
        %v3202 = vsel %vm2740, 1, 0
        %v3203 = vsel %vm2741, 1, 0
        %v3204 = vsel %vm2742, 1, 0
        %v3205 = vsel %vm2743, 1, 0
        %v3206 = vsel %vm2744, 1, 0
        %v3207 = vsel %vm2745, 1, 0
        %v3208 = vsel %vm2746, 1, 0
        %v3209 = vsel %vm2747, 1, 0
        %v3210 = vsel %vm2748, 1, 0
        %v3211 = vsel %vm2749, 1, 0
        %v3212 = vsel %vm2750, 1, 0
        %v3213 = vcvt.s32.f32 %v3197
        %v3214 = vcvt.s32.f32 %v3198
        %v3215 = vcvt.s32.f32 %v3199
        %v3216 = vcvt.s32.f32 %v3200
        %v3217 = vcvt.s32.f32 %v3201
        %v3218 = vcvt.s32.f32 %v3202
        %v3219 = vcvt.s32.f32 %v3203
        %v3220 = vcvt.s32.f32 %v3204
        %v3221 = vcvt.s32.f32 %v3205
        %v3222 = vcvt.s32.f32 %v3206
        %v3223 = vcvt.s32.f32 %v3207
        %v3224 = vcvt.s32.f32 %v3208
        %v3225 = vcvt.s32.f32 %v3209
        %v3226 = vcvt.s32.f32 %v3210
        %v3227 = vcvt.s32.f32 %v3211
        %v3228 = vcvt.s32.f32 %v3212
        %v3229 = vsel %vm1216, %v3213, 0.0
        %v3230 = vsel %vm1216, %v3214, 0.0
        %v3231 = vadd.f32 %v3229, %v3230
        %v3232 = vsel %vm1216, %v3215, 0.0
        %v3233 = vadd.f32 %v3231, %v3232
        %v3234 = vsel %vm1216, %v3216, 0.0
        %v3235 = vadd.f32 %v3233, %v3234
        %v3236 = vsel %vm1216, %v3217, 0.0
        %v3237 = vadd.f32 %v3235, %v3236
        %v3238 = vsel %vm1216, %v3218, 0.0
        %v3239 = vadd.f32 %v3237, %v3238
        %v3240 = vsel %vm1216, %v3219, 0.0
        %v3241 = vadd.f32 %v3239, %v3240
        %v3242 = vsel %vm1216, %v3220, 0.0
        %v3243 = vadd.f32 %v3241, %v3242
        %v3244 = vsel %vm1216, %v3221, 0.0
        %v3245 = vadd.f32 %v3243, %v3244
        %v3246 = vsel %vm1216, %v3222, 0.0
        %v3247 = vadd.f32 %v3245, %v3246
        %v3248 = vsel %vm1216, %v3223, 0.0
        %v3249 = vadd.f32 %v3247, %v3248
        %v3250 = vsel %vm1216, %v3224, 0.0
        %v3251 = vadd.f32 %v3249, %v3250
        %v3252 = vsel %vm1216, %v3225, 0.0
        %v3253 = vadd.f32 %v3251, %v3252
        %v3254 = vsel %vm1216, %v3226, 0.0
        %v3255 = vadd.f32 %v3253, %v3254
        %v3256 = vsel %vm1216, %v3227, 0.0
        %v3257 = vadd.f32 %v3255, %v3256
        %v3258 = vsel %vm1216, %v3228, 0.0
        %v3259 = vadd.f32 %v3257, %v3258
        %3260 = vadd.xlane.f32.xlu0 %v3259
        %v3261 = vpop.xlane.xlu0 %3260
        %v3262 = vrot.slane %v3261, 4
        %v3263 = vadd.f32 %v3261, %v3262
        %v3264 = vrot.slane %v3263, 2
        %v3265 = vadd.f32 %v3263, %v3264
        %v3266 = vrot.slane %v3265, 1
        %v3267 = vadd.f32 %v3265, %v3266
        %s3268 = vtos %v3267
        %s3269 = sadd.f32 %s2633, %s3268
        %3270 = vst [vmem:[#allocation1] sm:$0xff] %v678
        %s3271 = scalar_lea.vmem [#allocation1], 3
        %v3272 = vld [vmem:[%s3271] ss:$9 sm:$0xff]
        %v3274 = vsel %vm2753, %v3272, 0.0
        %v3275 = vsel %vm1332, %v3274, 0.0
        %3276 = vadd.xlane.f32.xlu0 %v3275
        %v3277 = vpop.xlane.xlu0 %3276
        %v3278 = vrot.slane %v3277, 4
        %v3279 = vadd.f32 %v3277, %v3278
        %v3280 = vrot.slane %v3279, 2
        %v3281 = vadd.f32 %v3279, %v3280
        %v3282 = vrot.slane %v3281, 1
        %v3283 = vadd.f32 %v3281, %v3282
        %s3284 = vtos %v3283
        %s3285 = sadd.f32 %s2649, %s3284
        %v3286 = vsel %vm2753, 1, 0
        %v3287 = vcvt.s32.f32 %v3286
        %v3288 = vsel %vm1332, %v3287, 0.0
        %3289 = vadd.xlane.f32.xlu0 %v3288
        %v3290 = vpop.xlane.xlu0 %3289
        %v3291 = vrot.slane %v3290, 4
        %v3292 = vadd.f32 %v3290, %v3291
        %v3293 = vrot.slane %v3292, 2
        %v3294 = vadd.f32 %v3292, %v3293
        %v3295 = vrot.slane %v3294, 1
        %v3296 = vadd.f32 %v3294, %v3295
        %s3297 = vtos %v3296
        %s3298 = sadd.f32 %s2662, %s3297
        %s3299 = sadd.s32 %s764, 4
        %p3300 = scmp.lt.s32.totalorder %s3299, 32
        %s3301 = sld [smem:[#allocation2 + %s3299]]
        %v3302 = vstv %s3301
        %vm3303 = vcmp.eq.s32.totalorder %v712, %v3302
        %vm3304 = vcmp.eq.s32.totalorder %v713, %v3302
        %vm3305 = vcmp.eq.s32.totalorder %v714, %v3302
        %vm3306 = vcmp.eq.s32.totalorder %v715, %v3302
        %vm3307 = vcmp.eq.s32.totalorder %v716, %v3302
        %vm3308 = vcmp.eq.s32.totalorder %v717, %v3302
        %vm3309 = vcmp.eq.s32.totalorder %v718, %v3302
        %vm3310 = vcmp.eq.s32.totalorder %v719, %v3302
        %vm3311 = vcmp.eq.s32.totalorder %v720, %v3302
        %vm3312 = vcmp.eq.s32.totalorder %v721, %v3302
        %vm3313 = vcmp.eq.s32.totalorder %v722, %v3302
        %vm3314 = vcmp.eq.s32.totalorder %v723, %v3302
        %vm3315 = vcmp.eq.s32.totalorder %v724, %v3302
        %vm3316 = vcmp.eq.s32.totalorder %v725, %v3302
        %vm3317 = vcmp.eq.s32.totalorder %v726, %v3302
        %vm3318 = vcmp.eq.s32.totalorder %v727, %v3302
        %v3319 = vstv %s3299
        %vm3320 = vcmp.ne.s32.totalorder %v729, %v3319
        %vm3321 = vcmp.ne.s32.totalorder %v730, %v3319
        %vm3322 = vcmp.ne.s32.totalorder %v731, %v3319
        %vm3323 = vcmp.ne.s32.totalorder %v732, %v3319
        %vm3324 = vcmp.ne.s32.totalorder %v733, %v3319
        %vm3325 = vcmp.ne.s32.totalorder %v734, %v3319
        %vm3326 = vcmp.ne.s32.totalorder %v735, %v3319
        %vm3327 = vcmp.ne.s32.totalorder %v736, %v3319
        %vm3328 = vcmp.ne.s32.totalorder %v737, %v3319
        %vm3329 = vcmp.ne.s32.totalorder %v738, %v3319
        %vm3330 = vcmp.ne.s32.totalorder %v739, %v3319
        %vm3331 = vcmp.ne.s32.totalorder %v740, %v3319
        %vm3332 = vcmp.ne.s32.totalorder %v741, %v3319
        %vm3333 = vcmp.ne.s32.totalorder %v742, %v3319
        %vm3334 = vcmp.ne.s32.totalorder %v743, %v3319
        %vm3335 = vcmp.ne.s32.totalorder %v744, %v3319
        %vm3336 = vmand %vm3303, %vm3320
        %vm3337 = vmand %vm3304, %vm3321
        %vm3338 = vmand %vm3305, %vm3322
        %vm3339 = vmand %vm3306, %vm3323
        %vm3340 = vmand %vm3307, %vm3324
        %vm3341 = vmand %vm3308, %vm3325
        %vm3342 = vmand %vm3309, %vm3326
        %vm3343 = vmand %vm3310, %vm3327
        %vm3344 = vmand %vm3311, %vm3328
        %vm3345 = vmand %vm3312, %vm3329
        %vm3346 = vmand %vm3313, %vm3330
        %vm3347 = vmand %vm3314, %vm3331
        %vm3348 = vmand %vm3315, %vm3332
        %vm3349 = vmand %vm3316, %vm3333
        %vm3350 = vmand %vm3317, %vm3334
        %vm3351 = vmand %vm3318, %vm3335
        %s3352 = scalar_select %p3300, 1, 0
        %v3353 = vstv %s3352
        %vm3354 = vcmp.eq.s32.totalorder %v3353, 1
        %vm3355 = vmand %vm747, %vm3354
        %vm3356 = vmand %vm748, %vm3354
        %vm3357 = vmand %vm749, %vm3354
        %vm3358 = vmand %vm750, %vm3354
        %vm3359 = vmand %vm751, %vm3354
        %vm3360 = vmand %vm752, %vm3354
        %vm3361 = vmand %vm753, %vm3354
        %vm3362 = vmand %vm754, %vm3354
        %vm3363 = vmand %vm755, %vm3354
        %vm3364 = vmand %vm756, %vm3354
        %vm3365 = vmand %vm757, %vm3354
        %vm3366 = vmand %vm758, %vm3354
        %vm3367 = vmand %vm759, %vm3354
        %vm3368 = vmand %vm760, %vm3354
        %vm3369 = vmand %vm761, %vm3354
        %vm3370 = vmand %vm762, %vm3354
        %vm3371 = vmand %vm3336, %vm3355
        %vm3372 = vmand %vm3337, %vm3356
        %vm3373 = vmand %vm3338, %vm3357
        %vm3374 = vmand %vm3339, %vm3358
        %vm3375 = vmand %vm3340, %vm3359
        %vm3376 = vmand %vm3341, %vm3360
        %vm3377 = vmand %vm3342, %vm3361
        %vm3378 = vmand %vm3343, %vm3362
        %vm3379 = vmand %vm3344, %vm3363
        %vm3380 = vmand %vm3345, %vm3364
        %vm3381 = vmand %vm3346, %vm3365
        %vm3382 = vmand %vm3347, %vm3366
        %vm3383 = vmand %vm3348, %vm3367
        %vm3384 = vmand %vm3349, %vm3368
        %vm3385 = vmand %vm3350, %vm3369
        %vm3386 = vmand %vm3351, %vm3370
        %vm3387 = vcmp.ne.s32.totalorder %v711, %v3302
        %vm3388 = vmand %vm763, %vm3354
        %vm3389 = vmand %vm3387, %vm3388
        %3390 = vrot.lane.b32.xlu0 %v880, 124
        %v3391 = vpop.permute.xlu0 %3390
        %3392 = vrot.lane.b32.xlu0 %v882, 124
        %v3393 = vpop.permute.xlu0 %3392
        %3394 = vrot.lane.b32.xlu0 %v884, 124
        %v3395 = vpop.permute.xlu0 %3394
        %3396 = vrot.lane.b32.xlu0 %v886, 124
        %v3397 = vpop.permute.xlu0 %3396
        %3398 = vrot.lane.b32.xlu0 %v888, 124
        %v3399 = vpop.permute.xlu0 %3398
        %3400 = vrot.lane.b32.xlu0 %v890, 124
        %v3401 = vpop.permute.xlu0 %3400
        %3402 = vrot.lane.b32.xlu0 %v892, 124
        %v3403 = vpop.permute.xlu0 %3402
        %3404 = vrot.lane.b32.xlu0 %v894, 124
        %v3405 = vpop.permute.xlu0 %3404
        %3406 = vrot.lane.b32.xlu0 %v896, 124
        %v3407 = vpop.permute.xlu0 %3406
        %3408 = vrot.lane.b32.xlu0 %v898, 124
        %v3409 = vpop.permute.xlu0 %3408
        %3410 = vrot.lane.b32.xlu0 %v900, 124
        %v3411 = vpop.permute.xlu0 %3410
        %3412 = vrot.lane.b32.xlu0 %v902, 124
        %v3413 = vpop.permute.xlu0 %3412
        %3414 = vrot.lane.b32.xlu0 %v904, 124
        %v3415 = vpop.permute.xlu0 %3414
        %3416 = vrot.lane.b32.xlu0 %v906, 124
        %v3417 = vpop.permute.xlu0 %3416
        %3418 = vrot.lane.b32.xlu0 %v908, 124
        %v3419 = vpop.permute.xlu0 %3418
        %3420 = vrot.lane.b32.xlu0 %v910, 124
        %v3421 = vpop.permute.xlu0 %3420
        %v3438 = vsel %vm3371, %v3391, 0.0
        %v3439 = vsel %vm3372, %v3393, 0.0
        %v3440 = vsel %vm3373, %v3395, 0.0
        %v3441 = vsel %vm3374, %v3397, 0.0
        %v3442 = vsel %vm3375, %v3399, 0.0
        %v3443 = vsel %vm3376, %v3401, 0.0
        %v3444 = vsel %vm3377, %v3403, 0.0
        %v3445 = vsel %vm3378, %v3405, 0.0
        %v3446 = vsel %vm3379, %v3407, 0.0
        %v3447 = vsel %vm3380, %v3409, 0.0
        %v3448 = vsel %vm3381, %v3411, 0.0
        %v3449 = vsel %vm3382, %v3413, 0.0
        %v3450 = vsel %vm3383, %v3415, 0.0
        %v3451 = vsel %vm3384, %v3417, 0.0
        %v3452 = vsel %vm3385, %v3419, 0.0
        %v3453 = vsel %vm3386, %v3421, 0.0
        %3454 = vst [vmem:[#allocation1] sm:$0xff] %v929
        %s3455 = scalar_lea.vmem [#allocation1], 4
        %v3456 = vld [vmem:[%s3455] ss:$9 sm:$0xff]
        %v3458 = vsel %vm3389, %v3456, 0.0
        %3460 = vset.pattern.permute.xlu0 0
        %3461 = vperm.xlu0 %3460, %v3438
        %v3462 = vpop.permute.xlu0 %3461
        %3465 = vset.pattern.permute.xlu0 0
        %3466 = vperm.xlu0 %3465, %v3439
        %v3467 = vpop.permute.xlu0 %3466
        %3470 = vset.pattern.permute.xlu0 0
        %3471 = vperm.xlu0 %3470, %v3440
        %v3472 = vpop.permute.xlu0 %3471
        %3475 = vset.pattern.permute.xlu0 0
        %3476 = vperm.xlu0 %3475, %v3441
        %v3477 = vpop.permute.xlu0 %3476
        %3480 = vset.pattern.permute.xlu0 0
        %3481 = vperm.xlu0 %3480, %v3442
        %v3482 = vpop.permute.xlu0 %3481
        %3485 = vset.pattern.permute.xlu0 0
        %3486 = vperm.xlu0 %3485, %v3443
        %v3487 = vpop.permute.xlu0 %3486
        %3490 = vset.pattern.permute.xlu0 0
        %3491 = vperm.xlu0 %3490, %v3444
        %v3492 = vpop.permute.xlu0 %3491
        %3495 = vset.pattern.permute.xlu0 0
        %3496 = vperm.xlu0 %3495, %v3445
        %v3497 = vpop.permute.xlu0 %3496
        %3500 = vset.pattern.permute.xlu0 0
        %3501 = vperm.xlu0 %3500, %v3446
        %v3502 = vpop.permute.xlu0 %3501
        %3505 = vset.pattern.permute.xlu0 0
        %3506 = vperm.xlu0 %3505, %v3447
        %v3507 = vpop.permute.xlu0 %3506
        %3510 = vset.pattern.permute.xlu0 0
        %3511 = vperm.xlu0 %3510, %v3448
        %v3512 = vpop.permute.xlu0 %3511
        %3515 = vset.pattern.permute.xlu0 0
        %3516 = vperm.xlu0 %3515, %v3449
        %v3517 = vpop.permute.xlu0 %3516
        %3520 = vset.pattern.permute.xlu0 0
        %3521 = vperm.xlu0 %3520, %v3450
        %v3522 = vpop.permute.xlu0 %3521
        %3525 = vset.pattern.permute.xlu0 0
        %3526 = vperm.xlu0 %3525, %v3451
        %v3527 = vpop.permute.xlu0 %3526
        %3530 = vset.pattern.permute.xlu0 0
        %3531 = vperm.xlu0 %3530, %v3452
        %v3532 = vpop.permute.xlu0 %3531
        %3535 = vset.pattern.permute.xlu0 0
        %3536 = vperm.xlu0 %3535, %v3453
        %v3537 = vpop.permute.xlu0 %3536
        %v3540 = vperm.slane %v3458, 0
        %v3542 = vmul.f32 %v3462, %v3540
        %v3543 = vmul.f32 %v3467, %v3540
        %v3544 = vmul.f32 %v3472, %v3540
        %v3545 = vmul.f32 %v3477, %v3540
        %v3546 = vmul.f32 %v3482, %v3540
        %v3547 = vmul.f32 %v3487, %v3540
        %v3548 = vmul.f32 %v3492, %v3540
        %v3549 = vmul.f32 %v3497, %v3540
        %v3550 = vmul.f32 %v3502, %v3540
        %v3551 = vmul.f32 %v3507, %v3540
        %v3552 = vmul.f32 %v3512, %v3540
        %v3553 = vmul.f32 %v3517, %v3540
        %v3554 = vmul.f32 %v3522, %v3540
        %v3555 = vmul.f32 %v3527, %v3540
        %v3556 = vmul.f32 %v3532, %v3540
        %v3557 = vmul.f32 %v3537, %v3540
        %vm3558 = vcmp.gt.f32.partialorder %v3542, 0.9997057
        %vm3559 = vcmp.gt.f32.partialorder %v3543, 0.9997057
        %vm3560 = vcmp.gt.f32.partialorder %v3544, 0.9997057
        %vm3561 = vcmp.gt.f32.partialorder %v3545, 0.9997057
        %vm3562 = vcmp.gt.f32.partialorder %v3546, 0.9997057
        %vm3563 = vcmp.gt.f32.partialorder %v3547, 0.9997057
        %vm3564 = vcmp.gt.f32.partialorder %v3548, 0.9997057
        %vm3565 = vcmp.gt.f32.partialorder %v3549, 0.9997057
        %vm3566 = vcmp.gt.f32.partialorder %v3550, 0.9997057
        %vm3567 = vcmp.gt.f32.partialorder %v3551, 0.9997057
        %vm3568 = vcmp.gt.f32.partialorder %v3552, 0.9997057
        %vm3569 = vcmp.gt.f32.partialorder %v3553, 0.9997057
        %vm3570 = vcmp.gt.f32.partialorder %v3554, 0.9997057
        %vm3571 = vcmp.gt.f32.partialorder %v3555, 0.9997057
        %vm3572 = vcmp.gt.f32.partialorder %v3556, 0.9997057
        %vm3573 = vcmp.gt.f32.partialorder %v3557, 0.9997057
        %v3574 = vsel %vm3558, 1, 0
        %v3575 = vsel %vm3559, 1, 0
        %v3576 = vsel %vm3560, 1, 0
        %v3577 = vsel %vm3561, 1, 0
        %v3578 = vsel %vm3562, 1, 0
        %v3579 = vsel %vm3563, 1, 0
        %v3580 = vsel %vm3564, 1, 0
        %v3581 = vsel %vm3565, 1, 0
        %v3582 = vsel %vm3566, 1, 0
        %v3583 = vsel %vm3567, 1, 0
        %v3584 = vsel %vm3568, 1, 0
        %v3585 = vsel %vm3569, 1, 0
        %v3586 = vsel %vm3570, 1, 0
        %v3587 = vsel %vm3571, 1, 0
        %v3588 = vsel %vm3572, 1, 0
        %v3589 = vsel %vm3573, 1, 0
        %v3590 = vcvt.s32.f32 %v3574
        %v3591 = vcvt.s32.f32 %v3575
        %v3592 = vcvt.s32.f32 %v3576
        %v3593 = vcvt.s32.f32 %v3577
        %v3594 = vcvt.s32.f32 %v3578
        %v3595 = vcvt.s32.f32 %v3579
        %v3596 = vcvt.s32.f32 %v3580
        %v3597 = vcvt.s32.f32 %v3581
        %v3598 = vcvt.s32.f32 %v3582
        %v3599 = vcvt.s32.f32 %v3583
        %v3600 = vcvt.s32.f32 %v3584
        %v3601 = vcvt.s32.f32 %v3585
        %v3602 = vcvt.s32.f32 %v3586
        %v3603 = vcvt.s32.f32 %v3587
        %v3604 = vcvt.s32.f32 %v3588
        %v3605 = vcvt.s32.f32 %v3589
        %v3606 = vadd.f32 %v3590, %v3591
        %v3607 = vadd.f32 %v3606, %v3592
        %v3608 = vadd.f32 %v3607, %v3593
        %v3609 = vadd.f32 %v3608, %v3594
        %v3610 = vadd.f32 %v3609, %v3595
        %v3611 = vadd.f32 %v3610, %v3596
        %v3612 = vadd.f32 %v3611, %v3597
        %v3613 = vadd.f32 %v3612, %v3598
        %v3614 = vadd.f32 %v3613, %v3599
        %v3615 = vadd.f32 %v3614, %v3600
        %v3616 = vadd.f32 %v3615, %v3601
        %v3617 = vadd.f32 %v3616, %v3602
        %v3618 = vadd.f32 %v3617, %v3603
        %v3619 = vadd.f32 %v3618, %v3604
        %v3620 = vadd.f32 %v3619, %v3605
        %3621 = vadd.xlane.f32.xlu0 %v3620
        %v3622 = vpop.xlane.xlu0 %3621
        %v3623 = vrot.slane %v3622, 4
        %v3624 = vadd.f32 %v3622, %v3623
        %v3625 = vrot.slane %v3624, 2
        %v3626 = vadd.f32 %v3624, %v3625
        %v3627 = vrot.slane %v3626, 1
        %v3628 = vadd.f32 %v3626, %v3627
        %s3629 = vtos %v3628
        %v3630 = vadd.f32 %v3542, 1.0
        %v3631 = vadd.f32 %v3543, 1.0
        %v3632 = vadd.f32 %v3544, 1.0
        %v3633 = vadd.f32 %v3545, 1.0
        %v3634 = vadd.f32 %v3546, 1.0
        %v3635 = vadd.f32 %v3547, 1.0
        %v3636 = vadd.f32 %v3548, 1.0
        %v3637 = vadd.f32 %v3549, 1.0
        %v3638 = vadd.f32 %v3550, 1.0
        %v3639 = vadd.f32 %v3551, 1.0
        %v3640 = vadd.f32 %v3552, 1.0
        %v3641 = vadd.f32 %v3553, 1.0
        %v3642 = vadd.f32 %v3554, 1.0
        %v3643 = vadd.f32 %v3555, 1.0
        %v3644 = vadd.f32 %v3556, 1.0
        %v3645 = vadd.f32 %v3557, 1.0
        %v3646 = vlog2.pop %v3630
        %v3647 = vmul.f32 %v3646, 0.6931472
        %v3648 = vlog2.pop %v3631
        %v3649 = vmul.f32 %v3648, 0.6931472
        %v3650 = vlog2.pop %v3632
        %v3651 = vmul.f32 %v3650, 0.6931472
        %v3652 = vlog2.pop %v3633
        %v3653 = vmul.f32 %v3652, 0.6931472
        %v3654 = vlog2.pop %v3634
        %v3655 = vmul.f32 %v3654, 0.6931472
        %v3656 = vlog2.pop %v3635
        %v3657 = vmul.f32 %v3656, 0.6931472
        %v3658 = vlog2.pop %v3636
        %v3659 = vmul.f32 %v3658, 0.6931472
        %v3660 = vlog2.pop %v3637
        %v3661 = vmul.f32 %v3660, 0.6931472
        %v3662 = vlog2.pop %v3638
        %v3663 = vmul.f32 %v3662, 0.6931472
        %v3664 = vlog2.pop %v3639
        %v3665 = vmul.f32 %v3664, 0.6931472
        %v3666 = vlog2.pop %v3640
        %v3667 = vmul.f32 %v3666, 0.6931472
        %v3668 = vlog2.pop %v3641
        %v3669 = vmul.f32 %v3668, 0.6931472
        %v3670 = vlog2.pop %v3642
        %v3671 = vmul.f32 %v3670, 0.6931472
        %v3672 = vlog2.pop %v3643
        %v3673 = vmul.f32 %v3672, 0.6931472
        %v3674 = vlog2.pop %v3644
        %v3675 = vmul.f32 %v3674, 0.6931472
        %v3676 = vlog2.pop %v3645
        %v3677 = vmul.f32 %v3676, 0.6931472
        %v3678 = vsel %vm3558, %v3647, 0.0
        %v3679 = vsel %vm3559, %v3649, 0.0
        %v3680 = vsel %vm3560, %v3651, 0.0
        %v3681 = vsel %vm3561, %v3653, 0.0
        %v3682 = vsel %vm3562, %v3655, 0.0
        %v3683 = vsel %vm3563, %v3657, 0.0
        %v3684 = vsel %vm3564, %v3659, 0.0
        %v3685 = vsel %vm3565, %v3661, 0.0
        %v3686 = vsel %vm3566, %v3663, 0.0
        %v3687 = vsel %vm3567, %v3665, 0.0
        %v3688 = vsel %vm3568, %v3667, 0.0
        %v3689 = vsel %vm3569, %v3669, 0.0
        %v3690 = vsel %vm3570, %v3671, 0.0
        %v3691 = vsel %vm3571, %v3673, 0.0
        %v3692 = vsel %vm3572, %v3675, 0.0
        %v3693 = vsel %vm3573, %v3677, 0.0
        %v3694 = vadd.f32 %v3678, %v3679
        %v3695 = vadd.f32 %v3694, %v3680
        %v3696 = vadd.f32 %v3695, %v3681
        %v3697 = vadd.f32 %v3696, %v3682
        %v3698 = vadd.f32 %v3697, %v3683
        %v3699 = vadd.f32 %v3698, %v3684
        %v3700 = vadd.f32 %v3699, %v3685
        %v3701 = vadd.f32 %v3700, %v3686
        %v3702 = vadd.f32 %v3701, %v3687
        %v3703 = vadd.f32 %v3702, %v3688
        %v3704 = vadd.f32 %v3703, %v3689
        %v3705 = vadd.f32 %v3704, %v3690
        %v3706 = vadd.f32 %v3705, %v3691
        %v3707 = vadd.f32 %v3706, %v3692
        %v3708 = vadd.f32 %v3707, %v3693
        %3709 = vadd.xlane.f32.xlu0 %v3708
        %v3710 = vpop.xlane.xlu0 %3709
        %v3711 = vrot.slane %v3710, 4
        %v3712 = vadd.f32 %v3710, %v3711
        %v3713 = vrot.slane %v3712, 2
        %v3714 = vadd.f32 %v3712, %v3713
        %v3715 = vrot.slane %v3714, 1
        %v3716 = vadd.f32 %v3714, %v3715
        %s3717 = vtos %v3716
        %v3718 = vstv %s3717
        %v3719 = vmul.f32 %v3718, %v779
        %v3720 = vadd.f32 %v3084, %v3719
        %v3721 = vstv %s3629
        %v3722 = vmul.f32 %v3721, %v779
        %v3723 = vadd.f32 %v3087, %v3722
        %s3724 = scalar_select %p3300, 1.0, 0.0
        %v3725 = vstv %s3724
        %v3726 = vmul.f32 %v3725, %v779
        %v3727 = vadd.f32 %v3091, %v3726
        %3728 = vrot.lane.b32.xlu0 %v695, 124
        %v3729 = vpop.permute.xlu0 %3728
        %3730 = vrot.lane.b32.xlu0 %v696, 124
        %v3731 = vpop.permute.xlu0 %3730
        %3732 = vrot.lane.b32.xlu0 %v697, 124
        %v3733 = vpop.permute.xlu0 %3732
        %3734 = vrot.lane.b32.xlu0 %v698, 124
        %v3735 = vpop.permute.xlu0 %3734
        %3736 = vrot.lane.b32.xlu0 %v699, 124
        %v3737 = vpop.permute.xlu0 %3736
        %3738 = vrot.lane.b32.xlu0 %v700, 124
        %v3739 = vpop.permute.xlu0 %3738
        %3740 = vrot.lane.b32.xlu0 %v701, 124
        %v3741 = vpop.permute.xlu0 %3740
        %3742 = vrot.lane.b32.xlu0 %v702, 124
        %v3743 = vpop.permute.xlu0 %3742
        %3744 = vrot.lane.b32.xlu0 %v703, 124
        %v3745 = vpop.permute.xlu0 %3744
        %3746 = vrot.lane.b32.xlu0 %v704, 124
        %v3747 = vpop.permute.xlu0 %3746
        %3748 = vrot.lane.b32.xlu0 %v705, 124
        %v3749 = vpop.permute.xlu0 %3748
        %3750 = vrot.lane.b32.xlu0 %v706, 124
        %v3751 = vpop.permute.xlu0 %3750
        %3752 = vrot.lane.b32.xlu0 %v707, 124
        %v3753 = vpop.permute.xlu0 %3752
        %3754 = vrot.lane.b32.xlu0 %v708, 124
        %v3755 = vpop.permute.xlu0 %3754
        %3756 = vrot.lane.b32.xlu0 %v709, 124
        %v3757 = vpop.permute.xlu0 %3756
        %3758 = vrot.lane.b32.xlu0 %v710, 124
        %v3759 = vpop.permute.xlu0 %3758
        %v3776 = vsel %vm3371, %v3729, 0.0
        %v3777 = vsel %vm3372, %v3731, 0.0
        %v3778 = vsel %vm3373, %v3733, 0.0
        %v3779 = vsel %vm3374, %v3735, 0.0
        %v3780 = vsel %vm3375, %v3737, 0.0
        %v3781 = vsel %vm3376, %v3739, 0.0
        %v3782 = vsel %vm3377, %v3741, 0.0
        %v3783 = vsel %vm3378, %v3743, 0.0
        %v3784 = vsel %vm3379, %v3745, 0.0
        %v3785 = vsel %vm3380, %v3747, 0.0
        %v3786 = vsel %vm3381, %v3749, 0.0
        %v3787 = vsel %vm3382, %v3751, 0.0
        %v3788 = vsel %vm3383, %v3753, 0.0
        %v3789 = vsel %vm3384, %v3755, 0.0
        %v3790 = vsel %vm3385, %v3757, 0.0
        %v3791 = vsel %vm3386, %v3759, 0.0
        %v3792 = vsel %vm1216, %v3776, 0.0
        %v3793 = vsel %vm1216, %v3777, 0.0
        %v3794 = vadd.f32 %v3792, %v3793
        %v3795 = vsel %vm1216, %v3778, 0.0
        %v3796 = vadd.f32 %v3794, %v3795
        %v3797 = vsel %vm1216, %v3779, 0.0
        %v3798 = vadd.f32 %v3796, %v3797
        %v3799 = vsel %vm1216, %v3780, 0.0
        %v3800 = vadd.f32 %v3798, %v3799
        %v3801 = vsel %vm1216, %v3781, 0.0
        %v3802 = vadd.f32 %v3800, %v3801
        %v3803 = vsel %vm1216, %v3782, 0.0
        %v3804 = vadd.f32 %v3802, %v3803
        %v3805 = vsel %vm1216, %v3783, 0.0
        %v3806 = vadd.f32 %v3804, %v3805
        %v3807 = vsel %vm1216, %v3784, 0.0
        %v3808 = vadd.f32 %v3806, %v3807
        %v3809 = vsel %vm1216, %v3785, 0.0
        %v3810 = vadd.f32 %v3808, %v3809
        %v3811 = vsel %vm1216, %v3786, 0.0
        %v3812 = vadd.f32 %v3810, %v3811
        %v3813 = vsel %vm1216, %v3787, 0.0
        %v3814 = vadd.f32 %v3812, %v3813
        %v3815 = vsel %vm1216, %v3788, 0.0
        %v3816 = vadd.f32 %v3814, %v3815
        %v3817 = vsel %vm1216, %v3789, 0.0
        %v3818 = vadd.f32 %v3816, %v3817
        %v3819 = vsel %vm1216, %v3790, 0.0
        %v3820 = vadd.f32 %v3818, %v3819
        %v3821 = vsel %vm1216, %v3791, 0.0
        %v3822 = vadd.f32 %v3820, %v3821
        %3823 = vadd.xlane.f32.xlu0 %v3822
        %v3824 = vpop.xlane.xlu0 %3823
        %v3825 = vrot.slane %v3824, 4
        %v3826 = vadd.f32 %v3824, %v3825
        %v3827 = vrot.slane %v3826, 2
        %v3828 = vadd.f32 %v3826, %v3827
        %v3829 = vrot.slane %v3828, 1
        %v3830 = vadd.f32 %v3828, %v3829
        %s3831 = vtos %v3830
        %s3832 = sadd.f32 %s3196, %s3831
        %v3833 = vsel %vm3371, 1, 0
        %v3834 = vsel %vm3372, 1, 0
        %v3835 = vsel %vm3373, 1, 0
        %v3836 = vsel %vm3374, 1, 0
        %v3837 = vsel %vm3375, 1, 0
        %v3838 = vsel %vm3376, 1, 0
        %v3839 = vsel %vm3377, 1, 0
        %v3840 = vsel %vm3378, 1, 0
        %v3841 = vsel %vm3379, 1, 0
        %v3842 = vsel %vm3380, 1, 0
        %v3843 = vsel %vm3381, 1, 0
        %v3844 = vsel %vm3382, 1, 0
        %v3845 = vsel %vm3383, 1, 0
        %v3846 = vsel %vm3384, 1, 0
        %v3847 = vsel %vm3385, 1, 0
        %v3848 = vsel %vm3386, 1, 0
        %v3849 = vcvt.s32.f32 %v3833
        %v3850 = vcvt.s32.f32 %v3834
        %v3851 = vcvt.s32.f32 %v3835
        %v3852 = vcvt.s32.f32 %v3836
        %v3853 = vcvt.s32.f32 %v3837
        %v3854 = vcvt.s32.f32 %v3838
        %v3855 = vcvt.s32.f32 %v3839
        %v3856 = vcvt.s32.f32 %v3840
        %v3857 = vcvt.s32.f32 %v3841
        %v3858 = vcvt.s32.f32 %v3842
        %v3859 = vcvt.s32.f32 %v3843
        %v3860 = vcvt.s32.f32 %v3844
        %v3861 = vcvt.s32.f32 %v3845
        %v3862 = vcvt.s32.f32 %v3846
        %v3863 = vcvt.s32.f32 %v3847
        %v3864 = vcvt.s32.f32 %v3848
        %v3865 = vsel %vm1216, %v3849, 0.0
        %v3866 = vsel %vm1216, %v3850, 0.0
        %v3867 = vadd.f32 %v3865, %v3866
        %v3868 = vsel %vm1216, %v3851, 0.0
        %v3869 = vadd.f32 %v3867, %v3868
        %v3870 = vsel %vm1216, %v3852, 0.0
        %v3871 = vadd.f32 %v3869, %v3870
        %v3872 = vsel %vm1216, %v3853, 0.0
        %v3873 = vadd.f32 %v3871, %v3872
        %v3874 = vsel %vm1216, %v3854, 0.0
        %v3875 = vadd.f32 %v3873, %v3874
        %v3876 = vsel %vm1216, %v3855, 0.0
        %v3877 = vadd.f32 %v3875, %v3876
        %v3878 = vsel %vm1216, %v3856, 0.0
        %v3879 = vadd.f32 %v3877, %v3878
        %v3880 = vsel %vm1216, %v3857, 0.0
        %v3881 = vadd.f32 %v3879, %v3880
        %v3882 = vsel %vm1216, %v3858, 0.0
        %v3883 = vadd.f32 %v3881, %v3882
        %v3884 = vsel %vm1216, %v3859, 0.0
        %v3885 = vadd.f32 %v3883, %v3884
        %v3886 = vsel %vm1216, %v3860, 0.0
        %v3887 = vadd.f32 %v3885, %v3886
        %v3888 = vsel %vm1216, %v3861, 0.0
        %v3889 = vadd.f32 %v3887, %v3888
        %v3890 = vsel %vm1216, %v3862, 0.0
        %v3891 = vadd.f32 %v3889, %v3890
        %v3892 = vsel %vm1216, %v3863, 0.0
        %v3893 = vadd.f32 %v3891, %v3892
        %v3894 = vsel %vm1216, %v3864, 0.0
        %v3895 = vadd.f32 %v3893, %v3894
        %3896 = vadd.xlane.f32.xlu0 %v3895
        %v3897 = vpop.xlane.xlu0 %3896
        %v3898 = vrot.slane %v3897, 4
        %v3899 = vadd.f32 %v3897, %v3898
        %v3900 = vrot.slane %v3899, 2
        %v3901 = vadd.f32 %v3899, %v3900
        %v3902 = vrot.slane %v3901, 1
        %v3903 = vadd.f32 %v3901, %v3902
        %s3904 = vtos %v3903
        %s3905 = sadd.f32 %s3269, %s3904
        %3906 = vst [vmem:[#allocation1] sm:$0xff] %v678
        %s3907 = scalar_lea.vmem [#allocation1], 4
        %v3908 = vld [vmem:[%s3907] ss:$9 sm:$0xff]
        %v3910 = vsel %vm3389, %v3908, 0.0
        %v3911 = vsel %vm1332, %v3910, 0.0
        %3912 = vadd.xlane.f32.xlu0 %v3911
        %v3913 = vpop.xlane.xlu0 %3912
        %v3914 = vrot.slane %v3913, 4
        %v3915 = vadd.f32 %v3913, %v3914
        %v3916 = vrot.slane %v3915, 2
        %v3917 = vadd.f32 %v3915, %v3916
        %v3918 = vrot.slane %v3917, 1
        %v3919 = vadd.f32 %v3917, %v3918
        %s3920 = vtos %v3919
        %s3921 = sadd.f32 %s3285, %s3920
        %v3922 = vsel %vm3389, 1, 0
        %v3923 = vcvt.s32.f32 %v3922
        %v3924 = vsel %vm1332, %v3923, 0.0
        %3925 = vadd.xlane.f32.xlu0 %v3924
        %v3926 = vpop.xlane.xlu0 %3925
        %v3927 = vrot.slane %v3926, 4
        %v3928 = vadd.f32 %v3926, %v3927
        %v3929 = vrot.slane %v3928, 2
        %v3930 = vadd.f32 %v3928, %v3929
        %v3931 = vrot.slane %v3930, 1
        %v3932 = vadd.f32 %v3930, %v3931
        %s3933 = vtos %v3932
        %s3934 = sadd.f32 %s3298, %s3933
        %s3935 = sadd.s32 %s764, 5
        %p3936 = scmp.lt.s32.totalorder %s3935, 32
        %s3937 = sld [smem:[#allocation2 + %s3935]]
        %v3938 = vstv %s3937
        %vm3939 = vcmp.eq.s32.totalorder %v712, %v3938
        %vm3940 = vcmp.eq.s32.totalorder %v713, %v3938
        %vm3941 = vcmp.eq.s32.totalorder %v714, %v3938
        %vm3942 = vcmp.eq.s32.totalorder %v715, %v3938
        %vm3943 = vcmp.eq.s32.totalorder %v716, %v3938
        %vm3944 = vcmp.eq.s32.totalorder %v717, %v3938
        %vm3945 = vcmp.eq.s32.totalorder %v718, %v3938
        %vm3946 = vcmp.eq.s32.totalorder %v719, %v3938
        %vm3947 = vcmp.eq.s32.totalorder %v720, %v3938
        %vm3948 = vcmp.eq.s32.totalorder %v721, %v3938
        %vm3949 = vcmp.eq.s32.totalorder %v722, %v3938
        %vm3950 = vcmp.eq.s32.totalorder %v723, %v3938
        %vm3951 = vcmp.eq.s32.totalorder %v724, %v3938
        %vm3952 = vcmp.eq.s32.totalorder %v725, %v3938
        %vm3953 = vcmp.eq.s32.totalorder %v726, %v3938
        %vm3954 = vcmp.eq.s32.totalorder %v727, %v3938
        %v3955 = vstv %s3935
        %vm3956 = vcmp.ne.s32.totalorder %v729, %v3955
        %vm3957 = vcmp.ne.s32.totalorder %v730, %v3955
        %vm3958 = vcmp.ne.s32.totalorder %v731, %v3955
        %vm3959 = vcmp.ne.s32.totalorder %v732, %v3955
        %vm3960 = vcmp.ne.s32.totalorder %v733, %v3955
        %vm3961 = vcmp.ne.s32.totalorder %v734, %v3955
        %vm3962 = vcmp.ne.s32.totalorder %v735, %v3955
        %vm3963 = vcmp.ne.s32.totalorder %v736, %v3955
        %vm3964 = vcmp.ne.s32.totalorder %v737, %v3955
        %vm3965 = vcmp.ne.s32.totalorder %v738, %v3955
        %vm3966 = vcmp.ne.s32.totalorder %v739, %v3955
        %vm3967 = vcmp.ne.s32.totalorder %v740, %v3955
        %vm3968 = vcmp.ne.s32.totalorder %v741, %v3955
        %vm3969 = vcmp.ne.s32.totalorder %v742, %v3955
        %vm3970 = vcmp.ne.s32.totalorder %v743, %v3955
        %vm3971 = vcmp.ne.s32.totalorder %v744, %v3955
        %vm3972 = vmand %vm3939, %vm3956
        %vm3973 = vmand %vm3940, %vm3957
        %vm3974 = vmand %vm3941, %vm3958
        %vm3975 = vmand %vm3942, %vm3959
        %vm3976 = vmand %vm3943, %vm3960
        %vm3977 = vmand %vm3944, %vm3961
        %vm3978 = vmand %vm3945, %vm3962
        %vm3979 = vmand %vm3946, %vm3963
        %vm3980 = vmand %vm3947, %vm3964
        %vm3981 = vmand %vm3948, %vm3965
        %vm3982 = vmand %vm3949, %vm3966
        %vm3983 = vmand %vm3950, %vm3967
        %vm3984 = vmand %vm3951, %vm3968
        %vm3985 = vmand %vm3952, %vm3969
        %vm3986 = vmand %vm3953, %vm3970
        %vm3987 = vmand %vm3954, %vm3971
        %s3988 = scalar_select %p3936, 1, 0
        %v3989 = vstv %s3988
        %vm3990 = vcmp.eq.s32.totalorder %v3989, 1
        %vm3991 = vmand %vm747, %vm3990
        %vm3992 = vmand %vm748, %vm3990
        %vm3993 = vmand %vm749, %vm3990
        %vm3994 = vmand %vm750, %vm3990
        %vm3995 = vmand %vm751, %vm3990
        %vm3996 = vmand %vm752, %vm3990
        %vm3997 = vmand %vm753, %vm3990
        %vm3998 = vmand %vm754, %vm3990
        %vm3999 = vmand %vm755, %vm3990
        %vm4000 = vmand %vm756, %vm3990
        %vm4001 = vmand %vm757, %vm3990
        %vm4002 = vmand %vm758, %vm3990
        %vm4003 = vmand %vm759, %vm3990
        %vm4004 = vmand %vm760, %vm3990
        %vm4005 = vmand %vm761, %vm3990
        %vm4006 = vmand %vm762, %vm3990
        %vm4007 = vmand %vm3972, %vm3991
        %vm4008 = vmand %vm3973, %vm3992
        %vm4009 = vmand %vm3974, %vm3993
        %vm4010 = vmand %vm3975, %vm3994
        %vm4011 = vmand %vm3976, %vm3995
        %vm4012 = vmand %vm3977, %vm3996
        %vm4013 = vmand %vm3978, %vm3997
        %vm4014 = vmand %vm3979, %vm3998
        %vm4015 = vmand %vm3980, %vm3999
        %vm4016 = vmand %vm3981, %vm4000
        %vm4017 = vmand %vm3982, %vm4001
        %vm4018 = vmand %vm3983, %vm4002
        %vm4019 = vmand %vm3984, %vm4003
        %vm4020 = vmand %vm3985, %vm4004
        %vm4021 = vmand %vm3986, %vm4005
        %vm4022 = vmand %vm3987, %vm4006
        %vm4023 = vcmp.ne.s32.totalorder %v711, %v3938
        %vm4024 = vmand %vm763, %vm3990
        %vm4025 = vmand %vm4023, %vm4024
        %4026 = vrot.lane.b32.xlu0 %v880, 123
        %v4027 = vpop.permute.xlu0 %4026
        %4028 = vrot.lane.b32.xlu0 %v882, 123
        %v4029 = vpop.permute.xlu0 %4028
        %4030 = vrot.lane.b32.xlu0 %v884, 123
        %v4031 = vpop.permute.xlu0 %4030
        %4032 = vrot.lane.b32.xlu0 %v886, 123
        %v4033 = vpop.permute.xlu0 %4032
        %4034 = vrot.lane.b32.xlu0 %v888, 123
        %v4035 = vpop.permute.xlu0 %4034
        %4036 = vrot.lane.b32.xlu0 %v890, 123
        %v4037 = vpop.permute.xlu0 %4036
        %4038 = vrot.lane.b32.xlu0 %v892, 123
        %v4039 = vpop.permute.xlu0 %4038
        %4040 = vrot.lane.b32.xlu0 %v894, 123
        %v4041 = vpop.permute.xlu0 %4040
        %4042 = vrot.lane.b32.xlu0 %v896, 123
        %v4043 = vpop.permute.xlu0 %4042
        %4044 = vrot.lane.b32.xlu0 %v898, 123
        %v4045 = vpop.permute.xlu0 %4044
        %4046 = vrot.lane.b32.xlu0 %v900, 123
        %v4047 = vpop.permute.xlu0 %4046
        %4048 = vrot.lane.b32.xlu0 %v902, 123
        %v4049 = vpop.permute.xlu0 %4048
        %4050 = vrot.lane.b32.xlu0 %v904, 123
        %v4051 = vpop.permute.xlu0 %4050
        %4052 = vrot.lane.b32.xlu0 %v906, 123
        %v4053 = vpop.permute.xlu0 %4052
        %4054 = vrot.lane.b32.xlu0 %v908, 123
        %v4055 = vpop.permute.xlu0 %4054
        %4056 = vrot.lane.b32.xlu0 %v910, 123
        %v4057 = vpop.permute.xlu0 %4056
        %v4074 = vsel %vm4007, %v4027, 0.0
        %v4075 = vsel %vm4008, %v4029, 0.0
        %v4076 = vsel %vm4009, %v4031, 0.0
        %v4077 = vsel %vm4010, %v4033, 0.0
        %v4078 = vsel %vm4011, %v4035, 0.0
        %v4079 = vsel %vm4012, %v4037, 0.0
        %v4080 = vsel %vm4013, %v4039, 0.0
        %v4081 = vsel %vm4014, %v4041, 0.0
        %v4082 = vsel %vm4015, %v4043, 0.0
        %v4083 = vsel %vm4016, %v4045, 0.0
        %v4084 = vsel %vm4017, %v4047, 0.0
        %v4085 = vsel %vm4018, %v4049, 0.0
        %v4086 = vsel %vm4019, %v4051, 0.0
        %v4087 = vsel %vm4020, %v4053, 0.0
        %v4088 = vsel %vm4021, %v4055, 0.0
        %v4089 = vsel %vm4022, %v4057, 0.0
        %4090 = vst [vmem:[#allocation1] sm:$0xff] %v929
        %s4091 = scalar_lea.vmem [#allocation1], 5
        %v4092 = vld [vmem:[%s4091] ss:$9 sm:$0xff]
        %v4094 = vsel %vm4025, %v4092, 0.0
        %4096 = vset.pattern.permute.xlu0 0
        %4097 = vperm.xlu0 %4096, %v4074
        %v4098 = vpop.permute.xlu0 %4097
        %4101 = vset.pattern.permute.xlu0 0
        %4102 = vperm.xlu0 %4101, %v4075
        %v4103 = vpop.permute.xlu0 %4102
        %4106 = vset.pattern.permute.xlu0 0
        %4107 = vperm.xlu0 %4106, %v4076
        %v4108 = vpop.permute.xlu0 %4107
        %4111 = vset.pattern.permute.xlu0 0
        %4112 = vperm.xlu0 %4111, %v4077
        %v4113 = vpop.permute.xlu0 %4112
        %4116 = vset.pattern.permute.xlu0 0
        %4117 = vperm.xlu0 %4116, %v4078
        %v4118 = vpop.permute.xlu0 %4117
        %4121 = vset.pattern.permute.xlu0 0
        %4122 = vperm.xlu0 %4121, %v4079
        %v4123 = vpop.permute.xlu0 %4122
        %4126 = vset.pattern.permute.xlu0 0
        %4127 = vperm.xlu0 %4126, %v4080
        %v4128 = vpop.permute.xlu0 %4127
        %4131 = vset.pattern.permute.xlu0 0
        %4132 = vperm.xlu0 %4131, %v4081
        %v4133 = vpop.permute.xlu0 %4132
        %4136 = vset.pattern.permute.xlu0 0
        %4137 = vperm.xlu0 %4136, %v4082
        %v4138 = vpop.permute.xlu0 %4137
        %4141 = vset.pattern.permute.xlu0 0
        %4142 = vperm.xlu0 %4141, %v4083
        %v4143 = vpop.permute.xlu0 %4142
        %4146 = vset.pattern.permute.xlu0 0
        %4147 = vperm.xlu0 %4146, %v4084
        %v4148 = vpop.permute.xlu0 %4147
        %4151 = vset.pattern.permute.xlu0 0
        %4152 = vperm.xlu0 %4151, %v4085
        %v4153 = vpop.permute.xlu0 %4152
        %4156 = vset.pattern.permute.xlu0 0
        %4157 = vperm.xlu0 %4156, %v4086
        %v4158 = vpop.permute.xlu0 %4157
        %4161 = vset.pattern.permute.xlu0 0
        %4162 = vperm.xlu0 %4161, %v4087
        %v4163 = vpop.permute.xlu0 %4162
        %4166 = vset.pattern.permute.xlu0 0
        %4167 = vperm.xlu0 %4166, %v4088
        %v4168 = vpop.permute.xlu0 %4167
        %4171 = vset.pattern.permute.xlu0 0
        %4172 = vperm.xlu0 %4171, %v4089
        %v4173 = vpop.permute.xlu0 %4172
        %v4176 = vperm.slane %v4094, 0
        %v4178 = vmul.f32 %v4098, %v4176
        %v4179 = vmul.f32 %v4103, %v4176
        %v4180 = vmul.f32 %v4108, %v4176
        %v4181 = vmul.f32 %v4113, %v4176
        %v4182 = vmul.f32 %v4118, %v4176
        %v4183 = vmul.f32 %v4123, %v4176
        %v4184 = vmul.f32 %v4128, %v4176
        %v4185 = vmul.f32 %v4133, %v4176
        %v4186 = vmul.f32 %v4138, %v4176
        %v4187 = vmul.f32 %v4143, %v4176
        %v4188 = vmul.f32 %v4148, %v4176
        %v4189 = vmul.f32 %v4153, %v4176
        %v4190 = vmul.f32 %v4158, %v4176
        %v4191 = vmul.f32 %v4163, %v4176
        %v4192 = vmul.f32 %v4168, %v4176
        %v4193 = vmul.f32 %v4173, %v4176
        %vm4194 = vcmp.gt.f32.partialorder %v4178, 0.9997057
        %vm4195 = vcmp.gt.f32.partialorder %v4179, 0.9997057
        %vm4196 = vcmp.gt.f32.partialorder %v4180, 0.9997057
        %vm4197 = vcmp.gt.f32.partialorder %v4181, 0.9997057
        %vm4198 = vcmp.gt.f32.partialorder %v4182, 0.9997057
        %vm4199 = vcmp.gt.f32.partialorder %v4183, 0.9997057
        %vm4200 = vcmp.gt.f32.partialorder %v4184, 0.9997057
        %vm4201 = vcmp.gt.f32.partialorder %v4185, 0.9997057
        %vm4202 = vcmp.gt.f32.partialorder %v4186, 0.9997057
        %vm4203 = vcmp.gt.f32.partialorder %v4187, 0.9997057
        %vm4204 = vcmp.gt.f32.partialorder %v4188, 0.9997057
        %vm4205 = vcmp.gt.f32.partialorder %v4189, 0.9997057
        %vm4206 = vcmp.gt.f32.partialorder %v4190, 0.9997057
        %vm4207 = vcmp.gt.f32.partialorder %v4191, 0.9997057
        %vm4208 = vcmp.gt.f32.partialorder %v4192, 0.9997057
        %vm4209 = vcmp.gt.f32.partialorder %v4193, 0.9997057
        %v4210 = vsel %vm4194, 1, 0
        %v4211 = vsel %vm4195, 1, 0
        %v4212 = vsel %vm4196, 1, 0
        %v4213 = vsel %vm4197, 1, 0
        %v4214 = vsel %vm4198, 1, 0
        %v4215 = vsel %vm4199, 1, 0
        %v4216 = vsel %vm4200, 1, 0
        %v4217 = vsel %vm4201, 1, 0
        %v4218 = vsel %vm4202, 1, 0
        %v4219 = vsel %vm4203, 1, 0
        %v4220 = vsel %vm4204, 1, 0
        %v4221 = vsel %vm4205, 1, 0
        %v4222 = vsel %vm4206, 1, 0
        %v4223 = vsel %vm4207, 1, 0
        %v4224 = vsel %vm4208, 1, 0
        %v4225 = vsel %vm4209, 1, 0
        %v4226 = vcvt.s32.f32 %v4210
        %v4227 = vcvt.s32.f32 %v4211
        %v4228 = vcvt.s32.f32 %v4212
        %v4229 = vcvt.s32.f32 %v4213
        %v4230 = vcvt.s32.f32 %v4214
        %v4231 = vcvt.s32.f32 %v4215
        %v4232 = vcvt.s32.f32 %v4216
        %v4233 = vcvt.s32.f32 %v4217
        %v4234 = vcvt.s32.f32 %v4218
        %v4235 = vcvt.s32.f32 %v4219
        %v4236 = vcvt.s32.f32 %v4220
        %v4237 = vcvt.s32.f32 %v4221
        %v4238 = vcvt.s32.f32 %v4222
        %v4239 = vcvt.s32.f32 %v4223
        %v4240 = vcvt.s32.f32 %v4224
        %v4241 = vcvt.s32.f32 %v4225
        %v4242 = vadd.f32 %v4226, %v4227
        %v4243 = vadd.f32 %v4242, %v4228
        %v4244 = vadd.f32 %v4243, %v4229
        %v4245 = vadd.f32 %v4244, %v4230
        %v4246 = vadd.f32 %v4245, %v4231
        %v4247 = vadd.f32 %v4246, %v4232
        %v4248 = vadd.f32 %v4247, %v4233
        %v4249 = vadd.f32 %v4248, %v4234
        %v4250 = vadd.f32 %v4249, %v4235
        %v4251 = vadd.f32 %v4250, %v4236
        %v4252 = vadd.f32 %v4251, %v4237
        %v4253 = vadd.f32 %v4252, %v4238
        %v4254 = vadd.f32 %v4253, %v4239
        %v4255 = vadd.f32 %v4254, %v4240
        %v4256 = vadd.f32 %v4255, %v4241
        %4257 = vadd.xlane.f32.xlu0 %v4256
        %v4258 = vpop.xlane.xlu0 %4257
        %v4259 = vrot.slane %v4258, 4
        %v4260 = vadd.f32 %v4258, %v4259
        %v4261 = vrot.slane %v4260, 2
        %v4262 = vadd.f32 %v4260, %v4261
        %v4263 = vrot.slane %v4262, 1
        %v4264 = vadd.f32 %v4262, %v4263
        %s4265 = vtos %v4264
        %v4266 = vadd.f32 %v4178, 1.0
        %v4267 = vadd.f32 %v4179, 1.0
        %v4268 = vadd.f32 %v4180, 1.0
        %v4269 = vadd.f32 %v4181, 1.0
        %v4270 = vadd.f32 %v4182, 1.0
        %v4271 = vadd.f32 %v4183, 1.0
        %v4272 = vadd.f32 %v4184, 1.0
        %v4273 = vadd.f32 %v4185, 1.0
        %v4274 = vadd.f32 %v4186, 1.0
        %v4275 = vadd.f32 %v4187, 1.0
        %v4276 = vadd.f32 %v4188, 1.0
        %v4277 = vadd.f32 %v4189, 1.0
        %v4278 = vadd.f32 %v4190, 1.0
        %v4279 = vadd.f32 %v4191, 1.0
        %v4280 = vadd.f32 %v4192, 1.0
        %v4281 = vadd.f32 %v4193, 1.0
        %v4282 = vlog2.pop %v4266
        %v4283 = vmul.f32 %v4282, 0.6931472
        %v4284 = vlog2.pop %v4267
        %v4285 = vmul.f32 %v4284, 0.6931472
        %v4286 = vlog2.pop %v4268
        %v4287 = vmul.f32 %v4286, 0.6931472
        %v4288 = vlog2.pop %v4269
        %v4289 = vmul.f32 %v4288, 0.6931472
        %v4290 = vlog2.pop %v4270
        %v4291 = vmul.f32 %v4290, 0.6931472
        %v4292 = vlog2.pop %v4271
        %v4293 = vmul.f32 %v4292, 0.6931472
        %v4294 = vlog2.pop %v4272
        %v4295 = vmul.f32 %v4294, 0.6931472
        %v4296 = vlog2.pop %v4273
        %v4297 = vmul.f32 %v4296, 0.6931472
        %v4298 = vlog2.pop %v4274
        %v4299 = vmul.f32 %v4298, 0.6931472
        %v4300 = vlog2.pop %v4275
        %v4301 = vmul.f32 %v4300, 0.6931472
        %v4302 = vlog2.pop %v4276
        %v4303 = vmul.f32 %v4302, 0.6931472
        %v4304 = vlog2.pop %v4277
        %v4305 = vmul.f32 %v4304, 0.6931472
        %v4306 = vlog2.pop %v4278
        %v4307 = vmul.f32 %v4306, 0.6931472
        %v4308 = vlog2.pop %v4279
        %v4309 = vmul.f32 %v4308, 0.6931472
        %v4310 = vlog2.pop %v4280
        %v4311 = vmul.f32 %v4310, 0.6931472
        %v4312 = vlog2.pop %v4281
        %v4313 = vmul.f32 %v4312, 0.6931472
        %v4314 = vsel %vm4194, %v4283, 0.0
        %v4315 = vsel %vm4195, %v4285, 0.0
        %v4316 = vsel %vm4196, %v4287, 0.0
        %v4317 = vsel %vm4197, %v4289, 0.0
        %v4318 = vsel %vm4198, %v4291, 0.0
        %v4319 = vsel %vm4199, %v4293, 0.0
        %v4320 = vsel %vm4200, %v4295, 0.0
        %v4321 = vsel %vm4201, %v4297, 0.0
        %v4322 = vsel %vm4202, %v4299, 0.0
        %v4323 = vsel %vm4203, %v4301, 0.0
        %v4324 = vsel %vm4204, %v4303, 0.0
        %v4325 = vsel %vm4205, %v4305, 0.0
        %v4326 = vsel %vm4206, %v4307, 0.0
        %v4327 = vsel %vm4207, %v4309, 0.0
        %v4328 = vsel %vm4208, %v4311, 0.0
        %v4329 = vsel %vm4209, %v4313, 0.0
        %v4330 = vadd.f32 %v4314, %v4315
        %v4331 = vadd.f32 %v4330, %v4316
        %v4332 = vadd.f32 %v4331, %v4317
        %v4333 = vadd.f32 %v4332, %v4318
        %v4334 = vadd.f32 %v4333, %v4319
        %v4335 = vadd.f32 %v4334, %v4320
        %v4336 = vadd.f32 %v4335, %v4321
        %v4337 = vadd.f32 %v4336, %v4322
        %v4338 = vadd.f32 %v4337, %v4323
        %v4339 = vadd.f32 %v4338, %v4324
        %v4340 = vadd.f32 %v4339, %v4325
        %v4341 = vadd.f32 %v4340, %v4326
        %v4342 = vadd.f32 %v4341, %v4327
        %v4343 = vadd.f32 %v4342, %v4328
        %v4344 = vadd.f32 %v4343, %v4329
        %4345 = vadd.xlane.f32.xlu0 %v4344
        %v4346 = vpop.xlane.xlu0 %4345
        %v4347 = vrot.slane %v4346, 4
        %v4348 = vadd.f32 %v4346, %v4347
        %v4349 = vrot.slane %v4348, 2
        %v4350 = vadd.f32 %v4348, %v4349
        %v4351 = vrot.slane %v4350, 1
        %v4352 = vadd.f32 %v4350, %v4351
        %s4353 = vtos %v4352
        %v4354 = vstv %s4353
        %v4355 = vmul.f32 %v4354, %v782
        %v4356 = vadd.f32 %v3720, %v4355
        %v4357 = vstv %s4265
        %v4358 = vmul.f32 %v4357, %v782
        %v4359 = vadd.f32 %v3723, %v4358
        %s4360 = scalar_select %p3936, 1.0, 0.0
        %v4361 = vstv %s4360
        %v4362 = vmul.f32 %v4361, %v782
        %v4363 = vadd.f32 %v3727, %v4362
        %4364 = vrot.lane.b32.xlu0 %v695, 123
        %v4365 = vpop.permute.xlu0 %4364
        %4366 = vrot.lane.b32.xlu0 %v696, 123
        %v4367 = vpop.permute.xlu0 %4366
        %4368 = vrot.lane.b32.xlu0 %v697, 123
        %v4369 = vpop.permute.xlu0 %4368
        %4370 = vrot.lane.b32.xlu0 %v698, 123
        %v4371 = vpop.permute.xlu0 %4370
        %4372 = vrot.lane.b32.xlu0 %v699, 123
        %v4373 = vpop.permute.xlu0 %4372
        %4374 = vrot.lane.b32.xlu0 %v700, 123
        %v4375 = vpop.permute.xlu0 %4374
        %4376 = vrot.lane.b32.xlu0 %v701, 123
        %v4377 = vpop.permute.xlu0 %4376
        %4378 = vrot.lane.b32.xlu0 %v702, 123
        %v4379 = vpop.permute.xlu0 %4378
        %4380 = vrot.lane.b32.xlu0 %v703, 123
        %v4381 = vpop.permute.xlu0 %4380
        %4382 = vrot.lane.b32.xlu0 %v704, 123
        %v4383 = vpop.permute.xlu0 %4382
        %4384 = vrot.lane.b32.xlu0 %v705, 123
        %v4385 = vpop.permute.xlu0 %4384
        %4386 = vrot.lane.b32.xlu0 %v706, 123
        %v4387 = vpop.permute.xlu0 %4386
        %4388 = vrot.lane.b32.xlu0 %v707, 123
        %v4389 = vpop.permute.xlu0 %4388
        %4390 = vrot.lane.b32.xlu0 %v708, 123
        %v4391 = vpop.permute.xlu0 %4390
        %4392 = vrot.lane.b32.xlu0 %v709, 123
        %v4393 = vpop.permute.xlu0 %4392
        %4394 = vrot.lane.b32.xlu0 %v710, 123
        %v4395 = vpop.permute.xlu0 %4394
        %v4412 = vsel %vm4007, %v4365, 0.0
        %v4413 = vsel %vm4008, %v4367, 0.0
        %v4414 = vsel %vm4009, %v4369, 0.0
        %v4415 = vsel %vm4010, %v4371, 0.0
        %v4416 = vsel %vm4011, %v4373, 0.0
        %v4417 = vsel %vm4012, %v4375, 0.0
        %v4418 = vsel %vm4013, %v4377, 0.0
        %v4419 = vsel %vm4014, %v4379, 0.0
        %v4420 = vsel %vm4015, %v4381, 0.0
        %v4421 = vsel %vm4016, %v4383, 0.0
        %v4422 = vsel %vm4017, %v4385, 0.0
        %v4423 = vsel %vm4018, %v4387, 0.0
        %v4424 = vsel %vm4019, %v4389, 0.0
        %v4425 = vsel %vm4020, %v4391, 0.0
        %v4426 = vsel %vm4021, %v4393, 0.0
        %v4427 = vsel %vm4022, %v4395, 0.0
        %v4428 = vsel %vm1216, %v4412, 0.0
        %v4429 = vsel %vm1216, %v4413, 0.0
        %v4430 = vadd.f32 %v4428, %v4429
        %v4431 = vsel %vm1216, %v4414, 0.0
        %v4432 = vadd.f32 %v4430, %v4431
        %v4433 = vsel %vm1216, %v4415, 0.0
        %v4434 = vadd.f32 %v4432, %v4433
        %v4435 = vsel %vm1216, %v4416, 0.0
        %v4436 = vadd.f32 %v4434, %v4435
        %v4437 = vsel %vm1216, %v4417, 0.0
        %v4438 = vadd.f32 %v4436, %v4437
        %v4439 = vsel %vm1216, %v4418, 0.0
        %v4440 = vadd.f32 %v4438, %v4439
        %v4441 = vsel %vm1216, %v4419, 0.0
        %v4442 = vadd.f32 %v4440, %v4441
        %v4443 = vsel %vm1216, %v4420, 0.0
        %v4444 = vadd.f32 %v4442, %v4443
        %v4445 = vsel %vm1216, %v4421, 0.0
        %v4446 = vadd.f32 %v4444, %v4445
        %v4447 = vsel %vm1216, %v4422, 0.0
        %v4448 = vadd.f32 %v4446, %v4447
        %v4449 = vsel %vm1216, %v4423, 0.0
        %v4450 = vadd.f32 %v4448, %v4449
        %v4451 = vsel %vm1216, %v4424, 0.0
        %v4452 = vadd.f32 %v4450, %v4451
        %v4453 = vsel %vm1216, %v4425, 0.0
        %v4454 = vadd.f32 %v4452, %v4453
        %v4455 = vsel %vm1216, %v4426, 0.0
        %v4456 = vadd.f32 %v4454, %v4455
        %v4457 = vsel %vm1216, %v4427, 0.0
        %v4458 = vadd.f32 %v4456, %v4457
        %4459 = vadd.xlane.f32.xlu0 %v4458
        %v4460 = vpop.xlane.xlu0 %4459
        %v4461 = vrot.slane %v4460, 4
        %v4462 = vadd.f32 %v4460, %v4461
        %v4463 = vrot.slane %v4462, 2
        %v4464 = vadd.f32 %v4462, %v4463
        %v4465 = vrot.slane %v4464, 1
        %v4466 = vadd.f32 %v4464, %v4465
        %s4467 = vtos %v4466
        %s4468 = sadd.f32 %s3832, %s4467
        %v4469 = vsel %vm4007, 1, 0
        %v4470 = vsel %vm4008, 1, 0
        %v4471 = vsel %vm4009, 1, 0
        %v4472 = vsel %vm4010, 1, 0
        %v4473 = vsel %vm4011, 1, 0
        %v4474 = vsel %vm4012, 1, 0
        %v4475 = vsel %vm4013, 1, 0
        %v4476 = vsel %vm4014, 1, 0
        %v4477 = vsel %vm4015, 1, 0
        %v4478 = vsel %vm4016, 1, 0
        %v4479 = vsel %vm4017, 1, 0
        %v4480 = vsel %vm4018, 1, 0
        %v4481 = vsel %vm4019, 1, 0
        %v4482 = vsel %vm4020, 1, 0
        %v4483 = vsel %vm4021, 1, 0
        %v4484 = vsel %vm4022, 1, 0
        %v4485 = vcvt.s32.f32 %v4469
        %v4486 = vcvt.s32.f32 %v4470
        %v4487 = vcvt.s32.f32 %v4471
        %v4488 = vcvt.s32.f32 %v4472
        %v4489 = vcvt.s32.f32 %v4473
        %v4490 = vcvt.s32.f32 %v4474
        %v4491 = vcvt.s32.f32 %v4475
        %v4492 = vcvt.s32.f32 %v4476
        %v4493 = vcvt.s32.f32 %v4477
        %v4494 = vcvt.s32.f32 %v4478
        %v4495 = vcvt.s32.f32 %v4479
        %v4496 = vcvt.s32.f32 %v4480
        %v4497 = vcvt.s32.f32 %v4481
        %v4498 = vcvt.s32.f32 %v4482
        %v4499 = vcvt.s32.f32 %v4483
        %v4500 = vcvt.s32.f32 %v4484
        %v4501 = vsel %vm1216, %v4485, 0.0
        %v4502 = vsel %vm1216, %v4486, 0.0
        %v4503 = vadd.f32 %v4501, %v4502
        %v4504 = vsel %vm1216, %v4487, 0.0
        %v4505 = vadd.f32 %v4503, %v4504
        %v4506 = vsel %vm1216, %v4488, 0.0
        %v4507 = vadd.f32 %v4505, %v4506
        %v4508 = vsel %vm1216, %v4489, 0.0
        %v4509 = vadd.f32 %v4507, %v4508
        %v4510 = vsel %vm1216, %v4490, 0.0
        %v4511 = vadd.f32 %v4509, %v4510
        %v4512 = vsel %vm1216, %v4491, 0.0
        %v4513 = vadd.f32 %v4511, %v4512
        %v4514 = vsel %vm1216, %v4492, 0.0
        %v4515 = vadd.f32 %v4513, %v4514
        %v4516 = vsel %vm1216, %v4493, 0.0
        %v4517 = vadd.f32 %v4515, %v4516
        %v4518 = vsel %vm1216, %v4494, 0.0
        %v4519 = vadd.f32 %v4517, %v4518
        %v4520 = vsel %vm1216, %v4495, 0.0
        %v4521 = vadd.f32 %v4519, %v4520
        %v4522 = vsel %vm1216, %v4496, 0.0
        %v4523 = vadd.f32 %v4521, %v4522
        %v4524 = vsel %vm1216, %v4497, 0.0
        %v4525 = vadd.f32 %v4523, %v4524
        %v4526 = vsel %vm1216, %v4498, 0.0
        %v4527 = vadd.f32 %v4525, %v4526
        %v4528 = vsel %vm1216, %v4499, 0.0
        %v4529 = vadd.f32 %v4527, %v4528
        %v4530 = vsel %vm1216, %v4500, 0.0
        %v4531 = vadd.f32 %v4529, %v4530
        %4532 = vadd.xlane.f32.xlu0 %v4531
        %v4533 = vpop.xlane.xlu0 %4532
        %v4534 = vrot.slane %v4533, 4
        %v4535 = vadd.f32 %v4533, %v4534
        %v4536 = vrot.slane %v4535, 2
        %v4537 = vadd.f32 %v4535, %v4536
        %v4538 = vrot.slane %v4537, 1
        %v4539 = vadd.f32 %v4537, %v4538
        %s4540 = vtos %v4539
        %s4541 = sadd.f32 %s3905, %s4540
        %4542 = vst [vmem:[#allocation1] sm:$0xff] %v678
        %s4543 = scalar_lea.vmem [#allocation1], 5
        %v4544 = vld [vmem:[%s4543] ss:$9 sm:$0xff]
        %v4546 = vsel %vm4025, %v4544, 0.0
        %v4547 = vsel %vm1332, %v4546, 0.0
        %4548 = vadd.xlane.f32.xlu0 %v4547
        %v4549 = vpop.xlane.xlu0 %4548
        %v4550 = vrot.slane %v4549, 4
        %v4551 = vadd.f32 %v4549, %v4550
        %v4552 = vrot.slane %v4551, 2
        %v4553 = vadd.f32 %v4551, %v4552
        %v4554 = vrot.slane %v4553, 1
        %v4555 = vadd.f32 %v4553, %v4554
        %s4556 = vtos %v4555
        %s4557 = sadd.f32 %s3921, %s4556
        %v4558 = vsel %vm4025, 1, 0
        %v4559 = vcvt.s32.f32 %v4558
        %v4560 = vsel %vm1332, %v4559, 0.0
        %4561 = vadd.xlane.f32.xlu0 %v4560
        %v4562 = vpop.xlane.xlu0 %4561
        %v4563 = vrot.slane %v4562, 4
        %v4564 = vadd.f32 %v4562, %v4563
        %v4565 = vrot.slane %v4564, 2
        %v4566 = vadd.f32 %v4564, %v4565
        %v4567 = vrot.slane %v4566, 1
        %v4568 = vadd.f32 %v4566, %v4567
        %s4569 = vtos %v4568
        %s4570 = sadd.f32 %s3934, %s4569
        %s4571 = sadd.s32 %s764, 6
        %p4572 = scmp.lt.s32.totalorder %s4571, 32
        %s4573 = sld [smem:[#allocation2 + %s4571]]
        %v4574 = vstv %s4573
        %vm4575 = vcmp.eq.s32.totalorder %v712, %v4574
        %vm4576 = vcmp.eq.s32.totalorder %v713, %v4574
        %vm4577 = vcmp.eq.s32.totalorder %v714, %v4574
        %vm4578 = vcmp.eq.s32.totalorder %v715, %v4574
        %vm4579 = vcmp.eq.s32.totalorder %v716, %v4574
        %vm4580 = vcmp.eq.s32.totalorder %v717, %v4574
        %vm4581 = vcmp.eq.s32.totalorder %v718, %v4574
        %vm4582 = vcmp.eq.s32.totalorder %v719, %v4574
        %vm4583 = vcmp.eq.s32.totalorder %v720, %v4574
        %vm4584 = vcmp.eq.s32.totalorder %v721, %v4574
        %vm4585 = vcmp.eq.s32.totalorder %v722, %v4574
        %vm4586 = vcmp.eq.s32.totalorder %v723, %v4574
        %vm4587 = vcmp.eq.s32.totalorder %v724, %v4574
        %vm4588 = vcmp.eq.s32.totalorder %v725, %v4574
        %vm4589 = vcmp.eq.s32.totalorder %v726, %v4574
        %vm4590 = vcmp.eq.s32.totalorder %v727, %v4574
        %v4591 = vstv %s4571
        %vm4592 = vcmp.ne.s32.totalorder %v729, %v4591
        %vm4593 = vcmp.ne.s32.totalorder %v730, %v4591
        %vm4594 = vcmp.ne.s32.totalorder %v731, %v4591
        %vm4595 = vcmp.ne.s32.totalorder %v732, %v4591
        %vm4596 = vcmp.ne.s32.totalorder %v733, %v4591
        %vm4597 = vcmp.ne.s32.totalorder %v734, %v4591
        %vm4598 = vcmp.ne.s32.totalorder %v735, %v4591
        %vm4599 = vcmp.ne.s32.totalorder %v736, %v4591
        %vm4600 = vcmp.ne.s32.totalorder %v737, %v4591
        %vm4601 = vcmp.ne.s32.totalorder %v738, %v4591
        %vm4602 = vcmp.ne.s32.totalorder %v739, %v4591
        %vm4603 = vcmp.ne.s32.totalorder %v740, %v4591
        %vm4604 = vcmp.ne.s32.totalorder %v741, %v4591
        %vm4605 = vcmp.ne.s32.totalorder %v742, %v4591
        %vm4606 = vcmp.ne.s32.totalorder %v743, %v4591
        %vm4607 = vcmp.ne.s32.totalorder %v744, %v4591
        %vm4608 = vmand %vm4575, %vm4592
        %vm4609 = vmand %vm4576, %vm4593
        %vm4610 = vmand %vm4577, %vm4594
        %vm4611 = vmand %vm4578, %vm4595
        %vm4612 = vmand %vm4579, %vm4596
        %vm4613 = vmand %vm4580, %vm4597
        %vm4614 = vmand %vm4581, %vm4598
        %vm4615 = vmand %vm4582, %vm4599
        %vm4616 = vmand %vm4583, %vm4600
        %vm4617 = vmand %vm4584, %vm4601
        %vm4618 = vmand %vm4585, %vm4602
        %vm4619 = vmand %vm4586, %vm4603
        %vm4620 = vmand %vm4587, %vm4604
        %vm4621 = vmand %vm4588, %vm4605
        %vm4622 = vmand %vm4589, %vm4606
        %vm4623 = vmand %vm4590, %vm4607
        %s4624 = scalar_select %p4572, 1, 0
        %v4625 = vstv %s4624
        %vm4626 = vcmp.eq.s32.totalorder %v4625, 1
        %vm4627 = vmand %vm747, %vm4626
        %vm4628 = vmand %vm748, %vm4626
        %vm4629 = vmand %vm749, %vm4626
        %vm4630 = vmand %vm750, %vm4626
        %vm4631 = vmand %vm751, %vm4626
        %vm4632 = vmand %vm752, %vm4626
        %vm4633 = vmand %vm753, %vm4626
        %vm4634 = vmand %vm754, %vm4626
        %vm4635 = vmand %vm755, %vm4626
        %vm4636 = vmand %vm756, %vm4626
        %vm4637 = vmand %vm757, %vm4626
        %vm4638 = vmand %vm758, %vm4626
        %vm4639 = vmand %vm759, %vm4626
        %vm4640 = vmand %vm760, %vm4626
        %vm4641 = vmand %vm761, %vm4626
        %vm4642 = vmand %vm762, %vm4626
        %vm4643 = vmand %vm4608, %vm4627
        %vm4644 = vmand %vm4609, %vm4628
        %vm4645 = vmand %vm4610, %vm4629
        %vm4646 = vmand %vm4611, %vm4630
        %vm4647 = vmand %vm4612, %vm4631
        %vm4648 = vmand %vm4613, %vm4632
        %vm4649 = vmand %vm4614, %vm4633
        %vm4650 = vmand %vm4615, %vm4634
        %vm4651 = vmand %vm4616, %vm4635
        %vm4652 = vmand %vm4617, %vm4636
        %vm4653 = vmand %vm4618, %vm4637
        %vm4654 = vmand %vm4619, %vm4638
        %vm4655 = vmand %vm4620, %vm4639
        %vm4656 = vmand %vm4621, %vm4640
        %vm4657 = vmand %vm4622, %vm4641
        %vm4658 = vmand %vm4623, %vm4642
        %vm4659 = vcmp.ne.s32.totalorder %v711, %v4574
        %vm4660 = vmand %vm763, %vm4626
        %vm4661 = vmand %vm4659, %vm4660
        %4662 = vrot.lane.b32.xlu0 %v880, 122
        %v4663 = vpop.permute.xlu0 %4662
        %4664 = vrot.lane.b32.xlu0 %v882, 122
        %v4665 = vpop.permute.xlu0 %4664
        %4666 = vrot.lane.b32.xlu0 %v884, 122
        %v4667 = vpop.permute.xlu0 %4666
        %4668 = vrot.lane.b32.xlu0 %v886, 122
        %v4669 = vpop.permute.xlu0 %4668
        %4670 = vrot.lane.b32.xlu0 %v888, 122
        %v4671 = vpop.permute.xlu0 %4670
        %4672 = vrot.lane.b32.xlu0 %v890, 122
        %v4673 = vpop.permute.xlu0 %4672
        %4674 = vrot.lane.b32.xlu0 %v892, 122
        %v4675 = vpop.permute.xlu0 %4674
        %4676 = vrot.lane.b32.xlu0 %v894, 122
        %v4677 = vpop.permute.xlu0 %4676
        %4678 = vrot.lane.b32.xlu0 %v896, 122
        %v4679 = vpop.permute.xlu0 %4678
        %4680 = vrot.lane.b32.xlu0 %v898, 122
        %v4681 = vpop.permute.xlu0 %4680
        %4682 = vrot.lane.b32.xlu0 %v900, 122
        %v4683 = vpop.permute.xlu0 %4682
        %4684 = vrot.lane.b32.xlu0 %v902, 122
        %v4685 = vpop.permute.xlu0 %4684
        %4686 = vrot.lane.b32.xlu0 %v904, 122
        %v4687 = vpop.permute.xlu0 %4686
        %4688 = vrot.lane.b32.xlu0 %v906, 122
        %v4689 = vpop.permute.xlu0 %4688
        %4690 = vrot.lane.b32.xlu0 %v908, 122
        %v4691 = vpop.permute.xlu0 %4690
        %4692 = vrot.lane.b32.xlu0 %v910, 122
        %v4693 = vpop.permute.xlu0 %4692
        %v4710 = vsel %vm4643, %v4663, 0.0
        %v4711 = vsel %vm4644, %v4665, 0.0
        %v4712 = vsel %vm4645, %v4667, 0.0
        %v4713 = vsel %vm4646, %v4669, 0.0
        %v4714 = vsel %vm4647, %v4671, 0.0
        %v4715 = vsel %vm4648, %v4673, 0.0
        %v4716 = vsel %vm4649, %v4675, 0.0
        %v4717 = vsel %vm4650, %v4677, 0.0
        %v4718 = vsel %vm4651, %v4679, 0.0
        %v4719 = vsel %vm4652, %v4681, 0.0
        %v4720 = vsel %vm4653, %v4683, 0.0
        %v4721 = vsel %vm4654, %v4685, 0.0
        %v4722 = vsel %vm4655, %v4687, 0.0
        %v4723 = vsel %vm4656, %v4689, 0.0
        %v4724 = vsel %vm4657, %v4691, 0.0
        %v4725 = vsel %vm4658, %v4693, 0.0
        %4726 = vst [vmem:[#allocation1] sm:$0xff] %v929
        %s4727 = scalar_lea.vmem [#allocation1], 6
        %v4728 = vld [vmem:[%s4727] ss:$9 sm:$0xff]
        %v4730 = vsel %vm4661, %v4728, 0.0
        %4732 = vset.pattern.permute.xlu0 0
        %4733 = vperm.xlu0 %4732, %v4710
        %v4734 = vpop.permute.xlu0 %4733
        %4737 = vset.pattern.permute.xlu0 0
        %4738 = vperm.xlu0 %4737, %v4711
        %v4739 = vpop.permute.xlu0 %4738
        %4742 = vset.pattern.permute.xlu0 0
        %4743 = vperm.xlu0 %4742, %v4712
        %v4744 = vpop.permute.xlu0 %4743
        %4747 = vset.pattern.permute.xlu0 0
        %4748 = vperm.xlu0 %4747, %v4713
        %v4749 = vpop.permute.xlu0 %4748
        %4752 = vset.pattern.permute.xlu0 0
        %4753 = vperm.xlu0 %4752, %v4714
        %v4754 = vpop.permute.xlu0 %4753
        %4757 = vset.pattern.permute.xlu0 0
        %4758 = vperm.xlu0 %4757, %v4715
        %v4759 = vpop.permute.xlu0 %4758
        %4762 = vset.pattern.permute.xlu0 0
        %4763 = vperm.xlu0 %4762, %v4716
        %v4764 = vpop.permute.xlu0 %4763
        %4767 = vset.pattern.permute.xlu0 0
        %4768 = vperm.xlu0 %4767, %v4717
        %v4769 = vpop.permute.xlu0 %4768
        %4772 = vset.pattern.permute.xlu0 0
        %4773 = vperm.xlu0 %4772, %v4718
        %v4774 = vpop.permute.xlu0 %4773
        %4777 = vset.pattern.permute.xlu0 0
        %4778 = vperm.xlu0 %4777, %v4719
        %v4779 = vpop.permute.xlu0 %4778
        %4782 = vset.pattern.permute.xlu0 0
        %4783 = vperm.xlu0 %4782, %v4720
        %v4784 = vpop.permute.xlu0 %4783
        %4787 = vset.pattern.permute.xlu0 0
        %4788 = vperm.xlu0 %4787, %v4721
        %v4789 = vpop.permute.xlu0 %4788
        %4792 = vset.pattern.permute.xlu0 0
        %4793 = vperm.xlu0 %4792, %v4722
        %v4794 = vpop.permute.xlu0 %4793
        %4797 = vset.pattern.permute.xlu0 0
        %4798 = vperm.xlu0 %4797, %v4723
        %v4799 = vpop.permute.xlu0 %4798
        %4802 = vset.pattern.permute.xlu0 0
        %4803 = vperm.xlu0 %4802, %v4724
        %v4804 = vpop.permute.xlu0 %4803
        %4807 = vset.pattern.permute.xlu0 0
        %4808 = vperm.xlu0 %4807, %v4725
        %v4809 = vpop.permute.xlu0 %4808
        %v4812 = vperm.slane %v4730, 0
        %v4814 = vmul.f32 %v4734, %v4812
        %v4815 = vmul.f32 %v4739, %v4812
        %v4816 = vmul.f32 %v4744, %v4812
        %v4817 = vmul.f32 %v4749, %v4812
        %v4818 = vmul.f32 %v4754, %v4812
        %v4819 = vmul.f32 %v4759, %v4812
        %v4820 = vmul.f32 %v4764, %v4812
        %v4821 = vmul.f32 %v4769, %v4812
        %v4822 = vmul.f32 %v4774, %v4812
        %v4823 = vmul.f32 %v4779, %v4812
        %v4824 = vmul.f32 %v4784, %v4812
        %v4825 = vmul.f32 %v4789, %v4812
        %v4826 = vmul.f32 %v4794, %v4812
        %v4827 = vmul.f32 %v4799, %v4812
        %v4828 = vmul.f32 %v4804, %v4812
        %v4829 = vmul.f32 %v4809, %v4812
        %vm4830 = vcmp.gt.f32.partialorder %v4814, 0.9997057
        %vm4831 = vcmp.gt.f32.partialorder %v4815, 0.9997057
        %vm4832 = vcmp.gt.f32.partialorder %v4816, 0.9997057
        %vm4833 = vcmp.gt.f32.partialorder %v4817, 0.9997057
        %vm4834 = vcmp.gt.f32.partialorder %v4818, 0.9997057
        %vm4835 = vcmp.gt.f32.partialorder %v4819, 0.9997057
        %vm4836 = vcmp.gt.f32.partialorder %v4820, 0.9997057
        %vm4837 = vcmp.gt.f32.partialorder %v4821, 0.9997057
        %vm4838 = vcmp.gt.f32.partialorder %v4822, 0.9997057
        %vm4839 = vcmp.gt.f32.partialorder %v4823, 0.9997057
        %vm4840 = vcmp.gt.f32.partialorder %v4824, 0.9997057
        %vm4841 = vcmp.gt.f32.partialorder %v4825, 0.9997057
        %vm4842 = vcmp.gt.f32.partialorder %v4826, 0.9997057
        %vm4843 = vcmp.gt.f32.partialorder %v4827, 0.9997057
        %vm4844 = vcmp.gt.f32.partialorder %v4828, 0.9997057
        %vm4845 = vcmp.gt.f32.partialorder %v4829, 0.9997057
        %v4846 = vsel %vm4830, 1, 0
        %v4847 = vsel %vm4831, 1, 0
        %v4848 = vsel %vm4832, 1, 0
        %v4849 = vsel %vm4833, 1, 0
        %v4850 = vsel %vm4834, 1, 0
        %v4851 = vsel %vm4835, 1, 0
        %v4852 = vsel %vm4836, 1, 0
        %v4853 = vsel %vm4837, 1, 0
        %v4854 = vsel %vm4838, 1, 0
        %v4855 = vsel %vm4839, 1, 0
        %v4856 = vsel %vm4840, 1, 0
        %v4857 = vsel %vm4841, 1, 0
        %v4858 = vsel %vm4842, 1, 0
        %v4859 = vsel %vm4843, 1, 0
        %v4860 = vsel %vm4844, 1, 0
        %v4861 = vsel %vm4845, 1, 0
        %v4862 = vcvt.s32.f32 %v4846
        %v4863 = vcvt.s32.f32 %v4847
        %v4864 = vcvt.s32.f32 %v4848
        %v4865 = vcvt.s32.f32 %v4849
        %v4866 = vcvt.s32.f32 %v4850
        %v4867 = vcvt.s32.f32 %v4851
        %v4868 = vcvt.s32.f32 %v4852
        %v4869 = vcvt.s32.f32 %v4853
        %v4870 = vcvt.s32.f32 %v4854
        %v4871 = vcvt.s32.f32 %v4855
        %v4872 = vcvt.s32.f32 %v4856
        %v4873 = vcvt.s32.f32 %v4857
        %v4874 = vcvt.s32.f32 %v4858
        %v4875 = vcvt.s32.f32 %v4859
        %v4876 = vcvt.s32.f32 %v4860
        %v4877 = vcvt.s32.f32 %v4861
        %v4878 = vadd.f32 %v4862, %v4863
        %v4879 = vadd.f32 %v4878, %v4864
        %v4880 = vadd.f32 %v4879, %v4865
        %v4881 = vadd.f32 %v4880, %v4866
        %v4882 = vadd.f32 %v4881, %v4867
        %v4883 = vadd.f32 %v4882, %v4868
        %v4884 = vadd.f32 %v4883, %v4869
        %v4885 = vadd.f32 %v4884, %v4870
        %v4886 = vadd.f32 %v4885, %v4871
        %v4887 = vadd.f32 %v4886, %v4872
        %v4888 = vadd.f32 %v4887, %v4873
        %v4889 = vadd.f32 %v4888, %v4874
        %v4890 = vadd.f32 %v4889, %v4875
        %v4891 = vadd.f32 %v4890, %v4876
        %v4892 = vadd.f32 %v4891, %v4877
        %4893 = vadd.xlane.f32.xlu0 %v4892
        %v4894 = vpop.xlane.xlu0 %4893
        %v4895 = vrot.slane %v4894, 4
        %v4896 = vadd.f32 %v4894, %v4895
        %v4897 = vrot.slane %v4896, 2
        %v4898 = vadd.f32 %v4896, %v4897
        %v4899 = vrot.slane %v4898, 1
        %v4900 = vadd.f32 %v4898, %v4899
        %s4901 = vtos %v4900
        %v4902 = vadd.f32 %v4814, 1.0
        %v4903 = vadd.f32 %v4815, 1.0
        %v4904 = vadd.f32 %v4816, 1.0
        %v4905 = vadd.f32 %v4817, 1.0
        %v4906 = vadd.f32 %v4818, 1.0
        %v4907 = vadd.f32 %v4819, 1.0
        %v4908 = vadd.f32 %v4820, 1.0
        %v4909 = vadd.f32 %v4821, 1.0
        %v4910 = vadd.f32 %v4822, 1.0
        %v4911 = vadd.f32 %v4823, 1.0
        %v4912 = vadd.f32 %v4824, 1.0
        %v4913 = vadd.f32 %v4825, 1.0
        %v4914 = vadd.f32 %v4826, 1.0
        %v4915 = vadd.f32 %v4827, 1.0
        %v4916 = vadd.f32 %v4828, 1.0
        %v4917 = vadd.f32 %v4829, 1.0
        %v4918 = vlog2.pop %v4902
        %v4919 = vmul.f32 %v4918, 0.6931472
        %v4920 = vlog2.pop %v4903
        %v4921 = vmul.f32 %v4920, 0.6931472
        %v4922 = vlog2.pop %v4904
        %v4923 = vmul.f32 %v4922, 0.6931472
        %v4924 = vlog2.pop %v4905
        %v4925 = vmul.f32 %v4924, 0.6931472
        %v4926 = vlog2.pop %v4906
        %v4927 = vmul.f32 %v4926, 0.6931472
        %v4928 = vlog2.pop %v4907
        %v4929 = vmul.f32 %v4928, 0.6931472
        %v4930 = vlog2.pop %v4908
        %v4931 = vmul.f32 %v4930, 0.6931472
        %v4932 = vlog2.pop %v4909
        %v4933 = vmul.f32 %v4932, 0.6931472
        %v4934 = vlog2.pop %v4910
        %v4935 = vmul.f32 %v4934, 0.6931472
        %v4936 = vlog2.pop %v4911
        %v4937 = vmul.f32 %v4936, 0.6931472
        %v4938 = vlog2.pop %v4912
        %v4939 = vmul.f32 %v4938, 0.6931472
        %v4940 = vlog2.pop %v4913
        %v4941 = vmul.f32 %v4940, 0.6931472
        %v4942 = vlog2.pop %v4914
        %v4943 = vmul.f32 %v4942, 0.6931472
        %v4944 = vlog2.pop %v4915
        %v4945 = vmul.f32 %v4944, 0.6931472
        %v4946 = vlog2.pop %v4916
        %v4947 = vmul.f32 %v4946, 0.6931472
        %v4948 = vlog2.pop %v4917
        %v4949 = vmul.f32 %v4948, 0.6931472
        %v4950 = vsel %vm4830, %v4919, 0.0
        %v4951 = vsel %vm4831, %v4921, 0.0
        %v4952 = vsel %vm4832, %v4923, 0.0
        %v4953 = vsel %vm4833, %v4925, 0.0
        %v4954 = vsel %vm4834, %v4927, 0.0
        %v4955 = vsel %vm4835, %v4929, 0.0
        %v4956 = vsel %vm4836, %v4931, 0.0
        %v4957 = vsel %vm4837, %v4933, 0.0
        %v4958 = vsel %vm4838, %v4935, 0.0
        %v4959 = vsel %vm4839, %v4937, 0.0
        %v4960 = vsel %vm4840, %v4939, 0.0
        %v4961 = vsel %vm4841, %v4941, 0.0
        %v4962 = vsel %vm4842, %v4943, 0.0
        %v4963 = vsel %vm4843, %v4945, 0.0
        %v4964 = vsel %vm4844, %v4947, 0.0
        %v4965 = vsel %vm4845, %v4949, 0.0
        %v4966 = vadd.f32 %v4950, %v4951
        %v4967 = vadd.f32 %v4966, %v4952
        %v4968 = vadd.f32 %v4967, %v4953
        %v4969 = vadd.f32 %v4968, %v4954
        %v4970 = vadd.f32 %v4969, %v4955
        %v4971 = vadd.f32 %v4970, %v4956
        %v4972 = vadd.f32 %v4971, %v4957
        %v4973 = vadd.f32 %v4972, %v4958
        %v4974 = vadd.f32 %v4973, %v4959
        %v4975 = vadd.f32 %v4974, %v4960
        %v4976 = vadd.f32 %v4975, %v4961
        %v4977 = vadd.f32 %v4976, %v4962
        %v4978 = vadd.f32 %v4977, %v4963
        %v4979 = vadd.f32 %v4978, %v4964
        %v4980 = vadd.f32 %v4979, %v4965
        %4981 = vadd.xlane.f32.xlu0 %v4980
        %v4982 = vpop.xlane.xlu0 %4981
        %v4983 = vrot.slane %v4982, 4
        %v4984 = vadd.f32 %v4982, %v4983
        %v4985 = vrot.slane %v4984, 2
        %v4986 = vadd.f32 %v4984, %v4985
        %v4987 = vrot.slane %v4986, 1
        %v4988 = vadd.f32 %v4986, %v4987
        %s4989 = vtos %v4988
        %v4990 = vstv %s4989
        %v4991 = vmul.f32 %v4990, %v785
        %v4992 = vadd.f32 %v4356, %v4991
        %v4993 = vstv %s4901
        %v4994 = vmul.f32 %v4993, %v785
        %v4995 = vadd.f32 %v4359, %v4994
        %s4996 = scalar_select %p4572, 1.0, 0.0
        %v4997 = vstv %s4996
        %v4998 = vmul.f32 %v4997, %v785
        %v4999 = vadd.f32 %v4363, %v4998
        %5000 = vrot.lane.b32.xlu0 %v695, 122
        %v5001 = vpop.permute.xlu0 %5000
        %5002 = vrot.lane.b32.xlu0 %v696, 122
        %v5003 = vpop.permute.xlu0 %5002
        %5004 = vrot.lane.b32.xlu0 %v697, 122
        %v5005 = vpop.permute.xlu0 %5004
        %5006 = vrot.lane.b32.xlu0 %v698, 122
        %v5007 = vpop.permute.xlu0 %5006
        %5008 = vrot.lane.b32.xlu0 %v699, 122
        %v5009 = vpop.permute.xlu0 %5008
        %5010 = vrot.lane.b32.xlu0 %v700, 122
        %v5011 = vpop.permute.xlu0 %5010
        %5012 = vrot.lane.b32.xlu0 %v701, 122
        %v5013 = vpop.permute.xlu0 %5012
        %5014 = vrot.lane.b32.xlu0 %v702, 122
        %v5015 = vpop.permute.xlu0 %5014
        %5016 = vrot.lane.b32.xlu0 %v703, 122
        %v5017 = vpop.permute.xlu0 %5016
        %5018 = vrot.lane.b32.xlu0 %v704, 122
        %v5019 = vpop.permute.xlu0 %5018
        %5020 = vrot.lane.b32.xlu0 %v705, 122
        %v5021 = vpop.permute.xlu0 %5020
        %5022 = vrot.lane.b32.xlu0 %v706, 122
        %v5023 = vpop.permute.xlu0 %5022
        %5024 = vrot.lane.b32.xlu0 %v707, 122
        %v5025 = vpop.permute.xlu0 %5024
        %5026 = vrot.lane.b32.xlu0 %v708, 122
        %v5027 = vpop.permute.xlu0 %5026
        %5028 = vrot.lane.b32.xlu0 %v709, 122
        %v5029 = vpop.permute.xlu0 %5028
        %5030 = vrot.lane.b32.xlu0 %v710, 122
        %v5031 = vpop.permute.xlu0 %5030
        %v5048 = vsel %vm4643, %v5001, 0.0
        %v5049 = vsel %vm4644, %v5003, 0.0
        %v5050 = vsel %vm4645, %v5005, 0.0
        %v5051 = vsel %vm4646, %v5007, 0.0
        %v5052 = vsel %vm4647, %v5009, 0.0
        %v5053 = vsel %vm4648, %v5011, 0.0
        %v5054 = vsel %vm4649, %v5013, 0.0
        %v5055 = vsel %vm4650, %v5015, 0.0
        %v5056 = vsel %vm4651, %v5017, 0.0
        %v5057 = vsel %vm4652, %v5019, 0.0
        %v5058 = vsel %vm4653, %v5021, 0.0
        %v5059 = vsel %vm4654, %v5023, 0.0
        %v5060 = vsel %vm4655, %v5025, 0.0
        %v5061 = vsel %vm4656, %v5027, 0.0
        %v5062 = vsel %vm4657, %v5029, 0.0
        %v5063 = vsel %vm4658, %v5031, 0.0
        %v5064 = vsel %vm1216, %v5048, 0.0
        %v5065 = vsel %vm1216, %v5049, 0.0
        %v5066 = vadd.f32 %v5064, %v5065
        %v5067 = vsel %vm1216, %v5050, 0.0
        %v5068 = vadd.f32 %v5066, %v5067
        %v5069 = vsel %vm1216, %v5051, 0.0
        %v5070 = vadd.f32 %v5068, %v5069
        %v5071 = vsel %vm1216, %v5052, 0.0
        %v5072 = vadd.f32 %v5070, %v5071
        %v5073 = vsel %vm1216, %v5053, 0.0
        %v5074 = vadd.f32 %v5072, %v5073
        %v5075 = vsel %vm1216, %v5054, 0.0
        %v5076 = vadd.f32 %v5074, %v5075
        %v5077 = vsel %vm1216, %v5055, 0.0
        %v5078 = vadd.f32 %v5076, %v5077
        %v5079 = vsel %vm1216, %v5056, 0.0
        %v5080 = vadd.f32 %v5078, %v5079
        %v5081 = vsel %vm1216, %v5057, 0.0
        %v5082 = vadd.f32 %v5080, %v5081
        %v5083 = vsel %vm1216, %v5058, 0.0
        %v5084 = vadd.f32 %v5082, %v5083
        %v5085 = vsel %vm1216, %v5059, 0.0
        %v5086 = vadd.f32 %v5084, %v5085
        %v5087 = vsel %vm1216, %v5060, 0.0
        %v5088 = vadd.f32 %v5086, %v5087
        %v5089 = vsel %vm1216, %v5061, 0.0
        %v5090 = vadd.f32 %v5088, %v5089
        %v5091 = vsel %vm1216, %v5062, 0.0
        %v5092 = vadd.f32 %v5090, %v5091
        %v5093 = vsel %vm1216, %v5063, 0.0
        %v5094 = vadd.f32 %v5092, %v5093
        %5095 = vadd.xlane.f32.xlu0 %v5094
        %v5096 = vpop.xlane.xlu0 %5095
        %v5097 = vrot.slane %v5096, 4
        %v5098 = vadd.f32 %v5096, %v5097
        %v5099 = vrot.slane %v5098, 2
        %v5100 = vadd.f32 %v5098, %v5099
        %v5101 = vrot.slane %v5100, 1
        %v5102 = vadd.f32 %v5100, %v5101
        %s5103 = vtos %v5102
        %s5104 = sadd.f32 %s4468, %s5103
        %v5105 = vsel %vm4643, 1, 0
        %v5106 = vsel %vm4644, 1, 0
        %v5107 = vsel %vm4645, 1, 0
        %v5108 = vsel %vm4646, 1, 0
        %v5109 = vsel %vm4647, 1, 0
        %v5110 = vsel %vm4648, 1, 0
        %v5111 = vsel %vm4649, 1, 0
        %v5112 = vsel %vm4650, 1, 0
        %v5113 = vsel %vm4651, 1, 0
        %v5114 = vsel %vm4652, 1, 0
        %v5115 = vsel %vm4653, 1, 0
        %v5116 = vsel %vm4654, 1, 0
        %v5117 = vsel %vm4655, 1, 0
        %v5118 = vsel %vm4656, 1, 0
        %v5119 = vsel %vm4657, 1, 0
        %v5120 = vsel %vm4658, 1, 0
        %v5121 = vcvt.s32.f32 %v5105
        %v5122 = vcvt.s32.f32 %v5106
        %v5123 = vcvt.s32.f32 %v5107
        %v5124 = vcvt.s32.f32 %v5108
        %v5125 = vcvt.s32.f32 %v5109
        %v5126 = vcvt.s32.f32 %v5110
        %v5127 = vcvt.s32.f32 %v5111
        %v5128 = vcvt.s32.f32 %v5112
        %v5129 = vcvt.s32.f32 %v5113
        %v5130 = vcvt.s32.f32 %v5114
        %v5131 = vcvt.s32.f32 %v5115
        %v5132 = vcvt.s32.f32 %v5116
        %v5133 = vcvt.s32.f32 %v5117
        %v5134 = vcvt.s32.f32 %v5118
        %v5135 = vcvt.s32.f32 %v5119
        %v5136 = vcvt.s32.f32 %v5120
        %v5137 = vsel %vm1216, %v5121, 0.0
        %v5138 = vsel %vm1216, %v5122, 0.0
        %v5139 = vadd.f32 %v5137, %v5138
        %v5140 = vsel %vm1216, %v5123, 0.0
        %v5141 = vadd.f32 %v5139, %v5140
        %v5142 = vsel %vm1216, %v5124, 0.0
        %v5143 = vadd.f32 %v5141, %v5142
        %v5144 = vsel %vm1216, %v5125, 0.0
        %v5145 = vadd.f32 %v5143, %v5144
        %v5146 = vsel %vm1216, %v5126, 0.0
        %v5147 = vadd.f32 %v5145, %v5146
        %v5148 = vsel %vm1216, %v5127, 0.0
        %v5149 = vadd.f32 %v5147, %v5148
        %v5150 = vsel %vm1216, %v5128, 0.0
        %v5151 = vadd.f32 %v5149, %v5150
        %v5152 = vsel %vm1216, %v5129, 0.0
        %v5153 = vadd.f32 %v5151, %v5152
        %v5154 = vsel %vm1216, %v5130, 0.0
        %v5155 = vadd.f32 %v5153, %v5154
        %v5156 = vsel %vm1216, %v5131, 0.0
        %v5157 = vadd.f32 %v5155, %v5156
        %v5158 = vsel %vm1216, %v5132, 0.0
        %v5159 = vadd.f32 %v5157, %v5158
        %v5160 = vsel %vm1216, %v5133, 0.0
        %v5161 = vadd.f32 %v5159, %v5160
        %v5162 = vsel %vm1216, %v5134, 0.0
        %v5163 = vadd.f32 %v5161, %v5162
        %v5164 = vsel %vm1216, %v5135, 0.0
        %v5165 = vadd.f32 %v5163, %v5164
        %v5166 = vsel %vm1216, %v5136, 0.0
        %v5167 = vadd.f32 %v5165, %v5166
        %5168 = vadd.xlane.f32.xlu0 %v5167
        %v5169 = vpop.xlane.xlu0 %5168
        %v5170 = vrot.slane %v5169, 4
        %v5171 = vadd.f32 %v5169, %v5170
        %v5172 = vrot.slane %v5171, 2
        %v5173 = vadd.f32 %v5171, %v5172
        %v5174 = vrot.slane %v5173, 1
        %v5175 = vadd.f32 %v5173, %v5174
        %s5176 = vtos %v5175
        %s5177 = sadd.f32 %s4541, %s5176
        %5178 = vst [vmem:[#allocation1] sm:$0xff] %v678
        %s5179 = scalar_lea.vmem [#allocation1], 6
        %v5180 = vld [vmem:[%s5179] ss:$9 sm:$0xff]
        %v5182 = vsel %vm4661, %v5180, 0.0
        %v5183 = vsel %vm1332, %v5182, 0.0
        %5184 = vadd.xlane.f32.xlu0 %v5183
        %v5185 = vpop.xlane.xlu0 %5184
        %v5186 = vrot.slane %v5185, 4
        %v5187 = vadd.f32 %v5185, %v5186
        %v5188 = vrot.slane %v5187, 2
        %v5189 = vadd.f32 %v5187, %v5188
        %v5190 = vrot.slane %v5189, 1
        %v5191 = vadd.f32 %v5189, %v5190
        %s5192 = vtos %v5191
        %s5193 = sadd.f32 %s4557, %s5192
        %v5194 = vsel %vm4661, 1, 0
        %v5195 = vcvt.s32.f32 %v5194
        %v5196 = vsel %vm1332, %v5195, 0.0
        %5197 = vadd.xlane.f32.xlu0 %v5196
        %v5198 = vpop.xlane.xlu0 %5197
        %v5199 = vrot.slane %v5198, 4
        %v5200 = vadd.f32 %v5198, %v5199
        %v5201 = vrot.slane %v5200, 2
        %v5202 = vadd.f32 %v5200, %v5201
        %v5203 = vrot.slane %v5202, 1
        %v5204 = vadd.f32 %v5202, %v5203
        %s5205 = vtos %v5204
        %s5206 = sadd.f32 %s4570, %s5205
        %s5207 = sadd.s32 %s764, 7
        %p5208 = scmp.lt.s32.totalorder %s5207, 32
        %s5209 = sld [smem:[#allocation2 + %s5207]]
        %v5210 = vstv %s5209
        %vm5211 = vcmp.eq.s32.totalorder %v712, %v5210
        %vm5212 = vcmp.eq.s32.totalorder %v713, %v5210
        %vm5213 = vcmp.eq.s32.totalorder %v714, %v5210
        %vm5214 = vcmp.eq.s32.totalorder %v715, %v5210
        %vm5215 = vcmp.eq.s32.totalorder %v716, %v5210
        %vm5216 = vcmp.eq.s32.totalorder %v717, %v5210
        %vm5217 = vcmp.eq.s32.totalorder %v718, %v5210
        %vm5218 = vcmp.eq.s32.totalorder %v719, %v5210
        %vm5219 = vcmp.eq.s32.totalorder %v720, %v5210
        %vm5220 = vcmp.eq.s32.totalorder %v721, %v5210
        %vm5221 = vcmp.eq.s32.totalorder %v722, %v5210
        %vm5222 = vcmp.eq.s32.totalorder %v723, %v5210
        %vm5223 = vcmp.eq.s32.totalorder %v724, %v5210
        %vm5224 = vcmp.eq.s32.totalorder %v725, %v5210
        %vm5225 = vcmp.eq.s32.totalorder %v726, %v5210
        %vm5226 = vcmp.eq.s32.totalorder %v727, %v5210
        %v5227 = vstv %s5207
        %vm5228 = vcmp.ne.s32.totalorder %v729, %v5227
        %vm5229 = vcmp.ne.s32.totalorder %v730, %v5227
        %vm5230 = vcmp.ne.s32.totalorder %v731, %v5227
        %vm5231 = vcmp.ne.s32.totalorder %v732, %v5227
        %vm5232 = vcmp.ne.s32.totalorder %v733, %v5227
        %vm5233 = vcmp.ne.s32.totalorder %v734, %v5227
        %vm5234 = vcmp.ne.s32.totalorder %v735, %v5227
        %vm5235 = vcmp.ne.s32.totalorder %v736, %v5227
        %vm5236 = vcmp.ne.s32.totalorder %v737, %v5227
        %vm5237 = vcmp.ne.s32.totalorder %v738, %v5227
        %vm5238 = vcmp.ne.s32.totalorder %v739, %v5227
        %vm5239 = vcmp.ne.s32.totalorder %v740, %v5227
        %vm5240 = vcmp.ne.s32.totalorder %v741, %v5227
        %vm5241 = vcmp.ne.s32.totalorder %v742, %v5227
        %vm5242 = vcmp.ne.s32.totalorder %v743, %v5227
        %vm5243 = vcmp.ne.s32.totalorder %v744, %v5227
        %vm5244 = vmand %vm5211, %vm5228
        %vm5245 = vmand %vm5212, %vm5229
        %vm5246 = vmand %vm5213, %vm5230
        %vm5247 = vmand %vm5214, %vm5231
        %vm5248 = vmand %vm5215, %vm5232
        %vm5249 = vmand %vm5216, %vm5233
        %vm5250 = vmand %vm5217, %vm5234
        %vm5251 = vmand %vm5218, %vm5235
        %vm5252 = vmand %vm5219, %vm5236
        %vm5253 = vmand %vm5220, %vm5237
        %vm5254 = vmand %vm5221, %vm5238
        %vm5255 = vmand %vm5222, %vm5239
        %vm5256 = vmand %vm5223, %vm5240
        %vm5257 = vmand %vm5224, %vm5241
        %vm5258 = vmand %vm5225, %vm5242
        %vm5259 = vmand %vm5226, %vm5243
        %s5260 = scalar_select %p5208, 1, 0
        %v5261 = vstv %s5260
        %vm5262 = vcmp.eq.s32.totalorder %v5261, 1
        %vm5263 = vmand %vm747, %vm5262
        %vm5264 = vmand %vm748, %vm5262
        %vm5265 = vmand %vm749, %vm5262
        %vm5266 = vmand %vm750, %vm5262
        %vm5267 = vmand %vm751, %vm5262
        %vm5268 = vmand %vm752, %vm5262
        %vm5269 = vmand %vm753, %vm5262
        %vm5270 = vmand %vm754, %vm5262
        %vm5271 = vmand %vm755, %vm5262
        %vm5272 = vmand %vm756, %vm5262
        %vm5273 = vmand %vm757, %vm5262
        %vm5274 = vmand %vm758, %vm5262
        %vm5275 = vmand %vm759, %vm5262
        %vm5276 = vmand %vm760, %vm5262
        %vm5277 = vmand %vm761, %vm5262
        %vm5278 = vmand %vm762, %vm5262
        %vm5279 = vmand %vm5244, %vm5263
        %vm5280 = vmand %vm5245, %vm5264
        %vm5281 = vmand %vm5246, %vm5265
        %vm5282 = vmand %vm5247, %vm5266
        %vm5283 = vmand %vm5248, %vm5267
        %vm5284 = vmand %vm5249, %vm5268
        %vm5285 = vmand %vm5250, %vm5269
        %vm5286 = vmand %vm5251, %vm5270
        %vm5287 = vmand %vm5252, %vm5271
        %vm5288 = vmand %vm5253, %vm5272
        %vm5289 = vmand %vm5254, %vm5273
        %vm5290 = vmand %vm5255, %vm5274
        %vm5291 = vmand %vm5256, %vm5275
        %vm5292 = vmand %vm5257, %vm5276
        %vm5293 = vmand %vm5258, %vm5277
        %vm5294 = vmand %vm5259, %vm5278
        %vm5295 = vcmp.ne.s32.totalorder %v711, %v5210
        %vm5296 = vmand %vm763, %vm5262
        %vm5297 = vmand %vm5295, %vm5296
        %5298 = vrot.lane.b32.xlu0 %v880, 121
        %v5299 = vpop.permute.xlu0 %5298
        %5300 = vrot.lane.b32.xlu0 %v882, 121
        %v5301 = vpop.permute.xlu0 %5300
        %5302 = vrot.lane.b32.xlu0 %v884, 121
        %v5303 = vpop.permute.xlu0 %5302
        %5304 = vrot.lane.b32.xlu0 %v886, 121
        %v5305 = vpop.permute.xlu0 %5304
        %5306 = vrot.lane.b32.xlu0 %v888, 121
        %v5307 = vpop.permute.xlu0 %5306
        %5308 = vrot.lane.b32.xlu0 %v890, 121
        %v5309 = vpop.permute.xlu0 %5308
        %5310 = vrot.lane.b32.xlu0 %v892, 121
        %v5311 = vpop.permute.xlu0 %5310
        %5312 = vrot.lane.b32.xlu0 %v894, 121
        %v5313 = vpop.permute.xlu0 %5312
        %5314 = vrot.lane.b32.xlu0 %v896, 121
        %v5315 = vpop.permute.xlu0 %5314
        %5316 = vrot.lane.b32.xlu0 %v898, 121
        %v5317 = vpop.permute.xlu0 %5316
        %5318 = vrot.lane.b32.xlu0 %v900, 121
        %v5319 = vpop.permute.xlu0 %5318
        %5320 = vrot.lane.b32.xlu0 %v902, 121
        %v5321 = vpop.permute.xlu0 %5320
        %5322 = vrot.lane.b32.xlu0 %v904, 121
        %v5323 = vpop.permute.xlu0 %5322
        %5324 = vrot.lane.b32.xlu0 %v906, 121
        %v5325 = vpop.permute.xlu0 %5324
        %5326 = vrot.lane.b32.xlu0 %v908, 121
        %v5327 = vpop.permute.xlu0 %5326
        %5328 = vrot.lane.b32.xlu0 %v910, 121
        %v5329 = vpop.permute.xlu0 %5328
        %v5346 = vsel %vm5279, %v5299, 0.0
        %v5347 = vsel %vm5280, %v5301, 0.0
        %v5348 = vsel %vm5281, %v5303, 0.0
        %v5349 = vsel %vm5282, %v5305, 0.0
        %v5350 = vsel %vm5283, %v5307, 0.0
        %v5351 = vsel %vm5284, %v5309, 0.0
        %v5352 = vsel %vm5285, %v5311, 0.0
        %v5353 = vsel %vm5286, %v5313, 0.0
        %v5354 = vsel %vm5287, %v5315, 0.0
        %v5355 = vsel %vm5288, %v5317, 0.0
        %v5356 = vsel %vm5289, %v5319, 0.0
        %v5357 = vsel %vm5290, %v5321, 0.0
        %v5358 = vsel %vm5291, %v5323, 0.0
        %v5359 = vsel %vm5292, %v5325, 0.0
        %v5360 = vsel %vm5293, %v5327, 0.0
        %v5361 = vsel %vm5294, %v5329, 0.0
        %5362 = vst [vmem:[#allocation1] sm:$0xff] %v929
        %s5363 = scalar_lea.vmem [#allocation1], 7
        %v5364 = vld [vmem:[%s5363] ss:$9 sm:$0xff]
        %v5366 = vsel %vm5297, %v5364, 0.0
        %5368 = vset.pattern.permute.xlu0 0
        %5369 = vperm.xlu0 %5368, %v5346
        %v5370 = vpop.permute.xlu0 %5369
        %5373 = vset.pattern.permute.xlu0 0
        %5374 = vperm.xlu0 %5373, %v5347
        %v5375 = vpop.permute.xlu0 %5374
        %5378 = vset.pattern.permute.xlu0 0
        %5379 = vperm.xlu0 %5378, %v5348
        %v5380 = vpop.permute.xlu0 %5379
        %5383 = vset.pattern.permute.xlu0 0
        %5384 = vperm.xlu0 %5383, %v5349
        %v5385 = vpop.permute.xlu0 %5384
        %5388 = vset.pattern.permute.xlu0 0
        %5389 = vperm.xlu0 %5388, %v5350
        %v5390 = vpop.permute.xlu0 %5389
        %5393 = vset.pattern.permute.xlu0 0
        %5394 = vperm.xlu0 %5393, %v5351
        %v5395 = vpop.permute.xlu0 %5394
        %5398 = vset.pattern.permute.xlu0 0
        %5399 = vperm.xlu0 %5398, %v5352
        %v5400 = vpop.permute.xlu0 %5399
        %5403 = vset.pattern.permute.xlu0 0
        %5404 = vperm.xlu0 %5403, %v5353
        %v5405 = vpop.permute.xlu0 %5404
        %5408 = vset.pattern.permute.xlu0 0
        %5409 = vperm.xlu0 %5408, %v5354
        %v5410 = vpop.permute.xlu0 %5409
        %5413 = vset.pattern.permute.xlu0 0
        %5414 = vperm.xlu0 %5413, %v5355
        %v5415 = vpop.permute.xlu0 %5414
        %5418 = vset.pattern.permute.xlu0 0
        %5419 = vperm.xlu0 %5418, %v5356
        %v5420 = vpop.permute.xlu0 %5419
        %5423 = vset.pattern.permute.xlu0 0
        %5424 = vperm.xlu0 %5423, %v5357
        %v5425 = vpop.permute.xlu0 %5424
        %5428 = vset.pattern.permute.xlu0 0
        %5429 = vperm.xlu0 %5428, %v5358
        %v5430 = vpop.permute.xlu0 %5429
        %5433 = vset.pattern.permute.xlu0 0
        %5434 = vperm.xlu0 %5433, %v5359
        %v5435 = vpop.permute.xlu0 %5434
        %5438 = vset.pattern.permute.xlu0 0
        %5439 = vperm.xlu0 %5438, %v5360
        %v5440 = vpop.permute.xlu0 %5439
        %5443 = vset.pattern.permute.xlu0 0
        %5444 = vperm.xlu0 %5443, %v5361
        %v5445 = vpop.permute.xlu0 %5444
        %v5448 = vperm.slane %v5366, 0
        %v5450 = vmul.f32 %v5370, %v5448
        %v5451 = vmul.f32 %v5375, %v5448
        %v5452 = vmul.f32 %v5380, %v5448
        %v5453 = vmul.f32 %v5385, %v5448
        %v5454 = vmul.f32 %v5390, %v5448
        %v5455 = vmul.f32 %v5395, %v5448
        %v5456 = vmul.f32 %v5400, %v5448
        %v5457 = vmul.f32 %v5405, %v5448
        %v5458 = vmul.f32 %v5410, %v5448
        %v5459 = vmul.f32 %v5415, %v5448
        %v5460 = vmul.f32 %v5420, %v5448
        %v5461 = vmul.f32 %v5425, %v5448
        %v5462 = vmul.f32 %v5430, %v5448
        %v5463 = vmul.f32 %v5435, %v5448
        %v5464 = vmul.f32 %v5440, %v5448
        %v5465 = vmul.f32 %v5445, %v5448
        %vm5466 = vcmp.gt.f32.partialorder %v5450, 0.9997057
        %vm5467 = vcmp.gt.f32.partialorder %v5451, 0.9997057
        %vm5468 = vcmp.gt.f32.partialorder %v5452, 0.9997057
        %vm5469 = vcmp.gt.f32.partialorder %v5453, 0.9997057
        %vm5470 = vcmp.gt.f32.partialorder %v5454, 0.9997057
        %vm5471 = vcmp.gt.f32.partialorder %v5455, 0.9997057
        %vm5472 = vcmp.gt.f32.partialorder %v5456, 0.9997057
        %vm5473 = vcmp.gt.f32.partialorder %v5457, 0.9997057
        %vm5474 = vcmp.gt.f32.partialorder %v5458, 0.9997057
        %vm5475 = vcmp.gt.f32.partialorder %v5459, 0.9997057
        %vm5476 = vcmp.gt.f32.partialorder %v5460, 0.9997057
        %vm5477 = vcmp.gt.f32.partialorder %v5461, 0.9997057
        %vm5478 = vcmp.gt.f32.partialorder %v5462, 0.9997057
        %vm5479 = vcmp.gt.f32.partialorder %v5463, 0.9997057
        %vm5480 = vcmp.gt.f32.partialorder %v5464, 0.9997057
        %vm5481 = vcmp.gt.f32.partialorder %v5465, 0.9997057
        %v5482 = vsel %vm5466, 1, 0
        %v5483 = vsel %vm5467, 1, 0
        %v5484 = vsel %vm5468, 1, 0
        %v5485 = vsel %vm5469, 1, 0
        %v5486 = vsel %vm5470, 1, 0
        %v5487 = vsel %vm5471, 1, 0
        %v5488 = vsel %vm5472, 1, 0
        %v5489 = vsel %vm5473, 1, 0
        %v5490 = vsel %vm5474, 1, 0
        %v5491 = vsel %vm5475, 1, 0
        %v5492 = vsel %vm5476, 1, 0
        %v5493 = vsel %vm5477, 1, 0
        %v5494 = vsel %vm5478, 1, 0
        %v5495 = vsel %vm5479, 1, 0
        %v5496 = vsel %vm5480, 1, 0
        %v5497 = vsel %vm5481, 1, 0
        %v5498 = vcvt.s32.f32 %v5482
        %v5499 = vcvt.s32.f32 %v5483
        %v5500 = vcvt.s32.f32 %v5484
        %v5501 = vcvt.s32.f32 %v5485
        %v5502 = vcvt.s32.f32 %v5486
        %v5503 = vcvt.s32.f32 %v5487
        %v5504 = vcvt.s32.f32 %v5488
        %v5505 = vcvt.s32.f32 %v5489
        %v5506 = vcvt.s32.f32 %v5490
        %v5507 = vcvt.s32.f32 %v5491
        %v5508 = vcvt.s32.f32 %v5492
        %v5509 = vcvt.s32.f32 %v5493
        %v5510 = vcvt.s32.f32 %v5494
        %v5511 = vcvt.s32.f32 %v5495
        %v5512 = vcvt.s32.f32 %v5496
        %v5513 = vcvt.s32.f32 %v5497
        %v5514 = vadd.f32 %v5498, %v5499
        %v5515 = vadd.f32 %v5514, %v5500
        %v5516 = vadd.f32 %v5515, %v5501
        %v5517 = vadd.f32 %v5516, %v5502
        %v5518 = vadd.f32 %v5517, %v5503
        %v5519 = vadd.f32 %v5518, %v5504
        %v5520 = vadd.f32 %v5519, %v5505
        %v5521 = vadd.f32 %v5520, %v5506
        %v5522 = vadd.f32 %v5521, %v5507
        %v5523 = vadd.f32 %v5522, %v5508
        %v5524 = vadd.f32 %v5523, %v5509
        %v5525 = vadd.f32 %v5524, %v5510
        %v5526 = vadd.f32 %v5525, %v5511
        %v5527 = vadd.f32 %v5526, %v5512
        %v5528 = vadd.f32 %v5527, %v5513
        %5529 = vadd.xlane.f32.xlu0 %v5528
        %v5530 = vpop.xlane.xlu0 %5529
        %v5531 = vrot.slane %v5530, 4
        %v5532 = vadd.f32 %v5530, %v5531
        %v5533 = vrot.slane %v5532, 2
        %v5534 = vadd.f32 %v5532, %v5533
        %v5535 = vrot.slane %v5534, 1
        %v5536 = vadd.f32 %v5534, %v5535
        %s5537 = vtos %v5536
        %v5538 = vadd.f32 %v5450, 1.0
        %v5539 = vadd.f32 %v5451, 1.0
        %v5540 = vadd.f32 %v5452, 1.0
        %v5541 = vadd.f32 %v5453, 1.0
        %v5542 = vadd.f32 %v5454, 1.0
        %v5543 = vadd.f32 %v5455, 1.0
        %v5544 = vadd.f32 %v5456, 1.0
        %v5545 = vadd.f32 %v5457, 1.0
        %v5546 = vadd.f32 %v5458, 1.0
        %v5547 = vadd.f32 %v5459, 1.0
        %v5548 = vadd.f32 %v5460, 1.0
        %v5549 = vadd.f32 %v5461, 1.0
        %v5550 = vadd.f32 %v5462, 1.0
        %v5551 = vadd.f32 %v5463, 1.0
        %v5552 = vadd.f32 %v5464, 1.0
        %v5553 = vadd.f32 %v5465, 1.0
        %v5554 = vlog2.pop %v5538
        %v5555 = vmul.f32 %v5554, 0.6931472
        %v5556 = vlog2.pop %v5539
        %v5557 = vmul.f32 %v5556, 0.6931472
        %v5558 = vlog2.pop %v5540
        %v5559 = vmul.f32 %v5558, 0.6931472
        %v5560 = vlog2.pop %v5541
        %v5561 = vmul.f32 %v5560, 0.6931472
        %v5562 = vlog2.pop %v5542
        %v5563 = vmul.f32 %v5562, 0.6931472
        %v5564 = vlog2.pop %v5543
        %v5565 = vmul.f32 %v5564, 0.6931472
        %v5566 = vlog2.pop %v5544
        %v5567 = vmul.f32 %v5566, 0.6931472
        %v5568 = vlog2.pop %v5545
        %v5569 = vmul.f32 %v5568, 0.6931472
        %v5570 = vlog2.pop %v5546
        %v5571 = vmul.f32 %v5570, 0.6931472
        %v5572 = vlog2.pop %v5547
        %v5573 = vmul.f32 %v5572, 0.6931472
        %v5574 = vlog2.pop %v5548
        %v5575 = vmul.f32 %v5574, 0.6931472
        %v5576 = vlog2.pop %v5549
        %v5577 = vmul.f32 %v5576, 0.6931472
        %v5578 = vlog2.pop %v5550
        %v5579 = vmul.f32 %v5578, 0.6931472
        %v5580 = vlog2.pop %v5551
        %v5581 = vmul.f32 %v5580, 0.6931472
        %v5582 = vlog2.pop %v5552
        %v5583 = vmul.f32 %v5582, 0.6931472
        %v5584 = vlog2.pop %v5553
        %v5585 = vmul.f32 %v5584, 0.6931472
        %v5586 = vsel %vm5466, %v5555, 0.0
        %v5587 = vsel %vm5467, %v5557, 0.0
        %v5588 = vsel %vm5468, %v5559, 0.0
        %v5589 = vsel %vm5469, %v5561, 0.0
        %v5590 = vsel %vm5470, %v5563, 0.0
        %v5591 = vsel %vm5471, %v5565, 0.0
        %v5592 = vsel %vm5472, %v5567, 0.0
        %v5593 = vsel %vm5473, %v5569, 0.0
        %v5594 = vsel %vm5474, %v5571, 0.0
        %v5595 = vsel %vm5475, %v5573, 0.0
        %v5596 = vsel %vm5476, %v5575, 0.0
        %v5597 = vsel %vm5477, %v5577, 0.0
        %v5598 = vsel %vm5478, %v5579, 0.0
        %v5599 = vsel %vm5479, %v5581, 0.0
        %v5600 = vsel %vm5480, %v5583, 0.0
        %v5601 = vsel %vm5481, %v5585, 0.0
        %v5602 = vadd.f32 %v5586, %v5587
        %v5603 = vadd.f32 %v5602, %v5588
        %v5604 = vadd.f32 %v5603, %v5589
        %v5605 = vadd.f32 %v5604, %v5590
        %v5606 = vadd.f32 %v5605, %v5591
        %v5607 = vadd.f32 %v5606, %v5592
        %v5608 = vadd.f32 %v5607, %v5593
        %v5609 = vadd.f32 %v5608, %v5594
        %v5610 = vadd.f32 %v5609, %v5595
        %v5611 = vadd.f32 %v5610, %v5596
        %v5612 = vadd.f32 %v5611, %v5597
        %v5613 = vadd.f32 %v5612, %v5598
        %v5614 = vadd.f32 %v5613, %v5599
        %v5615 = vadd.f32 %v5614, %v5600
        %v5616 = vadd.f32 %v5615, %v5601
        %5617 = vadd.xlane.f32.xlu0 %v5616
        %v5618 = vpop.xlane.xlu0 %5617
        %v5619 = vrot.slane %v5618, 4
        %v5620 = vadd.f32 %v5618, %v5619
        %v5621 = vrot.slane %v5620, 2
        %v5622 = vadd.f32 %v5620, %v5621
        %v5623 = vrot.slane %v5622, 1
        %v5624 = vadd.f32 %v5622, %v5623
        %s5625 = vtos %v5624
        %v5626 = vstv %s5625
        %v5627 = vmul.f32 %v5626, %v788
        %v5628 = vadd.f32 %v4992, %v5627
        %v5629 = vstv %s5537
        %v5630 = vmul.f32 %v5629, %v788
        %v5631 = vadd.f32 %v4995, %v5630
        %s5632 = scalar_select %p5208, 1.0, 0.0
        %v5633 = vstv %s5632
        %v5634 = vmul.f32 %v5633, %v788
        %v5635 = vadd.f32 %v4999, %v5634
        %5636 = vrot.lane.b32.xlu0 %v695, 121
        %v5637 = vpop.permute.xlu0 %5636
        %5638 = vrot.lane.b32.xlu0 %v696, 121
        %v5639 = vpop.permute.xlu0 %5638
        %5640 = vrot.lane.b32.xlu0 %v697, 121
        %v5641 = vpop.permute.xlu0 %5640
        %5642 = vrot.lane.b32.xlu0 %v698, 121
        %v5643 = vpop.permute.xlu0 %5642
        %5644 = vrot.lane.b32.xlu0 %v699, 121
        %v5645 = vpop.permute.xlu0 %5644
        %5646 = vrot.lane.b32.xlu0 %v700, 121
        %v5647 = vpop.permute.xlu0 %5646
        %5648 = vrot.lane.b32.xlu0 %v701, 121
        %v5649 = vpop.permute.xlu0 %5648
        %5650 = vrot.lane.b32.xlu0 %v702, 121
        %v5651 = vpop.permute.xlu0 %5650
        %5652 = vrot.lane.b32.xlu0 %v703, 121
        %v5653 = vpop.permute.xlu0 %5652
        %5654 = vrot.lane.b32.xlu0 %v704, 121
        %v5655 = vpop.permute.xlu0 %5654
        %5656 = vrot.lane.b32.xlu0 %v705, 121
        %v5657 = vpop.permute.xlu0 %5656
        %5658 = vrot.lane.b32.xlu0 %v706, 121
        %v5659 = vpop.permute.xlu0 %5658
        %5660 = vrot.lane.b32.xlu0 %v707, 121
        %v5661 = vpop.permute.xlu0 %5660
        %5662 = vrot.lane.b32.xlu0 %v708, 121
        %v5663 = vpop.permute.xlu0 %5662
        %5664 = vrot.lane.b32.xlu0 %v709, 121
        %v5665 = vpop.permute.xlu0 %5664
        %5666 = vrot.lane.b32.xlu0 %v710, 121
        %v5667 = vpop.permute.xlu0 %5666
        %v5684 = vsel %vm5279, %v5637, 0.0
        %v5685 = vsel %vm5280, %v5639, 0.0
        %v5686 = vsel %vm5281, %v5641, 0.0
        %v5687 = vsel %vm5282, %v5643, 0.0
        %v5688 = vsel %vm5283, %v5645, 0.0
        %v5689 = vsel %vm5284, %v5647, 0.0
        %v5690 = vsel %vm5285, %v5649, 0.0
        %v5691 = vsel %vm5286, %v5651, 0.0
        %v5692 = vsel %vm5287, %v5653, 0.0
        %v5693 = vsel %vm5288, %v5655, 0.0
        %v5694 = vsel %vm5289, %v5657, 0.0
        %v5695 = vsel %vm5290, %v5659, 0.0
        %v5696 = vsel %vm5291, %v5661, 0.0
        %v5697 = vsel %vm5292, %v5663, 0.0
        %v5698 = vsel %vm5293, %v5665, 0.0
        %v5699 = vsel %vm5294, %v5667, 0.0
        %v5700 = vsel %vm1216, %v5684, 0.0
        %v5701 = vsel %vm1216, %v5685, 0.0
        %v5702 = vadd.f32 %v5700, %v5701
        %v5703 = vsel %vm1216, %v5686, 0.0
        %v5704 = vadd.f32 %v5702, %v5703
        %v5705 = vsel %vm1216, %v5687, 0.0
        %v5706 = vadd.f32 %v5704, %v5705
        %v5707 = vsel %vm1216, %v5688, 0.0
        %v5708 = vadd.f32 %v5706, %v5707
        %v5709 = vsel %vm1216, %v5689, 0.0
        %v5710 = vadd.f32 %v5708, %v5709
        %v5711 = vsel %vm1216, %v5690, 0.0
        %v5712 = vadd.f32 %v5710, %v5711
        %v5713 = vsel %vm1216, %v5691, 0.0
        %v5714 = vadd.f32 %v5712, %v5713
        %v5715 = vsel %vm1216, %v5692, 0.0
        %v5716 = vadd.f32 %v5714, %v5715
        %v5717 = vsel %vm1216, %v5693, 0.0
        %v5718 = vadd.f32 %v5716, %v5717
        %v5719 = vsel %vm1216, %v5694, 0.0
        %v5720 = vadd.f32 %v5718, %v5719
        %v5721 = vsel %vm1216, %v5695, 0.0
        %v5722 = vadd.f32 %v5720, %v5721
        %v5723 = vsel %vm1216, %v5696, 0.0
        %v5724 = vadd.f32 %v5722, %v5723
        %v5725 = vsel %vm1216, %v5697, 0.0
        %v5726 = vadd.f32 %v5724, %v5725
        %v5727 = vsel %vm1216, %v5698, 0.0
        %v5728 = vadd.f32 %v5726, %v5727
        %v5729 = vsel %vm1216, %v5699, 0.0
        %v5730 = vadd.f32 %v5728, %v5729
        %5731 = vadd.xlane.f32.xlu0 %v5730
        %v5732 = vpop.xlane.xlu0 %5731
        %v5733 = vrot.slane %v5732, 4
        %v5734 = vadd.f32 %v5732, %v5733
        %v5735 = vrot.slane %v5734, 2
        %v5736 = vadd.f32 %v5734, %v5735
        %v5737 = vrot.slane %v5736, 1
        %v5738 = vadd.f32 %v5736, %v5737
        %s5739 = vtos %v5738
        %s5740 = sadd.f32 %s5104, %s5739
        %v5741 = vsel %vm5279, 1, 0
        %v5742 = vsel %vm5280, 1, 0
        %v5743 = vsel %vm5281, 1, 0
        %v5744 = vsel %vm5282, 1, 0
        %v5745 = vsel %vm5283, 1, 0
        %v5746 = vsel %vm5284, 1, 0
        %v5747 = vsel %vm5285, 1, 0
        %v5748 = vsel %vm5286, 1, 0
        %v5749 = vsel %vm5287, 1, 0
        %v5750 = vsel %vm5288, 1, 0
        %v5751 = vsel %vm5289, 1, 0
        %v5752 = vsel %vm5290, 1, 0
        %v5753 = vsel %vm5291, 1, 0
        %v5754 = vsel %vm5292, 1, 0
        %v5755 = vsel %vm5293, 1, 0
        %v5756 = vsel %vm5294, 1, 0
        %v5757 = vcvt.s32.f32 %v5741
        %v5758 = vcvt.s32.f32 %v5742
        %v5759 = vcvt.s32.f32 %v5743
        %v5760 = vcvt.s32.f32 %v5744
        %v5761 = vcvt.s32.f32 %v5745
        %v5762 = vcvt.s32.f32 %v5746
        %v5763 = vcvt.s32.f32 %v5747
        %v5764 = vcvt.s32.f32 %v5748
        %v5765 = vcvt.s32.f32 %v5749
        %v5766 = vcvt.s32.f32 %v5750
        %v5767 = vcvt.s32.f32 %v5751
        %v5768 = vcvt.s32.f32 %v5752
        %v5769 = vcvt.s32.f32 %v5753
        %v5770 = vcvt.s32.f32 %v5754
        %v5771 = vcvt.s32.f32 %v5755
        %v5772 = vcvt.s32.f32 %v5756
        %v5773 = vsel %vm1216, %v5757, 0.0
        %v5774 = vsel %vm1216, %v5758, 0.0
        %v5775 = vadd.f32 %v5773, %v5774
        %v5776 = vsel %vm1216, %v5759, 0.0
        %v5777 = vadd.f32 %v5775, %v5776
        %v5778 = vsel %vm1216, %v5760, 0.0
        %v5779 = vadd.f32 %v5777, %v5778
        %v5780 = vsel %vm1216, %v5761, 0.0
        %v5781 = vadd.f32 %v5779, %v5780
        %v5782 = vsel %vm1216, %v5762, 0.0
        %v5783 = vadd.f32 %v5781, %v5782
        %v5784 = vsel %vm1216, %v5763, 0.0
        %v5785 = vadd.f32 %v5783, %v5784
        %v5786 = vsel %vm1216, %v5764, 0.0
        %v5787 = vadd.f32 %v5785, %v5786
        %v5788 = vsel %vm1216, %v5765, 0.0
        %v5789 = vadd.f32 %v5787, %v5788
        %v5790 = vsel %vm1216, %v5766, 0.0
        %v5791 = vadd.f32 %v5789, %v5790
        %v5792 = vsel %vm1216, %v5767, 0.0
        %v5793 = vadd.f32 %v5791, %v5792
        %v5794 = vsel %vm1216, %v5768, 0.0
        %v5795 = vadd.f32 %v5793, %v5794
        %v5796 = vsel %vm1216, %v5769, 0.0
        %v5797 = vadd.f32 %v5795, %v5796
        %v5798 = vsel %vm1216, %v5770, 0.0
        %v5799 = vadd.f32 %v5797, %v5798
        %v5800 = vsel %vm1216, %v5771, 0.0
        %v5801 = vadd.f32 %v5799, %v5800
        %v5802 = vsel %vm1216, %v5772, 0.0
        %v5803 = vadd.f32 %v5801, %v5802
        %5804 = vadd.xlane.f32.xlu0 %v5803
        %v5805 = vpop.xlane.xlu0 %5804
        %v5806 = vrot.slane %v5805, 4
        %v5807 = vadd.f32 %v5805, %v5806
        %v5808 = vrot.slane %v5807, 2
        %v5809 = vadd.f32 %v5807, %v5808
        %v5810 = vrot.slane %v5809, 1
        %v5811 = vadd.f32 %v5809, %v5810
        %s5812 = vtos %v5811
        %s5813 = sadd.f32 %s5177, %s5812
        %5814 = vst [vmem:[#allocation1] sm:$0xff] %v678
        %s5815 = scalar_lea.vmem [#allocation1], 7
        %v5816 = vld [vmem:[%s5815] ss:$9 sm:$0xff]
        %v5818 = vsel %vm5297, %v5816, 0.0
        %v5819 = vsel %vm1332, %v5818, 0.0
        %5820 = vadd.xlane.f32.xlu0 %v5819
        %v5821 = vpop.xlane.xlu0 %5820
        %v5822 = vrot.slane %v5821, 4
        %v5823 = vadd.f32 %v5821, %v5822
        %v5824 = vrot.slane %v5823, 2
        %v5825 = vadd.f32 %v5823, %v5824
        %v5826 = vrot.slane %v5825, 1
        %v5827 = vadd.f32 %v5825, %v5826
        %s5828 = vtos %v5827
        %s5829 = sadd.f32 %s5193, %s5828
        %v5830 = vsel %vm5297, 1, 0
        %v5831 = vcvt.s32.f32 %v5830
        %v5832 = vsel %vm1332, %v5831, 0.0
        %5833 = vadd.xlane.f32.xlu0 %v5832
        %v5834 = vpop.xlane.xlu0 %5833
        %v5835 = vrot.slane %v5834, 4
        %v5836 = vadd.f32 %v5834, %v5835
        %v5837 = vrot.slane %v5836, 2
        %v5838 = vadd.f32 %v5836, %v5837
        %v5839 = vrot.slane %v5838, 1
        %v5840 = vadd.f32 %v5838, %v5839
        %s5841 = vtos %v5840
        %s5842 = sadd.f32 %s5206, %s5841
        %vm5843 = vcmp.gt.f32.partialorder %v5631, 0.5
        %v5844 = vmax.f32 %v5631, 1.0
        %v5845 = vrcp.pop %v5844
        %v5846 = vmul.f32 %v5844, %v5845
        %v5847 = vsub.f32 1.0, %v5846
        %v5848 = vmul.f32 %v5845, %v5847
        %v5849 = vadd.f32 %v5845, %v5848
        %vm5850 = vweird.f32 %v5844
        %vm5851 = vweird.f32 %v5845
        %vm5852 = vmor %vm5850, %vm5851
        %v5853 = vsel %vm5852, %v5845, %v5849
        %v5854 = vand.u32 2147483647, %v5844
        %vm5855 = vcmp.eq.f32.partialorder %v5854, 8.507059e+37
        %v5856 = vand.u32 %v5844, 2147483648
        %v5857 = vor.u32 1.1754944e-38, %v5856
        %v5858 = vsel %vm5855, %v5857, %v5853
        %v5859 = vmul.f32 %v5628, %v5858
        %v5860 = vsel %vm5843, %v5859, 0.0
        %vm5861 = vcmask 57344
        %v5862 = vsel %vm5861, %v5860, 0.0
        %5863 = vadd.xlane.f32.xlu0 %v5862
        %v5864 = vpop.xlane.xlu0 %5863
        %v5865 = vrot.slane %v5864, 4
        %v5866 = vadd.f32 %v5864, %v5865
        %v5867 = vrot.slane %v5866, 2
        %v5868 = vadd.f32 %v5866, %v5867
        %v5869 = vrot.slane %v5868, 1
        %v5870 = vadd.f32 %v5868, %v5869
        %s5871 = vtos %v5870
        %v5872 = vsel %vm5861, %v5631, 0.0
        %5873 = vadd.xlane.f32.xlu0 %v5872
        %v5874 = vpop.xlane.xlu0 %5873
        %v5875 = vrot.slane %v5874, 4
        %v5876 = vadd.f32 %v5874, %v5875
        %v5877 = vrot.slane %v5876, 2
        %v5878 = vadd.f32 %v5876, %v5877
        %v5879 = vrot.slane %v5878, 1
        %v5880 = vadd.f32 %v5878, %v5879
        %s5881 = vtos %v5880
        %v5882 = vsel %vm5843, 0.0, %v5635
        %v5883 = vsel %vm5861, %v5882, 0.0
        %5884 = vadd.xlane.f32.xlu0 %v5883
        %v5885 = vpop.xlane.xlu0 %5884
        %v5886 = vrot.slane %v5885, 4
        %v5887 = vadd.f32 %v5885, %v5886
        %v5888 = vrot.slane %v5887, 2
        %v5889 = vadd.f32 %v5887, %v5888
        %v5890 = vrot.slane %v5889, 1
        %v5891 = vadd.f32 %v5889, %v5890
        %s5892 = vtos %v5891
        %v5893 = vstv %s5871
        %v5894 = vsel %vm765, %v5893, 0.0
        %v5895 = vadd.f32 %v5894, 0.0
        %v5896 = vstv %s5881
        %v5897 = vsel %vm768, %v5896, 0.0
        %v5898 = vadd.f32 %v5895, %v5897
        %v5899 = vstv %s5892
        %v5900 = vsel %vm771, %v5899, 0.0
        %v5901 = vadd.f32 %v5898, %v5900
        %v5902 = vstv %s5740
        %v5903 = vsel %vm774, %v5902, 0.0
        %v5904 = vadd.f32 %v5901, %v5903
        %v5905 = vstv %s5813
        %v5906 = vsel %vm777, %v5905, 0.0
        %v5907 = vadd.f32 %v5904, %v5906
        %v5908 = vstv %s5829
        %v5909 = vsel %vm780, %v5908, 0.0
        %v5910 = vadd.f32 %v5907, %v5909
        %v5911 = vstv %s5842
        %v5912 = vsel %vm783, %v5911, 0.0
        %v5913 = vadd.f32 %v5910, %v5912
        %5914 = vst [vmem:[%s229] sm:$0xff] %v5913
        %s5915 = sand.u32 %s138, 1
        %s5916 = scalar_lea.sflag [#allocation3], %s5915
        %s5917 = sand.u32 %s138, 1
        %s5918 = smul.addr %s5917, 8
        %s5919 = scalar_lea.vmem [#allocation5], %s5918
        // Predicated region
        $region45: #{tpu_custom_call.1} parent=39 // pred_check
          %p5920 = pneg %p148
        $region46: #{tpu_custom_call.1} parent=39 // pred_check_branch
          %5922 = sbr.rel (%p5920) target = $region48
        $region47: #{tpu_custom_call.1} parent=39 // pred_region
          %5924 = vsyncadd %s5916, 0
          %s5925 = smul.addr %s20, 8
          %s5926 = scalar_lea.hbm %s5, %s5925
          %s5928 = sshll.u32 %s5919, 4
          %s5929 = int_to_ptr.vmem [resolvable:$true] %s5928
          %s5930 = sshll.u32 %s5926, 4
          %s5931 = int_to_ptr.hbm [resolvable:$true] %s5930
          %5933 = dma.vmem_to_hbm [thread:$0]  %s5929, 128, %s5931, %s5916
        $region48: #{tpu_custom_call.1} parent=39 // pred_fallthru
          _
      $region40: #{tpu_custom_call.1} parent=5 // pred_fallthru
        _
      %p5934 = scmp.le.s32.totalorder 2, %s15
      // Predicated region
      $region49: #{tpu_custom_call.1} parent=5 // pred_check
        %p5935 = pneg %p5934
      $region50: #{tpu_custom_call.1} parent=5 // pred_check_branch
        %5937 = sbr.rel (%p5935) target = $region52
      $region51: #{tpu_custom_call.1} parent=5 // pred_region
        %s5938 = ssub.s32 %s15, 2
        // Predicated region
        $region53: #{tpu_custom_call.1} parent=51 // pred_check
          %p5939 = pneg %p154
        $region54: #{tpu_custom_call.1} parent=51 // pred_check_branch
          %5941 = sbr.rel (%p5939) target = $region56
        $region55: #{tpu_custom_call.1} parent=51 // pred_region
          %s5942 = sand.u32 %s139, 1
          %s5943 = scalar_lea.sflag [#allocation3], %s5942
          %s5944 = sand.u32 %s139, 1
          %s5945 = smul.addr %s5944, 8
          %s5946 = scalar_lea.vmem [#allocation5], %s5945
          %5948 = dma.done %s5943, 128
        $region56: #{tpu_custom_call.1} parent=51 // pred_fallthru
          _
      $region52: #{tpu_custom_call.1} parent=5 // pred_fallthru
        _
    $region6: #{tpu_custom_call.1} parent=1 // loop_footer
      %s19 = sadd.s32 1, %s15
    $region7: #{tpu_custom_call.1} parent=1 // loop_footer_branch
      %14 = sbr.rel target = $region3
    $region8: #{tpu_custom_call.1} parent=1 // loop_exit
      _
    %5949 = vsyncpa [#allocation3], 1
    %s5950 = scalar_lea.sflag [#allocation3], 1
    %5951 = vsyncpa %s5950, 1
    %5952 = vsyncpa [#allocation4], 1
    %s5953 = scalar_lea.sflag [#allocation4], 1
    %5954 = vsyncpa %s5953, 1

</llo_original>
